<compile_context>
chip_gen: v5e
topology: v5e:2x2
jax: 0.10.0
libtpu: 0.0.40
codegen_flags: <defaults>
</compile_context>

<pallas_src>
import functools

import jax
import jax.numpy as jnp
import numpy as np
from jax.experimental import pallas as pl
from jax.experimental.pallas import tpu as pltpu


def es_kernel(x_cj_ref, x_exp_ref, xl_ref,
              wfc_ref, bfc_ref, wfl_ref, bfl_ref,
              segj_ref, segk_ref, ek_ref, wbd_ref, bgf_ref,
              o_ref):
    f32 = jnp.float32
    bb, cn = o_ref.shape                    # batch block, C4*N (lane-dense width)
    l4 = x_exp_ref.shape[0]                 # sequence length
    p = x_cj_ref.shape[0]                   # bb * N rows, one per (batch, node m)
    n = p // bb                             # num_points
    c = bfc_ref.shape[1] // l4              # conv output channels (= C4 // 4)

    x_cj = x_cj_ref[...]                    # (P, C4*L4)  lanes (c4, j)
    xl = xl_ref[...]                        # (P, C4*N)   lanes (c4, k), rows replicated over m

    # ---- 1x1 conv: channel contraction folded into lane-blocked constant matmuls ----
    fc = jnp.dot(x_cj, wfc_ref[...], preferred_element_type=f32) + bfc_ref[...]   # (P, C*L4)
    fl = jnp.dot(xl, wfl_ref[...], preferred_element_type=f32) + bfl_ref[...]     # (P, C*N)

    # ---- exact per-batch normalizer  l2[b] = sum_q ||Fl[b,q,:]|| * ||Fc[b,q,:,:]|| ----
    xx_sq = jnp.dot(fl * fl, segk_ref[...], preferred_element_type=f32)           # (P, C)
    ps = jnp.dot(fc * fc, segj_ref[...], preferred_element_type=f32)              # (P, C) per (b,m)
    ps_b = jnp.sum(ps.reshape(bb, n, c), axis=1, keepdims=True)                   # (bb, 1, C)
    yy_sq = jnp.broadcast_to(ps_b, (bb, n, c)).reshape(p, c)                      # (P, C)
    l2 = jnp.sum(jnp.sqrt(xx_sq) * jnp.sqrt(yy_sq), axis=1, keepdims=True)        # (P, 1)
    fl_s = fl * (1.0 / l2)                                                        # fold exact 1/l2 into Fl

    # ---- R[(b,m), c*N+k] = sum_q ( sum_j x[b,c,m,j]*Fc[b,q,m,j] ) * Fl_s[b,q,k] ----
    # statically-unrolled VPU FMAs on (P, 128) slabs (no tiny-K batched matmuls)
    ek = ek_ref[...]                                                              # (N, C4*N) 0/1 tile-expander
    r = jnp.zeros((p, cn), f32)
    for q in range(c):                      # C = 4, static unroll
        fexp = jnp.dot(fl_s[:, q * n:(q + 1) * n], ek,
                       preferred_element_type=f32)                                # (P, C4*N): Fl_s[b,q,k] tiled over c
        g = jnp.zeros((p, cn), f32)
        for j in range(l4):                 # L4 = 8, static unroll
            col = fc[:, q * l4 + j:q * l4 + j + 1]                                # (P, 1) = Fc[b,q,m,j]
            g = g + x_exp_ref[j] * col                                            # lane-dense FMA
        r = r + g * fexp

    # ---- adjacency A[b,m,k] = relu(tanh(max_c R[b,c,m,k])) ----
    # max over the C4 lane-groups via a rotate-and-max tree (XLU slot, no lane-sparse reshape)
    mx = r
    shift = cn // 2
    while shift >= n:
        mx = jnp.maximum(mx, pltpu.roll(mx, shift, axis=1))
        shift //= 2
    # aggregation needs A[b,k,m] at row (b,m): one per-batch (n,cn)->(cn,n) tile
    # transpose of the (c-replicated) max, then slice the first n rows.
    mx_t = jnp.swapaxes(mx.reshape(bb, n, cn), 1, 2)                              # (bb, cn, n)
    at = jnp.maximum(jnp.tanh(mx_t[:, :n, :]), 0.0).reshape(p, n)                 # (P, N) = A[b,k,m]
    at_exp = jnp.dot(at, ek, preferred_element_type=f32)                          # (P, C4*N), tiled over c

    # ---- aggregation X[b,c,k] = sum_m R[b,c,m,k] * A[b,k,m]  (sublane reduce over m) ----
    xagg = jnp.sum((r * at_exp).reshape(bb, n, cn), axis=1)                       # (bb, C4*N)

    # ---- fused per-node GCN linears: one (C4*N, C4*N) block-diagonal matmul ----
    fg = jnp.dot(xagg, wbd_ref[...], preferred_element_type=f32) + bgf_ref[...]
    o_ref[...] = fg.astype(o_ref.dtype)                                           # lane-dense 128-wide store


def prepare_es_params(wconv, bconv, wg, bg, seq_len):
    """One-time parameter prep (hoisted out of the per-call wrapper)."""
    C, C4 = wconv.shape
    N = wg.shape[0]
    L4 = seq_len
    f32 = jnp.float32
    eye_l = jnp.eye(L4, dtype=f32)
    eye_n = jnp.eye(N, dtype=f32)
    # conv weight expanded so Fc / Fl come out lane-blocked: (c4,j)->(q,j), (c4,k)->(q,k)
    wfc = jnp.einsum('qc,jJ->cjqJ', wconv, eye_l).reshape(C4 * L4, C * L4)
    bfc = jnp.repeat(bconv, L4).reshape(1, C * L4)
    wfl = jnp.einsum('qc,kK->ckqK', wconv, eye_n).reshape(C4 * N, C * N)
    bfl = jnp.repeat(bconv, N).reshape(1, C * N)
    # 0/1 lane-segment reducers / tile expander (drive the MXU, keep VPU lane-dense)
    segj = jnp.repeat(jnp.eye(C, dtype=f32), L4, axis=0)          # (C*L4, C)
    segk = jnp.repeat(jnp.eye(C, dtype=f32), N, axis=0)           # (C*N,  C)
    ek = jnp.tile(eye_n, (1, C4))                                 # (N, C4*N)
    # fused block-diagonal GCN weight / bias:  wbd[c*N+k, o*N+k'] = wg[k,o,c]*(k==k')
    wbd = jnp.einsum('koc,kl->ckol', wg, eye_n).reshape(C4 * N, C4 * N)
    bgf = bg.T.reshape(1, C4 * N)
    return dict(wfc=wfc, bfc=bfc, wfl=wfl, bfl=bfl, segj=segj, segk=segk,
                ek=ek, wbd=wbd, bgf=bgf)


@functools.partial(jax.jit, static_argnames=("bb",))
def es_module_forward(x, params, *, bb=8):
    """x:(B,C4,N,L4) + prepared params -> (B,C4,N,1)."""
    B, C4, N, L4 = x.shape
    CN = C4 * N
    assert (C4 & (C4 - 1)) == 0, "rotate-max tree assumes power-of-two C4"
    if B < bb:
        bb = B
    assert B % bb == 0, "batch must be divisible by the batch block"
    P = bb * N

    # ---- layout plumbing: lane-dense kernel inputs (cheap one-time XLA work) ----
    x_cj = jnp.transpose(x, (0, 2, 1, 3)).reshape(B * N, C4 * L4)          # rows (b,m), lanes (c4,j)
    x_exp = jnp.broadcast_to(
        jnp.transpose(x, (3, 0, 2, 1))[..., None], (L4, B, N, C4, N)
    ).reshape(L4, B * N, CN)                                               # [j, (b,m), (c,k)] = x[b,c,m,j]
    xl = jnp.broadcast_to(
        x[:, :, :, L4 - 1][:, None, :, :], (B, N, C4, N)
    ).reshape(B * N, CN)                                                   # [(b,m), (c4,k)] = x[b,c4,k,last]

    out_flat = pl.pallas_call(
        es_kernel,
        out_shape=jax.ShapeDtypeStruct((B, CN), jnp.float32),
        grid=(B // bb,),
        in_specs=[
            pl.BlockSpec((P, C4 * L4), lambda i: (i, 0)),                  # x_cj
            pl.BlockSpec((L4, P, CN), lambda i: (0, i, 0)),                # x_exp
            pl.BlockSpec((P, CN), lambda i: (i, 0)),                       # xl
            pl.BlockSpec(params['wfc'].shape, lambda i: (0, 0)),
            pl.BlockSpec(params['bfc'].shape, lambda i: (0, 0)),
            pl.BlockSpec(params['wfl'].shape, lambda i: (0, 0)),
            pl.BlockSpec(params['bfl'].shape, lambda i: (0, 0)),
            pl.BlockSpec(params['segj'].shape, lambda i: (0, 0)),
            pl.BlockSpec(params['segk'].shape, lambda i: (0, 0)),
            pl.BlockSpec(params['ek'].shape, lambda i: (0, 0)),
            pl.BlockSpec(params['wbd'].shape, lambda i: (0, 0)),
            pl.BlockSpec(params['bgf'].shape, lambda i: (0, 0)),
        ],
        out_specs=pl.BlockSpec((bb, CN), lambda i: (i, 0)),
        compiler_params=pltpu.CompilerParams(
            dimension_semantics=("parallel",)),                            # one step per v7x TensorCore
    )(x_cj, x_exp, xl, params['wfc'], params['bfc'], params['wfl'],
      params['bfl'], params['segj'], params['segk'], params['ek'],
      params['wbd'], params['bgf'])

    return out_flat.reshape(B, C4, N, 1)


def reference(x, wconv, bconv, wg, bg):
    """Pure-JAX transcription of the PyTorch forward, for validation."""
    Fc = jnp.einsum('oc,bcnl->bonl', wconv, x) + bconv[None, :, None, None]
    Fl = Fc[:, :, :, -1]
    xy = jnp.einsum('bcn,bcmt->bnmt', Fl, Fc)
    xx = jnp.sqrt(jnp.einsum('bcn,bcn->bc', Fl, Fl))
    yy = jnp.sqrt(jnp.einsum('bcnt,bcnt->bc', Fc, Fc))
    l2 = jnp.einsum('bc,bc->b', xx, yy)[:, None, None, None]
    S = xy / l2
    R = jnp.einsum('bkmj,bcmj->bcmk', S, x)
    A = jnp.maximum(jnp.tanh(jnp.max(R, axis=1)), 0.0)          # (b, m, k)
    X = jnp.einsum('bcmk,bkm->bck', R, A)
    Fg = jnp.einsum('koc,bck->bok', wg, X) + bg.T[None]
    return Fg[..., None]


if __name__ == "__main__":
    jax.config.update("jax_default_matmul_precision", "highest")

    B, C4, N, L4 = 16, 16, 8, 8      # batch, in_dim, num_points, seq
    C = C4 // 4                      # conv out channels

    key = jax.random.PRNGKey(0)
    k1, k2, k3, k4, k5 = jax.random.split(key, 5)
    x = jax.random.normal(k1, (B, C4, N, L4), jnp.float32)
    wconv = jax.random.normal(k2, (C, C4), jnp.float32) * 0.25
    bconv = jax.random.normal(k3, (C,), jnp.float32) * 0.1
    wg = jax.random.normal(k4, (N, C4, C4), jnp.float32) * (1.0 / np.sqrt(C4))
    bg = jax.random.normal(k5, (N, C4), jnp.float32) * 0.1

    params = prepare_es_params(wconv, bconv, wg, bg, L4)         # one-time prep
    out = es_module_forward(x, params)
    jax.block_until_ready(out)

    ref = reference(x, wconv, bconv, wg, bg)
    assert out.shape == (B, C4, N, 1)
    np.testing.assert_allclose(np.asarray(out), np.asarray(ref),
                               rtol=2e-3, atol=2e-3)
    print("KERNEL_OK")
</pallas_src>

<mosaic_0001>
module attributes {stable_mosaic.version = 11 : i64} {
  func.func @es_kernel(%arg0: i32, %arg1: memref<64x128xf32, #tpu.memory_space<vmem>>, %arg2: memref<8x64x128xf32, #tpu.memory_space<vmem>>, %arg3: memref<64x128xf32, #tpu.memory_space<vmem>>, %arg4: memref<128x32xf32, #tpu.memory_space<vmem>>, %arg5: memref<1x32xf32, #tpu.memory_space<vmem>>, %arg6: memref<128x32xf32, #tpu.memory_space<vmem>>, %arg7: memref<1x32xf32, #tpu.memory_space<vmem>>, %arg8: memref<32x4xf32, #tpu.memory_space<vmem>>, %arg9: memref<32x4xf32, #tpu.memory_space<vmem>>, %arg10: memref<8x128xf32, #tpu.memory_space<vmem>>, %arg11: memref<128x128xf32, #tpu.memory_space<vmem>>, %arg12: memref<1x128xf32, #tpu.memory_space<vmem>>, %arg13: memref<8x128xf32, #tpu.memory_space<vmem>>) attributes {dimension_semantics = [#tpu.dimension_semantics<parallel>], iteration_bounds = array<i64: 2>, scalar_prefetch = 0 : i64, scratch_operands = 0 : i64, tpu.core_type = #tpu.core_type<tc>, window_params = [{transform_indices = @transform_0, window_bounds = array<i64: 64, 128>}, {transform_indices = @transform_1, window_bounds = array<i64: 8, 64, 128>}, {transform_indices = @transform_2, window_bounds = array<i64: 64, 128>}, {pipeline_mode = #tpu.pipeline_mode<synchronous>, transform_indices = @transform_3, window_bounds = array<i64: 128, 32>}, {pipeline_mode = #tpu.pipeline_mode<synchronous>, transform_indices = @transform_4, window_bounds = array<i64: 1, 32>}, {pipeline_mode = #tpu.pipeline_mode<synchronous>, transform_indices = @transform_5, window_bounds = array<i64: 128, 32>}, {pipeline_mode = #tpu.pipeline_mode<synchronous>, transform_indices = @transform_6, window_bounds = array<i64: 1, 32>}, {pipeline_mode = #tpu.pipeline_mode<synchronous>, transform_indices = @transform_7, window_bounds = array<i64: 32, 4>}, {pipeline_mode = #tpu.pipeline_mode<synchronous>, transform_indices = @transform_8, window_bounds = array<i64: 32, 4>}, {pipeline_mode = #tpu.pipeline_mode<synchronous>, transform_indices = @transform_9, window_bounds = array<i64: 8, 128>}, {pipeline_mode = #tpu.pipeline_mode<synchronous>, transform_indices = @transform_10, window_bounds = array<i64: 128, 128>}, {pipeline_mode = #tpu.pipeline_mode<synchronous>, transform_indices = @transform_11, window_bounds = array<i64: 1, 128>}, {transform_indices = @transform_12, window_bounds = array<i64: 8, 128>}]} {
    %c0 = arith.constant 0 : index
    %c0_0 = arith.constant 0 : index
    %0 = vector.load %arg1[%c0, %c0_0] : memref<64x128xf32, #tpu.memory_space<vmem>>, vector<64x128xf32>
    %c0_1 = arith.constant 0 : index
    %c0_2 = arith.constant 0 : index
    %1 = vector.load %arg3[%c0_1, %c0_2] : memref<64x128xf32, #tpu.memory_space<vmem>>, vector<64x128xf32>
    %c0_3 = arith.constant 0 : index
    %c0_4 = arith.constant 0 : index
    %2 = vector.load %arg4[%c0_3, %c0_4] : memref<128x32xf32, #tpu.memory_space<vmem>>, vector<128x32xf32>
    %cst = arith.constant dense<0.000000e+00> : vector<64x32xf32>
    %3 = tpu.matmul %0, %2, %cst {dimension_numbers = #tpu.dot_dimension_numbers<[1], [0], [0], [1], [0, 0, 1, 1], [], []>, precision = #tpu.contract_precision<fp32>} : vector<64x128xf32>, vector<128x32xf32>, vector<64x32xf32> -> vector<64x32xf32>
    %c0_5 = arith.constant 0 : index
    %c0_6 = arith.constant 0 : index
    %4 = vector.load %arg5[%c0_5, %c0_6] : memref<1x32xf32, #tpu.memory_space<vmem>>, vector<1x32xf32>
    %5 = vector.broadcast %4 : vector<1x32xf32> to vector<64x32xf32>
    %6 = arith.addf %3, %5 : vector<64x32xf32>
    %c0_7 = arith.constant 0 : index
    %c0_8 = arith.constant 0 : index
    %7 = vector.load %arg6[%c0_7, %c0_8] : memref<128x32xf32, #tpu.memory_space<vmem>>, vector<128x32xf32>
    %cst_9 = arith.constant dense<0.000000e+00> : vector<64x32xf32>
    %8 = tpu.matmul %1, %7, %cst_9 {dimension_numbers = #tpu.dot_dimension_numbers<[1], [0], [0], [1], [0, 0, 1, 1], [], []>, precision = #tpu.contract_precision<fp32>} : vector<64x128xf32>, vector<128x32xf32>, vector<64x32xf32> -> vector<64x32xf32>
    %c0_10 = arith.constant 0 : index
    %c0_11 = arith.constant 0 : index
    %9 = vector.load %arg7[%c0_10, %c0_11] : memref<1x32xf32, #tpu.memory_space<vmem>>, vector<1x32xf32>
    %10 = vector.broadcast %9 : vector<1x32xf32> to vector<64x32xf32>
    %11 = arith.addf %8, %10 : vector<64x32xf32>
    %12 = arith.mulf %11, %11 : vector<64x32xf32>
    %c0_12 = arith.constant 0 : index
    %c0_13 = arith.constant 0 : index
    %13 = vector.load %arg9[%c0_12, %c0_13] : memref<32x4xf32, #tpu.memory_space<vmem>>, vector<32x4xf32>
    %cst_14 = arith.constant dense<0.000000e+00> : vector<64x4xf32>
    %14 = tpu.matmul %12, %13, %cst_14 {dimension_numbers = #tpu.dot_dimension_numbers<[1], [0], [0], [1], [0, 0, 1, 1], [], []>, precision = #tpu.contract_precision<fp32>} : vector<64x32xf32>, vector<32x4xf32>, vector<64x4xf32> -> vector<64x4xf32>
    %15 = arith.mulf %6, %6 : vector<64x32xf32>
    %c0_15 = arith.constant 0 : index
    %c0_16 = arith.constant 0 : index
    %16 = vector.load %arg8[%c0_15, %c0_16] : memref<32x4xf32, #tpu.memory_space<vmem>>, vector<32x4xf32>
    %cst_17 = arith.constant dense<0.000000e+00> : vector<64x4xf32>
    %17 = tpu.matmul %15, %16, %cst_17 {dimension_numbers = #tpu.dot_dimension_numbers<[1], [0], [0], [1], [0, 0, 1, 1], [], []>, precision = #tpu.contract_precision<fp32>} : vector<64x32xf32>, vector<32x4xf32>, vector<64x4xf32> -> vector<64x4xf32>
    %18 = vector.shape_cast %17 : vector<64x4xf32> to vector<8x8x4xf32>
    %cst_18 = arith.constant dense<0.000000e+00> : vector<8x4xf32>
    %19 = vector.multi_reduction <add>, %18, %cst_18 [1] : vector<8x8x4xf32> to vector<8x4xf32>
    %20 = vector.shape_cast %19 : vector<8x4xf32> to vector<8x1x4xf32>
    %21 = vector.shape_cast %20 : vector<8x1x4xf32> to vector<8x1x4xf32>
    %22 = vector.broadcast %21 : vector<8x1x4xf32> to vector<8x8x4xf32>
    %23 = vector.shape_cast %22 : vector<8x8x4xf32> to vector<64x4xf32>
    %24 = math.sqrt %14 : vector<64x4xf32>
    %25 = math.sqrt %23 : vector<64x4xf32>
    %26 = arith.mulf %24, %25 : vector<64x4xf32>
    %cst_19 = arith.constant dense<0.000000e+00> : vector<64xf32>
    %27 = vector.multi_reduction <add>, %26, %cst_19 [1] : vector<64x4xf32> to vector<64xf32>
    %28 = vector.shape_cast %27 : vector<64xf32> to vector<64x1xf32>
    %cst_20 = arith.constant 1.000000e+00 : f32
    %29 = vector.broadcast %cst_20 : f32 to vector<64x1xf32>
    %30 = arith.divf %29, %28 : vector<64x1xf32>
    %31 = vector.broadcast %30 : vector<64x1xf32> to vector<64x32xf32>
    %32 = arith.mulf %11, %31 : vector<64x32xf32>
    %c0_21 = arith.constant 0 : index
    %c0_22 = arith.constant 0 : index
    %33 = vector.load %arg10[%c0_21, %c0_22] : memref<8x128xf32, #tpu.memory_space<vmem>>, vector<8x128xf32>
    %cst_23 = arith.constant 0.000000e+00 : f32
    %34 = vector.broadcast %cst_23 : f32 to vector<64x128xf32>
    %35 = vector.extract_strided_slice %32 {offsets = [0, 0], sizes = [64, 8], strides = [1, 1]} : vector<64x32xf32> to vector<64x8xf32>
    %cst_24 = arith.constant dense<0.000000e+00> : vector<64x128xf32>
    %36 = tpu.matmul %35, %33, %cst_24 {dimension_numbers = #tpu.dot_dimension_numbers<[1], [0], [0], [1], [0, 0, 1, 1], [], []>, precision = #tpu.contract_precision<fp32>} : vector<64x8xf32>, vector<8x128xf32>, vector<64x128xf32> -> vector<64x128xf32>
    %cst_25 = arith.constant 0.000000e+00 : f32
    %37 = vector.broadcast %cst_25 : f32 to vector<64x128xf32>
    %38 = vector.extract_strided_slice %6 {offsets = [0, 0], sizes = [64, 1], strides = [1, 1]} : vector<64x32xf32> to vector<64x1xf32>
    %c0_26 = arith.constant 0 : index
    %c0_27 = arith.constant 0 : index
    %c0_28 = arith.constant 0 : index
    %39 = vector.load %arg2[%c0_26, %c0_27, %c0_28] : memref<8x64x128xf32, #tpu.memory_space<vmem>>, vector<1x64x128xf32>
    %40 = vector.shape_cast %39 : vector<1x64x128xf32> to vector<64x128xf32>
    %41 = vector.broadcast %38 : vector<64x1xf32> to vector<64x128xf32>
    %42 = arith.mulf %40, %41 : vector<64x128xf32>
    %43 = arith.addf %37, %42 : vector<64x128xf32>
    %44 = vector.extract_strided_slice %6 {offsets = [0, 1], sizes = [64, 1], strides = [1, 1]} : vector<64x32xf32> to vector<64x1xf32>
    %c1 = arith.constant 1 : index
    %c0_29 = arith.constant 0 : index
    %c0_30 = arith.constant 0 : index
    %45 = vector.load %arg2[%c1, %c0_29, %c0_30] : memref<8x64x128xf32, #tpu.memory_space<vmem>>, vector<1x64x128xf32>
    %46 = vector.shape_cast %45 : vector<1x64x128xf32> to vector<64x128xf32>
    %47 = vector.broadcast %44 : vector<64x1xf32> to vector<64x128xf32>
    %48 = arith.mulf %46, %47 : vector<64x128xf32>
    %49 = arith.addf %43, %48 : vector<64x128xf32>
    %50 = vector.extract_strided_slice %6 {offsets = [0, 2], sizes = [64, 1], strides = [1, 1]} : vector<64x32xf32> to vector<64x1xf32>
    %c2 = arith.constant 2 : index
    %c0_31 = arith.constant 0 : index
    %c0_32 = arith.constant 0 : index
    %51 = vector.load %arg2[%c2, %c0_31, %c0_32] : memref<8x64x128xf32, #tpu.memory_space<vmem>>, vector<1x64x128xf32>
    %52 = vector.shape_cast %51 : vector<1x64x128xf32> to vector<64x128xf32>
    %53 = vector.broadcast %50 : vector<64x1xf32> to vector<64x128xf32>
    %54 = arith.mulf %52, %53 : vector<64x128xf32>
    %55 = arith.addf %49, %54 : vector<64x128xf32>
    %56 = vector.extract_strided_slice %6 {offsets = [0, 3], sizes = [64, 1], strides = [1, 1]} : vector<64x32xf32> to vector<64x1xf32>
    %c3 = arith.constant 3 : index
    %c0_33 = arith.constant 0 : index
    %c0_34 = arith.constant 0 : index
    %57 = vector.load %arg2[%c3, %c0_33, %c0_34] : memref<8x64x128xf32, #tpu.memory_space<vmem>>, vector<1x64x128xf32>
    %58 = vector.shape_cast %57 : vector<1x64x128xf32> to vector<64x128xf32>
    %59 = vector.broadcast %56 : vector<64x1xf32> to vector<64x128xf32>
    %60 = arith.mulf %58, %59 : vector<64x128xf32>
    %61 = arith.addf %55, %60 : vector<64x128xf32>
    %62 = vector.extract_strided_slice %6 {offsets = [0, 4], sizes = [64, 1], strides = [1, 1]} : vector<64x32xf32> to vector<64x1xf32>
    %c4 = arith.constant 4 : index
    %c0_35 = arith.constant 0 : index
    %c0_36 = arith.constant 0 : index
    %63 = vector.load %arg2[%c4, %c0_35, %c0_36] : memref<8x64x128xf32, #tpu.memory_space<vmem>>, vector<1x64x128xf32>
    %64 = vector.shape_cast %63 : vector<1x64x128xf32> to vector<64x128xf32>
    %65 = vector.broadcast %62 : vector<64x1xf32> to vector<64x128xf32>
    %66 = arith.mulf %64, %65 : vector<64x128xf32>
    %67 = arith.addf %61, %66 : vector<64x128xf32>
    %68 = vector.extract_strided_slice %6 {offsets = [0, 5], sizes = [64, 1], strides = [1, 1]} : vector<64x32xf32> to vector<64x1xf32>
    %c5 = arith.constant 5 : index
    %c0_37 = arith.constant 0 : index
    %c0_38 = arith.constant 0 : index
    %69 = vector.load %arg2[%c5, %c0_37, %c0_38] : memref<8x64x128xf32, #tpu.memory_space<vmem>>, vector<1x64x128xf32>
    %70 = vector.shape_cast %69 : vector<1x64x128xf32> to vector<64x128xf32>
    %71 = vector.broadcast %68 : vector<64x1xf32> to vector<64x128xf32>
    %72 = arith.mulf %70, %71 : vector<64x128xf32>
    %73 = arith.addf %67, %72 : vector<64x128xf32>
    %74 = vector.extract_strided_slice %6 {offsets = [0, 6], sizes = [64, 1], strides = [1, 1]} : vector<64x32xf32> to vector<64x1xf32>
    %c6 = arith.constant 6 : index
    %c0_39 = arith.constant 0 : index
    %c0_40 = arith.constant 0 : index
    %75 = vector.load %arg2[%c6, %c0_39, %c0_40] : memref<8x64x128xf32, #tpu.memory_space<vmem>>, vector<1x64x128xf32>
    %76 = vector.shape_cast %75 : vector<1x64x128xf32> to vector<64x128xf32>
    %77 = vector.broadcast %74 : vector<64x1xf32> to vector<64x128xf32>
    %78 = arith.mulf %76, %77 : vector<64x128xf32>
    %79 = arith.addf %73, %78 : vector<64x128xf32>
    %80 = vector.extract_strided_slice %6 {offsets = [0, 7], sizes = [64, 1], strides = [1, 1]} : vector<64x32xf32> to vector<64x1xf32>
    %c7 = arith.constant 7 : index
    %c0_41 = arith.constant 0 : index
    %c0_42 = arith.constant 0 : index
    %81 = vector.load %arg2[%c7, %c0_41, %c0_42] : memref<8x64x128xf32, #tpu.memory_space<vmem>>, vector<1x64x128xf32>
    %82 = vector.shape_cast %81 : vector<1x64x128xf32> to vector<64x128xf32>
    %83 = vector.broadcast %80 : vector<64x1xf32> to vector<64x128xf32>
    %84 = arith.mulf %82, %83 : vector<64x128xf32>
    %85 = arith.addf %79, %84 : vector<64x128xf32>
    %86 = arith.mulf %85, %36 : vector<64x128xf32>
    %87 = arith.addf %34, %86 : vector<64x128xf32>
    %88 = vector.extract_strided_slice %32 {offsets = [0, 8], sizes = [64, 8], strides = [1, 1]} : vector<64x32xf32> to vector<64x8xf32>
    %cst_43 = arith.constant dense<0.000000e+00> : vector<64x128xf32>
    %89 = tpu.matmul %88, %33, %cst_43 {dimension_numbers = #tpu.dot_dimension_numbers<[1], [0], [0], [1], [0, 0, 1, 1], [], []>, precision = #tpu.contract_precision<fp32>} : vector<64x8xf32>, vector<8x128xf32>, vector<64x128xf32> -> vector<64x128xf32>
    %cst_44 = arith.constant 0.000000e+00 : f32
    %90 = vector.broadcast %cst_44 : f32 to vector<64x128xf32>
    %91 = vector.extract_strided_slice %6 {offsets = [0, 8], sizes = [64, 1], strides = [1, 1]} : vector<64x32xf32> to vector<64x1xf32>
    %c0_45 = arith.constant 0 : index
    %c0_46 = arith.constant 0 : index
    %c0_47 = arith.constant 0 : index
    %92 = vector.load %arg2[%c0_45, %c0_46, %c0_47] : memref<8x64x128xf32, #tpu.memory_space<vmem>>, vector<1x64x128xf32>
    %93 = vector.shape_cast %92 : vector<1x64x128xf32> to vector<64x128xf32>
    %94 = vector.broadcast %91 : vector<64x1xf32> to vector<64x128xf32>
    %95 = arith.mulf %93, %94 : vector<64x128xf32>
    %96 = arith.addf %90, %95 : vector<64x128xf32>
    %97 = vector.extract_strided_slice %6 {offsets = [0, 9], sizes = [64, 1], strides = [1, 1]} : vector<64x32xf32> to vector<64x1xf32>
    %c1_48 = arith.constant 1 : index
    %c0_49 = arith.constant 0 : index
    %c0_50 = arith.constant 0 : index
    %98 = vector.load %arg2[%c1_48, %c0_49, %c0_50] : memref<8x64x128xf32, #tpu.memory_space<vmem>>, vector<1x64x128xf32>
    %99 = vector.shape_cast %98 : vector<1x64x128xf32> to vector<64x128xf32>
    %100 = vector.broadcast %97 : vector<64x1xf32> to vector<64x128xf32>
    %101 = arith.mulf %99, %100 : vector<64x128xf32>
    %102 = arith.addf %96, %101 : vector<64x128xf32>
    %103 = vector.extract_strided_slice %6 {offsets = [0, 10], sizes = [64, 1], strides = [1, 1]} : vector<64x32xf32> to vector<64x1xf32>
    %c2_51 = arith.constant 2 : index
    %c0_52 = arith.constant 0 : index
    %c0_53 = arith.constant 0 : index
    %104 = vector.load %arg2[%c2_51, %c0_52, %c0_53] : memref<8x64x128xf32, #tpu.memory_space<vmem>>, vector<1x64x128xf32>
    %105 = vector.shape_cast %104 : vector<1x64x128xf32> to vector<64x128xf32>
    %106 = vector.broadcast %103 : vector<64x1xf32> to vector<64x128xf32>
    %107 = arith.mulf %105, %106 : vector<64x128xf32>
    %108 = arith.addf %102, %107 : vector<64x128xf32>
    %109 = vector.extract_strided_slice %6 {offsets = [0, 11], sizes = [64, 1], strides = [1, 1]} : vector<64x32xf32> to vector<64x1xf32>
    %c3_54 = arith.constant 3 : index
    %c0_55 = arith.constant 0 : index
    %c0_56 = arith.constant 0 : index
    %110 = vector.load %arg2[%c3_54, %c0_55, %c0_56] : memref<8x64x128xf32, #tpu.memory_space<vmem>>, vector<1x64x128xf32>
    %111 = vector.shape_cast %110 : vector<1x64x128xf32> to vector<64x128xf32>
    %112 = vector.broadcast %109 : vector<64x1xf32> to vector<64x128xf32>
    %113 = arith.mulf %111, %112 : vector<64x128xf32>
    %114 = arith.addf %108, %113 : vector<64x128xf32>
    %115 = vector.extract_strided_slice %6 {offsets = [0, 12], sizes = [64, 1], strides = [1, 1]} : vector<64x32xf32> to vector<64x1xf32>
    %c4_57 = arith.constant 4 : index
    %c0_58 = arith.constant 0 : index
    %c0_59 = arith.constant 0 : index
    %116 = vector.load %arg2[%c4_57, %c0_58, %c0_59] : memref<8x64x128xf32, #tpu.memory_space<vmem>>, vector<1x64x128xf32>
    %117 = vector.shape_cast %116 : vector<1x64x128xf32> to vector<64x128xf32>
    %118 = vector.broadcast %115 : vector<64x1xf32> to vector<64x128xf32>
    %119 = arith.mulf %117, %118 : vector<64x128xf32>
    %120 = arith.addf %114, %119 : vector<64x128xf32>
    %121 = vector.extract_strided_slice %6 {offsets = [0, 13], sizes = [64, 1], strides = [1, 1]} : vector<64x32xf32> to vector<64x1xf32>
    %c5_60 = arith.constant 5 : index
    %c0_61 = arith.constant 0 : index
    %c0_62 = arith.constant 0 : index
    %122 = vector.load %arg2[%c5_60, %c0_61, %c0_62] : memref<8x64x128xf32, #tpu.memory_space<vmem>>, vector<1x64x128xf32>
    %123 = vector.shape_cast %122 : vector<1x64x128xf32> to vector<64x128xf32>
    %124 = vector.broadcast %121 : vector<64x1xf32> to vector<64x128xf32>
    %125 = arith.mulf %123, %124 : vector<64x128xf32>
    %126 = arith.addf %120, %125 : vector<64x128xf32>
    %127 = vector.extract_strided_slice %6 {offsets = [0, 14], sizes = [64, 1], strides = [1, 1]} : vector<64x32xf32> to vector<64x1xf32>
    %c6_63 = arith.constant 6 : index
    %c0_64 = arith.constant 0 : index
    %c0_65 = arith.constant 0 : index
    %128 = vector.load %arg2[%c6_63, %c0_64, %c0_65] : memref<8x64x128xf32, #tpu.memory_space<vmem>>, vector<1x64x128xf32>
    %129 = vector.shape_cast %128 : vector<1x64x128xf32> to vector<64x128xf32>
    %130 = vector.broadcast %127 : vector<64x1xf32> to vector<64x128xf32>
    %131 = arith.mulf %129, %130 : vector<64x128xf32>
    %132 = arith.addf %126, %131 : vector<64x128xf32>
    %133 = vector.extract_strided_slice %6 {offsets = [0, 15], sizes = [64, 1], strides = [1, 1]} : vector<64x32xf32> to vector<64x1xf32>
    %c7_66 = arith.constant 7 : index
    %c0_67 = arith.constant 0 : index
    %c0_68 = arith.constant 0 : index
    %134 = vector.load %arg2[%c7_66, %c0_67, %c0_68] : memref<8x64x128xf32, #tpu.memory_space<vmem>>, vector<1x64x128xf32>
    %135 = vector.shape_cast %134 : vector<1x64x128xf32> to vector<64x128xf32>
    %136 = vector.broadcast %133 : vector<64x1xf32> to vector<64x128xf32>
    %137 = arith.mulf %135, %136 : vector<64x128xf32>
    %138 = arith.addf %132, %137 : vector<64x128xf32>
    %139 = arith.mulf %138, %89 : vector<64x128xf32>
    %140 = arith.addf %87, %139 : vector<64x128xf32>
    %141 = vector.extract_strided_slice %32 {offsets = [0, 16], sizes = [64, 8], strides = [1, 1]} : vector<64x32xf32> to vector<64x8xf32>
    %cst_69 = arith.constant dense<0.000000e+00> : vector<64x128xf32>
    %142 = tpu.matmul %141, %33, %cst_69 {dimension_numbers = #tpu.dot_dimension_numbers<[1], [0], [0], [1], [0, 0, 1, 1], [], []>, precision = #tpu.contract_precision<fp32>} : vector<64x8xf32>, vector<8x128xf32>, vector<64x128xf32> -> vector<64x128xf32>
    %cst_70 = arith.constant 0.000000e+00 : f32
    %143 = vector.broadcast %cst_70 : f32 to vector<64x128xf32>
    %144 = vector.extract_strided_slice %6 {offsets = [0, 16], sizes = [64, 1], strides = [1, 1]} : vector<64x32xf32> to vector<64x1xf32>
    %c0_71 = arith.constant 0 : index
    %c0_72 = arith.constant 0 : index
    %c0_73 = arith.constant 0 : index
    %145 = vector.load %arg2[%c0_71, %c0_72, %c0_73] : memref<8x64x128xf32, #tpu.memory_space<vmem>>, vector<1x64x128xf32>
    %146 = vector.shape_cast %145 : vector<1x64x128xf32> to vector<64x128xf32>
    %147 = vector.broadcast %144 : vector<64x1xf32> to vector<64x128xf32>
    %148 = arith.mulf %146, %147 : vector<64x128xf32>
    %149 = arith.addf %143, %148 : vector<64x128xf32>
    %150 = vector.extract_strided_slice %6 {offsets = [0, 17], sizes = [64, 1], strides = [1, 1]} : vector<64x32xf32> to vector<64x1xf32>
    %c1_74 = arith.constant 1 : index
    %c0_75 = arith.constant 0 : index
    %c0_76 = arith.constant 0 : index
    %151 = vector.load %arg2[%c1_74, %c0_75, %c0_76] : memref<8x64x128xf32, #tpu.memory_space<vmem>>, vector<1x64x128xf32>
    %152 = vector.shape_cast %151 : vector<1x64x128xf32> to vector<64x128xf32>
    %153 = vector.broadcast %150 : vector<64x1xf32> to vector<64x128xf32>
    %154 = arith.mulf %152, %153 : vector<64x128xf32>
    %155 = arith.addf %149, %154 : vector<64x128xf32>
    %156 = vector.extract_strided_slice %6 {offsets = [0, 18], sizes = [64, 1], strides = [1, 1]} : vector<64x32xf32> to vector<64x1xf32>
    %c2_77 = arith.constant 2 : index
    %c0_78 = arith.constant 0 : index
    %c0_79 = arith.constant 0 : index
    %157 = vector.load %arg2[%c2_77, %c0_78, %c0_79] : memref<8x64x128xf32, #tpu.memory_space<vmem>>, vector<1x64x128xf32>
    %158 = vector.shape_cast %157 : vector<1x64x128xf32> to vector<64x128xf32>
    %159 = vector.broadcast %156 : vector<64x1xf32> to vector<64x128xf32>
    %160 = arith.mulf %158, %159 : vector<64x128xf32>
    %161 = arith.addf %155, %160 : vector<64x128xf32>
    %162 = vector.extract_strided_slice %6 {offsets = [0, 19], sizes = [64, 1], strides = [1, 1]} : vector<64x32xf32> to vector<64x1xf32>
    %c3_80 = arith.constant 3 : index
    %c0_81 = arith.constant 0 : index
    %c0_82 = arith.constant 0 : index
    %163 = vector.load %arg2[%c3_80, %c0_81, %c0_82] : memref<8x64x128xf32, #tpu.memory_space<vmem>>, vector<1x64x128xf32>
    %164 = vector.shape_cast %163 : vector<1x64x128xf32> to vector<64x128xf32>
    %165 = vector.broadcast %162 : vector<64x1xf32> to vector<64x128xf32>
    %166 = arith.mulf %164, %165 : vector<64x128xf32>
    %167 = arith.addf %161, %166 : vector<64x128xf32>
    %168 = vector.extract_strided_slice %6 {offsets = [0, 20], sizes = [64, 1], strides = [1, 1]} : vector<64x32xf32> to vector<64x1xf32>
    %c4_83 = arith.constant 4 : index
    %c0_84 = arith.constant 0 : index
    %c0_85 = arith.constant 0 : index
    %169 = vector.load %arg2[%c4_83, %c0_84, %c0_85] : memref<8x64x128xf32, #tpu.memory_space<vmem>>, vector<1x64x128xf32>
    %170 = vector.shape_cast %169 : vector<1x64x128xf32> to vector<64x128xf32>
    %171 = vector.broadcast %168 : vector<64x1xf32> to vector<64x128xf32>
    %172 = arith.mulf %170, %171 : vector<64x128xf32>
    %173 = arith.addf %167, %172 : vector<64x128xf32>
    %174 = vector.extract_strided_slice %6 {offsets = [0, 21], sizes = [64, 1], strides = [1, 1]} : vector<64x32xf32> to vector<64x1xf32>
    %c5_86 = arith.constant 5 : index
    %c0_87 = arith.constant 0 : index
    %c0_88 = arith.constant 0 : index
    %175 = vector.load %arg2[%c5_86, %c0_87, %c0_88] : memref<8x64x128xf32, #tpu.memory_space<vmem>>, vector<1x64x128xf32>
    %176 = vector.shape_cast %175 : vector<1x64x128xf32> to vector<64x128xf32>
    %177 = vector.broadcast %174 : vector<64x1xf32> to vector<64x128xf32>
    %178 = arith.mulf %176, %177 : vector<64x128xf32>
    %179 = arith.addf %173, %178 : vector<64x128xf32>
    %180 = vector.extract_strided_slice %6 {offsets = [0, 22], sizes = [64, 1], strides = [1, 1]} : vector<64x32xf32> to vector<64x1xf32>
    %c6_89 = arith.constant 6 : index
    %c0_90 = arith.constant 0 : index
    %c0_91 = arith.constant 0 : index
    %181 = vector.load %arg2[%c6_89, %c0_90, %c0_91] : memref<8x64x128xf32, #tpu.memory_space<vmem>>, vector<1x64x128xf32>
    %182 = vector.shape_cast %181 : vector<1x64x128xf32> to vector<64x128xf32>
    %183 = vector.broadcast %180 : vector<64x1xf32> to vector<64x128xf32>
    %184 = arith.mulf %182, %183 : vector<64x128xf32>
    %185 = arith.addf %179, %184 : vector<64x128xf32>
    %186 = vector.extract_strided_slice %6 {offsets = [0, 23], sizes = [64, 1], strides = [1, 1]} : vector<64x32xf32> to vector<64x1xf32>
    %c7_92 = arith.constant 7 : index
    %c0_93 = arith.constant 0 : index
    %c0_94 = arith.constant 0 : index
    %187 = vector.load %arg2[%c7_92, %c0_93, %c0_94] : memref<8x64x128xf32, #tpu.memory_space<vmem>>, vector<1x64x128xf32>
    %188 = vector.shape_cast %187 : vector<1x64x128xf32> to vector<64x128xf32>
    %189 = vector.broadcast %186 : vector<64x1xf32> to vector<64x128xf32>
    %190 = arith.mulf %188, %189 : vector<64x128xf32>
    %191 = arith.addf %185, %190 : vector<64x128xf32>
    %192 = arith.mulf %191, %142 : vector<64x128xf32>
    %193 = arith.addf %140, %192 : vector<64x128xf32>
    %194 = vector.extract_strided_slice %32 {offsets = [0, 24], sizes = [64, 8], strides = [1, 1]} : vector<64x32xf32> to vector<64x8xf32>
    %cst_95 = arith.constant dense<0.000000e+00> : vector<64x128xf32>
    %195 = tpu.matmul %194, %33, %cst_95 {dimension_numbers = #tpu.dot_dimension_numbers<[1], [0], [0], [1], [0, 0, 1, 1], [], []>, precision = #tpu.contract_precision<fp32>} : vector<64x8xf32>, vector<8x128xf32>, vector<64x128xf32> -> vector<64x128xf32>
    %cst_96 = arith.constant 0.000000e+00 : f32
    %196 = vector.broadcast %cst_96 : f32 to vector<64x128xf32>
    %197 = vector.extract_strided_slice %6 {offsets = [0, 24], sizes = [64, 1], strides = [1, 1]} : vector<64x32xf32> to vector<64x1xf32>
    %c0_97 = arith.constant 0 : index
    %c0_98 = arith.constant 0 : index
    %c0_99 = arith.constant 0 : index
    %198 = vector.load %arg2[%c0_97, %c0_98, %c0_99] : memref<8x64x128xf32, #tpu.memory_space<vmem>>, vector<1x64x128xf32>
    %199 = vector.shape_cast %198 : vector<1x64x128xf32> to vector<64x128xf32>
    %200 = vector.broadcast %197 : vector<64x1xf32> to vector<64x128xf32>
    %201 = arith.mulf %199, %200 : vector<64x128xf32>
    %202 = arith.addf %196, %201 : vector<64x128xf32>
    %203 = vector.extract_strided_slice %6 {offsets = [0, 25], sizes = [64, 1], strides = [1, 1]} : vector<64x32xf32> to vector<64x1xf32>
    %c1_100 = arith.constant 1 : index
    %c0_101 = arith.constant 0 : index
    %c0_102 = arith.constant 0 : index
    %204 = vector.load %arg2[%c1_100, %c0_101, %c0_102] : memref<8x64x128xf32, #tpu.memory_space<vmem>>, vector<1x64x128xf32>
    %205 = vector.shape_cast %204 : vector<1x64x128xf32> to vector<64x128xf32>
    %206 = vector.broadcast %203 : vector<64x1xf32> to vector<64x128xf32>
    %207 = arith.mulf %205, %206 : vector<64x128xf32>
    %208 = arith.addf %202, %207 : vector<64x128xf32>
    %209 = vector.extract_strided_slice %6 {offsets = [0, 26], sizes = [64, 1], strides = [1, 1]} : vector<64x32xf32> to vector<64x1xf32>
    %c2_103 = arith.constant 2 : index
    %c0_104 = arith.constant 0 : index
    %c0_105 = arith.constant 0 : index
    %210 = vector.load %arg2[%c2_103, %c0_104, %c0_105] : memref<8x64x128xf32, #tpu.memory_space<vmem>>, vector<1x64x128xf32>
    %211 = vector.shape_cast %210 : vector<1x64x128xf32> to vector<64x128xf32>
    %212 = vector.broadcast %209 : vector<64x1xf32> to vector<64x128xf32>
    %213 = arith.mulf %211, %212 : vector<64x128xf32>
    %214 = arith.addf %208, %213 : vector<64x128xf32>
    %215 = vector.extract_strided_slice %6 {offsets = [0, 27], sizes = [64, 1], strides = [1, 1]} : vector<64x32xf32> to vector<64x1xf32>
    %c3_106 = arith.constant 3 : index
    %c0_107 = arith.constant 0 : index
    %c0_108 = arith.constant 0 : index
    %216 = vector.load %arg2[%c3_106, %c0_107, %c0_108] : memref<8x64x128xf32, #tpu.memory_space<vmem>>, vector<1x64x128xf32>
    %217 = vector.shape_cast %216 : vector<1x64x128xf32> to vector<64x128xf32>
    %218 = vector.broadcast %215 : vector<64x1xf32> to vector<64x128xf32>
    %219 = arith.mulf %217, %218 : vector<64x128xf32>
    %220 = arith.addf %214, %219 : vector<64x128xf32>
    %221 = vector.extract_strided_slice %6 {offsets = [0, 28], sizes = [64, 1], strides = [1, 1]} : vector<64x32xf32> to vector<64x1xf32>
    %c4_109 = arith.constant 4 : index
    %c0_110 = arith.constant 0 : index
    %c0_111 = arith.constant 0 : index
    %222 = vector.load %arg2[%c4_109, %c0_110, %c0_111] : memref<8x64x128xf32, #tpu.memory_space<vmem>>, vector<1x64x128xf32>
    %223 = vector.shape_cast %222 : vector<1x64x128xf32> to vector<64x128xf32>
    %224 = vector.broadcast %221 : vector<64x1xf32> to vector<64x128xf32>
    %225 = arith.mulf %223, %224 : vector<64x128xf32>
    %226 = arith.addf %220, %225 : vector<64x128xf32>
    %227 = vector.extract_strided_slice %6 {offsets = [0, 29], sizes = [64, 1], strides = [1, 1]} : vector<64x32xf32> to vector<64x1xf32>
    %c5_112 = arith.constant 5 : index
    %c0_113 = arith.constant 0 : index
    %c0_114 = arith.constant 0 : index
    %228 = vector.load %arg2[%c5_112, %c0_113, %c0_114] : memref<8x64x128xf32, #tpu.memory_space<vmem>>, vector<1x64x128xf32>
    %229 = vector.shape_cast %228 : vector<1x64x128xf32> to vector<64x128xf32>
    %230 = vector.broadcast %227 : vector<64x1xf32> to vector<64x128xf32>
    %231 = arith.mulf %229, %230 : vector<64x128xf32>
    %232 = arith.addf %226, %231 : vector<64x128xf32>
    %233 = vector.extract_strided_slice %6 {offsets = [0, 30], sizes = [64, 1], strides = [1, 1]} : vector<64x32xf32> to vector<64x1xf32>
    %c6_115 = arith.constant 6 : index
    %c0_116 = arith.constant 0 : index
    %c0_117 = arith.constant 0 : index
    %234 = vector.load %arg2[%c6_115, %c0_116, %c0_117] : memref<8x64x128xf32, #tpu.memory_space<vmem>>, vector<1x64x128xf32>
    %235 = vector.shape_cast %234 : vector<1x64x128xf32> to vector<64x128xf32>
    %236 = vector.broadcast %233 : vector<64x1xf32> to vector<64x128xf32>
    %237 = arith.mulf %235, %236 : vector<64x128xf32>
    %238 = arith.addf %232, %237 : vector<64x128xf32>
    %239 = vector.extract_strided_slice %6 {offsets = [0, 31], sizes = [64, 1], strides = [1, 1]} : vector<64x32xf32> to vector<64x1xf32>
    %c7_118 = arith.constant 7 : index
    %c0_119 = arith.constant 0 : index
    %c0_120 = arith.constant 0 : index
    %240 = vector.load %arg2[%c7_118, %c0_119, %c0_120] : memref<8x64x128xf32, #tpu.memory_space<vmem>>, vector<1x64x128xf32>
    %241 = vector.shape_cast %240 : vector<1x64x128xf32> to vector<64x128xf32>
    %242 = vector.broadcast %239 : vector<64x1xf32> to vector<64x128xf32>
    %243 = arith.mulf %241, %242 : vector<64x128xf32>
    %244 = arith.addf %238, %243 : vector<64x128xf32>
    %245 = arith.mulf %244, %195 : vector<64x128xf32>
    %246 = arith.addf %193, %245 : vector<64x128xf32>
    %c64_i32 = arith.constant 64 : i32
    %247 = tpu.dynamic_rotate %246 by %c64_i32 dim 1 : vector<64x128xf32>, i32 -> vector<64x128xf32>
    %248 = arith.maximumf %246, %247 : vector<64x128xf32>
    %c32_i32 = arith.constant 32 : i32
    %249 = tpu.dynamic_rotate %248 by %c32_i32 dim 1 : vector<64x128xf32>, i32 -> vector<64x128xf32>
    %250 = arith.maximumf %248, %249 : vector<64x128xf32>
    %c16_i32 = arith.constant 16 : i32
    %251 = tpu.dynamic_rotate %250 by %c16_i32 dim 1 : vector<64x128xf32>, i32 -> vector<64x128xf32>
    %252 = arith.maximumf %250, %251 : vector<64x128xf32>
    %c8_i32 = arith.constant 8 : i32
    %253 = tpu.dynamic_rotate %252 by %c8_i32 dim 1 : vector<64x128xf32>, i32 -> vector<64x128xf32>
    %254 = arith.maximumf %252, %253 : vector<64x128xf32>
    %255 = vector.shape_cast %254 : vector<64x128xf32> to vector<8x8x128xf32>
    %256 = tpu.transpose %255, [0, 2, 1] : vector<8x8x128xf32> -> vector<8x128x8xf32>
    %257 = vector.extract_strided_slice %256 {offsets = [0, 0, 0], sizes = [8, 8, 8], strides = [1, 1, 1]} : vector<8x128x8xf32> to vector<8x8x8xf32>
    %258 = math.tanh %257 : vector<8x8x8xf32>
    %cst_121 = arith.constant 0.000000e+00 : f32
    %259 = vector.broadcast %cst_121 : f32 to vector<8x8x8xf32>
    %260 = arith.maximumf %258, %259 : vector<8x8x8xf32>
    %261 = vector.shape_cast %260 : vector<8x8x8xf32> to vector<64x8xf32>
    %cst_122 = arith.constant dense<0.000000e+00> : vector<64x128xf32>
    %262 = tpu.matmul %261, %33, %cst_122 {dimension_numbers = #tpu.dot_dimension_numbers<[1], [0], [0], [1], [0, 0, 1, 1], [], []>, precision = #tpu.contract_precision<fp32>} : vector<64x8xf32>, vector<8x128xf32>, vector<64x128xf32> -> vector<64x128xf32>
    %263 = arith.mulf %246, %262 : vector<64x128xf32>
    %264 = vector.shape_cast %263 : vector<64x128xf32> to vector<8x8x128xf32>
    %cst_123 = arith.constant dense<0.000000e+00> : vector<8x128xf32>
    %265 = vector.multi_reduction <add>, %264, %cst_123 [1] : vector<8x8x128xf32> to vector<8x128xf32>
    %c0_124 = arith.constant 0 : index
    %c0_125 = arith.constant 0 : index
    %266 = vector.load %arg11[%c0_124, %c0_125] : memref<128x128xf32, #tpu.memory_space<vmem>>, vector<128x128xf32>
    %cst_126 = arith.constant dense<0.000000e+00> : vector<8x128xf32>
    %267 = tpu.matmul %265, %266, %cst_126 {dimension_numbers = #tpu.dot_dimension_numbers<[1], [0], [0], [1], [0, 0, 1, 1], [], []>, precision = #tpu.contract_precision<fp32>} : vector<8x128xf32>, vector<128x128xf32>, vector<8x128xf32> -> vector<8x128xf32>
    %c0_127 = arith.constant 0 : index
    %c0_128 = arith.constant 0 : index
    %268 = vector.load %arg12[%c0_127, %c0_128] : memref<1x128xf32, #tpu.memory_space<vmem>>, vector<1x128xf32>
    %269 = vector.broadcast %268 : vector<1x128xf32> to vector<8x128xf32>
    %270 = arith.addf %267, %269 : vector<8x128xf32>
    %c0_129 = arith.constant 0 : index
    %c0_130 = arith.constant 0 : index
    %271 = vector.load %arg13[%c0_129, %c0_130] : memref<8x128xf32, #tpu.memory_space<vmem>>, vector<8x128xf32>
    tpu.vector_store %arg13[%c0_129, %c0_130], %270 {strides = array<i32>} : memref<8x128xf32, #tpu.memory_space<vmem>>, vector<8x128xf32>,
    return
  }
  func.func @transform_0(%arg0: i32) -> (i32, i32) {
    %c0_i32 = arith.constant 0 : i32
    %c0_i32_0 = arith.constant 0 : i32
    return %arg0, %c0_i32 : i32, i32
  }
  func.func @transform_1(%arg0: i32) -> (i32, i32, i32) {
    %c0_i32 = arith.constant 0 : i32
    %c0_i32_0 = arith.constant 0 : i32
    %c0_i32_1 = arith.constant 0 : i32
    return %c0_i32, %arg0, %c0_i32_0 : i32, i32, i32
  }
  func.func @transform_2(%arg0: i32) -> (i32, i32) {
    %c0_i32 = arith.constant 0 : i32
    %c0_i32_0 = arith.constant 0 : i32
    return %arg0, %c0_i32 : i32, i32
  }
  func.func @transform_3(%arg0: i32) -> (i32, i32) {
    %c0_i32 = arith.constant 0 : i32
    %c0_i32_0 = arith.constant 0 : i32
    %c0_i32_1 = arith.constant 0 : i32
    return %c0_i32, %c0_i32_0 : i32, i32
  }
  func.func @transform_4(%arg0: i32) -> (i32, i32) {
    %c0_i32 = arith.constant 0 : i32
    %c0_i32_0 = arith.constant 0 : i32
    %c0_i32_1 = arith.constant 0 : i32
    return %c0_i32, %c0_i32_0 : i32, i32
  }
  func.func @transform_5(%arg0: i32) -> (i32, i32) {
    %c0_i32 = arith.constant 0 : i32
    %c0_i32_0 = arith.constant 0 : i32
    %c0_i32_1 = arith.constant 0 : i32
    return %c0_i32, %c0_i32_0 : i32, i32
  }
  func.func @transform_6(%arg0: i32) -> (i32, i32) {
    %c0_i32 = arith.constant 0 : i32
    %c0_i32_0 = arith.constant 0 : i32
    %c0_i32_1 = arith.constant 0 : i32
    return %c0_i32, %c0_i32_0 : i32, i32
  }
  func.func @transform_7(%arg0: i32) -> (i32, i32) {
    %c0_i32 = arith.constant 0 : i32
    %c0_i32_0 = arith.constant 0 : i32
    %c0_i32_1 = arith.constant 0 : i32
    return %c0_i32, %c0_i32_0 : i32, i32
  }
  func.func @transform_8(%arg0: i32) -> (i32, i32) {
    %c0_i32 = arith.constant 0 : i32
    %c0_i32_0 = arith.constant 0 : i32
    %c0_i32_1 = arith.constant 0 : i32
    return %c0_i32, %c0_i32_0 : i32, i32
  }
  func.func @transform_9(%arg0: i32) -> (i32, i32) {
    %c0_i32 = arith.constant 0 : i32
    %c0_i32_0 = arith.constant 0 : i32
    %c0_i32_1 = arith.constant 0 : i32
    return %c0_i32, %c0_i32_0 : i32, i32
  }
  func.func @transform_10(%arg0: i32) -> (i32, i32) {
    %c0_i32 = arith.constant 0 : i32
    %c0_i32_0 = arith.constant 0 : i32
    %c0_i32_1 = arith.constant 0 : i32
    return %c0_i32, %c0_i32_0 : i32, i32
  }
  func.func @transform_11(%arg0: i32) -> (i32, i32) {
    %c0_i32 = arith.constant 0 : i32
    %c0_i32_0 = arith.constant 0 : i32
    %c0_i32_1 = arith.constant 0 : i32
    return %c0_i32, %c0_i32_0 : i32, i32
  }
  func.func @transform_12(%arg0: i32) -> (i32, i32) {
    %c0_i32 = arith.constant 0 : i32
    %c0_i32_0 = arith.constant 0 : i32
    return %arg0, %c0_i32 : i32, i32
  }
}

</mosaic_0001>

<llo_original>
// kernel: es_module_forward.1
$region0: #{es_module_forward.1}
  #allocation0 [shape = 'u32[]', space=smem, size = 0x4, offset = 0x4, fixed_abs, tag = 'smem constant byte address 0x4 - core index']
  #allocation1 [shape = 'u32[72,128]{1,0:T(1,128)}', space=vmem, size = 0x9000, scoped, tag = 'internal scratch']
  %s0 = inlined_call_operand.vmem [shape: f32[128,128], index: 0, kind: input, shape index: {}]
  %s1 = inlined_call_operand.vmem [shape: f32[8,128,128], index: 1, kind: input, shape index: {}]
  %s2 = inlined_call_operand.vmem [shape: f32[128,128], index: 2, kind: input, shape index: {}]
  %s3 = inlined_call_operand.vmem [shape: f32[128,32], index: 3, kind: input, shape index: {}]
  %s4 = inlined_call_operand.vmem [shape: f32[1,32], index: 4, kind: input, shape index: {}]
  %s5 = inlined_call_operand.vmem [shape: f32[128,32], index: 5, kind: input, shape index: {}]
  %s6 = inlined_call_operand.vmem [shape: f32[1,32], index: 6, kind: input, shape index: {}]
  %s7 = inlined_call_operand.vmem [shape: f32[32,4], index: 7, kind: input, shape index: {}]
  %s8 = inlined_call_operand.vmem [shape: f32[32,4], index: 8, kind: input, shape index: {}]
  %s9 = inlined_call_operand.vmem [shape: f32[8,128], index: 9, kind: input, shape index: {}]
  %s10 = inlined_call_operand.vmem [shape: f32[128,128], index: 10, kind: input, shape index: {}]
  %s11 = inlined_call_operand.vmem [shape: f32[1,128], index: 11, kind: input, shape index: {}]
  %s12 = inlined_call_operand.vmem [shape: f32[16,128], index: 12, kind: output, shape index: {}]
  %s13 = sld [smem:[#allocation0]]
  $region119: #{es_module_forward.1} parent=0
    _
  %s15 = ssub.s32 1, %s13
  %s16 = scalar_select 0, %s15, %s13
  $region1: #{es_module_forward.1} parent=0
    #allocation2 [shape = 'u8[524288]{0}', space=vmem, size = 0x80000, scoped, tag = 'input window, operand 1']
    loop: start=0, step=1, limit=4
    $region2: #{es_module_forward.1} parent=1 // loop_pre_header
      _
    $region3: #{es_module_forward.1} parent=1 // loop_header
      %s18 = sphi 0, %s22
      %p19 = scmp.ge.s32.totalorder %s18, 4
      %s28 = sphi 0, %s30
      %s31 = sphi 0, %s28
      %s32 = sphi 0, %s31
      %s48 = sphi 0, %s32
      %s54 = sphi 0, %s56
      %s57 = sphi 0, %s54
      %s58 = sphi 0, %s57
      %s74 = sphi 0, %s58
      %s80 = sphi 0, %s82
      %s83 = sphi 0, %s80
      %s84 = sphi 0, %s83
      %s100 = sphi 0, %s84
      %s104 = sphi 0, %s104
      %s106 = sphi 0, %s104
      %s107 = sphi 0, %s106
      %s121 = sphi 0, %s107
      %s125 = sphi 0, %s125
      %s127 = sphi 0, %s125
      %s128 = sphi 0, %s127
      %s142 = sphi 0, %s128
      %s146 = sphi 0, %s146
      %s148 = sphi 0, %s146
      %s149 = sphi 0, %s148
      %s163 = sphi 0, %s149
      %s167 = sphi 0, %s167
      %s169 = sphi 0, %s167
      %s170 = sphi 0, %s169
      %s184 = sphi 0, %s170
      %s188 = sphi 0, %s188
      %s190 = sphi 0, %s188
      %s191 = sphi 0, %s190
      %s205 = sphi 0, %s191
      %s209 = sphi 0, %s209
      %s211 = sphi 0, %s209
      %s212 = sphi 0, %s211
      %s226 = sphi 0, %s212
      %s230 = sphi 0, %s230
      %s232 = sphi 0, %s230
      %s233 = sphi 0, %s232
      %s247 = sphi 0, %s233
      %s251 = sphi 0, %s251
      %s253 = sphi 0, %s251
      %s254 = sphi 0, %s253
      %s268 = sphi 0, %s254
      %s272 = sphi 0, %s272
      %s274 = sphi 0, %s272
      %s275 = sphi 0, %s274
      %s289 = sphi 0, %s275
      %s295 = sphi 0, %s297
      %s298 = sphi 0, %s295
      %s299 = sphi 0, %s298
      %s315 = sphi 0, %s299
    $region4: #{es_module_forward.1} parent=1 // loop_header_branch
      %21 = sbr.rel (%p19) target = $region8
    $region5: #{es_module_forward.1} parent=1 // loop_body
      %s23 = ssub.s32 %s18, 1
      %s24 = ssub.s32 %s18, 2
      %s25 = sadd.s32 %s18, 1
      %s26 = ssub.s32 %s18, %s25
      %p27 = scmp.eq.s32.totalorder %s26, 0
      %s29 = sadd.s32 %s28, 1
      %s30 = scalar_select %p27, %s28, %s29
      %p33 = pneg %p27
      %p34 = scmp.eq.s32.totalorder %s18, 1
      %p35 = por %p33, %p34
      %p36 = scmp.ne.s32.totalorder %s28, %s31
      %p37 = scmp.eq.s32.totalorder %s18, 0
      %p38 = por %p36, %p37
      %p39 = scmp.ne.s32.totalorder %s28, %s31
      %p40 = scmp.eq.s32.totalorder %s23, 1
      %p41 = por %p39, %p40
      %p42 = scmp.ne.s32.totalorder %s31, %s32
      %p43 = scmp.eq.s32.totalorder %s23, 0
      %p44 = por %p42, %p43
      %p45 = scmp.ne.s32.totalorder %s31, %s32
      %p46 = scmp.eq.s32.totalorder %s24, 1
      %p47 = por %p45, %p46
      %p49 = scmp.ne.s32.totalorder %s32, %s48
      %p50 = scmp.eq.s32.totalorder %s24, 0
      %p51 = por %p49, %p50
      %s52 = ssub.s32 %s18, %s25
      %p53 = scmp.eq.s32.totalorder %s52, 0
      %s55 = sadd.s32 %s54, 1
      %s56 = scalar_select %p53, %s54, %s55
      %p59 = pneg %p53
      %p60 = scmp.eq.s32.totalorder %s18, 1
      %p61 = por %p59, %p60
      %p62 = scmp.ne.s32.totalorder %s54, %s57
      %p63 = scmp.eq.s32.totalorder %s18, 0
      %p64 = por %p62, %p63
      %p65 = scmp.ne.s32.totalorder %s54, %s57
      %p66 = scmp.eq.s32.totalorder %s23, 1
      %p67 = por %p65, %p66
      %p68 = scmp.ne.s32.totalorder %s57, %s58
      %p69 = scmp.eq.s32.totalorder %s23, 0
      %p70 = por %p68, %p69
      %p71 = scmp.ne.s32.totalorder %s57, %s58
      %p72 = scmp.eq.s32.totalorder %s24, 1
      %p73 = por %p71, %p72
      %p75 = scmp.ne.s32.totalorder %s58, %s74
      %p76 = scmp.eq.s32.totalorder %s24, 0
      %p77 = por %p75, %p76
      %s78 = ssub.s32 %s18, %s25
      %p79 = scmp.eq.s32.totalorder %s78, 0
      %s81 = sadd.s32 %s80, 1
      %s82 = scalar_select %p79, %s80, %s81
      %p85 = pneg %p79
      %p86 = scmp.eq.s32.totalorder %s18, 1
      %p87 = por %p85, %p86
      %p88 = scmp.ne.s32.totalorder %s80, %s83
      %p89 = scmp.eq.s32.totalorder %s18, 0
      %p90 = por %p88, %p89
      %p91 = scmp.ne.s32.totalorder %s80, %s83
      %p92 = scmp.eq.s32.totalorder %s23, 1
      %p93 = por %p91, %p92
      %p94 = scmp.ne.s32.totalorder %s83, %s84
      %p95 = scmp.eq.s32.totalorder %s23, 0
      %p96 = por %p94, %p95
      %p97 = scmp.ne.s32.totalorder %s83, %s84
      %p98 = scmp.eq.s32.totalorder %s24, 1
      %p99 = por %p97, %p98
      %p101 = scmp.ne.s32.totalorder %s84, %s100
      %p102 = scmp.eq.s32.totalorder %s24, 0
      %p103 = por %p101, %p102
      %s105 = sadd.s32 %s104, 1
      %p108 = scmp.eq.s32.totalorder %s18, 1
      %p109 = scmp.ne.s32.totalorder %s104, %s106
      %p110 = scmp.eq.s32.totalorder %s18, 0
      %p111 = por %p109, %p110
      %p112 = scmp.ne.s32.totalorder %s104, %s106
      %p113 = scmp.eq.s32.totalorder %s23, 1
      %p114 = por %p112, %p113
      %p115 = scmp.ne.s32.totalorder %s106, %s107
      %p116 = scmp.eq.s32.totalorder %s23, 0
      %p117 = por %p115, %p116
      %p118 = scmp.ne.s32.totalorder %s106, %s107
      %p119 = scmp.eq.s32.totalorder %s24, 1
      %p120 = por %p118, %p119
      %p122 = scmp.ne.s32.totalorder %s107, %s121
      %p123 = scmp.eq.s32.totalorder %s24, 0
      %p124 = por %p122, %p123
      %s126 = sadd.s32 %s125, 1
      %p129 = scmp.eq.s32.totalorder %s18, 1
      %p130 = scmp.ne.s32.totalorder %s125, %s127
      %p131 = scmp.eq.s32.totalorder %s18, 0
      %p132 = por %p130, %p131
      %p133 = scmp.ne.s32.totalorder %s125, %s127
      %p134 = scmp.eq.s32.totalorder %s23, 1
      %p135 = por %p133, %p134
      %p136 = scmp.ne.s32.totalorder %s127, %s128
      %p137 = scmp.eq.s32.totalorder %s23, 0
      %p138 = por %p136, %p137
      %p139 = scmp.ne.s32.totalorder %s127, %s128
      %p140 = scmp.eq.s32.totalorder %s24, 1
      %p141 = por %p139, %p140
      %p143 = scmp.ne.s32.totalorder %s128, %s142
      %p144 = scmp.eq.s32.totalorder %s24, 0
      %p145 = por %p143, %p144
      %s147 = sadd.s32 %s146, 1
      %p150 = scmp.eq.s32.totalorder %s18, 1
      %p151 = scmp.ne.s32.totalorder %s146, %s148
      %p152 = scmp.eq.s32.totalorder %s18, 0
      %p153 = por %p151, %p152
      %p154 = scmp.ne.s32.totalorder %s146, %s148
      %p155 = scmp.eq.s32.totalorder %s23, 1
      %p156 = por %p154, %p155
      %p157 = scmp.ne.s32.totalorder %s148, %s149
      %p158 = scmp.eq.s32.totalorder %s23, 0
      %p159 = por %p157, %p158
      %p160 = scmp.ne.s32.totalorder %s148, %s149
      %p161 = scmp.eq.s32.totalorder %s24, 1
      %p162 = por %p160, %p161
      %p164 = scmp.ne.s32.totalorder %s149, %s163
      %p165 = scmp.eq.s32.totalorder %s24, 0
      %p166 = por %p164, %p165
      %s168 = sadd.s32 %s167, 1
      %p171 = scmp.eq.s32.totalorder %s18, 1
      %p172 = scmp.ne.s32.totalorder %s167, %s169
      %p173 = scmp.eq.s32.totalorder %s18, 0
      %p174 = por %p172, %p173
      %p175 = scmp.ne.s32.totalorder %s167, %s169
      %p176 = scmp.eq.s32.totalorder %s23, 1
      %p177 = por %p175, %p176
      %p178 = scmp.ne.s32.totalorder %s169, %s170
      %p179 = scmp.eq.s32.totalorder %s23, 0
      %p180 = por %p178, %p179
      %p181 = scmp.ne.s32.totalorder %s169, %s170
      %p182 = scmp.eq.s32.totalorder %s24, 1
      %p183 = por %p181, %p182
      %p185 = scmp.ne.s32.totalorder %s170, %s184
      %p186 = scmp.eq.s32.totalorder %s24, 0
      %p187 = por %p185, %p186
      %s189 = sadd.s32 %s188, 1
      %p192 = scmp.eq.s32.totalorder %s18, 1
      %p193 = scmp.ne.s32.totalorder %s188, %s190
      %p194 = scmp.eq.s32.totalorder %s18, 0
      %p195 = por %p193, %p194
      %p196 = scmp.ne.s32.totalorder %s188, %s190
      %p197 = scmp.eq.s32.totalorder %s23, 1
      %p198 = por %p196, %p197
      %p199 = scmp.ne.s32.totalorder %s190, %s191
      %p200 = scmp.eq.s32.totalorder %s23, 0
      %p201 = por %p199, %p200
      %p202 = scmp.ne.s32.totalorder %s190, %s191
      %p203 = scmp.eq.s32.totalorder %s24, 1
      %p204 = por %p202, %p203
      %p206 = scmp.ne.s32.totalorder %s191, %s205
      %p207 = scmp.eq.s32.totalorder %s24, 0
      %p208 = por %p206, %p207
      %s210 = sadd.s32 %s209, 1
      %p213 = scmp.eq.s32.totalorder %s18, 1
      %p214 = scmp.ne.s32.totalorder %s209, %s211
      %p215 = scmp.eq.s32.totalorder %s18, 0
      %p216 = por %p214, %p215
      %p217 = scmp.ne.s32.totalorder %s209, %s211
      %p218 = scmp.eq.s32.totalorder %s23, 1
      %p219 = por %p217, %p218
      %p220 = scmp.ne.s32.totalorder %s211, %s212
      %p221 = scmp.eq.s32.totalorder %s23, 0
      %p222 = por %p220, %p221
      %p223 = scmp.ne.s32.totalorder %s211, %s212
      %p224 = scmp.eq.s32.totalorder %s24, 1
      %p225 = por %p223, %p224
      %p227 = scmp.ne.s32.totalorder %s212, %s226
      %p228 = scmp.eq.s32.totalorder %s24, 0
      %p229 = por %p227, %p228
      %s231 = sadd.s32 %s230, 1
      %p234 = scmp.eq.s32.totalorder %s18, 1
      %p235 = scmp.ne.s32.totalorder %s230, %s232
      %p236 = scmp.eq.s32.totalorder %s18, 0
      %p237 = por %p235, %p236
      %p238 = scmp.ne.s32.totalorder %s230, %s232
      %p239 = scmp.eq.s32.totalorder %s23, 1
      %p240 = por %p238, %p239
      %p241 = scmp.ne.s32.totalorder %s232, %s233
      %p242 = scmp.eq.s32.totalorder %s23, 0
      %p243 = por %p241, %p242
      %p244 = scmp.ne.s32.totalorder %s232, %s233
      %p245 = scmp.eq.s32.totalorder %s24, 1
      %p246 = por %p244, %p245
      %p248 = scmp.ne.s32.totalorder %s233, %s247
      %p249 = scmp.eq.s32.totalorder %s24, 0
      %p250 = por %p248, %p249
      %s252 = sadd.s32 %s251, 1
      %p255 = scmp.eq.s32.totalorder %s18, 1
      %p256 = scmp.ne.s32.totalorder %s251, %s253
      %p257 = scmp.eq.s32.totalorder %s18, 0
      %p258 = por %p256, %p257
      %p259 = scmp.ne.s32.totalorder %s251, %s253
      %p260 = scmp.eq.s32.totalorder %s23, 1
      %p261 = por %p259, %p260
      %p262 = scmp.ne.s32.totalorder %s253, %s254
      %p263 = scmp.eq.s32.totalorder %s23, 0
      %p264 = por %p262, %p263
      %p265 = scmp.ne.s32.totalorder %s253, %s254
      %p266 = scmp.eq.s32.totalorder %s24, 1
      %p267 = por %p265, %p266
      %p269 = scmp.ne.s32.totalorder %s254, %s268
      %p270 = scmp.eq.s32.totalorder %s24, 0
      %p271 = por %p269, %p270
      %s273 = sadd.s32 %s272, 1
      %p276 = scmp.eq.s32.totalorder %s18, 1
      %p277 = scmp.ne.s32.totalorder %s272, %s274
      %p278 = scmp.eq.s32.totalorder %s18, 0
      %p279 = por %p277, %p278
      %p280 = scmp.ne.s32.totalorder %s272, %s274
      %p281 = scmp.eq.s32.totalorder %s23, 1
      %p282 = por %p280, %p281
      %p283 = scmp.ne.s32.totalorder %s274, %s275
      %p284 = scmp.eq.s32.totalorder %s23, 0
      %p285 = por %p283, %p284
      %p286 = scmp.ne.s32.totalorder %s274, %s275
      %p287 = scmp.eq.s32.totalorder %s24, 1
      %p288 = por %p286, %p287
      %p290 = scmp.ne.s32.totalorder %s275, %s289
      %p291 = scmp.eq.s32.totalorder %s24, 0
      %p292 = por %p290, %p291
      %s293 = ssub.s32 %s18, %s25
      %p294 = scmp.eq.s32.totalorder %s293, 0
      %s296 = sadd.s32 %s295, 1
      %s297 = scalar_select %p294, %s295, %s296
      %p300 = pneg %p294
      %p301 = scmp.eq.s32.totalorder %s18, 1
      %p302 = por %p300, %p301
      %p303 = scmp.ne.s32.totalorder %s295, %s298
      %p304 = scmp.eq.s32.totalorder %s18, 0
      %p305 = por %p303, %p304
      %p306 = scmp.ne.s32.totalorder %s295, %s298
      %p307 = scmp.eq.s32.totalorder %s23, 1
      %p308 = por %p306, %p307
      %p309 = scmp.ne.s32.totalorder %s298, %s299
      %p310 = scmp.eq.s32.totalorder %s23, 0
      %p311 = por %p309, %p310
      %p312 = scmp.ne.s32.totalorder %s298, %s299
      %p313 = scmp.eq.s32.totalorder %s24, 1
      %p314 = por %p312, %p313
      %p316 = scmp.ne.s32.totalorder %s299, %s315
      %p317 = scmp.eq.s32.totalorder %s24, 0
      %p318 = por %p316, %p317
      %p319 = scmp.le.s32.totalorder 1, %s18
      %p320 = scmp.lt.s32.totalorder %s18, 3
      %p321 = pnand %p319, %p320
      %p322 = pneg %p321
      // Predicated region
      $region9: #{es_module_forward.1} parent=5 // pred_check
        _
      $region10: #{es_module_forward.1} parent=5 // pred_check_branch
        %324 = sbr.rel (%p321) target = $region12
      $region11: #{es_module_forward.1} parent=5 // pred_region
        %s325 = ssub.s32 %s18, 1
        // Predicated region
        $region13: #{es_module_forward.1} parent=11 // pred_check
          %p326 = pneg %p117
        $region14: #{es_module_forward.1} parent=11 // pred_check_branch
          %328 = sbr.rel (%p326) target = $region16
        $region15: #{es_module_forward.1} parent=11 // pred_region
          _
        $region16: #{es_module_forward.1} parent=11 // pred_fallthru
          _
        // Predicated region
        $region17: #{es_module_forward.1} parent=11 // pred_check
          %p329 = pneg %p138
        $region18: #{es_module_forward.1} parent=11 // pred_check_branch
          %331 = sbr.rel (%p329) target = $region20
        $region19: #{es_module_forward.1} parent=11 // pred_region
          _
        $region20: #{es_module_forward.1} parent=11 // pred_fallthru
          _
        // Predicated region
        $region21: #{es_module_forward.1} parent=11 // pred_check
          %p332 = pneg %p159
        $region22: #{es_module_forward.1} parent=11 // pred_check_branch
          %334 = sbr.rel (%p332) target = $region24
        $region23: #{es_module_forward.1} parent=11 // pred_region
          _
        $region24: #{es_module_forward.1} parent=11 // pred_fallthru
          _
        // Predicated region
        $region25: #{es_module_forward.1} parent=11 // pred_check
          %p335 = pneg %p180
        $region26: #{es_module_forward.1} parent=11 // pred_check_branch
          %337 = sbr.rel (%p335) target = $region28
        $region27: #{es_module_forward.1} parent=11 // pred_region
          _
        $region28: #{es_module_forward.1} parent=11 // pred_fallthru
          _
        // Predicated region
        $region29: #{es_module_forward.1} parent=11 // pred_check
          %p338 = pneg %p201
        $region30: #{es_module_forward.1} parent=11 // pred_check_branch
          %340 = sbr.rel (%p338) target = $region32
        $region31: #{es_module_forward.1} parent=11 // pred_region
          _
        $region32: #{es_module_forward.1} parent=11 // pred_fallthru
          _
        // Predicated region
        $region33: #{es_module_forward.1} parent=11 // pred_check
          %p341 = pneg %p222
        $region34: #{es_module_forward.1} parent=11 // pred_check_branch
          %343 = sbr.rel (%p341) target = $region36
        $region35: #{es_module_forward.1} parent=11 // pred_region
          _
        $region36: #{es_module_forward.1} parent=11 // pred_fallthru
          _
        // Predicated region
        $region37: #{es_module_forward.1} parent=11 // pred_check
          %p344 = pneg %p243
        $region38: #{es_module_forward.1} parent=11 // pred_check_branch
          %346 = sbr.rel (%p344) target = $region40
        $region39: #{es_module_forward.1} parent=11 // pred_region
          _
        $region40: #{es_module_forward.1} parent=11 // pred_fallthru
          _
        // Predicated region
        $region41: #{es_module_forward.1} parent=11 // pred_check
          %p347 = pneg %p264
        $region42: #{es_module_forward.1} parent=11 // pred_check_branch
          %349 = sbr.rel (%p347) target = $region44
        $region43: #{es_module_forward.1} parent=11 // pred_region
          _
        $region44: #{es_module_forward.1} parent=11 // pred_fallthru
          _
        // Predicated region
        $region45: #{es_module_forward.1} parent=11 // pred_check
          %p350 = pneg %p285
        $region46: #{es_module_forward.1} parent=11 // pred_check_branch
          %352 = sbr.rel (%p350) target = $region48
        $region47: #{es_module_forward.1} parent=11 // pred_region
          _
        $region48: #{es_module_forward.1} parent=11 // pred_fallthru
          _
      $region12: #{es_module_forward.1} parent=5 // pred_fallthru
        _
      %p353 = scmp.lt.s32.totalorder %s18, 2
      // Predicated region
      $region49: #{es_module_forward.1} parent=5 // pred_check
        %p354 = pneg %p353
      $region50: #{es_module_forward.1} parent=5 // pred_check_branch
        %356 = sbr.rel (%p354) target = $region52
      $region51: #{es_module_forward.1} parent=5 // pred_region
        // Predicated region
        $region53: #{es_module_forward.1} parent=51 // pred_check
          %p357 = pneg %p38
        $region54: #{es_module_forward.1} parent=51 // pred_check_branch
          %359 = sbr.rel (%p357) target = $region56
        $region55: #{es_module_forward.1} parent=51 // pred_region
          %s360 = smul.u32 8, %s18
          %p361 = scmp.lt.s32.totalorder %s360, 15
          %s362 = scalar_select %p361, %s360, 15
          %s363 = smul.addr %s362, 8
          %s364 = scalar_lea.vmem %s0, %s363
          %s365 = smul.u32 8, %s18
        $region56: #{es_module_forward.1} parent=51 // pred_fallthru
          _
        // Predicated region
        $region57: #{es_module_forward.1} parent=51 // pred_check
          %p366 = pneg %p64
        $region58: #{es_module_forward.1} parent=51 // pred_check_branch
          %368 = sbr.rel (%p366) target = $region60
        $region59: #{es_module_forward.1} parent=51 // pred_region
          %s369 = sand.u32 %s54, 1
          %s370 = sand.u32 %s54, 1
          %s371 = smul.addr %s370, 512
          %s372 = scalar_lea.vmem [#allocation2], %s371
          %s373 = smul.u32 8, %s18
          %s374 = smul.addr %s373, 8
          %s375 = scalar_lea.vmem %s1, %s374
          // Predicated region
          $region61: #{es_module_forward.1} parent=59 // pred_check
            _
          $region62: #{es_module_forward.1} parent=59 // pred_check_branch
            %377 = sbr.rel (0) target = $region64
          $region63: #{es_module_forward.1} parent=59 // pred_region
            // Predicated region
            $region65: #{es_module_forward.1} parent=63 // pred_check
              _
            $region66: #{es_module_forward.1} parent=63 // pred_check_branch
              %379 = sbr.rel (0) target = $region68
            $region67: #{es_module_forward.1} parent=63 // pred_region
              // Predicated region
              $region80: #{es_module_forward.1} parent=67 // pred_check
                _
              $region81: #{es_module_forward.1} parent=67 // pred_check_branch
                %521 = sbr.rel (0) target = $region83
              $region82: #{es_module_forward.1} parent=67 // pred_region
                loop: start=0, step=1, limit=1
                $region84: #{es_module_forward.1} parent=82 // loop_pre_header
                  _
                $region85: #{es_module_forward.1} parent=82 // loop_header
                  %s523 = sphi 0, %s527
                  %p524 = scmp.ge.s32.totalorder %s523, 1
                  %s528 = sphi %s375, %s375
                  %s529 = sphi %s372, %s372
                $region86: #{es_module_forward.1} parent=82 // loop_header_branch
                  %526 = sbr.rel (%p524) target = $region90
                $region87: #{es_module_forward.1} parent=82 // loop_body
                  %v530 = vld [vmem:[%s528] sm:$0xff]
                  %531 = vst [vmem:[%s529] sm:$0xff] %v530
                  %v532 = vld [vmem:[%s528 + $0x8] sm:$0xff]
                  %533 = vst [vmem:[%s529 + $0x8] sm:$0xff] %v532
                  %v534 = vld [vmem:[%s528 + $0x10] sm:$0xff]
                  %535 = vst [vmem:[%s529 + $0x10] sm:$0xff] %v534
                  %v536 = vld [vmem:[%s528 + $0x18] sm:$0xff]
                  %537 = vst [vmem:[%s529 + $0x18] sm:$0xff] %v536
                  %v538 = vld [vmem:[%s528 + $0x20] sm:$0xff]
                  %539 = vst [vmem:[%s529 + $0x20] sm:$0xff] %v538
                  %v540 = vld [vmem:[%s528 + $0x28] sm:$0xff]
                  %541 = vst [vmem:[%s529 + $0x28] sm:$0xff] %v540
                  %v542 = vld [vmem:[%s528 + $0x30] sm:$0xff]
                  %543 = vst [vmem:[%s529 + $0x30] sm:$0xff] %v542
                  %v544 = vld [vmem:[%s528 + $0x38] sm:$0xff]
                  %545 = vst [vmem:[%s529 + $0x38] sm:$0xff] %v544
                  %v546 = vld [vmem:[%s528 + $0x80] sm:$0xff]
                  %547 = vst [vmem:[%s529 + $0x40] sm:$0xff] %v546
                  %v548 = vld [vmem:[%s528 + $0x88] sm:$0xff]
                  %549 = vst [vmem:[%s529 + $0x48] sm:$0xff] %v548
                  %v550 = vld [vmem:[%s528 + $0x90] sm:$0xff]
                  %551 = vst [vmem:[%s529 + $0x50] sm:$0xff] %v550
                  %v552 = vld [vmem:[%s528 + $0x98] sm:$0xff]
                  %553 = vst [vmem:[%s529 + $0x58] sm:$0xff] %v552
                  %v554 = vld [vmem:[%s528 + $0xa0] sm:$0xff]
                  %555 = vst [vmem:[%s529 + $0x60] sm:$0xff] %v554
                  %v556 = vld [vmem:[%s528 + $0xa8] sm:$0xff]
                  %557 = vst [vmem:[%s529 + $0x68] sm:$0xff] %v556
                  %v558 = vld [vmem:[%s528 + $0xb0] sm:$0xff]
                  %559 = vst [vmem:[%s529 + $0x70] sm:$0xff] %v558
                  %v560 = vld [vmem:[%s528 + $0xb8] sm:$0xff]
                  %561 = vst [vmem:[%s529 + $0x78] sm:$0xff] %v560
                  %v562 = vld [vmem:[%s528 + $0x100] sm:$0xff]
                  %563 = vst [vmem:[%s529 + $0x80] sm:$0xff] %v562
                  %v564 = vld [vmem:[%s528 + $0x108] sm:$0xff]
                  %565 = vst [vmem:[%s529 + $0x88] sm:$0xff] %v564
                  %v566 = vld [vmem:[%s528 + $0x110] sm:$0xff]
                  %567 = vst [vmem:[%s529 + $0x90] sm:$0xff] %v566
                  %v568 = vld [vmem:[%s528 + $0x118] sm:$0xff]
                  %569 = vst [vmem:[%s529 + $0x98] sm:$0xff] %v568
                  %v570 = vld [vmem:[%s528 + $0x120] sm:$0xff]
                  %571 = vst [vmem:[%s529 + $0xa0] sm:$0xff] %v570
                  %v572 = vld [vmem:[%s528 + $0x128] sm:$0xff]
                  %573 = vst [vmem:[%s529 + $0xa8] sm:$0xff] %v572
                  %v574 = vld [vmem:[%s528 + $0x130] sm:$0xff]
                  %575 = vst [vmem:[%s529 + $0xb0] sm:$0xff] %v574
                  %v576 = vld [vmem:[%s528 + $0x138] sm:$0xff]
                  %577 = vst [vmem:[%s529 + $0xb8] sm:$0xff] %v576
                  %v578 = vld [vmem:[%s528 + $0x180] sm:$0xff]
                  %579 = vst [vmem:[%s529 + $0xc0] sm:$0xff] %v578
                  %v580 = vld [vmem:[%s528 + $0x188] sm:$0xff]
                  %581 = vst [vmem:[%s529 + $0xc8] sm:$0xff] %v580
                  %v582 = vld [vmem:[%s528 + $0x190] sm:$0xff]
                  %583 = vst [vmem:[%s529 + $0xd0] sm:$0xff] %v582
                  %v584 = vld [vmem:[%s528 + $0x198] sm:$0xff]
                  %585 = vst [vmem:[%s529 + $0xd8] sm:$0xff] %v584
                  %v586 = vld [vmem:[%s528 + $0x1a0] sm:$0xff]
                  %587 = vst [vmem:[%s529 + $0xe0] sm:$0xff] %v586
                  %v588 = vld [vmem:[%s528 + $0x1a8] sm:$0xff]
                  %589 = vst [vmem:[%s529 + $0xe8] sm:$0xff] %v588
                  %v590 = vld [vmem:[%s528 + $0x1b0] sm:$0xff]
                  %591 = vst [vmem:[%s529 + $0xf0] sm:$0xff] %v590
                  %v592 = vld [vmem:[%s528 + $0x1b8] sm:$0xff]
                  %593 = vst [vmem:[%s529 + $0xf8] sm:$0xff] %v592
                  %v594 = vld [vmem:[%s528 + $0x200] sm:$0xff]
                  %595 = vst [vmem:[%s529 + $0x100] sm:$0xff] %v594
                  %v596 = vld [vmem:[%s528 + $0x208] sm:$0xff]
                  %597 = vst [vmem:[%s529 + $0x108] sm:$0xff] %v596
                  %v598 = vld [vmem:[%s528 + $0x210] sm:$0xff]
                  %599 = vst [vmem:[%s529 + $0x110] sm:$0xff] %v598
                  %v600 = vld [vmem:[%s528 + $0x218] sm:$0xff]
                  %601 = vst [vmem:[%s529 + $0x118] sm:$0xff] %v600
                  %v602 = vld [vmem:[%s528 + $0x220] sm:$0xff]
                  %603 = vst [vmem:[%s529 + $0x120] sm:$0xff] %v602
                  %v604 = vld [vmem:[%s528 + $0x228] sm:$0xff]
                  %605 = vst [vmem:[%s529 + $0x128] sm:$0xff] %v604
                  %v606 = vld [vmem:[%s528 + $0x230] sm:$0xff]
                  %607 = vst [vmem:[%s529 + $0x130] sm:$0xff] %v606
                  %v608 = vld [vmem:[%s528 + $0x238] sm:$0xff]
                  %609 = vst [vmem:[%s529 + $0x138] sm:$0xff] %v608
                  %v610 = vld [vmem:[%s528 + $0x280] sm:$0xff]
                  %611 = vst [vmem:[%s529 + $0x140] sm:$0xff] %v610
                  %v612 = vld [vmem:[%s528 + $0x288] sm:$0xff]
                  %613 = vst [vmem:[%s529 + $0x148] sm:$0xff] %v612
                  %v614 = vld [vmem:[%s528 + $0x290] sm:$0xff]
                  %615 = vst [vmem:[%s529 + $0x150] sm:$0xff] %v614
                  %v616 = vld [vmem:[%s528 + $0x298] sm:$0xff]
                  %617 = vst [vmem:[%s529 + $0x158] sm:$0xff] %v616
                  %v618 = vld [vmem:[%s528 + $0x2a0] sm:$0xff]
                  %619 = vst [vmem:[%s529 + $0x160] sm:$0xff] %v618
                  %v620 = vld [vmem:[%s528 + $0x2a8] sm:$0xff]
                  %621 = vst [vmem:[%s529 + $0x168] sm:$0xff] %v620
                  %v622 = vld [vmem:[%s528 + $0x2b0] sm:$0xff]
                  %623 = vst [vmem:[%s529 + $0x170] sm:$0xff] %v622
                  %v624 = vld [vmem:[%s528 + $0x2b8] sm:$0xff]
                  %625 = vst [vmem:[%s529 + $0x178] sm:$0xff] %v624
                  %v626 = vld [vmem:[%s528 + $0x300] sm:$0xff]
                  %627 = vst [vmem:[%s529 + $0x180] sm:$0xff] %v626
                  %v628 = vld [vmem:[%s528 + $0x308] sm:$0xff]
                  %629 = vst [vmem:[%s529 + $0x188] sm:$0xff] %v628
                  %v630 = vld [vmem:[%s528 + $0x310] sm:$0xff]
                  %631 = vst [vmem:[%s529 + $0x190] sm:$0xff] %v630
                  %v632 = vld [vmem:[%s528 + $0x318] sm:$0xff]
                  %633 = vst [vmem:[%s529 + $0x198] sm:$0xff] %v632
                  %v634 = vld [vmem:[%s528 + $0x320] sm:$0xff]
                  %635 = vst [vmem:[%s529 + $0x1a0] sm:$0xff] %v634
                  %v636 = vld [vmem:[%s528 + $0x328] sm:$0xff]
                  %637 = vst [vmem:[%s529 + $0x1a8] sm:$0xff] %v636
                  %v638 = vld [vmem:[%s528 + $0x330] sm:$0xff]
                  %639 = vst [vmem:[%s529 + $0x1b0] sm:$0xff] %v638
                  %v640 = vld [vmem:[%s528 + $0x338] sm:$0xff]
                  %641 = vst [vmem:[%s529 + $0x1b8] sm:$0xff] %v640
                  %v642 = vld [vmem:[%s528 + $0x380] sm:$0xff]
                  %643 = vst [vmem:[%s529 + $0x1c0] sm:$0xff] %v642
                  %v644 = vld [vmem:[%s528 + $0x388] sm:$0xff]
                  %645 = vst [vmem:[%s529 + $0x1c8] sm:$0xff] %v644
                  %v646 = vld [vmem:[%s528 + $0x390] sm:$0xff]
                  %647 = vst [vmem:[%s529 + $0x1d0] sm:$0xff] %v646
                  %v648 = vld [vmem:[%s528 + $0x398] sm:$0xff]
                  %649 = vst [vmem:[%s529 + $0x1d8] sm:$0xff] %v648
                  %v650 = vld [vmem:[%s528 + $0x3a0] sm:$0xff]
                  %651 = vst [vmem:[%s529 + $0x1e0] sm:$0xff] %v650
                  %v652 = vld [vmem:[%s528 + $0x3a8] sm:$0xff]
                  %653 = vst [vmem:[%s529 + $0x1e8] sm:$0xff] %v652
                  %v654 = vld [vmem:[%s528 + $0x3b0] sm:$0xff]
                  %655 = vst [vmem:[%s529 + $0x1f0] sm:$0xff] %v654
                  %v656 = vld [vmem:[%s528 + $0x3b8] sm:$0xff]
                  %657 = vst [vmem:[%s529 + $0x1f8] sm:$0xff] %v656
                $region88: #{es_module_forward.1} parent=82 // loop_footer
                  %s527 = sadd.s32 1, %s523
                $region89: #{es_module_forward.1} parent=82 // loop_footer_branch
                  %522 = sbr.rel target = $region85
                $region90: #{es_module_forward.1} parent=82 // loop_exit
                  _
              $region83: #{es_module_forward.1} parent=67 // pred_fallthru
                _
              // Predicated region
              $region91: #{es_module_forward.1} parent=67 // pred_check
                _
              $region92: #{es_module_forward.1} parent=67 // pred_check_branch
                %659 = sbr.rel target = $region94
              $region93: #{es_module_forward.1} parent=67 // pred_region
                _
              $region94: #{es_module_forward.1} parent=67 // pred_fallthru
                _
            $region68: #{es_module_forward.1} parent=63 // pred_fallthru
              _
            // Predicated region
            $region69: #{es_module_forward.1} parent=63 // pred_check
              _
            $region70: #{es_module_forward.1} parent=63 // pred_check_branch
              %381 = sbr.rel target = $region72
            $region71: #{es_module_forward.1} parent=63 // pred_region
              %s383 = ssub.s32 256, 1
              loop: start=0, step=1, limit=1
              $region73: #{es_module_forward.1} parent=71 // loop_pre_header
                _
              $region74: #{es_module_forward.1} parent=71 // loop_header
                %s385 = sphi 0, %s389
                %p386 = scmp.ge.s32.totalorder %s385, 1
                %s390 = sphi %s375, %s375
                %s391 = sphi %s372, %s372
              $region75: #{es_module_forward.1} parent=71 // loop_header_branch
                %388 = sbr.rel (%p386) target = $region79
              $region76: #{es_module_forward.1} parent=71 // loop_body
                %v392 = vld [vmem:[%s390] sm:%s383]
                %393 = vst [vmem:[%s391] sm:%s383] %v392
                %v394 = vld [vmem:[%s390 + $0x8] sm:%s383]
                %395 = vst [vmem:[%s391 + $0x8] sm:%s383] %v394
                %v396 = vld [vmem:[%s390 + $0x10] sm:%s383]
                %397 = vst [vmem:[%s391 + $0x10] sm:%s383] %v396
                %v398 = vld [vmem:[%s390 + $0x18] sm:%s383]
                %399 = vst [vmem:[%s391 + $0x18] sm:%s383] %v398
                %v400 = vld [vmem:[%s390 + $0x20] sm:%s383]
                %401 = vst [vmem:[%s391 + $0x20] sm:%s383] %v400
                %v402 = vld [vmem:[%s390 + $0x28] sm:%s383]
                %403 = vst [vmem:[%s391 + $0x28] sm:%s383] %v402
                %v404 = vld [vmem:[%s390 + $0x30] sm:%s383]
                %405 = vst [vmem:[%s391 + $0x30] sm:%s383] %v404
                %v406 = vld [vmem:[%s390 + $0x38] sm:%s383]
                %407 = vst [vmem:[%s391 + $0x38] sm:%s383] %v406
                %v408 = vld [vmem:[%s390 + $0x80] sm:%s383]
                %409 = vst [vmem:[%s391 + $0x40] sm:%s383] %v408
                %v410 = vld [vmem:[%s390 + $0x88] sm:%s383]
                %411 = vst [vmem:[%s391 + $0x48] sm:%s383] %v410
                %v412 = vld [vmem:[%s390 + $0x90] sm:%s383]
                %413 = vst [vmem:[%s391 + $0x50] sm:%s383] %v412
                %v414 = vld [vmem:[%s390 + $0x98] sm:%s383]
                %415 = vst [vmem:[%s391 + $0x58] sm:%s383] %v414
                %v416 = vld [vmem:[%s390 + $0xa0] sm:%s383]
                %417 = vst [vmem:[%s391 + $0x60] sm:%s383] %v416
                %v418 = vld [vmem:[%s390 + $0xa8] sm:%s383]
                %419 = vst [vmem:[%s391 + $0x68] sm:%s383] %v418
                %v420 = vld [vmem:[%s390 + $0xb0] sm:%s383]
                %421 = vst [vmem:[%s391 + $0x70] sm:%s383] %v420
                %v422 = vld [vmem:[%s390 + $0xb8] sm:%s383]
                %423 = vst [vmem:[%s391 + $0x78] sm:%s383] %v422
                %v424 = vld [vmem:[%s390 + $0x100] sm:%s383]
                %425 = vst [vmem:[%s391 + $0x80] sm:%s383] %v424
                %v426 = vld [vmem:[%s390 + $0x108] sm:%s383]
                %427 = vst [vmem:[%s391 + $0x88] sm:%s383] %v426
                %v428 = vld [vmem:[%s390 + $0x110] sm:%s383]
                %429 = vst [vmem:[%s391 + $0x90] sm:%s383] %v428
                %v430 = vld [vmem:[%s390 + $0x118] sm:%s383]
                %431 = vst [vmem:[%s391 + $0x98] sm:%s383] %v430
                %v432 = vld [vmem:[%s390 + $0x120] sm:%s383]
                %433 = vst [vmem:[%s391 + $0xa0] sm:%s383] %v432
                %v434 = vld [vmem:[%s390 + $0x128] sm:%s383]
                %435 = vst [vmem:[%s391 + $0xa8] sm:%s383] %v434
                %v436 = vld [vmem:[%s390 + $0x130] sm:%s383]
                %437 = vst [vmem:[%s391 + $0xb0] sm:%s383] %v436
                %v438 = vld [vmem:[%s390 + $0x138] sm:%s383]
                %439 = vst [vmem:[%s391 + $0xb8] sm:%s383] %v438
                %v440 = vld [vmem:[%s390 + $0x180] sm:%s383]
                %441 = vst [vmem:[%s391 + $0xc0] sm:%s383] %v440
                %v442 = vld [vmem:[%s390 + $0x188] sm:%s383]
                %443 = vst [vmem:[%s391 + $0xc8] sm:%s383] %v442
                %v444 = vld [vmem:[%s390 + $0x190] sm:%s383]
                %445 = vst [vmem:[%s391 + $0xd0] sm:%s383] %v444
                %v446 = vld [vmem:[%s390 + $0x198] sm:%s383]
                %447 = vst [vmem:[%s391 + $0xd8] sm:%s383] %v446
                %v448 = vld [vmem:[%s390 + $0x1a0] sm:%s383]
                %449 = vst [vmem:[%s391 + $0xe0] sm:%s383] %v448
                %v450 = vld [vmem:[%s390 + $0x1a8] sm:%s383]
                %451 = vst [vmem:[%s391 + $0xe8] sm:%s383] %v450
                %v452 = vld [vmem:[%s390 + $0x1b0] sm:%s383]
                %453 = vst [vmem:[%s391 + $0xf0] sm:%s383] %v452
                %v454 = vld [vmem:[%s390 + $0x1b8] sm:%s383]
                %455 = vst [vmem:[%s391 + $0xf8] sm:%s383] %v454
                %v456 = vld [vmem:[%s390 + $0x200] sm:%s383]
                %457 = vst [vmem:[%s391 + $0x100] sm:%s383] %v456
                %v458 = vld [vmem:[%s390 + $0x208] sm:%s383]
                %459 = vst [vmem:[%s391 + $0x108] sm:%s383] %v458
                %v460 = vld [vmem:[%s390 + $0x210] sm:%s383]
                %461 = vst [vmem:[%s391 + $0x110] sm:%s383] %v460
                %v462 = vld [vmem:[%s390 + $0x218] sm:%s383]
                %463 = vst [vmem:[%s391 + $0x118] sm:%s383] %v462
                %v464 = vld [vmem:[%s390 + $0x220] sm:%s383]
                %465 = vst [vmem:[%s391 + $0x120] sm:%s383] %v464
                %v466 = vld [vmem:[%s390 + $0x228] sm:%s383]
                %467 = vst [vmem:[%s391 + $0x128] sm:%s383] %v466
                %v468 = vld [vmem:[%s390 + $0x230] sm:%s383]
                %469 = vst [vmem:[%s391 + $0x130] sm:%s383] %v468
                %v470 = vld [vmem:[%s390 + $0x238] sm:%s383]
                %471 = vst [vmem:[%s391 + $0x138] sm:%s383] %v470
                %v472 = vld [vmem:[%s390 + $0x280] sm:%s383]
                %473 = vst [vmem:[%s391 + $0x140] sm:%s383] %v472
                %v474 = vld [vmem:[%s390 + $0x288] sm:%s383]
                %475 = vst [vmem:[%s391 + $0x148] sm:%s383] %v474
                %v476 = vld [vmem:[%s390 + $0x290] sm:%s383]
                %477 = vst [vmem:[%s391 + $0x150] sm:%s383] %v476
                %v478 = vld [vmem:[%s390 + $0x298] sm:%s383]
                %479 = vst [vmem:[%s391 + $0x158] sm:%s383] %v478
                %v480 = vld [vmem:[%s390 + $0x2a0] sm:%s383]
                %481 = vst [vmem:[%s391 + $0x160] sm:%s383] %v480
                %v482 = vld [vmem:[%s390 + $0x2a8] sm:%s383]
                %483 = vst [vmem:[%s391 + $0x168] sm:%s383] %v482
                %v484 = vld [vmem:[%s390 + $0x2b0] sm:%s383]
                %485 = vst [vmem:[%s391 + $0x170] sm:%s383] %v484
                %v486 = vld [vmem:[%s390 + $0x2b8] sm:%s383]
                %487 = vst [vmem:[%s391 + $0x178] sm:%s383] %v486
                %v488 = vld [vmem:[%s390 + $0x300] sm:%s383]
                %489 = vst [vmem:[%s391 + $0x180] sm:%s383] %v488
                %v490 = vld [vmem:[%s390 + $0x308] sm:%s383]
                %491 = vst [vmem:[%s391 + $0x188] sm:%s383] %v490
                %v492 = vld [vmem:[%s390 + $0x310] sm:%s383]
                %493 = vst [vmem:[%s391 + $0x190] sm:%s383] %v492
                %v494 = vld [vmem:[%s390 + $0x318] sm:%s383]
                %495 = vst [vmem:[%s391 + $0x198] sm:%s383] %v494
                %v496 = vld [vmem:[%s390 + $0x320] sm:%s383]
                %497 = vst [vmem:[%s391 + $0x1a0] sm:%s383] %v496
                %v498 = vld [vmem:[%s390 + $0x328] sm:%s383]
                %499 = vst [vmem:[%s391 + $0x1a8] sm:%s383] %v498
                %v500 = vld [vmem:[%s390 + $0x330] sm:%s383]
                %501 = vst [vmem:[%s391 + $0x1b0] sm:%s383] %v500
                %v502 = vld [vmem:[%s390 + $0x338] sm:%s383]
                %503 = vst [vmem:[%s391 + $0x1b8] sm:%s383] %v502
                %v504 = vld [vmem:[%s390 + $0x380] sm:%s383]
                %505 = vst [vmem:[%s391 + $0x1c0] sm:%s383] %v504
                %v506 = vld [vmem:[%s390 + $0x388] sm:%s383]
                %507 = vst [vmem:[%s391 + $0x1c8] sm:%s383] %v506
                %v508 = vld [vmem:[%s390 + $0x390] sm:%s383]
                %509 = vst [vmem:[%s391 + $0x1d0] sm:%s383] %v508
                %v510 = vld [vmem:[%s390 + $0x398] sm:%s383]
                %511 = vst [vmem:[%s391 + $0x1d8] sm:%s383] %v510
                %v512 = vld [vmem:[%s390 + $0x3a0] sm:%s383]
                %513 = vst [vmem:[%s391 + $0x1e0] sm:%s383] %v512
                %v514 = vld [vmem:[%s390 + $0x3a8] sm:%s383]
                %515 = vst [vmem:[%s391 + $0x1e8] sm:%s383] %v514
                %v516 = vld [vmem:[%s390 + $0x3b0] sm:%s383]
                %517 = vst [vmem:[%s391 + $0x1f0] sm:%s383] %v516
                %v518 = vld [vmem:[%s390 + $0x3b8] sm:%s383]
                %519 = vst [vmem:[%s391 + $0x1f8] sm:%s383] %v518
              $region77: #{es_module_forward.1} parent=71 // loop_footer
                %s389 = sadd.s32 1, %s385
              $region78: #{es_module_forward.1} parent=71 // loop_footer_branch
                %384 = sbr.rel target = $region74
              $region79: #{es_module_forward.1} parent=71 // loop_exit
                _
            $region72: #{es_module_forward.1} parent=63 // pred_fallthru
              _
          $region64: #{es_module_forward.1} parent=59 // pred_fallthru
            _
          %660 = vnop
        $region60: #{es_module_forward.1} parent=51 // pred_fallthru
          _
        // Predicated region
        $region95: #{es_module_forward.1} parent=51 // pred_check
          %p661 = pneg %p90
        $region96: #{es_module_forward.1} parent=51 // pred_check_branch
          %663 = sbr.rel (%p661) target = $region98
        $region97: #{es_module_forward.1} parent=51 // pred_region
          %s664 = smul.u32 8, %s18
          %p665 = scmp.lt.s32.totalorder %s664, 15
          %s666 = scalar_select %p665, %s664, 15
          %s667 = smul.addr %s666, 8
          %s668 = scalar_lea.vmem %s2, %s667
          %s669 = smul.u32 8, %s18
        $region98: #{es_module_forward.1} parent=51 // pred_fallthru
          _
      $region52: #{es_module_forward.1} parent=5 // pred_fallthru
        _
      %p670 = scmp.le.s32.totalorder 1, %s18
      %p671 = scmp.lt.s32.totalorder %s18, 3
      %p672 = pnand %p670, %p671
      %p673 = pneg %p672
      // Predicated region
      $region99: #{es_module_forward.1} parent=5 // pred_check
        _
      $region100: #{es_module_forward.1} parent=5 // pred_check_branch
        %675 = sbr.rel (%p672) target = $region102
      $region101: #{es_module_forward.1} parent=5 // pred_region
        %s676 = ssub.s32 %s18, 1
        %s677 = sand.u32 %s57, 1
        %s678 = sand.u32 %s57, 1
        %s679 = smul.addr %s678, 512
        %s680 = scalar_lea.vmem [#allocation2], %s679
        // Predicated region
        $region103: #{es_module_forward.1} parent=101 // pred_check
          %p681 = pneg %p70
        $region104: #{es_module_forward.1} parent=101 // pred_check_branch
          %683 = sbr.rel (%p681) target = $region106
        $region105: #{es_module_forward.1} parent=101 // pred_region
          _
        $region106: #{es_module_forward.1} parent=101 // pred_fallthru
          _
        %s684 = smul.u32 8, %s23
        %p685 = scmp.lt.s32.totalorder %s684, 15
        %s686 = scalar_select %p685, %s684, 15
        %s687 = smul.addr %s686, 8
        %s688 = scalar_lea.vmem %s0, %s687
        %p689 = pneg %p44
        %p690 = pneg %p41
        %s691 = sand.u32 %s57, 1
        %s692 = sand.u32 %s57, 1
        %s693 = smul.addr %s692, 512
        %s694 = scalar_lea.vmem [#allocation2], %s693
        %p695 = pneg %p70
        %p696 = pneg %p67
        %s697 = smul.u32 8, %s23
        %p698 = scmp.lt.s32.totalorder %s697, 15
        %s699 = scalar_select %p698, %s697, 15
        %s700 = smul.addr %s699, 8
        %s701 = scalar_lea.vmem %s2, %s700
        %p702 = pneg %p96
        %p703 = pneg %p93
        %p704 = pneg %p117
        %p705 = pneg %p114
        %p706 = pneg %p138
        %p707 = pneg %p135
        %p708 = pneg %p159
        %p709 = pneg %p156
        %p710 = pneg %p180
        %p711 = pneg %p177
        %p712 = pneg %p201
        %p713 = pneg %p198
        %p714 = pneg %p222
        %p715 = pneg %p219
        %p716 = pneg %p243
        %p717 = pneg %p240
        %p718 = pneg %p264
        %p719 = pneg %p261
        %p720 = pneg %p285
        %p721 = pneg %p282
        %p722 = pneg %p311
        %p723 = pneg %p308
        %p724 = scmp.lt.s32.totalorder %s23, 1
        %s725 = scalar_select %p724, %s23, 1
        %s726 = smul.addr %s725, 8
        %s727 = scalar_lea.vmem %s12, %s726
        %s728 = smul.u32 8, %s23
        %p729 = scmp.lt.s32.totalorder %s728, 15
        %s730 = scalar_select %p729, %s728, 15
        %s731 = smul.addr %s730, 8
        %s732 = scalar_lea.vmem %s0, %s731
        %s733 = smul.u32 8, %s23
        %s734 = smul.u32 8, %s23
        %s735 = smul.u32 8, %s23
        %p736 = scmp.lt.s32.totalorder %s735, 15
        %s737 = scalar_select %p736, %s735, 15
        %s738 = smul.addr %s737, 8
        %s739 = scalar_lea.vmem %s2, %s738
        %s740 = smul.u32 8, %s23
        %p741 = scmp.lt.s32.totalorder %s23, 1
        %s742 = scalar_select %p741, %s23, 1
        %s743 = smul.addr %s742, 8
        %s744 = scalar_lea.vmem %s12, %s743
        %v745 = vld [vmem:[%s732] sm:$0xff]
        %v746 = vld [vmem:[%s732 + $0x8] sm:$0xff]
        %v747 = vld [vmem:[%s732 + $0x10] sm:$0xff]
        %v748 = vld [vmem:[%s732 + $0x18] sm:$0xff]
        %v749 = vld [vmem:[%s732 + $0x20] sm:$0xff]
        %v750 = vld [vmem:[%s732 + $0x28] sm:$0xff]
        %v751 = vld [vmem:[%s732 + $0x30] sm:$0xff]
        %v752 = vld [vmem:[%s732 + $0x38] sm:$0xff]
        %v753 = vld [vmem:[%s739] sm:$0xff]
        %v754 = vld [vmem:[%s739 + $0x8] sm:$0xff]
        %v755 = vld [vmem:[%s739 + $0x10] sm:$0xff]
        %v756 = vld [vmem:[%s739 + $0x18] sm:$0xff]
        %v757 = vld [vmem:[%s739 + $0x20] sm:$0xff]
        %v758 = vld [vmem:[%s739 + $0x28] sm:$0xff]
        %v759 = vld [vmem:[%s739 + $0x30] sm:$0xff]
        %v760 = vld [vmem:[%s739 + $0x38] sm:$0xff]
        %v761 = vld [vmem:[%s3] sm:$0xff]
        %v762 = vld [vmem:[%s3 + $0x8] sm:$0xff]
        %v763 = vld [vmem:[%s3 + $0x10] sm:$0xff]
        %v764 = vld [vmem:[%s3 + $0x18] sm:$0xff]
        %v765 = vld [vmem:[%s3 + $0x20] sm:$0xff]
        %v766 = vld [vmem:[%s3 + $0x28] sm:$0xff]
        %v767 = vld [vmem:[%s3 + $0x30] sm:$0xff]
        %v768 = vld [vmem:[%s3 + $0x38] sm:$0xff]
        %v769 = vld [vmem:[%s3 + $0x40] sm:$0xff]
        %v770 = vld [vmem:[%s3 + $0x48] sm:$0xff]
        %v771 = vld [vmem:[%s3 + $0x50] sm:$0xff]
        %v772 = vld [vmem:[%s3 + $0x58] sm:$0xff]
        %v773 = vld [vmem:[%s3 + $0x60] sm:$0xff]
        %v774 = vld [vmem:[%s3 + $0x68] sm:$0xff]
        %v775 = vld [vmem:[%s3 + $0x70] sm:$0xff]
        %v776 = vld [vmem:[%s3 + $0x78] sm:$0xff]
        %v777 = vld [vmem:[%s4] sm:$0x1]
        %v779 = vperm.slane %v777, 0
        %v781 = vand.u32 %v776, 4294901760
        %782 = vmatpush.msra.mxu0 %v781
        %v783 = vand.u32 %v775, 4294901760
        %784 = vmatpush.msra.mxu0 %v783
        %v785 = vand.u32 %v774, 4294901760
        %786 = vmatpush.msra.mxu0 %v785
        %v787 = vand.u32 %v773, 4294901760
        %788 = vmatpush.msra.mxu0 %v787
        %v789 = vand.u32 %v772, 4294901760
        %790 = vmatpush.msra.mxu0 %v789
        %v791 = vand.u32 %v771, 4294901760
        %792 = vmatpush.msra.mxu0 %v791
        %v793 = vand.u32 %v770, 4294901760
        %794 = vmatpush.msra.mxu0 %v793
        %v795 = vand.u32 %v769, 4294901760
        %796 = vmatpush.msra.mxu0 %v795
        %v797 = vand.u32 %v768, 4294901760
        %798 = vmatpush.msra.mxu0 %v797
        %v799 = vand.u32 %v767, 4294901760
        %800 = vmatpush.msra.mxu0 %v799
        %v801 = vand.u32 %v766, 4294901760
        %802 = vmatpush.msra.mxu0 %v801
        %v803 = vand.u32 %v765, 4294901760
        %804 = vmatpush.msra.mxu0 %v803
        %v805 = vand.u32 %v764, 4294901760
        %806 = vmatpush.msra.mxu0 %v805
        %v807 = vand.u32 %v763, 4294901760
        %808 = vmatpush.msra.mxu0 %v807
        %v809 = vand.u32 %v762, 4294901760
        %810 = vmatpush.msra.mxu0 %v809
        %v811 = vand.u32 %v761, 4294901760
        %812 = vmatpush.msra.mxu0 %v811
        %v813 = vand.u32 %v745, 4294901760
        %v814 = vsub.f32 %v745, %v813
        %v815 = vand.u32 %v814, 4294901760
        %v816 = vsub.f32 %v814, %v815
        %v817 = vand.u32 %v816, 4294901760
        %818 = vmatmul.f32.gmra.mxu0 %v817
        %v819 = vpop.f32.mrf.mxu0
        %v820 = vadd.f32 %v779, %v819
        %v821 = vand.u32 %v746, 4294901760
        %v822 = vsub.f32 %v746, %v821
        %v823 = vand.u32 %v822, 4294901760
        %v824 = vsub.f32 %v822, %v823
        %v825 = vand.u32 %v824, 4294901760
        %826 = vmatmul.f32.gmra.mxu0 %v825
        %v827 = vpop.f32.mrf.mxu0
        %v828 = vadd.f32 %v779, %v827
        %v829 = vand.u32 %v747, 4294901760
        %v830 = vsub.f32 %v747, %v829
        %v831 = vand.u32 %v830, 4294901760
        %v832 = vsub.f32 %v830, %v831
        %v833 = vand.u32 %v832, 4294901760
        %834 = vmatmul.f32.gmra.mxu0 %v833
        %v835 = vpop.f32.mrf.mxu0
        %v836 = vadd.f32 %v779, %v835
        %v837 = vand.u32 %v748, 4294901760
        %v838 = vsub.f32 %v748, %v837
        %v839 = vand.u32 %v838, 4294901760
        %v840 = vsub.f32 %v838, %v839
        %v841 = vand.u32 %v840, 4294901760
        %842 = vmatmul.f32.gmra.mxu0 %v841
        %v843 = vpop.f32.mrf.mxu0
        %v844 = vadd.f32 %v779, %v843
        %v845 = vand.u32 %v749, 4294901760
        %v846 = vsub.f32 %v749, %v845
        %v847 = vand.u32 %v846, 4294901760
        %v848 = vsub.f32 %v846, %v847
        %v849 = vand.u32 %v848, 4294901760
        %850 = vmatmul.f32.gmra.mxu0 %v849
        %v851 = vpop.f32.mrf.mxu0
        %v852 = vadd.f32 %v779, %v851
        %v853 = vand.u32 %v750, 4294901760
        %v854 = vsub.f32 %v750, %v853
        %v855 = vand.u32 %v854, 4294901760
        %v856 = vsub.f32 %v854, %v855
        %v857 = vand.u32 %v856, 4294901760
        %858 = vmatmul.f32.gmra.mxu0 %v857
        %v859 = vpop.f32.mrf.mxu0
        %v860 = vadd.f32 %v779, %v859
        %v861 = vand.u32 %v751, 4294901760
        %v862 = vsub.f32 %v751, %v861
        %v863 = vand.u32 %v862, 4294901760
        %v864 = vsub.f32 %v862, %v863
        %v865 = vand.u32 %v864, 4294901760
        %866 = vmatmul.f32.gmra.mxu0 %v865
        %v867 = vpop.f32.mrf.mxu0
        %v868 = vadd.f32 %v779, %v867
        %v869 = vand.u32 %v752, 4294901760
        %v870 = vsub.f32 %v752, %v869
        %v871 = vand.u32 %v870, 4294901760
        %v872 = vsub.f32 %v870, %v871
        %v873 = vand.u32 %v872, 4294901760
        %874 = vmatmul.f32.gmra.mxu0 %v873
        %v875 = vpop.f32.mrf.mxu0
        %v876 = vadd.f32 %v779, %v875
        %877 = vdwg.mxu0
        %v878 = vand.u32 %v776, 4294901760
        %v879 = vsub.f32 %v776, %v878
        %v880 = vand.u32 %v879, 4294901760
        %v881 = vsub.f32 %v879, %v880
        %v882 = vand.u32 %v881, 4294901760
        %883 = vmatpush.msra.mxu0 %v882
        %v884 = vand.u32 %v775, 4294901760
        %v885 = vsub.f32 %v775, %v884
        %v886 = vand.u32 %v885, 4294901760
        %v887 = vsub.f32 %v885, %v886
        %v888 = vand.u32 %v887, 4294901760
        %889 = vmatpush.msra.mxu0 %v888
        %v890 = vand.u32 %v774, 4294901760
        %v891 = vsub.f32 %v774, %v890
        %v892 = vand.u32 %v891, 4294901760
        %v893 = vsub.f32 %v891, %v892
        %v894 = vand.u32 %v893, 4294901760
        %895 = vmatpush.msra.mxu0 %v894
        %v896 = vand.u32 %v773, 4294901760
        %v897 = vsub.f32 %v773, %v896
        %v898 = vand.u32 %v897, 4294901760
        %v899 = vsub.f32 %v897, %v898
        %v900 = vand.u32 %v899, 4294901760
        %901 = vmatpush.msra.mxu0 %v900
        %v902 = vand.u32 %v772, 4294901760
        %v903 = vsub.f32 %v772, %v902
        %v904 = vand.u32 %v903, 4294901760
        %v905 = vsub.f32 %v903, %v904
        %v906 = vand.u32 %v905, 4294901760
        %907 = vmatpush.msra.mxu0 %v906
        %v908 = vand.u32 %v771, 4294901760
        %v909 = vsub.f32 %v771, %v908
        %v910 = vand.u32 %v909, 4294901760
        %v911 = vsub.f32 %v909, %v910
        %v912 = vand.u32 %v911, 4294901760
        %913 = vmatpush.msra.mxu0 %v912
        %v914 = vand.u32 %v770, 4294901760
        %v915 = vsub.f32 %v770, %v914
        %v916 = vand.u32 %v915, 4294901760
        %v917 = vsub.f32 %v915, %v916
        %v918 = vand.u32 %v917, 4294901760
        %919 = vmatpush.msra.mxu0 %v918
        %v920 = vand.u32 %v769, 4294901760
        %v921 = vsub.f32 %v769, %v920
        %v922 = vand.u32 %v921, 4294901760
        %v923 = vsub.f32 %v921, %v922
        %v924 = vand.u32 %v923, 4294901760
        %925 = vmatpush.msra.mxu0 %v924
        %v926 = vand.u32 %v768, 4294901760
        %v927 = vsub.f32 %v768, %v926
        %v928 = vand.u32 %v927, 4294901760
        %v929 = vsub.f32 %v927, %v928
        %v930 = vand.u32 %v929, 4294901760
        %931 = vmatpush.msra.mxu0 %v930
        %v932 = vand.u32 %v767, 4294901760
        %v933 = vsub.f32 %v767, %v932
        %v934 = vand.u32 %v933, 4294901760
        %v935 = vsub.f32 %v933, %v934
        %v936 = vand.u32 %v935, 4294901760
        %937 = vmatpush.msra.mxu0 %v936
        %v938 = vand.u32 %v766, 4294901760
        %v939 = vsub.f32 %v766, %v938
        %v940 = vand.u32 %v939, 4294901760
        %v941 = vsub.f32 %v939, %v940
        %v942 = vand.u32 %v941, 4294901760
        %943 = vmatpush.msra.mxu0 %v942
        %v944 = vand.u32 %v765, 4294901760
        %v945 = vsub.f32 %v765, %v944
        %v946 = vand.u32 %v945, 4294901760
        %v947 = vsub.f32 %v945, %v946
        %v948 = vand.u32 %v947, 4294901760
        %949 = vmatpush.msra.mxu0 %v948
        %v950 = vand.u32 %v764, 4294901760
        %v951 = vsub.f32 %v764, %v950
        %v952 = vand.u32 %v951, 4294901760
        %v953 = vsub.f32 %v951, %v952
        %v954 = vand.u32 %v953, 4294901760
        %955 = vmatpush.msra.mxu0 %v954
        %v956 = vand.u32 %v763, 4294901760
        %v957 = vsub.f32 %v763, %v956
        %v958 = vand.u32 %v957, 4294901760
        %v959 = vsub.f32 %v957, %v958
        %v960 = vand.u32 %v959, 4294901760
        %961 = vmatpush.msra.mxu0 %v960
        %v962 = vand.u32 %v762, 4294901760
        %v963 = vsub.f32 %v762, %v962
        %v964 = vand.u32 %v963, 4294901760
        %v965 = vsub.f32 %v963, %v964
        %v966 = vand.u32 %v965, 4294901760
        %967 = vmatpush.msra.mxu0 %v966
        %v968 = vand.u32 %v761, 4294901760
        %v969 = vsub.f32 %v761, %v968
        %v970 = vand.u32 %v969, 4294901760
        %v971 = vsub.f32 %v969, %v970
        %v972 = vand.u32 %v971, 4294901760
        %973 = vmatpush.msra.mxu0 %v972
        %v974 = vand.u32 %v745, 4294901760
        %975 = vmatmul.f32.gmra.mxu0 %v974
        %v976 = vpop.f32.mrf.mxu0
        %v977 = vadd.f32 %v820, %v976
        %v978 = vand.u32 %v746, 4294901760
        %979 = vmatmul.f32.gmra.mxu0 %v978
        %v980 = vpop.f32.mrf.mxu0
        %v981 = vadd.f32 %v828, %v980
        %v982 = vand.u32 %v747, 4294901760
        %983 = vmatmul.f32.gmra.mxu0 %v982
        %v984 = vpop.f32.mrf.mxu0
        %v985 = vadd.f32 %v836, %v984
        %v986 = vand.u32 %v748, 4294901760
        %987 = vmatmul.f32.gmra.mxu0 %v986
        %v988 = vpop.f32.mrf.mxu0
        %v989 = vadd.f32 %v844, %v988
        %v990 = vand.u32 %v749, 4294901760
        %991 = vmatmul.f32.gmra.mxu0 %v990
        %v992 = vpop.f32.mrf.mxu0
        %v993 = vadd.f32 %v852, %v992
        %v994 = vand.u32 %v750, 4294901760
        %995 = vmatmul.f32.gmra.mxu0 %v994
        %v996 = vpop.f32.mrf.mxu0
        %v997 = vadd.f32 %v860, %v996
        %v998 = vand.u32 %v751, 4294901760
        %999 = vmatmul.f32.gmra.mxu0 %v998
        %v1000 = vpop.f32.mrf.mxu0
        %v1001 = vadd.f32 %v868, %v1000
        %v1002 = vand.u32 %v752, 4294901760
        %1003 = vmatmul.f32.gmra.mxu0 %v1002
        %v1004 = vpop.f32.mrf.mxu0
        %v1005 = vadd.f32 %v876, %v1004
        %1006 = vdwg.mxu0
        %v1007 = vand.u32 %v776, 4294901760
        %v1008 = vsub.f32 %v776, %v1007
        %1009 = vmatpush.msra.mxu0 %v1008
        %v1010 = vand.u32 %v775, 4294901760
        %v1011 = vsub.f32 %v775, %v1010
        %1012 = vmatpush.msra.mxu0 %v1011
        %v1013 = vand.u32 %v774, 4294901760
        %v1014 = vsub.f32 %v774, %v1013
        %1015 = vmatpush.msra.mxu0 %v1014
        %v1016 = vand.u32 %v773, 4294901760
        %v1017 = vsub.f32 %v773, %v1016
        %1018 = vmatpush.msra.mxu0 %v1017
        %v1019 = vand.u32 %v772, 4294901760
        %v1020 = vsub.f32 %v772, %v1019
        %1021 = vmatpush.msra.mxu0 %v1020
        %v1022 = vand.u32 %v771, 4294901760
        %v1023 = vsub.f32 %v771, %v1022
        %1024 = vmatpush.msra.mxu0 %v1023
        %v1025 = vand.u32 %v770, 4294901760
        %v1026 = vsub.f32 %v770, %v1025
        %1027 = vmatpush.msra.mxu0 %v1026
        %v1028 = vand.u32 %v769, 4294901760
        %v1029 = vsub.f32 %v769, %v1028
        %1030 = vmatpush.msra.mxu0 %v1029
        %v1031 = vand.u32 %v768, 4294901760
        %v1032 = vsub.f32 %v768, %v1031
        %1033 = vmatpush.msra.mxu0 %v1032
        %v1034 = vand.u32 %v767, 4294901760
        %v1035 = vsub.f32 %v767, %v1034
        %1036 = vmatpush.msra.mxu0 %v1035
        %v1037 = vand.u32 %v766, 4294901760
        %v1038 = vsub.f32 %v766, %v1037
        %1039 = vmatpush.msra.mxu0 %v1038
        %v1040 = vand.u32 %v765, 4294901760
        %v1041 = vsub.f32 %v765, %v1040
        %1042 = vmatpush.msra.mxu0 %v1041
        %v1043 = vand.u32 %v764, 4294901760
        %v1044 = vsub.f32 %v764, %v1043
        %1045 = vmatpush.msra.mxu0 %v1044
        %v1046 = vand.u32 %v763, 4294901760
        %v1047 = vsub.f32 %v763, %v1046
        %1048 = vmatpush.msra.mxu0 %v1047
        %v1049 = vand.u32 %v762, 4294901760
        %v1050 = vsub.f32 %v762, %v1049
        %1051 = vmatpush.msra.mxu0 %v1050
        %v1052 = vand.u32 %v761, 4294901760
        %v1053 = vsub.f32 %v761, %v1052
        %1054 = vmatpush.msra.mxu0 %v1053
        %v1055 = vand.u32 %v745, 4294901760
        %v1056 = vsub.f32 %v745, %v1055
        %1057 = vmatmul.f32.gmra.mxu0 %v1056
        %v1058 = vpop.f32.mrf.mxu0
        %v1059 = vadd.f32 %v977, %v1058
        %v1060 = vand.u32 %v746, 4294901760
        %v1061 = vsub.f32 %v746, %v1060
        %1062 = vmatmul.f32.gmra.mxu0 %v1061
        %v1063 = vpop.f32.mrf.mxu0
        %v1064 = vadd.f32 %v981, %v1063
        %v1065 = vand.u32 %v747, 4294901760
        %v1066 = vsub.f32 %v747, %v1065
        %1067 = vmatmul.f32.gmra.mxu0 %v1066
        %v1068 = vpop.f32.mrf.mxu0
        %v1069 = vadd.f32 %v985, %v1068
        %v1070 = vand.u32 %v748, 4294901760
        %v1071 = vsub.f32 %v748, %v1070
        %1072 = vmatmul.f32.gmra.mxu0 %v1071
        %v1073 = vpop.f32.mrf.mxu0
        %v1074 = vadd.f32 %v989, %v1073
        %v1075 = vand.u32 %v749, 4294901760
        %v1076 = vsub.f32 %v749, %v1075
        %1077 = vmatmul.f32.gmra.mxu0 %v1076
        %v1078 = vpop.f32.mrf.mxu0
        %v1079 = vadd.f32 %v993, %v1078
        %v1080 = vand.u32 %v750, 4294901760
        %v1081 = vsub.f32 %v750, %v1080
        %1082 = vmatmul.f32.gmra.mxu0 %v1081
        %v1083 = vpop.f32.mrf.mxu0
        %v1084 = vadd.f32 %v997, %v1083
        %v1085 = vand.u32 %v751, 4294901760
        %v1086 = vsub.f32 %v751, %v1085
        %1087 = vmatmul.f32.gmra.mxu0 %v1086
        %v1088 = vpop.f32.mrf.mxu0
        %v1089 = vadd.f32 %v1001, %v1088
        %v1090 = vand.u32 %v752, 4294901760
        %v1091 = vsub.f32 %v752, %v1090
        %1092 = vmatmul.f32.gmra.mxu0 %v1091
        %v1093 = vpop.f32.mrf.mxu0
        %v1094 = vadd.f32 %v1005, %v1093
        %1095 = vdwg.mxu0
        %v1096 = vand.u32 %v776, 4294901760
        %1097 = vmatpush.msra.mxu0 %v1096
        %v1098 = vand.u32 %v775, 4294901760
        %1099 = vmatpush.msra.mxu0 %v1098
        %v1100 = vand.u32 %v774, 4294901760
        %1101 = vmatpush.msra.mxu0 %v1100
        %v1102 = vand.u32 %v773, 4294901760
        %1103 = vmatpush.msra.mxu0 %v1102
        %v1104 = vand.u32 %v772, 4294901760
        %1105 = vmatpush.msra.mxu0 %v1104
        %v1106 = vand.u32 %v771, 4294901760
        %1107 = vmatpush.msra.mxu0 %v1106
        %v1108 = vand.u32 %v770, 4294901760
        %1109 = vmatpush.msra.mxu0 %v1108
        %v1110 = vand.u32 %v769, 4294901760
        %1111 = vmatpush.msra.mxu0 %v1110
        %v1112 = vand.u32 %v768, 4294901760
        %1113 = vmatpush.msra.mxu0 %v1112
        %v1114 = vand.u32 %v767, 4294901760
        %1115 = vmatpush.msra.mxu0 %v1114
        %v1116 = vand.u32 %v766, 4294901760
        %1117 = vmatpush.msra.mxu0 %v1116
        %v1118 = vand.u32 %v765, 4294901760
        %1119 = vmatpush.msra.mxu0 %v1118
        %v1120 = vand.u32 %v764, 4294901760
        %1121 = vmatpush.msra.mxu0 %v1120
        %v1122 = vand.u32 %v763, 4294901760
        %1123 = vmatpush.msra.mxu0 %v1122
        %v1124 = vand.u32 %v762, 4294901760
        %1125 = vmatpush.msra.mxu0 %v1124
        %v1126 = vand.u32 %v761, 4294901760
        %1127 = vmatpush.msra.mxu0 %v1126
        %v1128 = vand.u32 %v745, 4294901760
        %v1129 = vsub.f32 %v745, %v1128
        %v1130 = vand.u32 %v1129, 4294901760
        %1131 = vmatmul.f32.gmra.mxu0 %v1130
        %v1132 = vpop.f32.mrf.mxu0
        %v1133 = vadd.f32 %v1059, %v1132
        %v1134 = vand.u32 %v746, 4294901760
        %v1135 = vsub.f32 %v746, %v1134
        %v1136 = vand.u32 %v1135, 4294901760
        %1137 = vmatmul.f32.gmra.mxu0 %v1136
        %v1138 = vpop.f32.mrf.mxu0
        %v1139 = vadd.f32 %v1064, %v1138
        %v1140 = vand.u32 %v747, 4294901760
        %v1141 = vsub.f32 %v747, %v1140
        %v1142 = vand.u32 %v1141, 4294901760
        %1143 = vmatmul.f32.gmra.mxu0 %v1142
        %v1144 = vpop.f32.mrf.mxu0
        %v1145 = vadd.f32 %v1069, %v1144
        %v1146 = vand.u32 %v748, 4294901760
        %v1147 = vsub.f32 %v748, %v1146
        %v1148 = vand.u32 %v1147, 4294901760
        %1149 = vmatmul.f32.gmra.mxu0 %v1148
        %v1150 = vpop.f32.mrf.mxu0
        %v1151 = vadd.f32 %v1074, %v1150
        %v1152 = vand.u32 %v749, 4294901760
        %v1153 = vsub.f32 %v749, %v1152
        %v1154 = vand.u32 %v1153, 4294901760
        %1155 = vmatmul.f32.gmra.mxu0 %v1154
        %v1156 = vpop.f32.mrf.mxu0
        %v1157 = vadd.f32 %v1079, %v1156
        %v1158 = vand.u32 %v750, 4294901760
        %v1159 = vsub.f32 %v750, %v1158
        %v1160 = vand.u32 %v1159, 4294901760
        %1161 = vmatmul.f32.gmra.mxu0 %v1160
        %v1162 = vpop.f32.mrf.mxu0
        %v1163 = vadd.f32 %v1084, %v1162
        %v1164 = vand.u32 %v751, 4294901760
        %v1165 = vsub.f32 %v751, %v1164
        %v1166 = vand.u32 %v1165, 4294901760
        %1167 = vmatmul.f32.gmra.mxu0 %v1166
        %v1168 = vpop.f32.mrf.mxu0
        %v1169 = vadd.f32 %v1089, %v1168
        %v1170 = vand.u32 %v752, 4294901760
        %v1171 = vsub.f32 %v752, %v1170
        %v1172 = vand.u32 %v1171, 4294901760
        %1173 = vmatmul.f32.gmra.mxu0 %v1172
        %v1174 = vpop.f32.mrf.mxu0
        %v1175 = vadd.f32 %v1094, %v1174
        %1176 = vdwg.mxu0
        %v1177 = vand.u32 %v776, 4294901760
        %v1178 = vsub.f32 %v776, %v1177
        %v1179 = vand.u32 %v1178, 4294901760
        %1180 = vmatpush.msra.mxu0 %v1179
        %v1181 = vand.u32 %v775, 4294901760
        %v1182 = vsub.f32 %v775, %v1181
        %v1183 = vand.u32 %v1182, 4294901760
        %1184 = vmatpush.msra.mxu0 %v1183
        %v1185 = vand.u32 %v774, 4294901760
        %v1186 = vsub.f32 %v774, %v1185
        %v1187 = vand.u32 %v1186, 4294901760
        %1188 = vmatpush.msra.mxu0 %v1187
        %v1189 = vand.u32 %v773, 4294901760
        %v1190 = vsub.f32 %v773, %v1189
        %v1191 = vand.u32 %v1190, 4294901760
        %1192 = vmatpush.msra.mxu0 %v1191
        %v1193 = vand.u32 %v772, 4294901760
        %v1194 = vsub.f32 %v772, %v1193
        %v1195 = vand.u32 %v1194, 4294901760
        %1196 = vmatpush.msra.mxu0 %v1195
        %v1197 = vand.u32 %v771, 4294901760
        %v1198 = vsub.f32 %v771, %v1197
        %v1199 = vand.u32 %v1198, 4294901760
        %1200 = vmatpush.msra.mxu0 %v1199
        %v1201 = vand.u32 %v770, 4294901760
        %v1202 = vsub.f32 %v770, %v1201
        %v1203 = vand.u32 %v1202, 4294901760
        %1204 = vmatpush.msra.mxu0 %v1203
        %v1205 = vand.u32 %v769, 4294901760
        %v1206 = vsub.f32 %v769, %v1205
        %v1207 = vand.u32 %v1206, 4294901760
        %1208 = vmatpush.msra.mxu0 %v1207
        %v1209 = vand.u32 %v768, 4294901760
        %v1210 = vsub.f32 %v768, %v1209
        %v1211 = vand.u32 %v1210, 4294901760
        %1212 = vmatpush.msra.mxu0 %v1211
        %v1213 = vand.u32 %v767, 4294901760
        %v1214 = vsub.f32 %v767, %v1213
        %v1215 = vand.u32 %v1214, 4294901760
        %1216 = vmatpush.msra.mxu0 %v1215
        %v1217 = vand.u32 %v766, 4294901760
        %v1218 = vsub.f32 %v766, %v1217
        %v1219 = vand.u32 %v1218, 4294901760
        %1220 = vmatpush.msra.mxu0 %v1219
        %v1221 = vand.u32 %v765, 4294901760
        %v1222 = vsub.f32 %v765, %v1221
        %v1223 = vand.u32 %v1222, 4294901760
        %1224 = vmatpush.msra.mxu0 %v1223
        %v1225 = vand.u32 %v764, 4294901760
        %v1226 = vsub.f32 %v764, %v1225
        %v1227 = vand.u32 %v1226, 4294901760
        %1228 = vmatpush.msra.mxu0 %v1227
        %v1229 = vand.u32 %v763, 4294901760
        %v1230 = vsub.f32 %v763, %v1229
        %v1231 = vand.u32 %v1230, 4294901760
        %1232 = vmatpush.msra.mxu0 %v1231
        %v1233 = vand.u32 %v762, 4294901760
        %v1234 = vsub.f32 %v762, %v1233
        %v1235 = vand.u32 %v1234, 4294901760
        %1236 = vmatpush.msra.mxu0 %v1235
        %v1237 = vand.u32 %v761, 4294901760
        %v1238 = vsub.f32 %v761, %v1237
        %v1239 = vand.u32 %v1238, 4294901760
        %1240 = vmatpush.msra.mxu0 %v1239
        %v1241 = vand.u32 %v745, 4294901760
        %1242 = vmatmul.f32.gmra.mxu0 %v1241
        %v1243 = vpop.f32.mrf.mxu0
        %v1244 = vadd.f32 %v1133, %v1243
        %v1245 = vand.u32 %v746, 4294901760
        %1246 = vmatmul.f32.gmra.mxu0 %v1245
        %v1247 = vpop.f32.mrf.mxu0
        %v1248 = vadd.f32 %v1139, %v1247
        %v1249 = vand.u32 %v747, 4294901760
        %1250 = vmatmul.f32.gmra.mxu0 %v1249
        %v1251 = vpop.f32.mrf.mxu0
        %v1252 = vadd.f32 %v1145, %v1251
        %v1253 = vand.u32 %v748, 4294901760
        %1254 = vmatmul.f32.gmra.mxu0 %v1253
        %v1255 = vpop.f32.mrf.mxu0
        %v1256 = vadd.f32 %v1151, %v1255
        %v1257 = vand.u32 %v749, 4294901760
        %1258 = vmatmul.f32.gmra.mxu0 %v1257
        %v1259 = vpop.f32.mrf.mxu0
        %v1260 = vadd.f32 %v1157, %v1259
        %v1261 = vand.u32 %v750, 4294901760
        %1262 = vmatmul.f32.gmra.mxu0 %v1261
        %v1263 = vpop.f32.mrf.mxu0
        %v1264 = vadd.f32 %v1163, %v1263
        %v1265 = vand.u32 %v751, 4294901760
        %1266 = vmatmul.f32.gmra.mxu0 %v1265
        %v1267 = vpop.f32.mrf.mxu0
        %v1268 = vadd.f32 %v1169, %v1267
        %v1269 = vand.u32 %v752, 4294901760
        %1270 = vmatmul.f32.gmra.mxu0 %v1269
        %v1271 = vpop.f32.mrf.mxu0
        %v1272 = vadd.f32 %v1175, %v1271
        %1273 = vdwg.mxu0
        %v1274 = vand.u32 %v776, 4294901760
        %1275 = vmatpush.msra.mxu0 %v1274
        %v1276 = vand.u32 %v775, 4294901760
        %1277 = vmatpush.msra.mxu0 %v1276
        %v1278 = vand.u32 %v774, 4294901760
        %1279 = vmatpush.msra.mxu0 %v1278
        %v1280 = vand.u32 %v773, 4294901760
        %1281 = vmatpush.msra.mxu0 %v1280
        %v1282 = vand.u32 %v772, 4294901760
        %1283 = vmatpush.msra.mxu0 %v1282
        %v1284 = vand.u32 %v771, 4294901760
        %1285 = vmatpush.msra.mxu0 %v1284
        %v1286 = vand.u32 %v770, 4294901760
        %1287 = vmatpush.msra.mxu0 %v1286
        %v1288 = vand.u32 %v769, 4294901760
        %1289 = vmatpush.msra.mxu0 %v1288
        %v1290 = vand.u32 %v768, 4294901760
        %1291 = vmatpush.msra.mxu0 %v1290
        %v1292 = vand.u32 %v767, 4294901760
        %1293 = vmatpush.msra.mxu0 %v1292
        %v1294 = vand.u32 %v766, 4294901760
        %1295 = vmatpush.msra.mxu0 %v1294
        %v1296 = vand.u32 %v765, 4294901760
        %1297 = vmatpush.msra.mxu0 %v1296
        %v1298 = vand.u32 %v764, 4294901760
        %1299 = vmatpush.msra.mxu0 %v1298
        %v1300 = vand.u32 %v763, 4294901760
        %1301 = vmatpush.msra.mxu0 %v1300
        %v1302 = vand.u32 %v762, 4294901760
        %1303 = vmatpush.msra.mxu0 %v1302
        %v1304 = vand.u32 %v761, 4294901760
        %1305 = vmatpush.msra.mxu0 %v1304
        %v1306 = vand.u32 %v745, 4294901760
        %1307 = vmatmul.f32.gmra.mxu0 %v1306
        %v1308 = vpop.f32.mrf.mxu0
        %v1309 = vadd.f32 %v1244, %v1308
        %v1310 = vand.u32 %v746, 4294901760
        %1311 = vmatmul.f32.gmra.mxu0 %v1310
        %v1312 = vpop.f32.mrf.mxu0
        %v1313 = vadd.f32 %v1248, %v1312
        %v1314 = vand.u32 %v747, 4294901760
        %1315 = vmatmul.f32.gmra.mxu0 %v1314
        %v1316 = vpop.f32.mrf.mxu0
        %v1317 = vadd.f32 %v1252, %v1316
        %v1318 = vand.u32 %v748, 4294901760
        %1319 = vmatmul.f32.gmra.mxu0 %v1318
        %v1320 = vpop.f32.mrf.mxu0
        %v1321 = vadd.f32 %v1256, %v1320
        %v1322 = vand.u32 %v749, 4294901760
        %1323 = vmatmul.f32.gmra.mxu0 %v1322
        %v1324 = vpop.f32.mrf.mxu0
        %v1325 = vadd.f32 %v1260, %v1324
        %v1326 = vand.u32 %v750, 4294901760
        %1327 = vmatmul.f32.gmra.mxu0 %v1326
        %v1328 = vpop.f32.mrf.mxu0
        %v1329 = vadd.f32 %v1264, %v1328
        %v1330 = vand.u32 %v751, 4294901760
        %1331 = vmatmul.f32.gmra.mxu0 %v1330
        %v1332 = vpop.f32.mrf.mxu0
        %v1333 = vadd.f32 %v1268, %v1332
        %v1334 = vand.u32 %v752, 4294901760
        %1335 = vmatmul.f32.gmra.mxu0 %v1334
        %v1336 = vpop.f32.mrf.mxu0
        %v1337 = vadd.f32 %v1272, %v1336
        %1338 = vdwg.mxu0
        %v1339 = vld [vmem:[%s5] sm:$0xff]
        %v1340 = vld [vmem:[%s5 + $0x8] sm:$0xff]
        %v1341 = vld [vmem:[%s5 + $0x10] sm:$0xff]
        %v1342 = vld [vmem:[%s5 + $0x18] sm:$0xff]
        %v1343 = vld [vmem:[%s5 + $0x20] sm:$0xff]
        %v1344 = vld [vmem:[%s5 + $0x28] sm:$0xff]
        %v1345 = vld [vmem:[%s5 + $0x30] sm:$0xff]
        %v1346 = vld [vmem:[%s5 + $0x38] sm:$0xff]
        %v1347 = vld [vmem:[%s5 + $0x40] sm:$0xff]
        %v1348 = vld [vmem:[%s5 + $0x48] sm:$0xff]
        %v1349 = vld [vmem:[%s5 + $0x50] sm:$0xff]
        %v1350 = vld [vmem:[%s5 + $0x58] sm:$0xff]
        %v1351 = vld [vmem:[%s5 + $0x60] sm:$0xff]
        %v1352 = vld [vmem:[%s5 + $0x68] sm:$0xff]
        %v1353 = vld [vmem:[%s5 + $0x70] sm:$0xff]
        %v1354 = vld [vmem:[%s5 + $0x78] sm:$0xff]
        %v1355 = vld [vmem:[%s6] sm:$0x1]
        %v1357 = vperm.slane %v1355, 0
        %v1359 = vand.u32 %v1354, 4294901760
        %1360 = vmatpush.msra.mxu0 %v1359
        %v1361 = vand.u32 %v1353, 4294901760
        %1362 = vmatpush.msra.mxu0 %v1361
        %v1363 = vand.u32 %v1352, 4294901760
        %1364 = vmatpush.msra.mxu0 %v1363
        %v1365 = vand.u32 %v1351, 4294901760
        %1366 = vmatpush.msra.mxu0 %v1365
        %v1367 = vand.u32 %v1350, 4294901760
        %1368 = vmatpush.msra.mxu0 %v1367
        %v1369 = vand.u32 %v1349, 4294901760
        %1370 = vmatpush.msra.mxu0 %v1369
        %v1371 = vand.u32 %v1348, 4294901760
        %1372 = vmatpush.msra.mxu0 %v1371
        %v1373 = vand.u32 %v1347, 4294901760
        %1374 = vmatpush.msra.mxu0 %v1373
        %v1375 = vand.u32 %v1346, 4294901760
        %1376 = vmatpush.msra.mxu0 %v1375
        %v1377 = vand.u32 %v1345, 4294901760
        %1378 = vmatpush.msra.mxu0 %v1377
        %v1379 = vand.u32 %v1344, 4294901760
        %1380 = vmatpush.msra.mxu0 %v1379
        %v1381 = vand.u32 %v1343, 4294901760
        %1382 = vmatpush.msra.mxu0 %v1381
        %v1383 = vand.u32 %v1342, 4294901760
        %1384 = vmatpush.msra.mxu0 %v1383
        %v1385 = vand.u32 %v1341, 4294901760
        %1386 = vmatpush.msra.mxu0 %v1385
        %v1387 = vand.u32 %v1340, 4294901760
        %1388 = vmatpush.msra.mxu0 %v1387
        %v1389 = vand.u32 %v1339, 4294901760
        %1390 = vmatpush.msra.mxu0 %v1389
        %v1391 = vand.u32 %v753, 4294901760
        %v1392 = vsub.f32 %v753, %v1391
        %v1393 = vand.u32 %v1392, 4294901760
        %v1394 = vsub.f32 %v1392, %v1393
        %v1395 = vand.u32 %v1394, 4294901760
        %1396 = vmatmul.f32.gmra.mxu0 %v1395
        %v1397 = vpop.f32.mrf.mxu0
        %v1398 = vadd.f32 %v1357, %v1397
        %v1399 = vand.u32 %v754, 4294901760
        %v1400 = vsub.f32 %v754, %v1399
        %v1401 = vand.u32 %v1400, 4294901760
        %v1402 = vsub.f32 %v1400, %v1401
        %v1403 = vand.u32 %v1402, 4294901760
        %1404 = vmatmul.f32.gmra.mxu0 %v1403
        %v1405 = vpop.f32.mrf.mxu0
        %v1406 = vadd.f32 %v1357, %v1405
        %v1407 = vand.u32 %v755, 4294901760
        %v1408 = vsub.f32 %v755, %v1407
        %v1409 = vand.u32 %v1408, 4294901760
        %v1410 = vsub.f32 %v1408, %v1409
        %v1411 = vand.u32 %v1410, 4294901760
        %1412 = vmatmul.f32.gmra.mxu0 %v1411
        %v1413 = vpop.f32.mrf.mxu0
        %v1414 = vadd.f32 %v1357, %v1413
        %v1415 = vand.u32 %v756, 4294901760
        %v1416 = vsub.f32 %v756, %v1415
        %v1417 = vand.u32 %v1416, 4294901760
        %v1418 = vsub.f32 %v1416, %v1417
        %v1419 = vand.u32 %v1418, 4294901760
        %1420 = vmatmul.f32.gmra.mxu0 %v1419
        %v1421 = vpop.f32.mrf.mxu0
        %v1422 = vadd.f32 %v1357, %v1421
        %v1423 = vand.u32 %v757, 4294901760
        %v1424 = vsub.f32 %v757, %v1423
        %v1425 = vand.u32 %v1424, 4294901760
        %v1426 = vsub.f32 %v1424, %v1425
        %v1427 = vand.u32 %v1426, 4294901760
        %1428 = vmatmul.f32.gmra.mxu0 %v1427
        %v1429 = vpop.f32.mrf.mxu0
        %v1430 = vadd.f32 %v1357, %v1429
        %v1431 = vand.u32 %v758, 4294901760
        %v1432 = vsub.f32 %v758, %v1431
        %v1433 = vand.u32 %v1432, 4294901760
        %v1434 = vsub.f32 %v1432, %v1433
        %v1435 = vand.u32 %v1434, 4294901760
        %1436 = vmatmul.f32.gmra.mxu0 %v1435
        %v1437 = vpop.f32.mrf.mxu0
        %v1438 = vadd.f32 %v1357, %v1437
        %v1439 = vand.u32 %v759, 4294901760
        %v1440 = vsub.f32 %v759, %v1439
        %v1441 = vand.u32 %v1440, 4294901760
        %v1442 = vsub.f32 %v1440, %v1441
        %v1443 = vand.u32 %v1442, 4294901760
        %1444 = vmatmul.f32.gmra.mxu0 %v1443
        %v1445 = vpop.f32.mrf.mxu0
        %v1446 = vadd.f32 %v1357, %v1445
        %v1447 = vand.u32 %v760, 4294901760
        %v1448 = vsub.f32 %v760, %v1447
        %v1449 = vand.u32 %v1448, 4294901760
        %v1450 = vsub.f32 %v1448, %v1449
        %v1451 = vand.u32 %v1450, 4294901760
        %1452 = vmatmul.f32.gmra.mxu0 %v1451
        %v1453 = vpop.f32.mrf.mxu0
        %v1454 = vadd.f32 %v1357, %v1453
        %1455 = vdwg.mxu0
        %v1456 = vand.u32 %v1354, 4294901760
        %v1457 = vsub.f32 %v1354, %v1456
        %v1458 = vand.u32 %v1457, 4294901760
        %v1459 = vsub.f32 %v1457, %v1458
        %v1460 = vand.u32 %v1459, 4294901760
        %1461 = vmatpush.msra.mxu0 %v1460
        %v1462 = vand.u32 %v1353, 4294901760
        %v1463 = vsub.f32 %v1353, %v1462
        %v1464 = vand.u32 %v1463, 4294901760
        %v1465 = vsub.f32 %v1463, %v1464
        %v1466 = vand.u32 %v1465, 4294901760
        %1467 = vmatpush.msra.mxu0 %v1466
        %v1468 = vand.u32 %v1352, 4294901760
        %v1469 = vsub.f32 %v1352, %v1468
        %v1470 = vand.u32 %v1469, 4294901760
        %v1471 = vsub.f32 %v1469, %v1470
        %v1472 = vand.u32 %v1471, 4294901760
        %1473 = vmatpush.msra.mxu0 %v1472
        %v1474 = vand.u32 %v1351, 4294901760
        %v1475 = vsub.f32 %v1351, %v1474
        %v1476 = vand.u32 %v1475, 4294901760
        %v1477 = vsub.f32 %v1475, %v1476
        %v1478 = vand.u32 %v1477, 4294901760
        %1479 = vmatpush.msra.mxu0 %v1478
        %v1480 = vand.u32 %v1350, 4294901760
        %v1481 = vsub.f32 %v1350, %v1480
        %v1482 = vand.u32 %v1481, 4294901760
        %v1483 = vsub.f32 %v1481, %v1482
        %v1484 = vand.u32 %v1483, 4294901760
        %1485 = vmatpush.msra.mxu0 %v1484
        %v1486 = vand.u32 %v1349, 4294901760
        %v1487 = vsub.f32 %v1349, %v1486
        %v1488 = vand.u32 %v1487, 4294901760
        %v1489 = vsub.f32 %v1487, %v1488
        %v1490 = vand.u32 %v1489, 4294901760
        %1491 = vmatpush.msra.mxu0 %v1490
        %v1492 = vand.u32 %v1348, 4294901760
        %v1493 = vsub.f32 %v1348, %v1492
        %v1494 = vand.u32 %v1493, 4294901760
        %v1495 = vsub.f32 %v1493, %v1494
        %v1496 = vand.u32 %v1495, 4294901760
        %1497 = vmatpush.msra.mxu0 %v1496
        %v1498 = vand.u32 %v1347, 4294901760
        %v1499 = vsub.f32 %v1347, %v1498
        %v1500 = vand.u32 %v1499, 4294901760
        %v1501 = vsub.f32 %v1499, %v1500
        %v1502 = vand.u32 %v1501, 4294901760
        %1503 = vmatpush.msra.mxu0 %v1502
        %v1504 = vand.u32 %v1346, 4294901760
        %v1505 = vsub.f32 %v1346, %v1504
        %v1506 = vand.u32 %v1505, 4294901760
        %v1507 = vsub.f32 %v1505, %v1506
        %v1508 = vand.u32 %v1507, 4294901760
        %1509 = vmatpush.msra.mxu0 %v1508
        %v1510 = vand.u32 %v1345, 4294901760
        %v1511 = vsub.f32 %v1345, %v1510
        %v1512 = vand.u32 %v1511, 4294901760
        %v1513 = vsub.f32 %v1511, %v1512
        %v1514 = vand.u32 %v1513, 4294901760
        %1515 = vmatpush.msra.mxu0 %v1514
        %v1516 = vand.u32 %v1344, 4294901760
        %v1517 = vsub.f32 %v1344, %v1516
        %v1518 = vand.u32 %v1517, 4294901760
        %v1519 = vsub.f32 %v1517, %v1518
        %v1520 = vand.u32 %v1519, 4294901760
        %1521 = vmatpush.msra.mxu0 %v1520
        %v1522 = vand.u32 %v1343, 4294901760
        %v1523 = vsub.f32 %v1343, %v1522
        %v1524 = vand.u32 %v1523, 4294901760
        %v1525 = vsub.f32 %v1523, %v1524
        %v1526 = vand.u32 %v1525, 4294901760
        %1527 = vmatpush.msra.mxu0 %v1526
        %v1528 = vand.u32 %v1342, 4294901760
        %v1529 = vsub.f32 %v1342, %v1528
        %v1530 = vand.u32 %v1529, 4294901760
        %v1531 = vsub.f32 %v1529, %v1530
        %v1532 = vand.u32 %v1531, 4294901760
        %1533 = vmatpush.msra.mxu0 %v1532
        %v1534 = vand.u32 %v1341, 4294901760
        %v1535 = vsub.f32 %v1341, %v1534
        %v1536 = vand.u32 %v1535, 4294901760
        %v1537 = vsub.f32 %v1535, %v1536
        %v1538 = vand.u32 %v1537, 4294901760
        %1539 = vmatpush.msra.mxu0 %v1538
        %v1540 = vand.u32 %v1340, 4294901760
        %v1541 = vsub.f32 %v1340, %v1540
        %v1542 = vand.u32 %v1541, 4294901760
        %v1543 = vsub.f32 %v1541, %v1542
        %v1544 = vand.u32 %v1543, 4294901760
        %1545 = vmatpush.msra.mxu0 %v1544
        %v1546 = vand.u32 %v1339, 4294901760
        %v1547 = vsub.f32 %v1339, %v1546
        %v1548 = vand.u32 %v1547, 4294901760
        %v1549 = vsub.f32 %v1547, %v1548
        %v1550 = vand.u32 %v1549, 4294901760
        %1551 = vmatpush.msra.mxu0 %v1550
        %v1552 = vand.u32 %v753, 4294901760
        %1553 = vmatmul.f32.gmra.mxu0 %v1552
        %v1554 = vpop.f32.mrf.mxu0
        %v1555 = vadd.f32 %v1398, %v1554
        %v1556 = vand.u32 %v754, 4294901760
        %1557 = vmatmul.f32.gmra.mxu0 %v1556
        %v1558 = vpop.f32.mrf.mxu0
        %v1559 = vadd.f32 %v1406, %v1558
        %v1560 = vand.u32 %v755, 4294901760
        %1561 = vmatmul.f32.gmra.mxu0 %v1560
        %v1562 = vpop.f32.mrf.mxu0
        %v1563 = vadd.f32 %v1414, %v1562
        %v1564 = vand.u32 %v756, 4294901760
        %1565 = vmatmul.f32.gmra.mxu0 %v1564
        %v1566 = vpop.f32.mrf.mxu0
        %v1567 = vadd.f32 %v1422, %v1566
        %v1568 = vand.u32 %v757, 4294901760
        %1569 = vmatmul.f32.gmra.mxu0 %v1568
        %v1570 = vpop.f32.mrf.mxu0
        %v1571 = vadd.f32 %v1430, %v1570
        %v1572 = vand.u32 %v758, 4294901760
        %1573 = vmatmul.f32.gmra.mxu0 %v1572
        %v1574 = vpop.f32.mrf.mxu0
        %v1575 = vadd.f32 %v1438, %v1574
        %v1576 = vand.u32 %v759, 4294901760
        %1577 = vmatmul.f32.gmra.mxu0 %v1576
        %v1578 = vpop.f32.mrf.mxu0
        %v1579 = vadd.f32 %v1446, %v1578
        %v1580 = vand.u32 %v760, 4294901760
        %1581 = vmatmul.f32.gmra.mxu0 %v1580
        %v1582 = vpop.f32.mrf.mxu0
        %v1583 = vadd.f32 %v1454, %v1582
        %1584 = vdwg.mxu0
        %v1585 = vand.u32 %v1354, 4294901760
        %v1586 = vsub.f32 %v1354, %v1585
        %1587 = vmatpush.msra.mxu0 %v1586
        %v1588 = vand.u32 %v1353, 4294901760
        %v1589 = vsub.f32 %v1353, %v1588
        %1590 = vmatpush.msra.mxu0 %v1589
        %v1591 = vand.u32 %v1352, 4294901760
        %v1592 = vsub.f32 %v1352, %v1591
        %1593 = vmatpush.msra.mxu0 %v1592
        %v1594 = vand.u32 %v1351, 4294901760
        %v1595 = vsub.f32 %v1351, %v1594
        %1596 = vmatpush.msra.mxu0 %v1595
        %v1597 = vand.u32 %v1350, 4294901760
        %v1598 = vsub.f32 %v1350, %v1597
        %1599 = vmatpush.msra.mxu0 %v1598
        %v1600 = vand.u32 %v1349, 4294901760
        %v1601 = vsub.f32 %v1349, %v1600
        %1602 = vmatpush.msra.mxu0 %v1601
        %v1603 = vand.u32 %v1348, 4294901760
        %v1604 = vsub.f32 %v1348, %v1603
        %1605 = vmatpush.msra.mxu0 %v1604
        %v1606 = vand.u32 %v1347, 4294901760
        %v1607 = vsub.f32 %v1347, %v1606
        %1608 = vmatpush.msra.mxu0 %v1607
        %v1609 = vand.u32 %v1346, 4294901760
        %v1610 = vsub.f32 %v1346, %v1609
        %1611 = vmatpush.msra.mxu0 %v1610
        %v1612 = vand.u32 %v1345, 4294901760
        %v1613 = vsub.f32 %v1345, %v1612
        %1614 = vmatpush.msra.mxu0 %v1613
        %v1615 = vand.u32 %v1344, 4294901760
        %v1616 = vsub.f32 %v1344, %v1615
        %1617 = vmatpush.msra.mxu0 %v1616
        %v1618 = vand.u32 %v1343, 4294901760
        %v1619 = vsub.f32 %v1343, %v1618
        %1620 = vmatpush.msra.mxu0 %v1619
        %v1621 = vand.u32 %v1342, 4294901760
        %v1622 = vsub.f32 %v1342, %v1621
        %1623 = vmatpush.msra.mxu0 %v1622
        %v1624 = vand.u32 %v1341, 4294901760
        %v1625 = vsub.f32 %v1341, %v1624
        %1626 = vmatpush.msra.mxu0 %v1625
        %v1627 = vand.u32 %v1340, 4294901760
        %v1628 = vsub.f32 %v1340, %v1627
        %1629 = vmatpush.msra.mxu0 %v1628
        %v1630 = vand.u32 %v1339, 4294901760
        %v1631 = vsub.f32 %v1339, %v1630
        %1632 = vmatpush.msra.mxu0 %v1631
        %v1633 = vand.u32 %v753, 4294901760
        %v1634 = vsub.f32 %v753, %v1633
        %1635 = vmatmul.f32.gmra.mxu0 %v1634
        %v1636 = vpop.f32.mrf.mxu0
        %v1637 = vadd.f32 %v1555, %v1636
        %v1638 = vand.u32 %v754, 4294901760
        %v1639 = vsub.f32 %v754, %v1638
        %1640 = vmatmul.f32.gmra.mxu0 %v1639
        %v1641 = vpop.f32.mrf.mxu0
        %v1642 = vadd.f32 %v1559, %v1641
        %v1643 = vand.u32 %v755, 4294901760
        %v1644 = vsub.f32 %v755, %v1643
        %1645 = vmatmul.f32.gmra.mxu0 %v1644
        %v1646 = vpop.f32.mrf.mxu0
        %v1647 = vadd.f32 %v1563, %v1646
        %v1648 = vand.u32 %v756, 4294901760
        %v1649 = vsub.f32 %v756, %v1648
        %1650 = vmatmul.f32.gmra.mxu0 %v1649
        %v1651 = vpop.f32.mrf.mxu0
        %v1652 = vadd.f32 %v1567, %v1651
        %v1653 = vand.u32 %v757, 4294901760
        %v1654 = vsub.f32 %v757, %v1653
        %1655 = vmatmul.f32.gmra.mxu0 %v1654
        %v1656 = vpop.f32.mrf.mxu0
        %v1657 = vadd.f32 %v1571, %v1656
        %v1658 = vand.u32 %v758, 4294901760
        %v1659 = vsub.f32 %v758, %v1658
        %1660 = vmatmul.f32.gmra.mxu0 %v1659
        %v1661 = vpop.f32.mrf.mxu0
        %v1662 = vadd.f32 %v1575, %v1661
        %v1663 = vand.u32 %v759, 4294901760
        %v1664 = vsub.f32 %v759, %v1663
        %1665 = vmatmul.f32.gmra.mxu0 %v1664
        %v1666 = vpop.f32.mrf.mxu0
        %v1667 = vadd.f32 %v1579, %v1666
        %v1668 = vand.u32 %v760, 4294901760
        %v1669 = vsub.f32 %v760, %v1668
        %1670 = vmatmul.f32.gmra.mxu0 %v1669
        %v1671 = vpop.f32.mrf.mxu0
        %v1672 = vadd.f32 %v1583, %v1671
        %1673 = vdwg.mxu0
        %v1674 = vand.u32 %v1354, 4294901760
        %1675 = vmatpush.msra.mxu0 %v1674
        %v1676 = vand.u32 %v1353, 4294901760
        %1677 = vmatpush.msra.mxu0 %v1676
        %v1678 = vand.u32 %v1352, 4294901760
        %1679 = vmatpush.msra.mxu0 %v1678
        %v1680 = vand.u32 %v1351, 4294901760
        %1681 = vmatpush.msra.mxu0 %v1680
        %v1682 = vand.u32 %v1350, 4294901760
        %1683 = vmatpush.msra.mxu0 %v1682
        %v1684 = vand.u32 %v1349, 4294901760
        %1685 = vmatpush.msra.mxu0 %v1684
        %v1686 = vand.u32 %v1348, 4294901760
        %1687 = vmatpush.msra.mxu0 %v1686
        %v1688 = vand.u32 %v1347, 4294901760
        %1689 = vmatpush.msra.mxu0 %v1688
        %v1690 = vand.u32 %v1346, 4294901760
        %1691 = vmatpush.msra.mxu0 %v1690
        %v1692 = vand.u32 %v1345, 4294901760
        %1693 = vmatpush.msra.mxu0 %v1692
        %v1694 = vand.u32 %v1344, 4294901760
        %1695 = vmatpush.msra.mxu0 %v1694
        %v1696 = vand.u32 %v1343, 4294901760
        %1697 = vmatpush.msra.mxu0 %v1696
        %v1698 = vand.u32 %v1342, 4294901760
        %1699 = vmatpush.msra.mxu0 %v1698
        %v1700 = vand.u32 %v1341, 4294901760
        %1701 = vmatpush.msra.mxu0 %v1700
        %v1702 = vand.u32 %v1340, 4294901760
        %1703 = vmatpush.msra.mxu0 %v1702
        %v1704 = vand.u32 %v1339, 4294901760
        %1705 = vmatpush.msra.mxu0 %v1704
        %v1706 = vand.u32 %v753, 4294901760
        %v1707 = vsub.f32 %v753, %v1706
        %v1708 = vand.u32 %v1707, 4294901760
        %1709 = vmatmul.f32.gmra.mxu0 %v1708
        %v1710 = vpop.f32.mrf.mxu0
        %v1711 = vadd.f32 %v1637, %v1710
        %v1712 = vand.u32 %v754, 4294901760
        %v1713 = vsub.f32 %v754, %v1712
        %v1714 = vand.u32 %v1713, 4294901760
        %1715 = vmatmul.f32.gmra.mxu0 %v1714
        %v1716 = vpop.f32.mrf.mxu0
        %v1717 = vadd.f32 %v1642, %v1716
        %v1718 = vand.u32 %v755, 4294901760
        %v1719 = vsub.f32 %v755, %v1718
        %v1720 = vand.u32 %v1719, 4294901760
        %1721 = vmatmul.f32.gmra.mxu0 %v1720
        %v1722 = vpop.f32.mrf.mxu0
        %v1723 = vadd.f32 %v1647, %v1722
        %v1724 = vand.u32 %v756, 4294901760
        %v1725 = vsub.f32 %v756, %v1724
        %v1726 = vand.u32 %v1725, 4294901760
        %1727 = vmatmul.f32.gmra.mxu0 %v1726
        %v1728 = vpop.f32.mrf.mxu0
        %v1729 = vadd.f32 %v1652, %v1728
        %v1730 = vand.u32 %v757, 4294901760
        %v1731 = vsub.f32 %v757, %v1730
        %v1732 = vand.u32 %v1731, 4294901760
        %1733 = vmatmul.f32.gmra.mxu0 %v1732
        %v1734 = vpop.f32.mrf.mxu0
        %v1735 = vadd.f32 %v1657, %v1734
        %v1736 = vand.u32 %v758, 4294901760
        %v1737 = vsub.f32 %v758, %v1736
        %v1738 = vand.u32 %v1737, 4294901760
        %1739 = vmatmul.f32.gmra.mxu0 %v1738
        %v1740 = vpop.f32.mrf.mxu0
        %v1741 = vadd.f32 %v1662, %v1740
        %v1742 = vand.u32 %v759, 4294901760
        %v1743 = vsub.f32 %v759, %v1742
        %v1744 = vand.u32 %v1743, 4294901760
        %1745 = vmatmul.f32.gmra.mxu0 %v1744
        %v1746 = vpop.f32.mrf.mxu0
        %v1747 = vadd.f32 %v1667, %v1746
        %v1748 = vand.u32 %v760, 4294901760
        %v1749 = vsub.f32 %v760, %v1748
        %v1750 = vand.u32 %v1749, 4294901760
        %1751 = vmatmul.f32.gmra.mxu0 %v1750
        %v1752 = vpop.f32.mrf.mxu0
        %v1753 = vadd.f32 %v1672, %v1752
        %1754 = vdwg.mxu0
        %v1755 = vand.u32 %v1354, 4294901760
        %v1756 = vsub.f32 %v1354, %v1755
        %v1757 = vand.u32 %v1756, 4294901760
        %1758 = vmatpush.msra.mxu0 %v1757
        %v1759 = vand.u32 %v1353, 4294901760
        %v1760 = vsub.f32 %v1353, %v1759
        %v1761 = vand.u32 %v1760, 4294901760
        %1762 = vmatpush.msra.mxu0 %v1761
        %v1763 = vand.u32 %v1352, 4294901760
        %v1764 = vsub.f32 %v1352, %v1763
        %v1765 = vand.u32 %v1764, 4294901760
        %1766 = vmatpush.msra.mxu0 %v1765
        %v1767 = vand.u32 %v1351, 4294901760
        %v1768 = vsub.f32 %v1351, %v1767
        %v1769 = vand.u32 %v1768, 4294901760
        %1770 = vmatpush.msra.mxu0 %v1769
        %v1771 = vand.u32 %v1350, 4294901760
        %v1772 = vsub.f32 %v1350, %v1771
        %v1773 = vand.u32 %v1772, 4294901760
        %1774 = vmatpush.msra.mxu0 %v1773
        %v1775 = vand.u32 %v1349, 4294901760
        %v1776 = vsub.f32 %v1349, %v1775
        %v1777 = vand.u32 %v1776, 4294901760
        %1778 = vmatpush.msra.mxu0 %v1777
        %v1779 = vand.u32 %v1348, 4294901760
        %v1780 = vsub.f32 %v1348, %v1779
        %v1781 = vand.u32 %v1780, 4294901760
        %1782 = vmatpush.msra.mxu0 %v1781
        %v1783 = vand.u32 %v1347, 4294901760
        %v1784 = vsub.f32 %v1347, %v1783
        %v1785 = vand.u32 %v1784, 4294901760
        %1786 = vmatpush.msra.mxu0 %v1785
        %v1787 = vand.u32 %v1346, 4294901760
        %v1788 = vsub.f32 %v1346, %v1787
        %v1789 = vand.u32 %v1788, 4294901760
        %1790 = vmatpush.msra.mxu0 %v1789
        %v1791 = vand.u32 %v1345, 4294901760
        %v1792 = vsub.f32 %v1345, %v1791
        %v1793 = vand.u32 %v1792, 4294901760
        %1794 = vmatpush.msra.mxu0 %v1793
        %v1795 = vand.u32 %v1344, 4294901760
        %v1796 = vsub.f32 %v1344, %v1795
        %v1797 = vand.u32 %v1796, 4294901760
        %1798 = vmatpush.msra.mxu0 %v1797
        %v1799 = vand.u32 %v1343, 4294901760
        %v1800 = vsub.f32 %v1343, %v1799
        %v1801 = vand.u32 %v1800, 4294901760
        %1802 = vmatpush.msra.mxu0 %v1801
        %v1803 = vand.u32 %v1342, 4294901760
        %v1804 = vsub.f32 %v1342, %v1803
        %v1805 = vand.u32 %v1804, 4294901760
        %1806 = vmatpush.msra.mxu0 %v1805
        %v1807 = vand.u32 %v1341, 4294901760
        %v1808 = vsub.f32 %v1341, %v1807
        %v1809 = vand.u32 %v1808, 4294901760
        %1810 = vmatpush.msra.mxu0 %v1809
        %v1811 = vand.u32 %v1340, 4294901760
        %v1812 = vsub.f32 %v1340, %v1811
        %v1813 = vand.u32 %v1812, 4294901760
        %1814 = vmatpush.msra.mxu0 %v1813
        %v1815 = vand.u32 %v1339, 4294901760
        %v1816 = vsub.f32 %v1339, %v1815
        %v1817 = vand.u32 %v1816, 4294901760
        %1818 = vmatpush.msra.mxu0 %v1817
        %v1819 = vand.u32 %v753, 4294901760
        %1820 = vmatmul.f32.gmra.mxu0 %v1819
        %v1821 = vpop.f32.mrf.mxu0
        %v1822 = vadd.f32 %v1711, %v1821
        %v1823 = vand.u32 %v754, 4294901760
        %1824 = vmatmul.f32.gmra.mxu0 %v1823
        %v1825 = vpop.f32.mrf.mxu0
        %v1826 = vadd.f32 %v1717, %v1825
        %v1827 = vand.u32 %v755, 4294901760
        %1828 = vmatmul.f32.gmra.mxu0 %v1827
        %v1829 = vpop.f32.mrf.mxu0
        %v1830 = vadd.f32 %v1723, %v1829
        %v1831 = vand.u32 %v756, 4294901760
        %1832 = vmatmul.f32.gmra.mxu0 %v1831
        %v1833 = vpop.f32.mrf.mxu0
        %v1834 = vadd.f32 %v1729, %v1833
        %v1835 = vand.u32 %v757, 4294901760
        %1836 = vmatmul.f32.gmra.mxu0 %v1835
        %v1837 = vpop.f32.mrf.mxu0
        %v1838 = vadd.f32 %v1735, %v1837
        %v1839 = vand.u32 %v758, 4294901760
        %1840 = vmatmul.f32.gmra.mxu0 %v1839
        %v1841 = vpop.f32.mrf.mxu0
        %v1842 = vadd.f32 %v1741, %v1841
        %v1843 = vand.u32 %v759, 4294901760
        %1844 = vmatmul.f32.gmra.mxu0 %v1843
        %v1845 = vpop.f32.mrf.mxu0
        %v1846 = vadd.f32 %v1747, %v1845
        %v1847 = vand.u32 %v760, 4294901760
        %1848 = vmatmul.f32.gmra.mxu0 %v1847
        %v1849 = vpop.f32.mrf.mxu0
        %v1850 = vadd.f32 %v1753, %v1849
        %1851 = vdwg.mxu0
        %v1852 = vand.u32 %v1354, 4294901760
        %1853 = vmatpush.msra.mxu0 %v1852
        %v1854 = vand.u32 %v1353, 4294901760
        %1855 = vmatpush.msra.mxu0 %v1854
        %v1856 = vand.u32 %v1352, 4294901760
        %1857 = vmatpush.msra.mxu0 %v1856
        %v1858 = vand.u32 %v1351, 4294901760
        %1859 = vmatpush.msra.mxu0 %v1858
        %v1860 = vand.u32 %v1350, 4294901760
        %1861 = vmatpush.msra.mxu0 %v1860
        %v1862 = vand.u32 %v1349, 4294901760
        %1863 = vmatpush.msra.mxu0 %v1862
        %v1864 = vand.u32 %v1348, 4294901760
        %1865 = vmatpush.msra.mxu0 %v1864
        %v1866 = vand.u32 %v1347, 4294901760
        %1867 = vmatpush.msra.mxu0 %v1866
        %v1868 = vand.u32 %v1346, 4294901760
        %1869 = vmatpush.msra.mxu0 %v1868
        %v1870 = vand.u32 %v1345, 4294901760
        %1871 = vmatpush.msra.mxu0 %v1870
        %v1872 = vand.u32 %v1344, 4294901760
        %1873 = vmatpush.msra.mxu0 %v1872
        %v1874 = vand.u32 %v1343, 4294901760
        %1875 = vmatpush.msra.mxu0 %v1874
        %v1876 = vand.u32 %v1342, 4294901760
        %1877 = vmatpush.msra.mxu0 %v1876
        %v1878 = vand.u32 %v1341, 4294901760
        %1879 = vmatpush.msra.mxu0 %v1878
        %v1880 = vand.u32 %v1340, 4294901760
        %1881 = vmatpush.msra.mxu0 %v1880
        %v1882 = vand.u32 %v1339, 4294901760
        %1883 = vmatpush.msra.mxu0 %v1882
        %v1884 = vand.u32 %v753, 4294901760
        %1885 = vmatmul.f32.gmra.mxu0 %v1884
        %v1886 = vpop.f32.mrf.mxu0
        %v1887 = vadd.f32 %v1822, %v1886
        %v1888 = vand.u32 %v754, 4294901760
        %1889 = vmatmul.f32.gmra.mxu0 %v1888
        %v1890 = vpop.f32.mrf.mxu0
        %v1891 = vadd.f32 %v1826, %v1890
        %v1892 = vand.u32 %v755, 4294901760
        %1893 = vmatmul.f32.gmra.mxu0 %v1892
        %v1894 = vpop.f32.mrf.mxu0
        %v1895 = vadd.f32 %v1830, %v1894
        %v1896 = vand.u32 %v756, 4294901760
        %1897 = vmatmul.f32.gmra.mxu0 %v1896
        %v1898 = vpop.f32.mrf.mxu0
        %v1899 = vadd.f32 %v1834, %v1898
        %v1900 = vand.u32 %v757, 4294901760
        %1901 = vmatmul.f32.gmra.mxu0 %v1900
        %v1902 = vpop.f32.mrf.mxu0
        %v1903 = vadd.f32 %v1838, %v1902
        %v1904 = vand.u32 %v758, 4294901760
        %1905 = vmatmul.f32.gmra.mxu0 %v1904
        %v1906 = vpop.f32.mrf.mxu0
        %v1907 = vadd.f32 %v1842, %v1906
        %v1908 = vand.u32 %v759, 4294901760
        %1909 = vmatmul.f32.gmra.mxu0 %v1908
        %v1910 = vpop.f32.mrf.mxu0
        %v1911 = vadd.f32 %v1846, %v1910
        %v1912 = vand.u32 %v760, 4294901760
        %1913 = vmatmul.f32.gmra.mxu0 %v1912
        %v1914 = vpop.f32.mrf.mxu0
        %v1915 = vadd.f32 %v1850, %v1914
        %1916 = vdwg.mxu0
        %v1917 = vmul.f32 %v1887, %v1887
        %v1918 = vmul.f32 %v1891, %v1891
        %v1919 = vmul.f32 %v1895, %v1895
        %v1920 = vmul.f32 %v1899, %v1899
        %v1921 = vmul.f32 %v1903, %v1903
        %v1922 = vmul.f32 %v1907, %v1907
        %v1923 = vmul.f32 %v1911, %v1911
        %v1924 = vmul.f32 %v1915, %v1915
        %v1925 = vld [vmem:[%s8] sm:$0xff]
        %v1926 = vld [vmem:[%s8 + $0x8] sm:$0xff]
        %v1927 = vld [vmem:[%s8 + $0x10] sm:$0xff]
        %v1928 = vld [vmem:[%s8 + $0x18] sm:$0xff]
        %vm1929 = vcmask 261120
        %v1931 = vsel %vm1929, %v1917, 0
        %v1934 = vsel %vm1929, %v1918, 0
        %v1937 = vsel %vm1929, %v1919, 0
        %v1940 = vsel %vm1929, %v1920, 0
        %v1943 = vsel %vm1929, %v1921, 0
        %v1946 = vsel %vm1929, %v1922, 0
        %v1949 = vsel %vm1929, %v1923, 0
        %v1952 = vsel %vm1929, %v1924, 0
        %1954 = vmatpush.msra.mxu0 0.0
        %1955 = vmatpush.msra.mxu0 0.0
        %1956 = vmatpush.msra.mxu0 0.0
        %1957 = vmatpush.msra.mxu0 0.0
        %1958 = vmatpush.msra.mxu0 0.0
        %1959 = vmatpush.msra.mxu0 0.0
        %1960 = vmatpush.msra.mxu0 0.0
        %1961 = vmatpush.msra.mxu0 0.0
        %1962 = vmatpush.msra.mxu0 0.0
        %1963 = vmatpush.msra.mxu0 0.0
        %1964 = vmatpush.msra.mxu0 0.0
        %1965 = vmatpush.msra.mxu0 0.0
        %v1966 = vand.u32 %v1928, 4294901760
        %1967 = vmatpush.msra.mxu0 %v1966
        %v1968 = vand.u32 %v1927, 4294901760
        %1969 = vmatpush.msra.mxu0 %v1968
        %v1970 = vand.u32 %v1926, 4294901760
        %1971 = vmatpush.msra.mxu0 %v1970
        %v1972 = vand.u32 %v1925, 4294901760
        %1973 = vmatpush.msra.mxu0 %v1972
        %v1974 = vand.u32 %v1931, 4294901760
        %v1975 = vsub.f32 %v1931, %v1974
        %v1976 = vand.u32 %v1975, 4294901760
        %v1977 = vsub.f32 %v1975, %v1976
        %v1978 = vand.u32 %v1977, 4294901760
        %1979 = vmatmul.f32.gmra.mxu0 %v1978
        %v1980 = vpop.f32.mrf.mxu0
        %v1981 = vadd.f32 0.0, %v1980
        %v1982 = vand.u32 %v1934, 4294901760
        %v1983 = vsub.f32 %v1934, %v1982
        %v1984 = vand.u32 %v1983, 4294901760
        %v1985 = vsub.f32 %v1983, %v1984
        %v1986 = vand.u32 %v1985, 4294901760
        %1987 = vmatmul.f32.gmra.mxu0 %v1986
        %v1988 = vpop.f32.mrf.mxu0
        %v1989 = vadd.f32 0.0, %v1988
        %v1990 = vand.u32 %v1937, 4294901760
        %v1991 = vsub.f32 %v1937, %v1990
        %v1992 = vand.u32 %v1991, 4294901760
        %v1993 = vsub.f32 %v1991, %v1992
        %v1994 = vand.u32 %v1993, 4294901760
        %1995 = vmatmul.f32.gmra.mxu0 %v1994
        %v1996 = vpop.f32.mrf.mxu0
        %v1997 = vadd.f32 0.0, %v1996
        %v1998 = vand.u32 %v1940, 4294901760
        %v1999 = vsub.f32 %v1940, %v1998
        %v2000 = vand.u32 %v1999, 4294901760
        %v2001 = vsub.f32 %v1999, %v2000
        %v2002 = vand.u32 %v2001, 4294901760
        %2003 = vmatmul.f32.gmra.mxu0 %v2002
        %v2004 = vpop.f32.mrf.mxu0
        %v2005 = vadd.f32 0.0, %v2004
        %v2006 = vand.u32 %v1943, 4294901760
        %v2007 = vsub.f32 %v1943, %v2006
        %v2008 = vand.u32 %v2007, 4294901760
        %v2009 = vsub.f32 %v2007, %v2008
        %v2010 = vand.u32 %v2009, 4294901760
        %2011 = vmatmul.f32.gmra.mxu0 %v2010
        %v2012 = vpop.f32.mrf.mxu0
        %v2013 = vadd.f32 0.0, %v2012
        %v2014 = vand.u32 %v1946, 4294901760
        %v2015 = vsub.f32 %v1946, %v2014
        %v2016 = vand.u32 %v2015, 4294901760
        %v2017 = vsub.f32 %v2015, %v2016
        %v2018 = vand.u32 %v2017, 4294901760
        %2019 = vmatmul.f32.gmra.mxu0 %v2018
        %v2020 = vpop.f32.mrf.mxu0
        %v2021 = vadd.f32 0.0, %v2020
        %v2022 = vand.u32 %v1949, 4294901760
        %v2023 = vsub.f32 %v1949, %v2022
        %v2024 = vand.u32 %v2023, 4294901760
        %v2025 = vsub.f32 %v2023, %v2024
        %v2026 = vand.u32 %v2025, 4294901760
        %2027 = vmatmul.f32.gmra.mxu0 %v2026
        %v2028 = vpop.f32.mrf.mxu0
        %v2029 = vadd.f32 0.0, %v2028
        %v2030 = vand.u32 %v1952, 4294901760
        %v2031 = vsub.f32 %v1952, %v2030
        %v2032 = vand.u32 %v2031, 4294901760
        %v2033 = vsub.f32 %v2031, %v2032
        %v2034 = vand.u32 %v2033, 4294901760
        %2035 = vmatmul.f32.gmra.mxu0 %v2034
        %v2036 = vpop.f32.mrf.mxu0
        %v2037 = vadd.f32 0.0, %v2036
        %2038 = vdwg.mxu0
        %2039 = vmatpush.msra.mxu0 0.0
        %2040 = vmatpush.msra.mxu0 0.0
        %2041 = vmatpush.msra.mxu0 0.0
        %2042 = vmatpush.msra.mxu0 0.0
        %2043 = vmatpush.msra.mxu0 0.0
        %2044 = vmatpush.msra.mxu0 0.0
        %2045 = vmatpush.msra.mxu0 0.0
        %2046 = vmatpush.msra.mxu0 0.0
        %2047 = vmatpush.msra.mxu0 0.0
        %2048 = vmatpush.msra.mxu0 0.0
        %2049 = vmatpush.msra.mxu0 0.0
        %2050 = vmatpush.msra.mxu0 0.0
        %v2051 = vand.u32 %v1928, 4294901760
        %v2052 = vsub.f32 %v1928, %v2051
        %v2053 = vand.u32 %v2052, 4294901760
        %v2054 = vsub.f32 %v2052, %v2053
        %v2055 = vand.u32 %v2054, 4294901760
        %2056 = vmatpush.msra.mxu0 %v2055
        %v2057 = vand.u32 %v1927, 4294901760
        %v2058 = vsub.f32 %v1927, %v2057
        %v2059 = vand.u32 %v2058, 4294901760
        %v2060 = vsub.f32 %v2058, %v2059
        %v2061 = vand.u32 %v2060, 4294901760
        %2062 = vmatpush.msra.mxu0 %v2061
        %v2063 = vand.u32 %v1926, 4294901760
        %v2064 = vsub.f32 %v1926, %v2063
        %v2065 = vand.u32 %v2064, 4294901760
        %v2066 = vsub.f32 %v2064, %v2065
        %v2067 = vand.u32 %v2066, 4294901760
        %2068 = vmatpush.msra.mxu0 %v2067
        %v2069 = vand.u32 %v1925, 4294901760
        %v2070 = vsub.f32 %v1925, %v2069
        %v2071 = vand.u32 %v2070, 4294901760
        %v2072 = vsub.f32 %v2070, %v2071
        %v2073 = vand.u32 %v2072, 4294901760
        %2074 = vmatpush.msra.mxu0 %v2073
        %v2075 = vand.u32 %v1931, 4294901760
        %2076 = vmatmul.f32.gmra.mxu0 %v2075
        %v2077 = vpop.f32.mrf.mxu0
        %v2078 = vadd.f32 %v1981, %v2077
        %v2079 = vand.u32 %v1934, 4294901760
        %2080 = vmatmul.f32.gmra.mxu0 %v2079
        %v2081 = vpop.f32.mrf.mxu0
        %v2082 = vadd.f32 %v1989, %v2081
        %v2083 = vand.u32 %v1937, 4294901760
        %2084 = vmatmul.f32.gmra.mxu0 %v2083
        %v2085 = vpop.f32.mrf.mxu0
        %v2086 = vadd.f32 %v1997, %v2085
        %v2087 = vand.u32 %v1940, 4294901760
        %2088 = vmatmul.f32.gmra.mxu0 %v2087
        %v2089 = vpop.f32.mrf.mxu0
        %v2090 = vadd.f32 %v2005, %v2089
        %v2091 = vand.u32 %v1943, 4294901760
        %2092 = vmatmul.f32.gmra.mxu0 %v2091
        %v2093 = vpop.f32.mrf.mxu0
        %v2094 = vadd.f32 %v2013, %v2093
        %v2095 = vand.u32 %v1946, 4294901760
        %2096 = vmatmul.f32.gmra.mxu0 %v2095
        %v2097 = vpop.f32.mrf.mxu0
        %v2098 = vadd.f32 %v2021, %v2097
        %v2099 = vand.u32 %v1949, 4294901760
        %2100 = vmatmul.f32.gmra.mxu0 %v2099
        %v2101 = vpop.f32.mrf.mxu0
        %v2102 = vadd.f32 %v2029, %v2101
        %v2103 = vand.u32 %v1952, 4294901760
        %2104 = vmatmul.f32.gmra.mxu0 %v2103
        %v2105 = vpop.f32.mrf.mxu0
        %v2106 = vadd.f32 %v2037, %v2105
        %2107 = vdwg.mxu0
        %2108 = vmatpush.msra.mxu0 0.0
        %2109 = vmatpush.msra.mxu0 0.0
        %2110 = vmatpush.msra.mxu0 0.0
        %2111 = vmatpush.msra.mxu0 0.0
        %2112 = vmatpush.msra.mxu0 0.0
        %2113 = vmatpush.msra.mxu0 0.0
        %2114 = vmatpush.msra.mxu0 0.0
        %2115 = vmatpush.msra.mxu0 0.0
        %2116 = vmatpush.msra.mxu0 0.0
        %2117 = vmatpush.msra.mxu0 0.0
        %2118 = vmatpush.msra.mxu0 0.0
        %2119 = vmatpush.msra.mxu0 0.0
        %v2120 = vand.u32 %v1928, 4294901760
        %v2121 = vsub.f32 %v1928, %v2120
        %2122 = vmatpush.msra.mxu0 %v2121
        %v2123 = vand.u32 %v1927, 4294901760
        %v2124 = vsub.f32 %v1927, %v2123
        %2125 = vmatpush.msra.mxu0 %v2124
        %v2126 = vand.u32 %v1926, 4294901760
        %v2127 = vsub.f32 %v1926, %v2126
        %2128 = vmatpush.msra.mxu0 %v2127
        %v2129 = vand.u32 %v1925, 4294901760
        %v2130 = vsub.f32 %v1925, %v2129
        %2131 = vmatpush.msra.mxu0 %v2130
        %v2132 = vand.u32 %v1931, 4294901760
        %v2133 = vsub.f32 %v1931, %v2132
        %2134 = vmatmul.f32.gmra.mxu0 %v2133
        %v2135 = vpop.f32.mrf.mxu0
        %v2136 = vadd.f32 %v2078, %v2135
        %v2137 = vand.u32 %v1934, 4294901760
        %v2138 = vsub.f32 %v1934, %v2137
        %2139 = vmatmul.f32.gmra.mxu0 %v2138
        %v2140 = vpop.f32.mrf.mxu0
        %v2141 = vadd.f32 %v2082, %v2140
        %v2142 = vand.u32 %v1937, 4294901760
        %v2143 = vsub.f32 %v1937, %v2142
        %2144 = vmatmul.f32.gmra.mxu0 %v2143
        %v2145 = vpop.f32.mrf.mxu0
        %v2146 = vadd.f32 %v2086, %v2145
        %v2147 = vand.u32 %v1940, 4294901760
        %v2148 = vsub.f32 %v1940, %v2147
        %2149 = vmatmul.f32.gmra.mxu0 %v2148
        %v2150 = vpop.f32.mrf.mxu0
        %v2151 = vadd.f32 %v2090, %v2150
        %v2152 = vand.u32 %v1943, 4294901760
        %v2153 = vsub.f32 %v1943, %v2152
        %2154 = vmatmul.f32.gmra.mxu0 %v2153
        %v2155 = vpop.f32.mrf.mxu0
        %v2156 = vadd.f32 %v2094, %v2155
        %v2157 = vand.u32 %v1946, 4294901760
        %v2158 = vsub.f32 %v1946, %v2157
        %2159 = vmatmul.f32.gmra.mxu0 %v2158
        %v2160 = vpop.f32.mrf.mxu0
        %v2161 = vadd.f32 %v2098, %v2160
        %v2162 = vand.u32 %v1949, 4294901760
        %v2163 = vsub.f32 %v1949, %v2162
        %2164 = vmatmul.f32.gmra.mxu0 %v2163
        %v2165 = vpop.f32.mrf.mxu0
        %v2166 = vadd.f32 %v2102, %v2165
        %v2167 = vand.u32 %v1952, 4294901760
        %v2168 = vsub.f32 %v1952, %v2167
        %2169 = vmatmul.f32.gmra.mxu0 %v2168
        %v2170 = vpop.f32.mrf.mxu0
        %v2171 = vadd.f32 %v2106, %v2170
        %2172 = vdwg.mxu0
        %2173 = vmatpush.msra.mxu0 0.0
        %2174 = vmatpush.msra.mxu0 0.0
        %2175 = vmatpush.msra.mxu0 0.0
        %2176 = vmatpush.msra.mxu0 0.0
        %2177 = vmatpush.msra.mxu0 0.0
        %2178 = vmatpush.msra.mxu0 0.0
        %2179 = vmatpush.msra.mxu0 0.0
        %2180 = vmatpush.msra.mxu0 0.0
        %2181 = vmatpush.msra.mxu0 0.0
        %2182 = vmatpush.msra.mxu0 0.0
        %2183 = vmatpush.msra.mxu0 0.0
        %2184 = vmatpush.msra.mxu0 0.0
        %v2185 = vand.u32 %v1928, 4294901760
        %2186 = vmatpush.msra.mxu0 %v2185
        %v2187 = vand.u32 %v1927, 4294901760
        %2188 = vmatpush.msra.mxu0 %v2187
        %v2189 = vand.u32 %v1926, 4294901760
        %2190 = vmatpush.msra.mxu0 %v2189
        %v2191 = vand.u32 %v1925, 4294901760
        %2192 = vmatpush.msra.mxu0 %v2191
        %v2193 = vand.u32 %v1931, 4294901760
        %v2194 = vsub.f32 %v1931, %v2193
        %v2195 = vand.u32 %v2194, 4294901760
        %2196 = vmatmul.f32.gmra.mxu0 %v2195
        %v2197 = vpop.f32.mrf.mxu0
        %v2198 = vadd.f32 %v2136, %v2197
        %v2199 = vand.u32 %v1934, 4294901760
        %v2200 = vsub.f32 %v1934, %v2199
        %v2201 = vand.u32 %v2200, 4294901760
        %2202 = vmatmul.f32.gmra.mxu0 %v2201
        %v2203 = vpop.f32.mrf.mxu0
        %v2204 = vadd.f32 %v2141, %v2203
        %v2205 = vand.u32 %v1937, 4294901760
        %v2206 = vsub.f32 %v1937, %v2205
        %v2207 = vand.u32 %v2206, 4294901760
        %2208 = vmatmul.f32.gmra.mxu0 %v2207
        %v2209 = vpop.f32.mrf.mxu0
        %v2210 = vadd.f32 %v2146, %v2209
        %v2211 = vand.u32 %v1940, 4294901760
        %v2212 = vsub.f32 %v1940, %v2211
        %v2213 = vand.u32 %v2212, 4294901760
        %2214 = vmatmul.f32.gmra.mxu0 %v2213
        %v2215 = vpop.f32.mrf.mxu0
        %v2216 = vadd.f32 %v2151, %v2215
        %v2217 = vand.u32 %v1943, 4294901760
        %v2218 = vsub.f32 %v1943, %v2217
        %v2219 = vand.u32 %v2218, 4294901760
        %2220 = vmatmul.f32.gmra.mxu0 %v2219
        %v2221 = vpop.f32.mrf.mxu0
        %v2222 = vadd.f32 %v2156, %v2221
        %v2223 = vand.u32 %v1946, 4294901760
        %v2224 = vsub.f32 %v1946, %v2223
        %v2225 = vand.u32 %v2224, 4294901760
        %2226 = vmatmul.f32.gmra.mxu0 %v2225
        %v2227 = vpop.f32.mrf.mxu0
        %v2228 = vadd.f32 %v2161, %v2227
        %v2229 = vand.u32 %v1949, 4294901760
        %v2230 = vsub.f32 %v1949, %v2229
        %v2231 = vand.u32 %v2230, 4294901760
        %2232 = vmatmul.f32.gmra.mxu0 %v2231
        %v2233 = vpop.f32.mrf.mxu0
        %v2234 = vadd.f32 %v2166, %v2233
        %v2235 = vand.u32 %v1952, 4294901760
        %v2236 = vsub.f32 %v1952, %v2235
        %v2237 = vand.u32 %v2236, 4294901760
        %2238 = vmatmul.f32.gmra.mxu0 %v2237
        %v2239 = vpop.f32.mrf.mxu0
        %v2240 = vadd.f32 %v2171, %v2239
        %2241 = vdwg.mxu0
        %2242 = vmatpush.msra.mxu0 0.0
        %2243 = vmatpush.msra.mxu0 0.0
        %2244 = vmatpush.msra.mxu0 0.0
        %2245 = vmatpush.msra.mxu0 0.0
        %2246 = vmatpush.msra.mxu0 0.0
        %2247 = vmatpush.msra.mxu0 0.0
        %2248 = vmatpush.msra.mxu0 0.0
        %2249 = vmatpush.msra.mxu0 0.0
        %2250 = vmatpush.msra.mxu0 0.0
        %2251 = vmatpush.msra.mxu0 0.0
        %2252 = vmatpush.msra.mxu0 0.0
        %2253 = vmatpush.msra.mxu0 0.0
        %v2254 = vand.u32 %v1928, 4294901760
        %v2255 = vsub.f32 %v1928, %v2254
        %v2256 = vand.u32 %v2255, 4294901760
        %2257 = vmatpush.msra.mxu0 %v2256
        %v2258 = vand.u32 %v1927, 4294901760
        %v2259 = vsub.f32 %v1927, %v2258
        %v2260 = vand.u32 %v2259, 4294901760
        %2261 = vmatpush.msra.mxu0 %v2260
        %v2262 = vand.u32 %v1926, 4294901760
        %v2263 = vsub.f32 %v1926, %v2262
        %v2264 = vand.u32 %v2263, 4294901760
        %2265 = vmatpush.msra.mxu0 %v2264
        %v2266 = vand.u32 %v1925, 4294901760
        %v2267 = vsub.f32 %v1925, %v2266
        %v2268 = vand.u32 %v2267, 4294901760
        %2269 = vmatpush.msra.mxu0 %v2268
        %v2270 = vand.u32 %v1931, 4294901760
        %2271 = vmatmul.f32.gmra.mxu0 %v2270
        %v2272 = vpop.f32.mrf.mxu0
        %v2273 = vadd.f32 %v2198, %v2272
        %v2274 = vand.u32 %v1934, 4294901760
        %2275 = vmatmul.f32.gmra.mxu0 %v2274
        %v2276 = vpop.f32.mrf.mxu0
        %v2277 = vadd.f32 %v2204, %v2276
        %v2278 = vand.u32 %v1937, 4294901760
        %2279 = vmatmul.f32.gmra.mxu0 %v2278
        %v2280 = vpop.f32.mrf.mxu0
        %v2281 = vadd.f32 %v2210, %v2280
        %v2282 = vand.u32 %v1940, 4294901760
        %2283 = vmatmul.f32.gmra.mxu0 %v2282
        %v2284 = vpop.f32.mrf.mxu0
        %v2285 = vadd.f32 %v2216, %v2284
        %v2286 = vand.u32 %v1943, 4294901760
        %2287 = vmatmul.f32.gmra.mxu0 %v2286
        %v2288 = vpop.f32.mrf.mxu0
        %v2289 = vadd.f32 %v2222, %v2288
        %v2290 = vand.u32 %v1946, 4294901760
        %2291 = vmatmul.f32.gmra.mxu0 %v2290
        %v2292 = vpop.f32.mrf.mxu0
        %v2293 = vadd.f32 %v2228, %v2292
        %v2294 = vand.u32 %v1949, 4294901760
        %2295 = vmatmul.f32.gmra.mxu0 %v2294
        %v2296 = vpop.f32.mrf.mxu0
        %v2297 = vadd.f32 %v2234, %v2296
        %v2298 = vand.u32 %v1952, 4294901760
        %2299 = vmatmul.f32.gmra.mxu0 %v2298
        %v2300 = vpop.f32.mrf.mxu0
        %v2301 = vadd.f32 %v2240, %v2300
        %2302 = vdwg.mxu0
        %2303 = vmatpush.msra.mxu0 0.0
        %2304 = vmatpush.msra.mxu0 0.0
        %2305 = vmatpush.msra.mxu0 0.0
        %2306 = vmatpush.msra.mxu0 0.0
        %2307 = vmatpush.msra.mxu0 0.0
        %2308 = vmatpush.msra.mxu0 0.0
        %2309 = vmatpush.msra.mxu0 0.0
        %2310 = vmatpush.msra.mxu0 0.0
        %2311 = vmatpush.msra.mxu0 0.0
        %2312 = vmatpush.msra.mxu0 0.0
        %2313 = vmatpush.msra.mxu0 0.0
        %2314 = vmatpush.msra.mxu0 0.0
        %v2315 = vand.u32 %v1928, 4294901760
        %2316 = vmatpush.msra.mxu0 %v2315
        %v2317 = vand.u32 %v1927, 4294901760
        %2318 = vmatpush.msra.mxu0 %v2317
        %v2319 = vand.u32 %v1926, 4294901760
        %2320 = vmatpush.msra.mxu0 %v2319
        %v2321 = vand.u32 %v1925, 4294901760
        %2322 = vmatpush.msra.mxu0 %v2321
        %v2323 = vand.u32 %v1931, 4294901760
        %2324 = vmatmul.f32.gmra.mxu0 %v2323
        %v2325 = vpop.f32.mrf.mxu0
        %v2326 = vadd.f32 %v2273, %v2325
        %v2327 = vand.u32 %v1934, 4294901760
        %2328 = vmatmul.f32.gmra.mxu0 %v2327
        %v2329 = vpop.f32.mrf.mxu0
        %v2330 = vadd.f32 %v2277, %v2329
        %v2331 = vand.u32 %v1937, 4294901760
        %2332 = vmatmul.f32.gmra.mxu0 %v2331
        %v2333 = vpop.f32.mrf.mxu0
        %v2334 = vadd.f32 %v2281, %v2333
        %v2335 = vand.u32 %v1940, 4294901760
        %2336 = vmatmul.f32.gmra.mxu0 %v2335
        %v2337 = vpop.f32.mrf.mxu0
        %v2338 = vadd.f32 %v2285, %v2337
        %v2339 = vand.u32 %v1943, 4294901760
        %2340 = vmatmul.f32.gmra.mxu0 %v2339
        %v2341 = vpop.f32.mrf.mxu0
        %v2342 = vadd.f32 %v2289, %v2341
        %v2343 = vand.u32 %v1946, 4294901760
        %2344 = vmatmul.f32.gmra.mxu0 %v2343
        %v2345 = vpop.f32.mrf.mxu0
        %v2346 = vadd.f32 %v2293, %v2345
        %v2347 = vand.u32 %v1949, 4294901760
        %2348 = vmatmul.f32.gmra.mxu0 %v2347
        %v2349 = vpop.f32.mrf.mxu0
        %v2350 = vadd.f32 %v2297, %v2349
        %v2351 = vand.u32 %v1952, 4294901760
        %2352 = vmatmul.f32.gmra.mxu0 %v2351
        %v2353 = vpop.f32.mrf.mxu0
        %v2354 = vadd.f32 %v2301, %v2353
        %2355 = vdwg.mxu0
        %v2356 = vmul.f32 %v1309, %v1309
        %v2357 = vmul.f32 %v1313, %v1313
        %v2358 = vmul.f32 %v1317, %v1317
        %v2359 = vmul.f32 %v1321, %v1321
        %v2360 = vmul.f32 %v1325, %v1325
        %v2361 = vmul.f32 %v1329, %v1329
        %v2362 = vmul.f32 %v1333, %v1333
        %v2363 = vmul.f32 %v1337, %v1337
        %v2364 = vld [vmem:[%s7] sm:$0xff]
        %v2365 = vld [vmem:[%s7 + $0x8] sm:$0xff]
        %v2366 = vld [vmem:[%s7 + $0x10] sm:$0xff]
        %v2367 = vld [vmem:[%s7 + $0x18] sm:$0xff]
        %v2369 = vsel %vm1929, %v2356, 0
        %v2372 = vsel %vm1929, %v2357, 0
        %v2375 = vsel %vm1929, %v2358, 0
        %v2378 = vsel %vm1929, %v2359, 0
        %v2381 = vsel %vm1929, %v2360, 0
        %v2384 = vsel %vm1929, %v2361, 0
        %v2387 = vsel %vm1929, %v2362, 0
        %v2390 = vsel %vm1929, %v2363, 0
        %2392 = vmatpush.msra.mxu0 0.0
        %2393 = vmatpush.msra.mxu0 0.0
        %2394 = vmatpush.msra.mxu0 0.0
        %2395 = vmatpush.msra.mxu0 0.0
        %2396 = vmatpush.msra.mxu0 0.0
        %2397 = vmatpush.msra.mxu0 0.0
        %2398 = vmatpush.msra.mxu0 0.0
        %2399 = vmatpush.msra.mxu0 0.0
        %2400 = vmatpush.msra.mxu0 0.0
        %2401 = vmatpush.msra.mxu0 0.0
        %2402 = vmatpush.msra.mxu0 0.0
        %2403 = vmatpush.msra.mxu0 0.0
        %v2404 = vand.u32 %v2367, 4294901760
        %2405 = vmatpush.msra.mxu0 %v2404
        %v2406 = vand.u32 %v2366, 4294901760
        %2407 = vmatpush.msra.mxu0 %v2406
        %v2408 = vand.u32 %v2365, 4294901760
        %2409 = vmatpush.msra.mxu0 %v2408
        %v2410 = vand.u32 %v2364, 4294901760
        %2411 = vmatpush.msra.mxu0 %v2410
        %v2412 = vand.u32 %v2369, 4294901760
        %v2413 = vsub.f32 %v2369, %v2412
        %v2414 = vand.u32 %v2413, 4294901760
        %v2415 = vsub.f32 %v2413, %v2414
        %v2416 = vand.u32 %v2415, 4294901760
        %2417 = vmatmul.f32.gmra.mxu0 %v2416
        %v2418 = vpop.f32.mrf.mxu0
        %v2419 = vadd.f32 0.0, %v2418
        %v2420 = vand.u32 %v2372, 4294901760
        %v2421 = vsub.f32 %v2372, %v2420
        %v2422 = vand.u32 %v2421, 4294901760
        %v2423 = vsub.f32 %v2421, %v2422
        %v2424 = vand.u32 %v2423, 4294901760
        %2425 = vmatmul.f32.gmra.mxu0 %v2424
        %v2426 = vpop.f32.mrf.mxu0
        %v2427 = vadd.f32 0.0, %v2426
        %v2428 = vand.u32 %v2375, 4294901760
        %v2429 = vsub.f32 %v2375, %v2428
        %v2430 = vand.u32 %v2429, 4294901760
        %v2431 = vsub.f32 %v2429, %v2430
        %v2432 = vand.u32 %v2431, 4294901760
        %2433 = vmatmul.f32.gmra.mxu0 %v2432
        %v2434 = vpop.f32.mrf.mxu0
        %v2435 = vadd.f32 0.0, %v2434
        %v2436 = vand.u32 %v2378, 4294901760
        %v2437 = vsub.f32 %v2378, %v2436
        %v2438 = vand.u32 %v2437, 4294901760
        %v2439 = vsub.f32 %v2437, %v2438
        %v2440 = vand.u32 %v2439, 4294901760
        %2441 = vmatmul.f32.gmra.mxu0 %v2440
        %v2442 = vpop.f32.mrf.mxu0
        %v2443 = vadd.f32 0.0, %v2442
        %v2444 = vand.u32 %v2381, 4294901760
        %v2445 = vsub.f32 %v2381, %v2444
        %v2446 = vand.u32 %v2445, 4294901760
        %v2447 = vsub.f32 %v2445, %v2446
        %v2448 = vand.u32 %v2447, 4294901760
        %2449 = vmatmul.f32.gmra.mxu0 %v2448
        %v2450 = vpop.f32.mrf.mxu0
        %v2451 = vadd.f32 0.0, %v2450
        %v2452 = vand.u32 %v2384, 4294901760
        %v2453 = vsub.f32 %v2384, %v2452
        %v2454 = vand.u32 %v2453, 4294901760
        %v2455 = vsub.f32 %v2453, %v2454
        %v2456 = vand.u32 %v2455, 4294901760
        %2457 = vmatmul.f32.gmra.mxu0 %v2456
        %v2458 = vpop.f32.mrf.mxu0
        %v2459 = vadd.f32 0.0, %v2458
        %v2460 = vand.u32 %v2387, 4294901760
        %v2461 = vsub.f32 %v2387, %v2460
        %v2462 = vand.u32 %v2461, 4294901760
        %v2463 = vsub.f32 %v2461, %v2462
        %v2464 = vand.u32 %v2463, 4294901760
        %2465 = vmatmul.f32.gmra.mxu0 %v2464
        %v2466 = vpop.f32.mrf.mxu0
        %v2467 = vadd.f32 0.0, %v2466
        %v2468 = vand.u32 %v2390, 4294901760
        %v2469 = vsub.f32 %v2390, %v2468
        %v2470 = vand.u32 %v2469, 4294901760
        %v2471 = vsub.f32 %v2469, %v2470
        %v2472 = vand.u32 %v2471, 4294901760
        %2473 = vmatmul.f32.gmra.mxu0 %v2472
        %v2474 = vpop.f32.mrf.mxu0
        %v2475 = vadd.f32 0.0, %v2474
        %2476 = vdwg.mxu0
        %2477 = vmatpush.msra.mxu0 0.0
        %2478 = vmatpush.msra.mxu0 0.0
        %2479 = vmatpush.msra.mxu0 0.0
        %2480 = vmatpush.msra.mxu0 0.0
        %2481 = vmatpush.msra.mxu0 0.0
        %2482 = vmatpush.msra.mxu0 0.0
        %2483 = vmatpush.msra.mxu0 0.0
        %2484 = vmatpush.msra.mxu0 0.0
        %2485 = vmatpush.msra.mxu0 0.0
        %2486 = vmatpush.msra.mxu0 0.0
        %2487 = vmatpush.msra.mxu0 0.0
        %2488 = vmatpush.msra.mxu0 0.0
        %v2489 = vand.u32 %v2367, 4294901760
        %v2490 = vsub.f32 %v2367, %v2489
        %v2491 = vand.u32 %v2490, 4294901760
        %v2492 = vsub.f32 %v2490, %v2491
        %v2493 = vand.u32 %v2492, 4294901760
        %2494 = vmatpush.msra.mxu0 %v2493
        %v2495 = vand.u32 %v2366, 4294901760
        %v2496 = vsub.f32 %v2366, %v2495
        %v2497 = vand.u32 %v2496, 4294901760
        %v2498 = vsub.f32 %v2496, %v2497
        %v2499 = vand.u32 %v2498, 4294901760
        %2500 = vmatpush.msra.mxu0 %v2499
        %v2501 = vand.u32 %v2365, 4294901760
        %v2502 = vsub.f32 %v2365, %v2501
        %v2503 = vand.u32 %v2502, 4294901760
        %v2504 = vsub.f32 %v2502, %v2503
        %v2505 = vand.u32 %v2504, 4294901760
        %2506 = vmatpush.msra.mxu0 %v2505
        %v2507 = vand.u32 %v2364, 4294901760
        %v2508 = vsub.f32 %v2364, %v2507
        %v2509 = vand.u32 %v2508, 4294901760
        %v2510 = vsub.f32 %v2508, %v2509
        %v2511 = vand.u32 %v2510, 4294901760
        %2512 = vmatpush.msra.mxu0 %v2511
        %v2513 = vand.u32 %v2369, 4294901760
        %2514 = vmatmul.f32.gmra.mxu0 %v2513
        %v2515 = vpop.f32.mrf.mxu0
        %v2516 = vadd.f32 %v2419, %v2515
        %v2517 = vand.u32 %v2372, 4294901760
        %2518 = vmatmul.f32.gmra.mxu0 %v2517
        %v2519 = vpop.f32.mrf.mxu0
        %v2520 = vadd.f32 %v2427, %v2519
        %v2521 = vand.u32 %v2375, 4294901760
        %2522 = vmatmul.f32.gmra.mxu0 %v2521
        %v2523 = vpop.f32.mrf.mxu0
        %v2524 = vadd.f32 %v2435, %v2523
        %v2525 = vand.u32 %v2378, 4294901760
        %2526 = vmatmul.f32.gmra.mxu0 %v2525
        %v2527 = vpop.f32.mrf.mxu0
        %v2528 = vadd.f32 %v2443, %v2527
        %v2529 = vand.u32 %v2381, 4294901760
        %2530 = vmatmul.f32.gmra.mxu0 %v2529
        %v2531 = vpop.f32.mrf.mxu0
        %v2532 = vadd.f32 %v2451, %v2531
        %v2533 = vand.u32 %v2384, 4294901760
        %2534 = vmatmul.f32.gmra.mxu0 %v2533
        %v2535 = vpop.f32.mrf.mxu0
        %v2536 = vadd.f32 %v2459, %v2535
        %v2537 = vand.u32 %v2387, 4294901760
        %2538 = vmatmul.f32.gmra.mxu0 %v2537
        %v2539 = vpop.f32.mrf.mxu0
        %v2540 = vadd.f32 %v2467, %v2539
        %v2541 = vand.u32 %v2390, 4294901760
        %2542 = vmatmul.f32.gmra.mxu0 %v2541
        %v2543 = vpop.f32.mrf.mxu0
        %v2544 = vadd.f32 %v2475, %v2543
        %2545 = vdwg.mxu0
        %2546 = vmatpush.msra.mxu0 0.0
        %2547 = vmatpush.msra.mxu0 0.0
        %2548 = vmatpush.msra.mxu0 0.0
        %2549 = vmatpush.msra.mxu0 0.0
        %2550 = vmatpush.msra.mxu0 0.0
        %2551 = vmatpush.msra.mxu0 0.0
        %2552 = vmatpush.msra.mxu0 0.0
        %2553 = vmatpush.msra.mxu0 0.0
        %2554 = vmatpush.msra.mxu0 0.0
        %2555 = vmatpush.msra.mxu0 0.0
        %2556 = vmatpush.msra.mxu0 0.0
        %2557 = vmatpush.msra.mxu0 0.0
        %v2558 = vand.u32 %v2367, 4294901760
        %v2559 = vsub.f32 %v2367, %v2558
        %2560 = vmatpush.msra.mxu0 %v2559
        %v2561 = vand.u32 %v2366, 4294901760
        %v2562 = vsub.f32 %v2366, %v2561
        %2563 = vmatpush.msra.mxu0 %v2562
        %v2564 = vand.u32 %v2365, 4294901760
        %v2565 = vsub.f32 %v2365, %v2564
        %2566 = vmatpush.msra.mxu0 %v2565
        %v2567 = vand.u32 %v2364, 4294901760
        %v2568 = vsub.f32 %v2364, %v2567
        %2569 = vmatpush.msra.mxu0 %v2568
        %v2570 = vand.u32 %v2369, 4294901760
        %v2571 = vsub.f32 %v2369, %v2570
        %2572 = vmatmul.f32.gmra.mxu0 %v2571
        %v2573 = vpop.f32.mrf.mxu0
        %v2574 = vadd.f32 %v2516, %v2573
        %v2575 = vand.u32 %v2372, 4294901760
        %v2576 = vsub.f32 %v2372, %v2575
        %2577 = vmatmul.f32.gmra.mxu0 %v2576
        %v2578 = vpop.f32.mrf.mxu0
        %v2579 = vadd.f32 %v2520, %v2578
        %v2580 = vand.u32 %v2375, 4294901760
        %v2581 = vsub.f32 %v2375, %v2580
        %2582 = vmatmul.f32.gmra.mxu0 %v2581
        %v2583 = vpop.f32.mrf.mxu0
        %v2584 = vadd.f32 %v2524, %v2583
        %v2585 = vand.u32 %v2378, 4294901760
        %v2586 = vsub.f32 %v2378, %v2585
        %2587 = vmatmul.f32.gmra.mxu0 %v2586
        %v2588 = vpop.f32.mrf.mxu0
        %v2589 = vadd.f32 %v2528, %v2588
        %v2590 = vand.u32 %v2381, 4294901760
        %v2591 = vsub.f32 %v2381, %v2590
        %2592 = vmatmul.f32.gmra.mxu0 %v2591
        %v2593 = vpop.f32.mrf.mxu0
        %v2594 = vadd.f32 %v2532, %v2593
        %v2595 = vand.u32 %v2384, 4294901760
        %v2596 = vsub.f32 %v2384, %v2595
        %2597 = vmatmul.f32.gmra.mxu0 %v2596
        %v2598 = vpop.f32.mrf.mxu0
        %v2599 = vadd.f32 %v2536, %v2598
        %v2600 = vand.u32 %v2387, 4294901760
        %v2601 = vsub.f32 %v2387, %v2600
        %2602 = vmatmul.f32.gmra.mxu0 %v2601
        %v2603 = vpop.f32.mrf.mxu0
        %v2604 = vadd.f32 %v2540, %v2603
        %v2605 = vand.u32 %v2390, 4294901760
        %v2606 = vsub.f32 %v2390, %v2605
        %2607 = vmatmul.f32.gmra.mxu0 %v2606
        %v2608 = vpop.f32.mrf.mxu0
        %v2609 = vadd.f32 %v2544, %v2608
        %2610 = vdwg.mxu0
        %2611 = vmatpush.msra.mxu0 0.0
        %2612 = vmatpush.msra.mxu0 0.0
        %2613 = vmatpush.msra.mxu0 0.0
        %2614 = vmatpush.msra.mxu0 0.0
        %2615 = vmatpush.msra.mxu0 0.0
        %2616 = vmatpush.msra.mxu0 0.0
        %2617 = vmatpush.msra.mxu0 0.0
        %2618 = vmatpush.msra.mxu0 0.0
        %2619 = vmatpush.msra.mxu0 0.0
        %2620 = vmatpush.msra.mxu0 0.0
        %2621 = vmatpush.msra.mxu0 0.0
        %2622 = vmatpush.msra.mxu0 0.0
        %v2623 = vand.u32 %v2367, 4294901760
        %2624 = vmatpush.msra.mxu0 %v2623
        %v2625 = vand.u32 %v2366, 4294901760
        %2626 = vmatpush.msra.mxu0 %v2625
        %v2627 = vand.u32 %v2365, 4294901760
        %2628 = vmatpush.msra.mxu0 %v2627
        %v2629 = vand.u32 %v2364, 4294901760
        %2630 = vmatpush.msra.mxu0 %v2629
        %v2631 = vand.u32 %v2369, 4294901760
        %v2632 = vsub.f32 %v2369, %v2631
        %v2633 = vand.u32 %v2632, 4294901760
        %2634 = vmatmul.f32.gmra.mxu0 %v2633
        %v2635 = vpop.f32.mrf.mxu0
        %v2636 = vadd.f32 %v2574, %v2635
        %v2637 = vand.u32 %v2372, 4294901760
        %v2638 = vsub.f32 %v2372, %v2637
        %v2639 = vand.u32 %v2638, 4294901760
        %2640 = vmatmul.f32.gmra.mxu0 %v2639
        %v2641 = vpop.f32.mrf.mxu0
        %v2642 = vadd.f32 %v2579, %v2641
        %v2643 = vand.u32 %v2375, 4294901760
        %v2644 = vsub.f32 %v2375, %v2643
        %v2645 = vand.u32 %v2644, 4294901760
        %2646 = vmatmul.f32.gmra.mxu0 %v2645
        %v2647 = vpop.f32.mrf.mxu0
        %v2648 = vadd.f32 %v2584, %v2647
        %v2649 = vand.u32 %v2378, 4294901760
        %v2650 = vsub.f32 %v2378, %v2649
        %v2651 = vand.u32 %v2650, 4294901760
        %2652 = vmatmul.f32.gmra.mxu0 %v2651
        %v2653 = vpop.f32.mrf.mxu0
        %v2654 = vadd.f32 %v2589, %v2653
        %v2655 = vand.u32 %v2381, 4294901760
        %v2656 = vsub.f32 %v2381, %v2655
        %v2657 = vand.u32 %v2656, 4294901760
        %2658 = vmatmul.f32.gmra.mxu0 %v2657
        %v2659 = vpop.f32.mrf.mxu0
        %v2660 = vadd.f32 %v2594, %v2659
        %v2661 = vand.u32 %v2384, 4294901760
        %v2662 = vsub.f32 %v2384, %v2661
        %v2663 = vand.u32 %v2662, 4294901760
        %2664 = vmatmul.f32.gmra.mxu0 %v2663
        %v2665 = vpop.f32.mrf.mxu0
        %v2666 = vadd.f32 %v2599, %v2665
        %v2667 = vand.u32 %v2387, 4294901760
        %v2668 = vsub.f32 %v2387, %v2667
        %v2669 = vand.u32 %v2668, 4294901760
        %2670 = vmatmul.f32.gmra.mxu0 %v2669
        %v2671 = vpop.f32.mrf.mxu0
        %v2672 = vadd.f32 %v2604, %v2671
        %v2673 = vand.u32 %v2390, 4294901760
        %v2674 = vsub.f32 %v2390, %v2673
        %v2675 = vand.u32 %v2674, 4294901760
        %2676 = vmatmul.f32.gmra.mxu0 %v2675
        %v2677 = vpop.f32.mrf.mxu0
        %v2678 = vadd.f32 %v2609, %v2677
        %2679 = vdwg.mxu0
        %2680 = vmatpush.msra.mxu0 0.0
        %2681 = vmatpush.msra.mxu0 0.0
        %2682 = vmatpush.msra.mxu0 0.0
        %2683 = vmatpush.msra.mxu0 0.0
        %2684 = vmatpush.msra.mxu0 0.0
        %2685 = vmatpush.msra.mxu0 0.0
        %2686 = vmatpush.msra.mxu0 0.0
        %2687 = vmatpush.msra.mxu0 0.0
        %2688 = vmatpush.msra.mxu0 0.0
        %2689 = vmatpush.msra.mxu0 0.0
        %2690 = vmatpush.msra.mxu0 0.0
        %2691 = vmatpush.msra.mxu0 0.0
        %v2692 = vand.u32 %v2367, 4294901760
        %v2693 = vsub.f32 %v2367, %v2692
        %v2694 = vand.u32 %v2693, 4294901760
        %2695 = vmatpush.msra.mxu0 %v2694
        %v2696 = vand.u32 %v2366, 4294901760
        %v2697 = vsub.f32 %v2366, %v2696
        %v2698 = vand.u32 %v2697, 4294901760
        %2699 = vmatpush.msra.mxu0 %v2698
        %v2700 = vand.u32 %v2365, 4294901760
        %v2701 = vsub.f32 %v2365, %v2700
        %v2702 = vand.u32 %v2701, 4294901760
        %2703 = vmatpush.msra.mxu0 %v2702
        %v2704 = vand.u32 %v2364, 4294901760
        %v2705 = vsub.f32 %v2364, %v2704
        %v2706 = vand.u32 %v2705, 4294901760
        %2707 = vmatpush.msra.mxu0 %v2706
        %v2708 = vand.u32 %v2369, 4294901760
        %2709 = vmatmul.f32.gmra.mxu0 %v2708
        %v2710 = vpop.f32.mrf.mxu0
        %v2711 = vadd.f32 %v2636, %v2710
        %v2712 = vand.u32 %v2372, 4294901760
        %2713 = vmatmul.f32.gmra.mxu0 %v2712
        %v2714 = vpop.f32.mrf.mxu0
        %v2715 = vadd.f32 %v2642, %v2714
        %v2716 = vand.u32 %v2375, 4294901760
        %2717 = vmatmul.f32.gmra.mxu0 %v2716
        %v2718 = vpop.f32.mrf.mxu0
        %v2719 = vadd.f32 %v2648, %v2718
        %v2720 = vand.u32 %v2378, 4294901760
        %2721 = vmatmul.f32.gmra.mxu0 %v2720
        %v2722 = vpop.f32.mrf.mxu0
        %v2723 = vadd.f32 %v2654, %v2722
        %v2724 = vand.u32 %v2381, 4294901760
        %2725 = vmatmul.f32.gmra.mxu0 %v2724
        %v2726 = vpop.f32.mrf.mxu0
        %v2727 = vadd.f32 %v2660, %v2726
        %v2728 = vand.u32 %v2384, 4294901760
        %2729 = vmatmul.f32.gmra.mxu0 %v2728
        %v2730 = vpop.f32.mrf.mxu0
        %v2731 = vadd.f32 %v2666, %v2730
        %v2732 = vand.u32 %v2387, 4294901760
        %2733 = vmatmul.f32.gmra.mxu0 %v2732
        %v2734 = vpop.f32.mrf.mxu0
        %v2735 = vadd.f32 %v2672, %v2734
        %v2736 = vand.u32 %v2390, 4294901760
        %2737 = vmatmul.f32.gmra.mxu0 %v2736
        %v2738 = vpop.f32.mrf.mxu0
        %v2739 = vadd.f32 %v2678, %v2738
        %2740 = vdwg.mxu0
        %2741 = vmatpush.msra.mxu0 0.0
        %2742 = vmatpush.msra.mxu0 0.0
        %2743 = vmatpush.msra.mxu0 0.0
        %2744 = vmatpush.msra.mxu0 0.0
        %2745 = vmatpush.msra.mxu0 0.0
        %2746 = vmatpush.msra.mxu0 0.0
        %2747 = vmatpush.msra.mxu0 0.0
        %2748 = vmatpush.msra.mxu0 0.0
        %2749 = vmatpush.msra.mxu0 0.0
        %2750 = vmatpush.msra.mxu0 0.0
        %2751 = vmatpush.msra.mxu0 0.0
        %2752 = vmatpush.msra.mxu0 0.0
        %v2753 = vand.u32 %v2367, 4294901760
        %2754 = vmatpush.msra.mxu0 %v2753
        %v2755 = vand.u32 %v2366, 4294901760
        %2756 = vmatpush.msra.mxu0 %v2755
        %v2757 = vand.u32 %v2365, 4294901760
        %2758 = vmatpush.msra.mxu0 %v2757
        %v2759 = vand.u32 %v2364, 4294901760
        %2760 = vmatpush.msra.mxu0 %v2759
        %v2761 = vand.u32 %v2369, 4294901760
        %2762 = vmatmul.f32.gmra.mxu0 %v2761
        %v2763 = vpop.f32.mrf.mxu0
        %v2764 = vadd.f32 %v2711, %v2763
        %v2765 = vand.u32 %v2372, 4294901760
        %2766 = vmatmul.f32.gmra.mxu0 %v2765
        %v2767 = vpop.f32.mrf.mxu0
        %v2768 = vadd.f32 %v2715, %v2767
        %v2769 = vand.u32 %v2375, 4294901760
        %2770 = vmatmul.f32.gmra.mxu0 %v2769
        %v2771 = vpop.f32.mrf.mxu0
        %v2772 = vadd.f32 %v2719, %v2771
        %v2773 = vand.u32 %v2378, 4294901760
        %2774 = vmatmul.f32.gmra.mxu0 %v2773
        %v2775 = vpop.f32.mrf.mxu0
        %v2776 = vadd.f32 %v2723, %v2775
        %v2777 = vand.u32 %v2381, 4294901760
        %2778 = vmatmul.f32.gmra.mxu0 %v2777
        %v2779 = vpop.f32.mrf.mxu0
        %v2780 = vadd.f32 %v2727, %v2779
        %v2781 = vand.u32 %v2384, 4294901760
        %2782 = vmatmul.f32.gmra.mxu0 %v2781
        %v2783 = vpop.f32.mrf.mxu0
        %v2784 = vadd.f32 %v2731, %v2783
        %v2785 = vand.u32 %v2387, 4294901760
        %2786 = vmatmul.f32.gmra.mxu0 %v2785
        %v2787 = vpop.f32.mrf.mxu0
        %v2788 = vadd.f32 %v2735, %v2787
        %v2789 = vand.u32 %v2390, 4294901760
        %2790 = vmatmul.f32.gmra.mxu0 %v2789
        %v2791 = vpop.f32.mrf.mxu0
        %v2792 = vadd.f32 %v2739, %v2791
        %2793 = vdwg.mxu0
        %vm2794 = vcmask 31744
        %v2795 = vsel %vm2794, %v2764, 0.0
        %v2796 = vrot.slane %v2795, 4
        %v2797 = vadd.f32 %v2795, %v2796
        %v2798 = vrot.slane %v2797, 2
        %v2799 = vadd.f32 %v2797, %v2798
        %v2800 = vrot.slane %v2799, 1
        %v2801 = vadd.f32 %v2799, %v2800
        %v2802 = vsel %vm2794, %v2768, 0.0
        %v2803 = vrot.slane %v2802, 4
        %v2804 = vadd.f32 %v2802, %v2803
        %v2805 = vrot.slane %v2804, 2
        %v2806 = vadd.f32 %v2804, %v2805
        %v2807 = vrot.slane %v2806, 1
        %v2808 = vadd.f32 %v2806, %v2807
        %v2809 = vsel %vm2794, %v2772, 0.0
        %v2810 = vrot.slane %v2809, 4
        %v2811 = vadd.f32 %v2809, %v2810
        %v2812 = vrot.slane %v2811, 2
        %v2813 = vadd.f32 %v2811, %v2812
        %v2814 = vrot.slane %v2813, 1
        %v2815 = vadd.f32 %v2813, %v2814
        %v2816 = vsel %vm2794, %v2776, 0.0
        %v2817 = vrot.slane %v2816, 4
        %v2818 = vadd.f32 %v2816, %v2817
        %v2819 = vrot.slane %v2818, 2
        %v2820 = vadd.f32 %v2818, %v2819
        %v2821 = vrot.slane %v2820, 1
        %v2822 = vadd.f32 %v2820, %v2821
        %v2823 = vsel %vm2794, %v2780, 0.0
        %v2824 = vrot.slane %v2823, 4
        %v2825 = vadd.f32 %v2823, %v2824
        %v2826 = vrot.slane %v2825, 2
        %v2827 = vadd.f32 %v2825, %v2826
        %v2828 = vrot.slane %v2827, 1
        %v2829 = vadd.f32 %v2827, %v2828
        %v2830 = vsel %vm2794, %v2784, 0.0
        %v2831 = vrot.slane %v2830, 4
        %v2832 = vadd.f32 %v2830, %v2831
        %v2833 = vrot.slane %v2832, 2
        %v2834 = vadd.f32 %v2832, %v2833
        %v2835 = vrot.slane %v2834, 1
        %v2836 = vadd.f32 %v2834, %v2835
        %v2837 = vsel %vm2794, %v2788, 0.0
        %v2838 = vrot.slane %v2837, 4
        %v2839 = vadd.f32 %v2837, %v2838
        %v2840 = vrot.slane %v2839, 2
        %v2841 = vadd.f32 %v2839, %v2840
        %v2842 = vrot.slane %v2841, 1
        %v2843 = vadd.f32 %v2841, %v2842
        %v2844 = vsel %vm2794, %v2792, 0.0
        %v2845 = vrot.slane %v2844, 4
        %v2846 = vadd.f32 %v2844, %v2845
        %v2847 = vrot.slane %v2846, 2
        %v2848 = vadd.f32 %v2846, %v2847
        %v2849 = vrot.slane %v2848, 1
        %v2850 = vadd.f32 %v2848, %v2849
        %v2851 = vrsqrt.pop %v2326
        %v2852 = vmul.f32 %v2851, %v2326
        %v2853 = vmul.f32 %v2852, %v2851
        %v2854 = vmul.f32 0.5, %v2853
        %v2855 = vsub.f32 1.5, %v2854
        %v2856 = vmul.f32 %v2851, %v2855
        %v2857 = vmul.f32 %v2326, %v2856
        %vm2858 = vcmp.eq.f32.partialorder %v2326, inf
        %v2859 = vsel %vm2858, %v2326, %v2857
        %vm2860 = vcmp.eq.f32.partialorder %v2326, 0.0
        %v2861 = vand.u32 %v2326, 2147483648
        %v2862 = vsel %vm2860, %v2861, %v2859
        %v2863 = vrsqrt.pop %v2330
        %v2864 = vmul.f32 %v2863, %v2330
        %v2865 = vmul.f32 %v2864, %v2863
        %v2866 = vmul.f32 0.5, %v2865
        %v2867 = vsub.f32 1.5, %v2866
        %v2868 = vmul.f32 %v2863, %v2867
        %v2869 = vmul.f32 %v2330, %v2868
        %vm2870 = vcmp.eq.f32.partialorder %v2330, inf
        %v2871 = vsel %vm2870, %v2330, %v2869
        %vm2872 = vcmp.eq.f32.partialorder %v2330, 0.0
        %v2873 = vand.u32 %v2330, 2147483648
        %v2874 = vsel %vm2872, %v2873, %v2871
        %v2875 = vrsqrt.pop %v2334
        %v2876 = vmul.f32 %v2875, %v2334
        %v2877 = vmul.f32 %v2876, %v2875
        %v2878 = vmul.f32 0.5, %v2877
        %v2879 = vsub.f32 1.5, %v2878
        %v2880 = vmul.f32 %v2875, %v2879
        %v2881 = vmul.f32 %v2334, %v2880
        %vm2882 = vcmp.eq.f32.partialorder %v2334, inf
        %v2883 = vsel %vm2882, %v2334, %v2881
        %vm2884 = vcmp.eq.f32.partialorder %v2334, 0.0
        %v2885 = vand.u32 %v2334, 2147483648
        %v2886 = vsel %vm2884, %v2885, %v2883
        %v2887 = vrsqrt.pop %v2338
        %v2888 = vmul.f32 %v2887, %v2338
        %v2889 = vmul.f32 %v2888, %v2887
        %v2890 = vmul.f32 0.5, %v2889
        %v2891 = vsub.f32 1.5, %v2890
        %v2892 = vmul.f32 %v2887, %v2891
        %v2893 = vmul.f32 %v2338, %v2892
        %vm2894 = vcmp.eq.f32.partialorder %v2338, inf
        %v2895 = vsel %vm2894, %v2338, %v2893
        %vm2896 = vcmp.eq.f32.partialorder %v2338, 0.0
        %v2897 = vand.u32 %v2338, 2147483648
        %v2898 = vsel %vm2896, %v2897, %v2895
        %v2899 = vrsqrt.pop %v2342
        %v2900 = vmul.f32 %v2899, %v2342
        %v2901 = vmul.f32 %v2900, %v2899
        %v2902 = vmul.f32 0.5, %v2901
        %v2903 = vsub.f32 1.5, %v2902
        %v2904 = vmul.f32 %v2899, %v2903
        %v2905 = vmul.f32 %v2342, %v2904
        %vm2906 = vcmp.eq.f32.partialorder %v2342, inf
        %v2907 = vsel %vm2906, %v2342, %v2905
        %vm2908 = vcmp.eq.f32.partialorder %v2342, 0.0
        %v2909 = vand.u32 %v2342, 2147483648
        %v2910 = vsel %vm2908, %v2909, %v2907
        %v2911 = vrsqrt.pop %v2346
        %v2912 = vmul.f32 %v2911, %v2346
        %v2913 = vmul.f32 %v2912, %v2911
        %v2914 = vmul.f32 0.5, %v2913
        %v2915 = vsub.f32 1.5, %v2914
        %v2916 = vmul.f32 %v2911, %v2915
        %v2917 = vmul.f32 %v2346, %v2916
        %vm2918 = vcmp.eq.f32.partialorder %v2346, inf
        %v2919 = vsel %vm2918, %v2346, %v2917
        %vm2920 = vcmp.eq.f32.partialorder %v2346, 0.0
        %v2921 = vand.u32 %v2346, 2147483648
        %v2922 = vsel %vm2920, %v2921, %v2919
        %v2923 = vrsqrt.pop %v2350
        %v2924 = vmul.f32 %v2923, %v2350
        %v2925 = vmul.f32 %v2924, %v2923
        %v2926 = vmul.f32 0.5, %v2925
        %v2927 = vsub.f32 1.5, %v2926
        %v2928 = vmul.f32 %v2923, %v2927
        %v2929 = vmul.f32 %v2350, %v2928
        %vm2930 = vcmp.eq.f32.partialorder %v2350, inf
        %v2931 = vsel %vm2930, %v2350, %v2929
        %vm2932 = vcmp.eq.f32.partialorder %v2350, 0.0
        %v2933 = vand.u32 %v2350, 2147483648
        %v2934 = vsel %vm2932, %v2933, %v2931
        %v2935 = vrsqrt.pop %v2354
        %v2936 = vmul.f32 %v2935, %v2354
        %v2937 = vmul.f32 %v2936, %v2935
        %v2938 = vmul.f32 0.5, %v2937
        %v2939 = vsub.f32 1.5, %v2938
        %v2940 = vmul.f32 %v2935, %v2939
        %v2941 = vmul.f32 %v2354, %v2940
        %vm2942 = vcmp.eq.f32.partialorder %v2354, inf
        %v2943 = vsel %vm2942, %v2354, %v2941
        %vm2944 = vcmp.eq.f32.partialorder %v2354, 0.0
        %v2945 = vand.u32 %v2354, 2147483648
        %v2946 = vsel %vm2944, %v2945, %v2943
        %v2947 = vrsqrt.pop %v2801
        %v2948 = vmul.f32 %v2947, %v2801
        %v2949 = vmul.f32 %v2948, %v2947
        %v2950 = vmul.f32 0.5, %v2949
        %v2951 = vsub.f32 1.5, %v2950
        %v2952 = vmul.f32 %v2947, %v2951
        %v2953 = vmul.f32 %v2801, %v2952
        %vm2954 = vcmp.eq.f32.partialorder %v2801, inf
        %v2955 = vsel %vm2954, %v2801, %v2953
        %vm2956 = vcmp.eq.f32.partialorder %v2801, 0.0
        %v2957 = vand.u32 %v2801, 2147483648
        %v2958 = vsel %vm2956, %v2957, %v2955
        %v2959 = vrsqrt.pop %v2808
        %v2960 = vmul.f32 %v2959, %v2808
        %v2961 = vmul.f32 %v2960, %v2959
        %v2962 = vmul.f32 0.5, %v2961
        %v2963 = vsub.f32 1.5, %v2962
        %v2964 = vmul.f32 %v2959, %v2963
        %v2965 = vmul.f32 %v2808, %v2964
        %vm2966 = vcmp.eq.f32.partialorder %v2808, inf
        %v2967 = vsel %vm2966, %v2808, %v2965
        %vm2968 = vcmp.eq.f32.partialorder %v2808, 0.0
        %v2969 = vand.u32 %v2808, 2147483648
        %v2970 = vsel %vm2968, %v2969, %v2967
        %v2971 = vrsqrt.pop %v2815
        %v2972 = vmul.f32 %v2971, %v2815
        %v2973 = vmul.f32 %v2972, %v2971
        %v2974 = vmul.f32 0.5, %v2973
        %v2975 = vsub.f32 1.5, %v2974
        %v2976 = vmul.f32 %v2971, %v2975
        %v2977 = vmul.f32 %v2815, %v2976
        %vm2978 = vcmp.eq.f32.partialorder %v2815, inf
        %v2979 = vsel %vm2978, %v2815, %v2977
        %vm2980 = vcmp.eq.f32.partialorder %v2815, 0.0
        %v2981 = vand.u32 %v2815, 2147483648
        %v2982 = vsel %vm2980, %v2981, %v2979
        %v2983 = vrsqrt.pop %v2822
        %v2984 = vmul.f32 %v2983, %v2822
        %v2985 = vmul.f32 %v2984, %v2983
        %v2986 = vmul.f32 0.5, %v2985
        %v2987 = vsub.f32 1.5, %v2986
        %v2988 = vmul.f32 %v2983, %v2987
        %v2989 = vmul.f32 %v2822, %v2988
        %vm2990 = vcmp.eq.f32.partialorder %v2822, inf
        %v2991 = vsel %vm2990, %v2822, %v2989
        %vm2992 = vcmp.eq.f32.partialorder %v2822, 0.0
        %v2993 = vand.u32 %v2822, 2147483648
        %v2994 = vsel %vm2992, %v2993, %v2991
        %v2995 = vrsqrt.pop %v2829
        %v2996 = vmul.f32 %v2995, %v2829
        %v2997 = vmul.f32 %v2996, %v2995
        %v2998 = vmul.f32 0.5, %v2997
        %v2999 = vsub.f32 1.5, %v2998
        %v3000 = vmul.f32 %v2995, %v2999
        %v3001 = vmul.f32 %v2829, %v3000
        %vm3002 = vcmp.eq.f32.partialorder %v2829, inf
        %v3003 = vsel %vm3002, %v2829, %v3001
        %vm3004 = vcmp.eq.f32.partialorder %v2829, 0.0
        %v3005 = vand.u32 %v2829, 2147483648
        %v3006 = vsel %vm3004, %v3005, %v3003
        %v3007 = vrsqrt.pop %v2836
        %v3008 = vmul.f32 %v3007, %v2836
        %v3009 = vmul.f32 %v3008, %v3007
        %v3010 = vmul.f32 0.5, %v3009
        %v3011 = vsub.f32 1.5, %v3010
        %v3012 = vmul.f32 %v3007, %v3011
        %v3013 = vmul.f32 %v2836, %v3012
        %vm3014 = vcmp.eq.f32.partialorder %v2836, inf
        %v3015 = vsel %vm3014, %v2836, %v3013
        %vm3016 = vcmp.eq.f32.partialorder %v2836, 0.0
        %v3017 = vand.u32 %v2836, 2147483648
        %v3018 = vsel %vm3016, %v3017, %v3015
        %v3019 = vrsqrt.pop %v2843
        %v3020 = vmul.f32 %v3019, %v2843
        %v3021 = vmul.f32 %v3020, %v3019
        %v3022 = vmul.f32 0.5, %v3021
        %v3023 = vsub.f32 1.5, %v3022
        %v3024 = vmul.f32 %v3019, %v3023
        %v3025 = vmul.f32 %v2843, %v3024
        %vm3026 = vcmp.eq.f32.partialorder %v2843, inf
        %v3027 = vsel %vm3026, %v2843, %v3025
        %vm3028 = vcmp.eq.f32.partialorder %v2843, 0.0
        %v3029 = vand.u32 %v2843, 2147483648
        %v3030 = vsel %vm3028, %v3029, %v3027
        %v3031 = vrsqrt.pop %v2850
        %v3032 = vmul.f32 %v3031, %v2850
        %v3033 = vmul.f32 %v3032, %v3031
        %v3034 = vmul.f32 0.5, %v3033
        %v3035 = vsub.f32 1.5, %v3034
        %v3036 = vmul.f32 %v3031, %v3035
        %v3037 = vmul.f32 %v2850, %v3036
        %vm3038 = vcmp.eq.f32.partialorder %v2850, inf
        %v3039 = vsel %vm3038, %v2850, %v3037
        %vm3040 = vcmp.eq.f32.partialorder %v2850, 0.0
        %v3041 = vand.u32 %v2850, 2147483648
        %v3042 = vsel %vm3040, %v3041, %v3039
        %v3043 = vmul.f32 %v2862, %v2958
        %v3044 = vmul.f32 %v2874, %v2970
        %v3045 = vmul.f32 %v2886, %v2982
        %v3046 = vmul.f32 %v2898, %v2994
        %v3047 = vmul.f32 %v2910, %v3006
        %v3048 = vmul.f32 %v2922, %v3018
        %v3049 = vmul.f32 %v2934, %v3030
        %v3050 = vmul.f32 %v2946, %v3042
        %v3051 = vsel %vm2794, %v3043, 0.0
        %3052 = vadd.xlane.f32.xlu0 %v3051
        %v3053 = vpop.xlane.xlu0 %3052
        %v3054 = vsel %vm2794, %v3044, 0.0
        %3055 = vadd.xlane.f32.xlu0 %v3054
        %v3056 = vpop.xlane.xlu0 %3055
        %v3057 = vsel %vm2794, %v3045, 0.0
        %3058 = vadd.xlane.f32.xlu0 %v3057
        %v3059 = vpop.xlane.xlu0 %3058
        %v3060 = vsel %vm2794, %v3046, 0.0
        %3061 = vadd.xlane.f32.xlu0 %v3060
        %v3062 = vpop.xlane.xlu0 %3061
        %v3063 = vsel %vm2794, %v3047, 0.0
        %3064 = vadd.xlane.f32.xlu0 %v3063
        %v3065 = vpop.xlane.xlu0 %3064
        %v3066 = vsel %vm2794, %v3048, 0.0
        %3067 = vadd.xlane.f32.xlu0 %v3066
        %v3068 = vpop.xlane.xlu0 %3067
        %v3069 = vsel %vm2794, %v3049, 0.0
        %3070 = vadd.xlane.f32.xlu0 %v3069
        %v3071 = vpop.xlane.xlu0 %3070
        %v3072 = vsel %vm2794, %v3050, 0.0
        %3073 = vadd.xlane.f32.xlu0 %v3072
        %v3074 = vpop.xlane.xlu0 %3073
        %v3075 = vrcp.pop %v3053
        %v3076 = vmul.f32 %v3053, %v3075
        %v3077 = vsub.f32 1.0, %v3076
        %v3078 = vmul.f32 %v3075, %v3077
        %v3079 = vadd.f32 %v3075, %v3078
        %vm3080 = vweird.f32 %v3053
        %vm3081 = vweird.f32 %v3075
        %vm3082 = vmor %vm3080, %vm3081
        %v3083 = vsel %vm3082, %v3075, %v3079
        %v3084 = vand.u32 2147483647, %v3053
        %vm3085 = vcmp.eq.f32.partialorder %v3084, 8.507059e+37
        %v3086 = vand.u32 %v3053, 2147483648
        %v3087 = vor.u32 1.1754944e-38, %v3086
        %v3088 = vsel %vm3085, %v3087, %v3083
        %v3089 = vmul.f32 1.0, %v3088
        %v3090 = vrcp.pop %v3056
        %v3091 = vmul.f32 %v3056, %v3090
        %v3092 = vsub.f32 1.0, %v3091
        %v3093 = vmul.f32 %v3090, %v3092
        %v3094 = vadd.f32 %v3090, %v3093
        %vm3095 = vweird.f32 %v3056
        %vm3096 = vweird.f32 %v3090
        %vm3097 = vmor %vm3095, %vm3096
        %v3098 = vsel %vm3097, %v3090, %v3094
        %v3099 = vand.u32 2147483647, %v3056
        %vm3100 = vcmp.eq.f32.partialorder %v3099, 8.507059e+37
        %v3101 = vand.u32 %v3056, 2147483648
        %v3102 = vor.u32 1.1754944e-38, %v3101
        %v3103 = vsel %vm3100, %v3102, %v3098
        %v3104 = vmul.f32 1.0, %v3103
        %v3105 = vrcp.pop %v3059
        %v3106 = vmul.f32 %v3059, %v3105
        %v3107 = vsub.f32 1.0, %v3106
        %v3108 = vmul.f32 %v3105, %v3107
        %v3109 = vadd.f32 %v3105, %v3108
        %vm3110 = vweird.f32 %v3059
        %vm3111 = vweird.f32 %v3105
        %vm3112 = vmor %vm3110, %vm3111
        %v3113 = vsel %vm3112, %v3105, %v3109
        %v3114 = vand.u32 2147483647, %v3059
        %vm3115 = vcmp.eq.f32.partialorder %v3114, 8.507059e+37
        %v3116 = vand.u32 %v3059, 2147483648
        %v3117 = vor.u32 1.1754944e-38, %v3116
        %v3118 = vsel %vm3115, %v3117, %v3113
        %v3119 = vmul.f32 1.0, %v3118
        %v3120 = vrcp.pop %v3062
        %v3121 = vmul.f32 %v3062, %v3120
        %v3122 = vsub.f32 1.0, %v3121
        %v3123 = vmul.f32 %v3120, %v3122
        %v3124 = vadd.f32 %v3120, %v3123
        %vm3125 = vweird.f32 %v3062
        %vm3126 = vweird.f32 %v3120
        %vm3127 = vmor %vm3125, %vm3126
        %v3128 = vsel %vm3127, %v3120, %v3124
        %v3129 = vand.u32 2147483647, %v3062
        %vm3130 = vcmp.eq.f32.partialorder %v3129, 8.507059e+37
        %v3131 = vand.u32 %v3062, 2147483648
        %v3132 = vor.u32 1.1754944e-38, %v3131
        %v3133 = vsel %vm3130, %v3132, %v3128
        %v3134 = vmul.f32 1.0, %v3133
        %v3135 = vrcp.pop %v3065
        %v3136 = vmul.f32 %v3065, %v3135
        %v3137 = vsub.f32 1.0, %v3136
        %v3138 = vmul.f32 %v3135, %v3137
        %v3139 = vadd.f32 %v3135, %v3138
        %vm3140 = vweird.f32 %v3065
        %vm3141 = vweird.f32 %v3135
        %vm3142 = vmor %vm3140, %vm3141
        %v3143 = vsel %vm3142, %v3135, %v3139
        %v3144 = vand.u32 2147483647, %v3065
        %vm3145 = vcmp.eq.f32.partialorder %v3144, 8.507059e+37
        %v3146 = vand.u32 %v3065, 2147483648
        %v3147 = vor.u32 1.1754944e-38, %v3146
        %v3148 = vsel %vm3145, %v3147, %v3143
        %v3149 = vmul.f32 1.0, %v3148
        %v3150 = vrcp.pop %v3068
        %v3151 = vmul.f32 %v3068, %v3150
        %v3152 = vsub.f32 1.0, %v3151
        %v3153 = vmul.f32 %v3150, %v3152
        %v3154 = vadd.f32 %v3150, %v3153
        %vm3155 = vweird.f32 %v3068
        %vm3156 = vweird.f32 %v3150
        %vm3157 = vmor %vm3155, %vm3156
        %v3158 = vsel %vm3157, %v3150, %v3154
        %v3159 = vand.u32 2147483647, %v3068
        %vm3160 = vcmp.eq.f32.partialorder %v3159, 8.507059e+37
        %v3161 = vand.u32 %v3068, 2147483648
        %v3162 = vor.u32 1.1754944e-38, %v3161
        %v3163 = vsel %vm3160, %v3162, %v3158
        %v3164 = vmul.f32 1.0, %v3163
        %v3165 = vrcp.pop %v3071
        %v3166 = vmul.f32 %v3071, %v3165
        %v3167 = vsub.f32 1.0, %v3166
        %v3168 = vmul.f32 %v3165, %v3167
        %v3169 = vadd.f32 %v3165, %v3168
        %vm3170 = vweird.f32 %v3071
        %vm3171 = vweird.f32 %v3165
        %vm3172 = vmor %vm3170, %vm3171
        %v3173 = vsel %vm3172, %v3165, %v3169
        %v3174 = vand.u32 2147483647, %v3071
        %vm3175 = vcmp.eq.f32.partialorder %v3174, 8.507059e+37
        %v3176 = vand.u32 %v3071, 2147483648
        %v3177 = vor.u32 1.1754944e-38, %v3176
        %v3178 = vsel %vm3175, %v3177, %v3173
        %v3179 = vmul.f32 1.0, %v3178
        %v3180 = vrcp.pop %v3074
        %v3181 = vmul.f32 %v3074, %v3180
        %v3182 = vsub.f32 1.0, %v3181
        %v3183 = vmul.f32 %v3180, %v3182
        %v3184 = vadd.f32 %v3180, %v3183
        %vm3185 = vweird.f32 %v3074
        %vm3186 = vweird.f32 %v3180
        %vm3187 = vmor %vm3185, %vm3186
        %v3188 = vsel %vm3187, %v3180, %v3184
        %v3189 = vand.u32 2147483647, %v3074
        %vm3190 = vcmp.eq.f32.partialorder %v3189, 8.507059e+37
        %v3191 = vand.u32 %v3074, 2147483648
        %v3192 = vor.u32 1.1754944e-38, %v3191
        %v3193 = vsel %vm3190, %v3192, %v3188
        %v3194 = vmul.f32 1.0, %v3193
        %v3195 = vmul.f32 %v1887, %v3089
        %v3196 = vmul.f32 %v1891, %v3104
        %v3197 = vmul.f32 %v1895, %v3119
        %v3198 = vmul.f32 %v1899, %v3134
        %v3199 = vmul.f32 %v1903, %v3149
        %v3200 = vmul.f32 %v1907, %v3164
        %v3201 = vmul.f32 %v1911, %v3179
        %v3202 = vmul.f32 %v1915, %v3194
        %v3203 = vld [vmem:[%s9] sm:$0xff]
        %vm3204 = vcmask 64512
        %v3206 = vsel %vm3204, %v3195, 0
        %v3209 = vsel %vm3204, %v3196, 0
        %v3212 = vsel %vm3204, %v3197, 0
        %v3215 = vsel %vm3204, %v3198, 0
        %v3218 = vsel %vm3204, %v3199, 0
        %v3221 = vsel %vm3204, %v3200, 0
        %v3224 = vsel %vm3204, %v3201, 0
        %v3227 = vsel %vm3204, %v3202, 0
        %3229 = vmatpush.msra.mxu0 0.0
        %3230 = vmatpush.msra.mxu0 0.0
        %3231 = vmatpush.msra.mxu0 0.0
        %3232 = vmatpush.msra.mxu0 0.0
        %3233 = vmatpush.msra.mxu0 0.0
        %3234 = vmatpush.msra.mxu0 0.0
        %3235 = vmatpush.msra.mxu0 0.0
        %3236 = vmatpush.msra.mxu0 0.0
        %3237 = vmatpush.msra.mxu0 0.0
        %3238 = vmatpush.msra.mxu0 0.0
        %3239 = vmatpush.msra.mxu0 0.0
        %3240 = vmatpush.msra.mxu0 0.0
        %3241 = vmatpush.msra.mxu0 0.0
        %3242 = vmatpush.msra.mxu0 0.0
        %3243 = vmatpush.msra.mxu0 0.0
        %v3244 = vand.u32 %v3203, 4294901760
        %3245 = vmatpush.msra.mxu0 %v3244
        %v3246 = vand.u32 %v3206, 4294901760
        %v3247 = vsub.f32 %v3206, %v3246
        %v3248 = vand.u32 %v3247, 4294901760
        %v3249 = vsub.f32 %v3247, %v3248
        %v3250 = vand.u32 %v3249, 4294901760
        %3251 = vmatmul.f32.gmra.mxu0 %v3250
        %v3252 = vpop.f32.mrf.mxu0
        %v3253 = vadd.f32 0.0, %v3252
        %v3254 = vand.u32 %v3209, 4294901760
        %v3255 = vsub.f32 %v3209, %v3254
        %v3256 = vand.u32 %v3255, 4294901760
        %v3257 = vsub.f32 %v3255, %v3256
        %v3258 = vand.u32 %v3257, 4294901760
        %3259 = vmatmul.f32.gmra.mxu0 %v3258
        %v3260 = vpop.f32.mrf.mxu0
        %v3261 = vadd.f32 0.0, %v3260
        %v3262 = vand.u32 %v3212, 4294901760
        %v3263 = vsub.f32 %v3212, %v3262
        %v3264 = vand.u32 %v3263, 4294901760
        %v3265 = vsub.f32 %v3263, %v3264
        %v3266 = vand.u32 %v3265, 4294901760
        %3267 = vmatmul.f32.gmra.mxu0 %v3266
        %v3268 = vpop.f32.mrf.mxu0
        %v3269 = vadd.f32 0.0, %v3268
        %v3270 = vand.u32 %v3215, 4294901760
        %v3271 = vsub.f32 %v3215, %v3270
        %v3272 = vand.u32 %v3271, 4294901760
        %v3273 = vsub.f32 %v3271, %v3272
        %v3274 = vand.u32 %v3273, 4294901760
        %3275 = vmatmul.f32.gmra.mxu0 %v3274
        %v3276 = vpop.f32.mrf.mxu0
        %v3277 = vadd.f32 0.0, %v3276
        %v3278 = vand.u32 %v3218, 4294901760
        %v3279 = vsub.f32 %v3218, %v3278
        %v3280 = vand.u32 %v3279, 4294901760
        %v3281 = vsub.f32 %v3279, %v3280
        %v3282 = vand.u32 %v3281, 4294901760
        %3283 = vmatmul.f32.gmra.mxu0 %v3282
        %v3284 = vpop.f32.mrf.mxu0
        %v3285 = vadd.f32 0.0, %v3284
        %v3286 = vand.u32 %v3221, 4294901760
        %v3287 = vsub.f32 %v3221, %v3286
        %v3288 = vand.u32 %v3287, 4294901760
        %v3289 = vsub.f32 %v3287, %v3288
        %v3290 = vand.u32 %v3289, 4294901760
        %3291 = vmatmul.f32.gmra.mxu0 %v3290
        %v3292 = vpop.f32.mrf.mxu0
        %v3293 = vadd.f32 0.0, %v3292
        %v3294 = vand.u32 %v3224, 4294901760
        %v3295 = vsub.f32 %v3224, %v3294
        %v3296 = vand.u32 %v3295, 4294901760
        %v3297 = vsub.f32 %v3295, %v3296
        %v3298 = vand.u32 %v3297, 4294901760
        %3299 = vmatmul.f32.gmra.mxu0 %v3298
        %v3300 = vpop.f32.mrf.mxu0
        %v3301 = vadd.f32 0.0, %v3300
        %v3302 = vand.u32 %v3227, 4294901760
        %v3303 = vsub.f32 %v3227, %v3302
        %v3304 = vand.u32 %v3303, 4294901760
        %v3305 = vsub.f32 %v3303, %v3304
        %v3306 = vand.u32 %v3305, 4294901760
        %3307 = vmatmul.f32.gmra.mxu0 %v3306
        %v3308 = vpop.f32.mrf.mxu0
        %v3309 = vadd.f32 0.0, %v3308
        %3310 = vdwg.mxu0
        %3311 = vmatpush.msra.mxu0 0.0
        %3312 = vmatpush.msra.mxu0 0.0
        %3313 = vmatpush.msra.mxu0 0.0
        %3314 = vmatpush.msra.mxu0 0.0
        %3315 = vmatpush.msra.mxu0 0.0
        %3316 = vmatpush.msra.mxu0 0.0
        %3317 = vmatpush.msra.mxu0 0.0
        %3318 = vmatpush.msra.mxu0 0.0
        %3319 = vmatpush.msra.mxu0 0.0
        %3320 = vmatpush.msra.mxu0 0.0
        %3321 = vmatpush.msra.mxu0 0.0
        %3322 = vmatpush.msra.mxu0 0.0
        %3323 = vmatpush.msra.mxu0 0.0
        %3324 = vmatpush.msra.mxu0 0.0
        %3325 = vmatpush.msra.mxu0 0.0
        %v3326 = vand.u32 %v3203, 4294901760
        %v3327 = vsub.f32 %v3203, %v3326
        %v3328 = vand.u32 %v3327, 4294901760
        %v3329 = vsub.f32 %v3327, %v3328
        %v3330 = vand.u32 %v3329, 4294901760
        %3331 = vmatpush.msra.mxu0 %v3330
        %v3332 = vand.u32 %v3206, 4294901760
        %3333 = vmatmul.f32.gmra.mxu0 %v3332
        %v3334 = vpop.f32.mrf.mxu0
        %v3335 = vadd.f32 %v3253, %v3334
        %v3336 = vand.u32 %v3209, 4294901760
        %3337 = vmatmul.f32.gmra.mxu0 %v3336
        %v3338 = vpop.f32.mrf.mxu0
        %v3339 = vadd.f32 %v3261, %v3338
        %v3340 = vand.u32 %v3212, 4294901760
        %3341 = vmatmul.f32.gmra.mxu0 %v3340
        %v3342 = vpop.f32.mrf.mxu0
        %v3343 = vadd.f32 %v3269, %v3342
        %v3344 = vand.u32 %v3215, 4294901760
        %3345 = vmatmul.f32.gmra.mxu0 %v3344
        %v3346 = vpop.f32.mrf.mxu0
        %v3347 = vadd.f32 %v3277, %v3346
        %v3348 = vand.u32 %v3218, 4294901760
        %3349 = vmatmul.f32.gmra.mxu0 %v3348
        %v3350 = vpop.f32.mrf.mxu0
        %v3351 = vadd.f32 %v3285, %v3350
        %v3352 = vand.u32 %v3221, 4294901760
        %3353 = vmatmul.f32.gmra.mxu0 %v3352
        %v3354 = vpop.f32.mrf.mxu0
        %v3355 = vadd.f32 %v3293, %v3354
        %v3356 = vand.u32 %v3224, 4294901760
        %3357 = vmatmul.f32.gmra.mxu0 %v3356
        %v3358 = vpop.f32.mrf.mxu0
        %v3359 = vadd.f32 %v3301, %v3358
        %v3360 = vand.u32 %v3227, 4294901760
        %3361 = vmatmul.f32.gmra.mxu0 %v3360
        %v3362 = vpop.f32.mrf.mxu0
        %v3363 = vadd.f32 %v3309, %v3362
        %3364 = vdwg.mxu0
        %3365 = vmatpush.msra.mxu0 0.0
        %3366 = vmatpush.msra.mxu0 0.0
        %3367 = vmatpush.msra.mxu0 0.0
        %3368 = vmatpush.msra.mxu0 0.0
        %3369 = vmatpush.msra.mxu0 0.0
        %3370 = vmatpush.msra.mxu0 0.0
        %3371 = vmatpush.msra.mxu0 0.0
        %3372 = vmatpush.msra.mxu0 0.0
        %3373 = vmatpush.msra.mxu0 0.0
        %3374 = vmatpush.msra.mxu0 0.0
        %3375 = vmatpush.msra.mxu0 0.0
        %3376 = vmatpush.msra.mxu0 0.0
        %3377 = vmatpush.msra.mxu0 0.0
        %3378 = vmatpush.msra.mxu0 0.0
        %3379 = vmatpush.msra.mxu0 0.0
        %v3380 = vand.u32 %v3203, 4294901760
        %v3381 = vsub.f32 %v3203, %v3380
        %3382 = vmatpush.msra.mxu0 %v3381
        %v3383 = vand.u32 %v3206, 4294901760
        %v3384 = vsub.f32 %v3206, %v3383
        %3385 = vmatmul.f32.gmra.mxu0 %v3384
        %v3386 = vpop.f32.mrf.mxu0
        %v3387 = vadd.f32 %v3335, %v3386
        %v3388 = vand.u32 %v3209, 4294901760
        %v3389 = vsub.f32 %v3209, %v3388
        %3390 = vmatmul.f32.gmra.mxu0 %v3389
        %v3391 = vpop.f32.mrf.mxu0
        %v3392 = vadd.f32 %v3339, %v3391
        %v3393 = vand.u32 %v3212, 4294901760
        %v3394 = vsub.f32 %v3212, %v3393
        %3395 = vmatmul.f32.gmra.mxu0 %v3394
        %v3396 = vpop.f32.mrf.mxu0
        %v3397 = vadd.f32 %v3343, %v3396
        %v3398 = vand.u32 %v3215, 4294901760
        %v3399 = vsub.f32 %v3215, %v3398
        %3400 = vmatmul.f32.gmra.mxu0 %v3399
        %v3401 = vpop.f32.mrf.mxu0
        %v3402 = vadd.f32 %v3347, %v3401
        %v3403 = vand.u32 %v3218, 4294901760
        %v3404 = vsub.f32 %v3218, %v3403
        %3405 = vmatmul.f32.gmra.mxu0 %v3404
        %v3406 = vpop.f32.mrf.mxu0
        %v3407 = vadd.f32 %v3351, %v3406
        %v3408 = vand.u32 %v3221, 4294901760
        %v3409 = vsub.f32 %v3221, %v3408
        %3410 = vmatmul.f32.gmra.mxu0 %v3409
        %v3411 = vpop.f32.mrf.mxu0
        %v3412 = vadd.f32 %v3355, %v3411
        %v3413 = vand.u32 %v3224, 4294901760
        %v3414 = vsub.f32 %v3224, %v3413
        %3415 = vmatmul.f32.gmra.mxu0 %v3414
        %v3416 = vpop.f32.mrf.mxu0
        %v3417 = vadd.f32 %v3359, %v3416
        %v3418 = vand.u32 %v3227, 4294901760
        %v3419 = vsub.f32 %v3227, %v3418
        %3420 = vmatmul.f32.gmra.mxu0 %v3419
        %v3421 = vpop.f32.mrf.mxu0
        %v3422 = vadd.f32 %v3363, %v3421
        %3423 = vdwg.mxu0
        %3424 = vmatpush.msra.mxu0 0.0
        %3425 = vmatpush.msra.mxu0 0.0
        %3426 = vmatpush.msra.mxu0 0.0
        %3427 = vmatpush.msra.mxu0 0.0
        %3428 = vmatpush.msra.mxu0 0.0
        %3429 = vmatpush.msra.mxu0 0.0
        %3430 = vmatpush.msra.mxu0 0.0
        %3431 = vmatpush.msra.mxu0 0.0
        %3432 = vmatpush.msra.mxu0 0.0
        %3433 = vmatpush.msra.mxu0 0.0
        %3434 = vmatpush.msra.mxu0 0.0
        %3435 = vmatpush.msra.mxu0 0.0
        %3436 = vmatpush.msra.mxu0 0.0
        %3437 = vmatpush.msra.mxu0 0.0
        %3438 = vmatpush.msra.mxu0 0.0
        %v3439 = vand.u32 %v3203, 4294901760
        %3440 = vmatpush.msra.mxu0 %v3439
        %v3441 = vand.u32 %v3206, 4294901760
        %v3442 = vsub.f32 %v3206, %v3441
        %v3443 = vand.u32 %v3442, 4294901760
        %3444 = vmatmul.f32.gmra.mxu0 %v3443
        %v3445 = vpop.f32.mrf.mxu0
        %v3446 = vadd.f32 %v3387, %v3445
        %v3447 = vand.u32 %v3209, 4294901760
        %v3448 = vsub.f32 %v3209, %v3447
        %v3449 = vand.u32 %v3448, 4294901760
        %3450 = vmatmul.f32.gmra.mxu0 %v3449
        %v3451 = vpop.f32.mrf.mxu0
        %v3452 = vadd.f32 %v3392, %v3451
        %v3453 = vand.u32 %v3212, 4294901760
        %v3454 = vsub.f32 %v3212, %v3453
        %v3455 = vand.u32 %v3454, 4294901760
        %3456 = vmatmul.f32.gmra.mxu0 %v3455
        %v3457 = vpop.f32.mrf.mxu0
        %v3458 = vadd.f32 %v3397, %v3457
        %v3459 = vand.u32 %v3215, 4294901760
        %v3460 = vsub.f32 %v3215, %v3459
        %v3461 = vand.u32 %v3460, 4294901760
        %3462 = vmatmul.f32.gmra.mxu0 %v3461
        %v3463 = vpop.f32.mrf.mxu0
        %v3464 = vadd.f32 %v3402, %v3463
        %v3465 = vand.u32 %v3218, 4294901760
        %v3466 = vsub.f32 %v3218, %v3465
        %v3467 = vand.u32 %v3466, 4294901760
        %3468 = vmatmul.f32.gmra.mxu0 %v3467
        %v3469 = vpop.f32.mrf.mxu0
        %v3470 = vadd.f32 %v3407, %v3469
        %v3471 = vand.u32 %v3221, 4294901760
        %v3472 = vsub.f32 %v3221, %v3471
        %v3473 = vand.u32 %v3472, 4294901760
        %3474 = vmatmul.f32.gmra.mxu0 %v3473
        %v3475 = vpop.f32.mrf.mxu0
        %v3476 = vadd.f32 %v3412, %v3475
        %v3477 = vand.u32 %v3224, 4294901760
        %v3478 = vsub.f32 %v3224, %v3477
        %v3479 = vand.u32 %v3478, 4294901760
        %3480 = vmatmul.f32.gmra.mxu0 %v3479
        %v3481 = vpop.f32.mrf.mxu0
        %v3482 = vadd.f32 %v3417, %v3481
        %v3483 = vand.u32 %v3227, 4294901760
        %v3484 = vsub.f32 %v3227, %v3483
        %v3485 = vand.u32 %v3484, 4294901760
        %3486 = vmatmul.f32.gmra.mxu0 %v3485
        %v3487 = vpop.f32.mrf.mxu0
        %v3488 = vadd.f32 %v3422, %v3487
        %3489 = vdwg.mxu0
        %3490 = vmatpush.msra.mxu0 0.0
        %3491 = vmatpush.msra.mxu0 0.0
        %3492 = vmatpush.msra.mxu0 0.0
        %3493 = vmatpush.msra.mxu0 0.0
        %3494 = vmatpush.msra.mxu0 0.0
        %3495 = vmatpush.msra.mxu0 0.0
        %3496 = vmatpush.msra.mxu0 0.0
        %3497 = vmatpush.msra.mxu0 0.0
        %3498 = vmatpush.msra.mxu0 0.0
        %3499 = vmatpush.msra.mxu0 0.0
        %3500 = vmatpush.msra.mxu0 0.0
        %3501 = vmatpush.msra.mxu0 0.0
        %3502 = vmatpush.msra.mxu0 0.0
        %3503 = vmatpush.msra.mxu0 0.0
        %3504 = vmatpush.msra.mxu0 0.0
        %v3505 = vand.u32 %v3203, 4294901760
        %v3506 = vsub.f32 %v3203, %v3505
        %v3507 = vand.u32 %v3506, 4294901760
        %3508 = vmatpush.msra.mxu0 %v3507
        %v3509 = vand.u32 %v3206, 4294901760
        %3510 = vmatmul.f32.gmra.mxu0 %v3509
        %v3511 = vpop.f32.mrf.mxu0
        %v3512 = vadd.f32 %v3446, %v3511
        %v3513 = vand.u32 %v3209, 4294901760
        %3514 = vmatmul.f32.gmra.mxu0 %v3513
        %v3515 = vpop.f32.mrf.mxu0
        %v3516 = vadd.f32 %v3452, %v3515
        %v3517 = vand.u32 %v3212, 4294901760
        %3518 = vmatmul.f32.gmra.mxu0 %v3517
        %v3519 = vpop.f32.mrf.mxu0
        %v3520 = vadd.f32 %v3458, %v3519
        %v3521 = vand.u32 %v3215, 4294901760
        %3522 = vmatmul.f32.gmra.mxu0 %v3521
        %v3523 = vpop.f32.mrf.mxu0
        %v3524 = vadd.f32 %v3464, %v3523
        %v3525 = vand.u32 %v3218, 4294901760
        %3526 = vmatmul.f32.gmra.mxu0 %v3525
        %v3527 = vpop.f32.mrf.mxu0
        %v3528 = vadd.f32 %v3470, %v3527
        %v3529 = vand.u32 %v3221, 4294901760
        %3530 = vmatmul.f32.gmra.mxu0 %v3529
        %v3531 = vpop.f32.mrf.mxu0
        %v3532 = vadd.f32 %v3476, %v3531
        %v3533 = vand.u32 %v3224, 4294901760
        %3534 = vmatmul.f32.gmra.mxu0 %v3533
        %v3535 = vpop.f32.mrf.mxu0
        %v3536 = vadd.f32 %v3482, %v3535
        %v3537 = vand.u32 %v3227, 4294901760
        %3538 = vmatmul.f32.gmra.mxu0 %v3537
        %v3539 = vpop.f32.mrf.mxu0
        %v3540 = vadd.f32 %v3488, %v3539
        %3541 = vdwg.mxu0
        %3542 = vmatpush.msra.mxu0 0.0
        %3543 = vmatpush.msra.mxu0 0.0
        %3544 = vmatpush.msra.mxu0 0.0
        %3545 = vmatpush.msra.mxu0 0.0
        %3546 = vmatpush.msra.mxu0 0.0
        %3547 = vmatpush.msra.mxu0 0.0
        %3548 = vmatpush.msra.mxu0 0.0
        %3549 = vmatpush.msra.mxu0 0.0
        %3550 = vmatpush.msra.mxu0 0.0
        %3551 = vmatpush.msra.mxu0 0.0
        %3552 = vmatpush.msra.mxu0 0.0
        %3553 = vmatpush.msra.mxu0 0.0
        %3554 = vmatpush.msra.mxu0 0.0
        %3555 = vmatpush.msra.mxu0 0.0
        %3556 = vmatpush.msra.mxu0 0.0
        %v3557 = vand.u32 %v3203, 4294901760
        %3558 = vmatpush.msra.mxu0 %v3557
        %v3559 = vand.u32 %v3206, 4294901760
        %3560 = vmatmul.f32.gmra.mxu0 %v3559
        %v3561 = vpop.f32.mrf.mxu0
        %v3562 = vadd.f32 %v3512, %v3561
        %v3563 = vand.u32 %v3209, 4294901760
        %3564 = vmatmul.f32.gmra.mxu0 %v3563
        %v3565 = vpop.f32.mrf.mxu0
        %v3566 = vadd.f32 %v3516, %v3565
        %v3567 = vand.u32 %v3212, 4294901760
        %3568 = vmatmul.f32.gmra.mxu0 %v3567
        %v3569 = vpop.f32.mrf.mxu0
        %v3570 = vadd.f32 %v3520, %v3569
        %v3571 = vand.u32 %v3215, 4294901760
        %3572 = vmatmul.f32.gmra.mxu0 %v3571
        %v3573 = vpop.f32.mrf.mxu0
        %v3574 = vadd.f32 %v3524, %v3573
        %v3575 = vand.u32 %v3218, 4294901760
        %3576 = vmatmul.f32.gmra.mxu0 %v3575
        %v3577 = vpop.f32.mrf.mxu0
        %v3578 = vadd.f32 %v3528, %v3577
        %v3579 = vand.u32 %v3221, 4294901760
        %3580 = vmatmul.f32.gmra.mxu0 %v3579
        %v3581 = vpop.f32.mrf.mxu0
        %v3582 = vadd.f32 %v3532, %v3581
        %v3583 = vand.u32 %v3224, 4294901760
        %3584 = vmatmul.f32.gmra.mxu0 %v3583
        %v3585 = vpop.f32.mrf.mxu0
        %v3586 = vadd.f32 %v3536, %v3585
        %v3587 = vand.u32 %v3227, 4294901760
        %3588 = vmatmul.f32.gmra.mxu0 %v3587
        %v3589 = vpop.f32.mrf.mxu0
        %v3590 = vadd.f32 %v3540, %v3589
        %3591 = vdwg.mxu0
        %v3592 = vld [vmem:[%s680] sm:$0xff]
        %v3593 = vld [vmem:[%s680 + $0x8] sm:$0xff]
        %v3594 = vld [vmem:[%s680 + $0x10] sm:$0xff]
        %v3595 = vld [vmem:[%s680 + $0x18] sm:$0xff]
        %v3596 = vld [vmem:[%s680 + $0x20] sm:$0xff]
        %v3597 = vld [vmem:[%s680 + $0x28] sm:$0xff]
        %v3598 = vld [vmem:[%s680 + $0x30] sm:$0xff]
        %v3599 = vld [vmem:[%s680 + $0x38] sm:$0xff]
        %3601 = vset.pattern.permute.xlu0 0
        %3602 = vperm.xlu0 %3601, %v1309
        %v3603 = vpop.permute.xlu0 %3602
        %3606 = vset.pattern.permute.xlu0 0
        %3607 = vperm.xlu0 %3606, %v1313
        %v3608 = vpop.permute.xlu0 %3607
        %3611 = vset.pattern.permute.xlu0 0
        %3612 = vperm.xlu0 %3611, %v1317
        %v3613 = vpop.permute.xlu0 %3612
        %3616 = vset.pattern.permute.xlu0 0
        %3617 = vperm.xlu0 %3616, %v1321
        %v3618 = vpop.permute.xlu0 %3617
        %3621 = vset.pattern.permute.xlu0 0
        %3622 = vperm.xlu0 %3621, %v1325
        %v3623 = vpop.permute.xlu0 %3622
        %3626 = vset.pattern.permute.xlu0 0
        %3627 = vperm.xlu0 %3626, %v1329
        %v3628 = vpop.permute.xlu0 %3627
        %3631 = vset.pattern.permute.xlu0 0
        %3632 = vperm.xlu0 %3631, %v1333
        %v3633 = vpop.permute.xlu0 %3632
        %3636 = vset.pattern.permute.xlu0 0
        %3637 = vperm.xlu0 %3636, %v1337
        %v3638 = vpop.permute.xlu0 %3637
        %v3640 = vmul.f32 %v3592, %v3603
        %v3641 = vmul.f32 %v3593, %v3608
        %v3642 = vmul.f32 %v3594, %v3613
        %v3643 = vmul.f32 %v3595, %v3618
        %v3644 = vmul.f32 %v3596, %v3623
        %v3645 = vmul.f32 %v3597, %v3628
        %v3646 = vmul.f32 %v3598, %v3633
        %v3647 = vmul.f32 %v3599, %v3638
        %v3648 = vadd.f32 %v3640, 0.0
        %v3649 = vadd.f32 %v3641, 0.0
        %v3650 = vadd.f32 %v3642, 0.0
        %v3651 = vadd.f32 %v3643, 0.0
        %v3652 = vadd.f32 %v3644, 0.0
        %v3653 = vadd.f32 %v3645, 0.0
        %v3654 = vadd.f32 %v3646, 0.0
        %v3655 = vadd.f32 %v3647, 0.0
        %s3656 = scalar_lea.vmem %s680, 64 [#allocation2]
        %v3657 = vld [vmem:[%s3656] sm:$0xff]
        %v3658 = vld [vmem:[%s3656 + $0x8] sm:$0xff]
        %v3659 = vld [vmem:[%s3656 + $0x10] sm:$0xff]
        %v3660 = vld [vmem:[%s3656 + $0x18] sm:$0xff]
        %v3661 = vld [vmem:[%s3656 + $0x20] sm:$0xff]
        %v3662 = vld [vmem:[%s3656 + $0x28] sm:$0xff]
        %v3663 = vld [vmem:[%s3656 + $0x30] sm:$0xff]
        %v3664 = vld [vmem:[%s3656 + $0x38] sm:$0xff]
        %3665 = vset.pattern.permute.xlu0 1
        %3666 = vperm.xlu0 %3665, %v1309
        %v3667 = vpop.permute.xlu0 %3666
        %3669 = vset.pattern.permute.xlu0 1
        %3670 = vperm.xlu0 %3669, %v1313
        %v3671 = vpop.permute.xlu0 %3670
        %3673 = vset.pattern.permute.xlu0 1
        %3674 = vperm.xlu0 %3673, %v1317
        %v3675 = vpop.permute.xlu0 %3674
        %3677 = vset.pattern.permute.xlu0 1
        %3678 = vperm.xlu0 %3677, %v1321
        %v3679 = vpop.permute.xlu0 %3678
        %3681 = vset.pattern.permute.xlu0 1
        %3682 = vperm.xlu0 %3681, %v1325
        %v3683 = vpop.permute.xlu0 %3682
        %3685 = vset.pattern.permute.xlu0 1
        %3686 = vperm.xlu0 %3685, %v1329
        %v3687 = vpop.permute.xlu0 %3686
        %3689 = vset.pattern.permute.xlu0 1
        %3690 = vperm.xlu0 %3689, %v1333
        %v3691 = vpop.permute.xlu0 %3690
        %3693 = vset.pattern.permute.xlu0 1
        %3694 = vperm.xlu0 %3693, %v1337
        %v3695 = vpop.permute.xlu0 %3694
        %v3697 = vmul.f32 %v3657, %v3667
        %v3698 = vmul.f32 %v3658, %v3671
        %v3699 = vmul.f32 %v3659, %v3675
        %v3700 = vmul.f32 %v3660, %v3679
        %v3701 = vmul.f32 %v3661, %v3683
        %v3702 = vmul.f32 %v3662, %v3687
        %v3703 = vmul.f32 %v3663, %v3691
        %v3704 = vmul.f32 %v3664, %v3695
        %v3705 = vadd.f32 %v3648, %v3697
        %v3706 = vadd.f32 %v3649, %v3698
        %v3707 = vadd.f32 %v3650, %v3699
        %v3708 = vadd.f32 %v3651, %v3700
        %v3709 = vadd.f32 %v3652, %v3701
        %v3710 = vadd.f32 %v3653, %v3702
        %v3711 = vadd.f32 %v3654, %v3703
        %v3712 = vadd.f32 %v3655, %v3704
        %s3713 = scalar_lea.vmem %s680, 128 [#allocation2]
        %v3714 = vld [vmem:[%s3713] sm:$0xff]
        %v3715 = vld [vmem:[%s3713 + $0x8] sm:$0xff]
        %v3716 = vld [vmem:[%s3713 + $0x10] sm:$0xff]
        %v3717 = vld [vmem:[%s3713 + $0x18] sm:$0xff]
        %v3718 = vld [vmem:[%s3713 + $0x20] sm:$0xff]
        %v3719 = vld [vmem:[%s3713 + $0x28] sm:$0xff]
        %v3720 = vld [vmem:[%s3713 + $0x30] sm:$0xff]
        %v3721 = vld [vmem:[%s3713 + $0x38] sm:$0xff]
        %3722 = vset.pattern.permute.xlu0 2
        %3723 = vperm.xlu0 %3722, %v1309
        %v3724 = vpop.permute.xlu0 %3723
        %3726 = vset.pattern.permute.xlu0 2
        %3727 = vperm.xlu0 %3726, %v1313
        %v3728 = vpop.permute.xlu0 %3727
        %3730 = vset.pattern.permute.xlu0 2
        %3731 = vperm.xlu0 %3730, %v1317
        %v3732 = vpop.permute.xlu0 %3731
        %3734 = vset.pattern.permute.xlu0 2
        %3735 = vperm.xlu0 %3734, %v1321
        %v3736 = vpop.permute.xlu0 %3735
        %3738 = vset.pattern.permute.xlu0 2
        %3739 = vperm.xlu0 %3738, %v1325
        %v3740 = vpop.permute.xlu0 %3739
        %3742 = vset.pattern.permute.xlu0 2
        %3743 = vperm.xlu0 %3742, %v1329
        %v3744 = vpop.permute.xlu0 %3743
        %3746 = vset.pattern.permute.xlu0 2
        %3747 = vperm.xlu0 %3746, %v1333
        %v3748 = vpop.permute.xlu0 %3747
        %3750 = vset.pattern.permute.xlu0 2
        %3751 = vperm.xlu0 %3750, %v1337
        %v3752 = vpop.permute.xlu0 %3751
        %v3754 = vmul.f32 %v3714, %v3724
        %v3755 = vmul.f32 %v3715, %v3728
        %v3756 = vmul.f32 %v3716, %v3732
        %v3757 = vmul.f32 %v3717, %v3736
        %v3758 = vmul.f32 %v3718, %v3740
        %v3759 = vmul.f32 %v3719, %v3744
        %v3760 = vmul.f32 %v3720, %v3748
        %v3761 = vmul.f32 %v3721, %v3752
        %v3762 = vadd.f32 %v3705, %v3754
        %v3763 = vadd.f32 %v3706, %v3755
        %v3764 = vadd.f32 %v3707, %v3756
        %v3765 = vadd.f32 %v3708, %v3757
        %v3766 = vadd.f32 %v3709, %v3758
        %v3767 = vadd.f32 %v3710, %v3759
        %v3768 = vadd.f32 %v3711, %v3760
        %v3769 = vadd.f32 %v3712, %v3761
        %s3770 = scalar_lea.vmem %s680, 192 [#allocation2]
        %v3771 = vld [vmem:[%s3770] sm:$0xff]
        %v3772 = vld [vmem:[%s3770 + $0x8] sm:$0xff]
        %v3773 = vld [vmem:[%s3770 + $0x10] sm:$0xff]
        %v3774 = vld [vmem:[%s3770 + $0x18] sm:$0xff]
        %v3775 = vld [vmem:[%s3770 + $0x20] sm:$0xff]
        %v3776 = vld [vmem:[%s3770 + $0x28] sm:$0xff]
        %v3777 = vld [vmem:[%s3770 + $0x30] sm:$0xff]
        %v3778 = vld [vmem:[%s3770 + $0x38] sm:$0xff]
        %3779 = vset.pattern.permute.xlu0 3
        %3780 = vperm.xlu0 %3779, %v1309
        %v3781 = vpop.permute.xlu0 %3780
        %3783 = vset.pattern.permute.xlu0 3
        %3784 = vperm.xlu0 %3783, %v1313
        %v3785 = vpop.permute.xlu0 %3784
        %3787 = vset.pattern.permute.xlu0 3
        %3788 = vperm.xlu0 %3787, %v1317
        %v3789 = vpop.permute.xlu0 %3788
        %3791 = vset.pattern.permute.xlu0 3
        %3792 = vperm.xlu0 %3791, %v1321
        %v3793 = vpop.permute.xlu0 %3792
        %3795 = vset.pattern.permute.xlu0 3
        %3796 = vperm.xlu0 %3795, %v1325
        %v3797 = vpop.permute.xlu0 %3796
        %3799 = vset.pattern.permute.xlu0 3
        %3800 = vperm.xlu0 %3799, %v1329
        %v3801 = vpop.permute.xlu0 %3800
        %3803 = vset.pattern.permute.xlu0 3
        %3804 = vperm.xlu0 %3803, %v1333
        %v3805 = vpop.permute.xlu0 %3804
        %3807 = vset.pattern.permute.xlu0 3
        %3808 = vperm.xlu0 %3807, %v1337
        %v3809 = vpop.permute.xlu0 %3808
        %v3811 = vmul.f32 %v3771, %v3781
        %v3812 = vmul.f32 %v3772, %v3785
        %v3813 = vmul.f32 %v3773, %v3789
        %v3814 = vmul.f32 %v3774, %v3793
        %v3815 = vmul.f32 %v3775, %v3797
        %v3816 = vmul.f32 %v3776, %v3801
        %v3817 = vmul.f32 %v3777, %v3805
        %v3818 = vmul.f32 %v3778, %v3809
        %v3819 = vadd.f32 %v3762, %v3811
        %v3820 = vadd.f32 %v3763, %v3812
        %v3821 = vadd.f32 %v3764, %v3813
        %v3822 = vadd.f32 %v3765, %v3814
        %v3823 = vadd.f32 %v3766, %v3815
        %v3824 = vadd.f32 %v3767, %v3816
        %v3825 = vadd.f32 %v3768, %v3817
        %v3826 = vadd.f32 %v3769, %v3818
        %s3827 = scalar_lea.vmem %s680, 256 [#allocation2]
        %v3828 = vld [vmem:[%s3827] sm:$0xff]
        %v3829 = vld [vmem:[%s3827 + $0x8] sm:$0xff]
        %v3830 = vld [vmem:[%s3827 + $0x10] sm:$0xff]
        %v3831 = vld [vmem:[%s3827 + $0x18] sm:$0xff]
        %v3832 = vld [vmem:[%s3827 + $0x20] sm:$0xff]
        %v3833 = vld [vmem:[%s3827 + $0x28] sm:$0xff]
        %v3834 = vld [vmem:[%s3827 + $0x30] sm:$0xff]
        %v3835 = vld [vmem:[%s3827 + $0x38] sm:$0xff]
        %3836 = vset.pattern.permute.xlu0 4
        %3837 = vperm.xlu0 %3836, %v1309
        %v3838 = vpop.permute.xlu0 %3837
        %3840 = vset.pattern.permute.xlu0 4
        %3841 = vperm.xlu0 %3840, %v1313
        %v3842 = vpop.permute.xlu0 %3841
        %3844 = vset.pattern.permute.xlu0 4
        %3845 = vperm.xlu0 %3844, %v1317
        %v3846 = vpop.permute.xlu0 %3845
        %3848 = vset.pattern.permute.xlu0 4
        %3849 = vperm.xlu0 %3848, %v1321
        %v3850 = vpop.permute.xlu0 %3849
        %3852 = vset.pattern.permute.xlu0 4
        %3853 = vperm.xlu0 %3852, %v1325
        %v3854 = vpop.permute.xlu0 %3853
        %3856 = vset.pattern.permute.xlu0 4
        %3857 = vperm.xlu0 %3856, %v1329
        %v3858 = vpop.permute.xlu0 %3857
        %3860 = vset.pattern.permute.xlu0 4
        %3861 = vperm.xlu0 %3860, %v1333
        %v3862 = vpop.permute.xlu0 %3861
        %3864 = vset.pattern.permute.xlu0 4
        %3865 = vperm.xlu0 %3864, %v1337
        %v3866 = vpop.permute.xlu0 %3865
        %v3868 = vmul.f32 %v3828, %v3838
        %v3869 = vmul.f32 %v3829, %v3842
        %v3870 = vmul.f32 %v3830, %v3846
        %v3871 = vmul.f32 %v3831, %v3850
        %v3872 = vmul.f32 %v3832, %v3854
        %v3873 = vmul.f32 %v3833, %v3858
        %v3874 = vmul.f32 %v3834, %v3862
        %v3875 = vmul.f32 %v3835, %v3866
        %v3876 = vadd.f32 %v3819, %v3868
        %v3877 = vadd.f32 %v3820, %v3869
        %v3878 = vadd.f32 %v3821, %v3870
        %v3879 = vadd.f32 %v3822, %v3871
        %v3880 = vadd.f32 %v3823, %v3872
        %v3881 = vadd.f32 %v3824, %v3873
        %v3882 = vadd.f32 %v3825, %v3874
        %v3883 = vadd.f32 %v3826, %v3875
        %s3884 = scalar_lea.vmem %s680, 320 [#allocation2]
        %v3885 = vld [vmem:[%s3884] sm:$0xff]
        %v3886 = vld [vmem:[%s3884 + $0x8] sm:$0xff]
        %v3887 = vld [vmem:[%s3884 + $0x10] sm:$0xff]
        %v3888 = vld [vmem:[%s3884 + $0x18] sm:$0xff]
        %v3889 = vld [vmem:[%s3884 + $0x20] sm:$0xff]
        %v3890 = vld [vmem:[%s3884 + $0x28] sm:$0xff]
        %v3891 = vld [vmem:[%s3884 + $0x30] sm:$0xff]
        %v3892 = vld [vmem:[%s3884 + $0x38] sm:$0xff]
        %3893 = vset.pattern.permute.xlu0 5
        %3894 = vperm.xlu0 %3893, %v1309
        %v3895 = vpop.permute.xlu0 %3894
        %3897 = vset.pattern.permute.xlu0 5
        %3898 = vperm.xlu0 %3897, %v1313
        %v3899 = vpop.permute.xlu0 %3898
        %3901 = vset.pattern.permute.xlu0 5
        %3902 = vperm.xlu0 %3901, %v1317
        %v3903 = vpop.permute.xlu0 %3902
        %3905 = vset.pattern.permute.xlu0 5
        %3906 = vperm.xlu0 %3905, %v1321
        %v3907 = vpop.permute.xlu0 %3906
        %3909 = vset.pattern.permute.xlu0 5
        %3910 = vperm.xlu0 %3909, %v1325
        %v3911 = vpop.permute.xlu0 %3910
        %3913 = vset.pattern.permute.xlu0 5
        %3914 = vperm.xlu0 %3913, %v1329
        %v3915 = vpop.permute.xlu0 %3914
        %3917 = vset.pattern.permute.xlu0 5
        %3918 = vperm.xlu0 %3917, %v1333
        %v3919 = vpop.permute.xlu0 %3918
        %3921 = vset.pattern.permute.xlu0 5
        %3922 = vperm.xlu0 %3921, %v1337
        %v3923 = vpop.permute.xlu0 %3922
        %v3925 = vmul.f32 %v3885, %v3895
        %v3926 = vmul.f32 %v3886, %v3899
        %v3927 = vmul.f32 %v3887, %v3903
        %v3928 = vmul.f32 %v3888, %v3907
        %v3929 = vmul.f32 %v3889, %v3911
        %v3930 = vmul.f32 %v3890, %v3915
        %v3931 = vmul.f32 %v3891, %v3919
        %v3932 = vmul.f32 %v3892, %v3923
        %v3933 = vadd.f32 %v3876, %v3925
        %v3934 = vadd.f32 %v3877, %v3926
        %v3935 = vadd.f32 %v3878, %v3927
        %v3936 = vadd.f32 %v3879, %v3928
        %v3937 = vadd.f32 %v3880, %v3929
        %v3938 = vadd.f32 %v3881, %v3930
        %v3939 = vadd.f32 %v3882, %v3931
        %v3940 = vadd.f32 %v3883, %v3932
        %s3941 = scalar_lea.vmem %s680, 384 [#allocation2]
        %v3942 = vld [vmem:[%s3941] sm:$0xff]
        %v3943 = vld [vmem:[%s3941 + $0x8] sm:$0xff]
        %v3944 = vld [vmem:[%s3941 + $0x10] sm:$0xff]
        %v3945 = vld [vmem:[%s3941 + $0x18] sm:$0xff]
        %v3946 = vld [vmem:[%s3941 + $0x20] sm:$0xff]
        %v3947 = vld [vmem:[%s3941 + $0x28] sm:$0xff]
        %v3948 = vld [vmem:[%s3941 + $0x30] sm:$0xff]
        %v3949 = vld [vmem:[%s3941 + $0x38] sm:$0xff]
        %3950 = vset.pattern.permute.xlu0 6
        %3951 = vperm.xlu0 %3950, %v1309
        %v3952 = vpop.permute.xlu0 %3951
        %3954 = vset.pattern.permute.xlu0 6
        %3955 = vperm.xlu0 %3954, %v1313
        %v3956 = vpop.permute.xlu0 %3955
        %3958 = vset.pattern.permute.xlu0 6
        %3959 = vperm.xlu0 %3958, %v1317
        %v3960 = vpop.permute.xlu0 %3959
        %3962 = vset.pattern.permute.xlu0 6
        %3963 = vperm.xlu0 %3962, %v1321
        %v3964 = vpop.permute.xlu0 %3963
        %3966 = vset.pattern.permute.xlu0 6
        %3967 = vperm.xlu0 %3966, %v1325
        %v3968 = vpop.permute.xlu0 %3967
        %3970 = vset.pattern.permute.xlu0 6
        %3971 = vperm.xlu0 %3970, %v1329
        %v3972 = vpop.permute.xlu0 %3971
        %3974 = vset.pattern.permute.xlu0 6
        %3975 = vperm.xlu0 %3974, %v1333
        %v3976 = vpop.permute.xlu0 %3975
        %3978 = vset.pattern.permute.xlu0 6
        %3979 = vperm.xlu0 %3978, %v1337
        %v3980 = vpop.permute.xlu0 %3979
        %v3982 = vmul.f32 %v3942, %v3952
        %v3983 = vmul.f32 %v3943, %v3956
        %v3984 = vmul.f32 %v3944, %v3960
        %v3985 = vmul.f32 %v3945, %v3964
        %v3986 = vmul.f32 %v3946, %v3968
        %v3987 = vmul.f32 %v3947, %v3972
        %v3988 = vmul.f32 %v3948, %v3976
        %v3989 = vmul.f32 %v3949, %v3980
        %v3990 = vadd.f32 %v3933, %v3982
        %v3991 = vadd.f32 %v3934, %v3983
        %v3992 = vadd.f32 %v3935, %v3984
        %v3993 = vadd.f32 %v3936, %v3985
        %v3994 = vadd.f32 %v3937, %v3986
        %v3995 = vadd.f32 %v3938, %v3987
        %v3996 = vadd.f32 %v3939, %v3988
        %v3997 = vadd.f32 %v3940, %v3989
        %s3998 = scalar_lea.vmem %s680, 448 [#allocation2]
        %v3999 = vld [vmem:[%s3998] sm:$0xff]
        %v4000 = vld [vmem:[%s3998 + $0x8] sm:$0xff]
        %v4001 = vld [vmem:[%s3998 + $0x10] sm:$0xff]
        %v4002 = vld [vmem:[%s3998 + $0x18] sm:$0xff]
        %v4003 = vld [vmem:[%s3998 + $0x20] sm:$0xff]
        %v4004 = vld [vmem:[%s3998 + $0x28] sm:$0xff]
        %v4005 = vld [vmem:[%s3998 + $0x30] sm:$0xff]
        %v4006 = vld [vmem:[%s3998 + $0x38] sm:$0xff]
        %4007 = vset.pattern.permute.xlu0 7
        %4008 = vperm.xlu0 %4007, %v1309
        %v4009 = vpop.permute.xlu0 %4008
        %4011 = vset.pattern.permute.xlu0 7
        %4012 = vperm.xlu0 %4011, %v1313
        %v4013 = vpop.permute.xlu0 %4012
        %4015 = vset.pattern.permute.xlu0 7
        %4016 = vperm.xlu0 %4015, %v1317
        %v4017 = vpop.permute.xlu0 %4016
        %4019 = vset.pattern.permute.xlu0 7
        %4020 = vperm.xlu0 %4019, %v1321
        %v4021 = vpop.permute.xlu0 %4020
        %4023 = vset.pattern.permute.xlu0 7
        %4024 = vperm.xlu0 %4023, %v1325
        %v4025 = vpop.permute.xlu0 %4024
        %4027 = vset.pattern.permute.xlu0 7
        %4028 = vperm.xlu0 %4027, %v1329
        %v4029 = vpop.permute.xlu0 %4028
        %4031 = vset.pattern.permute.xlu0 7
        %4032 = vperm.xlu0 %4031, %v1333
        %v4033 = vpop.permute.xlu0 %4032
        %4035 = vset.pattern.permute.xlu0 7
        %4036 = vperm.xlu0 %4035, %v1337
        %v4037 = vpop.permute.xlu0 %4036
        %v4039 = vmul.f32 %v3999, %v4009
        %v4040 = vmul.f32 %v4000, %v4013
        %v4041 = vmul.f32 %v4001, %v4017
        %v4042 = vmul.f32 %v4002, %v4021
        %v4043 = vmul.f32 %v4003, %v4025
        %v4044 = vmul.f32 %v4004, %v4029
        %v4045 = vmul.f32 %v4005, %v4033
        %v4046 = vmul.f32 %v4006, %v4037
        %v4047 = vadd.f32 %v3990, %v4039
        %v4048 = vadd.f32 %v3991, %v4040
        %v4049 = vadd.f32 %v3992, %v4041
        %v4050 = vadd.f32 %v3993, %v4042
        %v4051 = vadd.f32 %v3994, %v4043
        %v4052 = vadd.f32 %v3995, %v4044
        %v4053 = vadd.f32 %v3996, %v4045
        %v4054 = vadd.f32 %v3997, %v4046
        %v4055 = vmul.f32 %v4047, %v3562
        %v4056 = vmul.f32 %v4048, %v3566
        %v4057 = vmul.f32 %v4049, %v3570
        %v4058 = vmul.f32 %v4050, %v3574
        %v4059 = vmul.f32 %v4051, %v3578
        %v4060 = vmul.f32 %v4052, %v3582
        %v4061 = vmul.f32 %v4053, %v3586
        %v4062 = vmul.f32 %v4054, %v3590
        %v4063 = vadd.f32 %v4055, 0.0
        %v4064 = vadd.f32 %v4056, 0.0
        %v4065 = vadd.f32 %v4057, 0.0
        %v4066 = vadd.f32 %v4058, 0.0
        %v4067 = vadd.f32 %v4059, 0.0
        %v4068 = vadd.f32 %v4060, 0.0
        %v4069 = vadd.f32 %v4061, 0.0
        %v4070 = vadd.f32 %v4062, 0.0
        %4071 = vrot.lane.b32.xlu0 %v3195, 120
        %v4072 = vpop.permute.xlu0 %4071
        %4073 = vrot.lane.b32.xlu0 %v3196, 120
        %v4074 = vpop.permute.xlu0 %4073
        %4075 = vrot.lane.b32.xlu0 %v3197, 120
        %v4076 = vpop.permute.xlu0 %4075
        %4077 = vrot.lane.b32.xlu0 %v3198, 120
        %v4078 = vpop.permute.xlu0 %4077
        %4079 = vrot.lane.b32.xlu0 %v3199, 120
        %v4080 = vpop.permute.xlu0 %4079
        %4081 = vrot.lane.b32.xlu0 %v3200, 120
        %v4082 = vpop.permute.xlu0 %4081
        %4083 = vrot.lane.b32.xlu0 %v3201, 120
        %v4084 = vpop.permute.xlu0 %4083
        %4085 = vrot.lane.b32.xlu0 %v3202, 120
        %v4086 = vpop.permute.xlu0 %4085
        %v4087 = vsel %vm3204, %v4072, 0
        %v4089 = vsel %vm3204, %v4074, 0
        %v4091 = vsel %vm3204, %v4076, 0
        %v4093 = vsel %vm3204, %v4078, 0
        %v4095 = vsel %vm3204, %v4080, 0
        %v4097 = vsel %vm3204, %v4082, 0
        %v4099 = vsel %vm3204, %v4084, 0
        %v4101 = vsel %vm3204, %v4086, 0
        %4103 = vmatpush.msra.mxu0 0.0
        %4104 = vmatpush.msra.mxu0 0.0
        %4105 = vmatpush.msra.mxu0 0.0
        %4106 = vmatpush.msra.mxu0 0.0
        %4107 = vmatpush.msra.mxu0 0.0
        %4108 = vmatpush.msra.mxu0 0.0
        %4109 = vmatpush.msra.mxu0 0.0
        %4110 = vmatpush.msra.mxu0 0.0
        %4111 = vmatpush.msra.mxu0 0.0
        %4112 = vmatpush.msra.mxu0 0.0
        %4113 = vmatpush.msra.mxu0 0.0
        %4114 = vmatpush.msra.mxu0 0.0
        %4115 = vmatpush.msra.mxu0 0.0
        %4116 = vmatpush.msra.mxu0 0.0
        %4117 = vmatpush.msra.mxu0 0.0
        %v4118 = vand.u32 %v3203, 4294901760
        %4119 = vmatpush.msra.mxu0 %v4118
        %v4120 = vand.u32 %v4087, 4294901760
        %v4121 = vsub.f32 %v4087, %v4120
        %v4122 = vand.u32 %v4121, 4294901760
        %v4123 = vsub.f32 %v4121, %v4122
        %v4124 = vand.u32 %v4123, 4294901760
        %4125 = vmatmul.f32.gmra.mxu0 %v4124
        %v4126 = vpop.f32.mrf.mxu0
        %v4127 = vadd.f32 0.0, %v4126
        %v4128 = vand.u32 %v4089, 4294901760
        %v4129 = vsub.f32 %v4089, %v4128
        %v4130 = vand.u32 %v4129, 4294901760
        %v4131 = vsub.f32 %v4129, %v4130
        %v4132 = vand.u32 %v4131, 4294901760
        %4133 = vmatmul.f32.gmra.mxu0 %v4132
        %v4134 = vpop.f32.mrf.mxu0
        %v4135 = vadd.f32 0.0, %v4134
        %v4136 = vand.u32 %v4091, 4294901760
        %v4137 = vsub.f32 %v4091, %v4136
        %v4138 = vand.u32 %v4137, 4294901760
        %v4139 = vsub.f32 %v4137, %v4138
        %v4140 = vand.u32 %v4139, 4294901760
        %4141 = vmatmul.f32.gmra.mxu0 %v4140
        %v4142 = vpop.f32.mrf.mxu0
        %v4143 = vadd.f32 0.0, %v4142
        %v4144 = vand.u32 %v4093, 4294901760
        %v4145 = vsub.f32 %v4093, %v4144
        %v4146 = vand.u32 %v4145, 4294901760
        %v4147 = vsub.f32 %v4145, %v4146
        %v4148 = vand.u32 %v4147, 4294901760
        %4149 = vmatmul.f32.gmra.mxu0 %v4148
        %v4150 = vpop.f32.mrf.mxu0
        %v4151 = vadd.f32 0.0, %v4150
        %v4152 = vand.u32 %v4095, 4294901760
        %v4153 = vsub.f32 %v4095, %v4152
        %v4154 = vand.u32 %v4153, 4294901760
        %v4155 = vsub.f32 %v4153, %v4154
        %v4156 = vand.u32 %v4155, 4294901760
        %4157 = vmatmul.f32.gmra.mxu0 %v4156
        %v4158 = vpop.f32.mrf.mxu0
        %v4159 = vadd.f32 0.0, %v4158
        %v4160 = vand.u32 %v4097, 4294901760
        %v4161 = vsub.f32 %v4097, %v4160
        %v4162 = vand.u32 %v4161, 4294901760
        %v4163 = vsub.f32 %v4161, %v4162
        %v4164 = vand.u32 %v4163, 4294901760
        %4165 = vmatmul.f32.gmra.mxu0 %v4164
        %v4166 = vpop.f32.mrf.mxu0
        %v4167 = vadd.f32 0.0, %v4166
        %v4168 = vand.u32 %v4099, 4294901760
        %v4169 = vsub.f32 %v4099, %v4168
        %v4170 = vand.u32 %v4169, 4294901760
        %v4171 = vsub.f32 %v4169, %v4170
        %v4172 = vand.u32 %v4171, 4294901760
        %4173 = vmatmul.f32.gmra.mxu0 %v4172
        %v4174 = vpop.f32.mrf.mxu0
        %v4175 = vadd.f32 0.0, %v4174
        %v4176 = vand.u32 %v4101, 4294901760
        %v4177 = vsub.f32 %v4101, %v4176
        %v4178 = vand.u32 %v4177, 4294901760
        %v4179 = vsub.f32 %v4177, %v4178
        %v4180 = vand.u32 %v4179, 4294901760
        %4181 = vmatmul.f32.gmra.mxu0 %v4180
        %v4182 = vpop.f32.mrf.mxu0
        %v4183 = vadd.f32 0.0, %v4182
        %4184 = vdwg.mxu0
        %4185 = vmatpush.msra.mxu0 0.0
        %4186 = vmatpush.msra.mxu0 0.0
        %4187 = vmatpush.msra.mxu0 0.0
        %4188 = vmatpush.msra.mxu0 0.0
        %4189 = vmatpush.msra.mxu0 0.0
        %4190 = vmatpush.msra.mxu0 0.0
        %4191 = vmatpush.msra.mxu0 0.0
        %4192 = vmatpush.msra.mxu0 0.0
        %4193 = vmatpush.msra.mxu0 0.0
        %4194 = vmatpush.msra.mxu0 0.0
        %4195 = vmatpush.msra.mxu0 0.0
        %4196 = vmatpush.msra.mxu0 0.0
        %4197 = vmatpush.msra.mxu0 0.0
        %4198 = vmatpush.msra.mxu0 0.0
        %4199 = vmatpush.msra.mxu0 0.0
        %v4200 = vand.u32 %v3203, 4294901760
        %v4201 = vsub.f32 %v3203, %v4200
        %v4202 = vand.u32 %v4201, 4294901760
        %v4203 = vsub.f32 %v4201, %v4202
        %v4204 = vand.u32 %v4203, 4294901760
        %4205 = vmatpush.msra.mxu0 %v4204
        %v4206 = vand.u32 %v4087, 4294901760
        %4207 = vmatmul.f32.gmra.mxu0 %v4206
        %v4208 = vpop.f32.mrf.mxu0
        %v4209 = vadd.f32 %v4127, %v4208
        %v4210 = vand.u32 %v4089, 4294901760
        %4211 = vmatmul.f32.gmra.mxu0 %v4210
        %v4212 = vpop.f32.mrf.mxu0
        %v4213 = vadd.f32 %v4135, %v4212
        %v4214 = vand.u32 %v4091, 4294901760
        %4215 = vmatmul.f32.gmra.mxu0 %v4214
        %v4216 = vpop.f32.mrf.mxu0
        %v4217 = vadd.f32 %v4143, %v4216
        %v4218 = vand.u32 %v4093, 4294901760
        %4219 = vmatmul.f32.gmra.mxu0 %v4218
        %v4220 = vpop.f32.mrf.mxu0
        %v4221 = vadd.f32 %v4151, %v4220
        %v4222 = vand.u32 %v4095, 4294901760
        %4223 = vmatmul.f32.gmra.mxu0 %v4222
        %v4224 = vpop.f32.mrf.mxu0
        %v4225 = vadd.f32 %v4159, %v4224
        %v4226 = vand.u32 %v4097, 4294901760
        %4227 = vmatmul.f32.gmra.mxu0 %v4226
        %v4228 = vpop.f32.mrf.mxu0
        %v4229 = vadd.f32 %v4167, %v4228
        %v4230 = vand.u32 %v4099, 4294901760
        %4231 = vmatmul.f32.gmra.mxu0 %v4230
        %v4232 = vpop.f32.mrf.mxu0
        %v4233 = vadd.f32 %v4175, %v4232
        %v4234 = vand.u32 %v4101, 4294901760
        %4235 = vmatmul.f32.gmra.mxu0 %v4234
        %v4236 = vpop.f32.mrf.mxu0
        %v4237 = vadd.f32 %v4183, %v4236
        %4238 = vdwg.mxu0
        %4239 = vmatpush.msra.mxu0 0.0
        %4240 = vmatpush.msra.mxu0 0.0
        %4241 = vmatpush.msra.mxu0 0.0
        %4242 = vmatpush.msra.mxu0 0.0
        %4243 = vmatpush.msra.mxu0 0.0
        %4244 = vmatpush.msra.mxu0 0.0
        %4245 = vmatpush.msra.mxu0 0.0
        %4246 = vmatpush.msra.mxu0 0.0
        %4247 = vmatpush.msra.mxu0 0.0
        %4248 = vmatpush.msra.mxu0 0.0
        %4249 = vmatpush.msra.mxu0 0.0
        %4250 = vmatpush.msra.mxu0 0.0
        %4251 = vmatpush.msra.mxu0 0.0
        %4252 = vmatpush.msra.mxu0 0.0
        %4253 = vmatpush.msra.mxu0 0.0
        %v4254 = vand.u32 %v3203, 4294901760
        %v4255 = vsub.f32 %v3203, %v4254
        %4256 = vmatpush.msra.mxu0 %v4255
        %v4257 = vand.u32 %v4087, 4294901760
        %v4258 = vsub.f32 %v4087, %v4257
        %4259 = vmatmul.f32.gmra.mxu0 %v4258
        %v4260 = vpop.f32.mrf.mxu0
        %v4261 = vadd.f32 %v4209, %v4260
        %v4262 = vand.u32 %v4089, 4294901760
        %v4263 = vsub.f32 %v4089, %v4262
        %4264 = vmatmul.f32.gmra.mxu0 %v4263
        %v4265 = vpop.f32.mrf.mxu0
        %v4266 = vadd.f32 %v4213, %v4265
        %v4267 = vand.u32 %v4091, 4294901760
        %v4268 = vsub.f32 %v4091, %v4267
        %4269 = vmatmul.f32.gmra.mxu0 %v4268
        %v4270 = vpop.f32.mrf.mxu0
        %v4271 = vadd.f32 %v4217, %v4270
        %v4272 = vand.u32 %v4093, 4294901760
        %v4273 = vsub.f32 %v4093, %v4272
        %4274 = vmatmul.f32.gmra.mxu0 %v4273
        %v4275 = vpop.f32.mrf.mxu0
        %v4276 = vadd.f32 %v4221, %v4275
        %v4277 = vand.u32 %v4095, 4294901760
        %v4278 = vsub.f32 %v4095, %v4277
        %4279 = vmatmul.f32.gmra.mxu0 %v4278
        %v4280 = vpop.f32.mrf.mxu0
        %v4281 = vadd.f32 %v4225, %v4280
        %v4282 = vand.u32 %v4097, 4294901760
        %v4283 = vsub.f32 %v4097, %v4282
        %4284 = vmatmul.f32.gmra.mxu0 %v4283
        %v4285 = vpop.f32.mrf.mxu0
        %v4286 = vadd.f32 %v4229, %v4285
        %v4287 = vand.u32 %v4099, 4294901760
        %v4288 = vsub.f32 %v4099, %v4287
        %4289 = vmatmul.f32.gmra.mxu0 %v4288
        %v4290 = vpop.f32.mrf.mxu0
        %v4291 = vadd.f32 %v4233, %v4290
        %v4292 = vand.u32 %v4101, 4294901760
        %v4293 = vsub.f32 %v4101, %v4292
        %4294 = vmatmul.f32.gmra.mxu0 %v4293
        %v4295 = vpop.f32.mrf.mxu0
        %v4296 = vadd.f32 %v4237, %v4295
        %4297 = vdwg.mxu0
        %4298 = vmatpush.msra.mxu0 0.0
        %4299 = vmatpush.msra.mxu0 0.0
        %4300 = vmatpush.msra.mxu0 0.0
        %4301 = vmatpush.msra.mxu0 0.0
        %4302 = vmatpush.msra.mxu0 0.0
        %4303 = vmatpush.msra.mxu0 0.0
        %4304 = vmatpush.msra.mxu0 0.0
        %4305 = vmatpush.msra.mxu0 0.0
        %4306 = vmatpush.msra.mxu0 0.0
        %4307 = vmatpush.msra.mxu0 0.0
        %4308 = vmatpush.msra.mxu0 0.0
        %4309 = vmatpush.msra.mxu0 0.0
        %4310 = vmatpush.msra.mxu0 0.0
        %4311 = vmatpush.msra.mxu0 0.0
        %4312 = vmatpush.msra.mxu0 0.0
        %v4313 = vand.u32 %v3203, 4294901760
        %4314 = vmatpush.msra.mxu0 %v4313
        %v4315 = vand.u32 %v4087, 4294901760
        %v4316 = vsub.f32 %v4087, %v4315
        %v4317 = vand.u32 %v4316, 4294901760
        %4318 = vmatmul.f32.gmra.mxu0 %v4317
        %v4319 = vpop.f32.mrf.mxu0
        %v4320 = vadd.f32 %v4261, %v4319
        %v4321 = vand.u32 %v4089, 4294901760
        %v4322 = vsub.f32 %v4089, %v4321
        %v4323 = vand.u32 %v4322, 4294901760
        %4324 = vmatmul.f32.gmra.mxu0 %v4323
        %v4325 = vpop.f32.mrf.mxu0
        %v4326 = vadd.f32 %v4266, %v4325
        %v4327 = vand.u32 %v4091, 4294901760
        %v4328 = vsub.f32 %v4091, %v4327
        %v4329 = vand.u32 %v4328, 4294901760
        %4330 = vmatmul.f32.gmra.mxu0 %v4329
        %v4331 = vpop.f32.mrf.mxu0
        %v4332 = vadd.f32 %v4271, %v4331
        %v4333 = vand.u32 %v4093, 4294901760
        %v4334 = vsub.f32 %v4093, %v4333
        %v4335 = vand.u32 %v4334, 4294901760
        %4336 = vmatmul.f32.gmra.mxu0 %v4335
        %v4337 = vpop.f32.mrf.mxu0
        %v4338 = vadd.f32 %v4276, %v4337
        %v4339 = vand.u32 %v4095, 4294901760
        %v4340 = vsub.f32 %v4095, %v4339
        %v4341 = vand.u32 %v4340, 4294901760
        %4342 = vmatmul.f32.gmra.mxu0 %v4341
        %v4343 = vpop.f32.mrf.mxu0
        %v4344 = vadd.f32 %v4281, %v4343
        %v4345 = vand.u32 %v4097, 4294901760
        %v4346 = vsub.f32 %v4097, %v4345
        %v4347 = vand.u32 %v4346, 4294901760
        %4348 = vmatmul.f32.gmra.mxu0 %v4347
        %v4349 = vpop.f32.mrf.mxu0
        %v4350 = vadd.f32 %v4286, %v4349
        %v4351 = vand.u32 %v4099, 4294901760
        %v4352 = vsub.f32 %v4099, %v4351
        %v4353 = vand.u32 %v4352, 4294901760
        %4354 = vmatmul.f32.gmra.mxu0 %v4353
        %v4355 = vpop.f32.mrf.mxu0
        %v4356 = vadd.f32 %v4291, %v4355
        %v4357 = vand.u32 %v4101, 4294901760
        %v4358 = vsub.f32 %v4101, %v4357
        %v4359 = vand.u32 %v4358, 4294901760
        %4360 = vmatmul.f32.gmra.mxu0 %v4359
        %v4361 = vpop.f32.mrf.mxu0
        %v4362 = vadd.f32 %v4296, %v4361
        %4363 = vdwg.mxu0
        %4364 = vmatpush.msra.mxu0 0.0
        %4365 = vmatpush.msra.mxu0 0.0
        %4366 = vmatpush.msra.mxu0 0.0
        %4367 = vmatpush.msra.mxu0 0.0
        %4368 = vmatpush.msra.mxu0 0.0
        %4369 = vmatpush.msra.mxu0 0.0
        %4370 = vmatpush.msra.mxu0 0.0
        %4371 = vmatpush.msra.mxu0 0.0
        %4372 = vmatpush.msra.mxu0 0.0
        %4373 = vmatpush.msra.mxu0 0.0
        %4374 = vmatpush.msra.mxu0 0.0
        %4375 = vmatpush.msra.mxu0 0.0
        %4376 = vmatpush.msra.mxu0 0.0
        %4377 = vmatpush.msra.mxu0 0.0
        %4378 = vmatpush.msra.mxu0 0.0
        %v4379 = vand.u32 %v3203, 4294901760
        %v4380 = vsub.f32 %v3203, %v4379
        %v4381 = vand.u32 %v4380, 4294901760
        %4382 = vmatpush.msra.mxu0 %v4381
        %v4383 = vand.u32 %v4087, 4294901760
        %4384 = vmatmul.f32.gmra.mxu0 %v4383
        %v4385 = vpop.f32.mrf.mxu0
        %v4386 = vadd.f32 %v4320, %v4385
        %v4387 = vand.u32 %v4089, 4294901760
        %4388 = vmatmul.f32.gmra.mxu0 %v4387
        %v4389 = vpop.f32.mrf.mxu0
        %v4390 = vadd.f32 %v4326, %v4389
        %v4391 = vand.u32 %v4091, 4294901760
        %4392 = vmatmul.f32.gmra.mxu0 %v4391
        %v4393 = vpop.f32.mrf.mxu0
        %v4394 = vadd.f32 %v4332, %v4393
        %v4395 = vand.u32 %v4093, 4294901760
        %4396 = vmatmul.f32.gmra.mxu0 %v4395
        %v4397 = vpop.f32.mrf.mxu0
        %v4398 = vadd.f32 %v4338, %v4397
        %v4399 = vand.u32 %v4095, 4294901760
        %4400 = vmatmul.f32.gmra.mxu0 %v4399
        %v4401 = vpop.f32.mrf.mxu0
        %v4402 = vadd.f32 %v4344, %v4401
        %v4403 = vand.u32 %v4097, 4294901760
        %4404 = vmatmul.f32.gmra.mxu0 %v4403
        %v4405 = vpop.f32.mrf.mxu0
        %v4406 = vadd.f32 %v4350, %v4405
        %v4407 = vand.u32 %v4099, 4294901760
        %4408 = vmatmul.f32.gmra.mxu0 %v4407
        %v4409 = vpop.f32.mrf.mxu0
        %v4410 = vadd.f32 %v4356, %v4409
        %v4411 = vand.u32 %v4101, 4294901760
        %4412 = vmatmul.f32.gmra.mxu0 %v4411
        %v4413 = vpop.f32.mrf.mxu0
        %v4414 = vadd.f32 %v4362, %v4413
        %4415 = vdwg.mxu0
        %4416 = vmatpush.msra.mxu0 0.0
        %4417 = vmatpush.msra.mxu0 0.0
        %4418 = vmatpush.msra.mxu0 0.0
        %4419 = vmatpush.msra.mxu0 0.0
        %4420 = vmatpush.msra.mxu0 0.0
        %4421 = vmatpush.msra.mxu0 0.0
        %4422 = vmatpush.msra.mxu0 0.0
        %4423 = vmatpush.msra.mxu0 0.0
        %4424 = vmatpush.msra.mxu0 0.0
        %4425 = vmatpush.msra.mxu0 0.0
        %4426 = vmatpush.msra.mxu0 0.0
        %4427 = vmatpush.msra.mxu0 0.0
        %4428 = vmatpush.msra.mxu0 0.0
        %4429 = vmatpush.msra.mxu0 0.0
        %4430 = vmatpush.msra.mxu0 0.0
        %v4431 = vand.u32 %v3203, 4294901760
        %4432 = vmatpush.msra.mxu0 %v4431
        %v4433 = vand.u32 %v4087, 4294901760
        %4434 = vmatmul.f32.gmra.mxu0 %v4433
        %v4435 = vpop.f32.mrf.mxu0
        %v4436 = vadd.f32 %v4386, %v4435
        %v4437 = vand.u32 %v4089, 4294901760
        %4438 = vmatmul.f32.gmra.mxu0 %v4437
        %v4439 = vpop.f32.mrf.mxu0
        %v4440 = vadd.f32 %v4390, %v4439
        %v4441 = vand.u32 %v4091, 4294901760
        %4442 = vmatmul.f32.gmra.mxu0 %v4441
        %v4443 = vpop.f32.mrf.mxu0
        %v4444 = vadd.f32 %v4394, %v4443
        %v4445 = vand.u32 %v4093, 4294901760
        %4446 = vmatmul.f32.gmra.mxu0 %v4445
        %v4447 = vpop.f32.mrf.mxu0
        %v4448 = vadd.f32 %v4398, %v4447
        %v4449 = vand.u32 %v4095, 4294901760
        %4450 = vmatmul.f32.gmra.mxu0 %v4449
        %v4451 = vpop.f32.mrf.mxu0
        %v4452 = vadd.f32 %v4402, %v4451
        %v4453 = vand.u32 %v4097, 4294901760
        %4454 = vmatmul.f32.gmra.mxu0 %v4453
        %v4455 = vpop.f32.mrf.mxu0
        %v4456 = vadd.f32 %v4406, %v4455
        %v4457 = vand.u32 %v4099, 4294901760
        %4458 = vmatmul.f32.gmra.mxu0 %v4457
        %v4459 = vpop.f32.mrf.mxu0
        %v4460 = vadd.f32 %v4410, %v4459
        %v4461 = vand.u32 %v4101, 4294901760
        %4462 = vmatmul.f32.gmra.mxu0 %v4461
        %v4463 = vpop.f32.mrf.mxu0
        %v4464 = vadd.f32 %v4414, %v4463
        %4465 = vdwg.mxu0
        %4466 = vset.pattern.permute.xlu0 8
        %4467 = vperm.xlu0 %4466, %v1309
        %v4468 = vpop.permute.xlu0 %4467
        %4470 = vset.pattern.permute.xlu0 8
        %4471 = vperm.xlu0 %4470, %v1313
        %v4472 = vpop.permute.xlu0 %4471
        %4474 = vset.pattern.permute.xlu0 8
        %4475 = vperm.xlu0 %4474, %v1317
        %v4476 = vpop.permute.xlu0 %4475
        %4478 = vset.pattern.permute.xlu0 8
        %4479 = vperm.xlu0 %4478, %v1321
        %v4480 = vpop.permute.xlu0 %4479
        %4482 = vset.pattern.permute.xlu0 8
        %4483 = vperm.xlu0 %4482, %v1325
        %v4484 = vpop.permute.xlu0 %4483
        %4486 = vset.pattern.permute.xlu0 8
        %4487 = vperm.xlu0 %4486, %v1329
        %v4488 = vpop.permute.xlu0 %4487
        %4490 = vset.pattern.permute.xlu0 8
        %4491 = vperm.xlu0 %4490, %v1333
        %v4492 = vpop.permute.xlu0 %4491
        %4494 = vset.pattern.permute.xlu0 8
        %4495 = vperm.xlu0 %4494, %v1337
        %v4496 = vpop.permute.xlu0 %4495
        %v4498 = vmul.f32 %v3592, %v4468
        %v4499 = vmul.f32 %v3593, %v4472
        %v4500 = vmul.f32 %v3594, %v4476
        %v4501 = vmul.f32 %v3595, %v4480
        %v4502 = vmul.f32 %v3596, %v4484
        %v4503 = vmul.f32 %v3597, %v4488
        %v4504 = vmul.f32 %v3598, %v4492
        %v4505 = vmul.f32 %v3599, %v4496
        %v4506 = vadd.f32 %v4498, 0.0
        %v4507 = vadd.f32 %v4499, 0.0
        %v4508 = vadd.f32 %v4500, 0.0
        %v4509 = vadd.f32 %v4501, 0.0
        %v4510 = vadd.f32 %v4502, 0.0
        %v4511 = vadd.f32 %v4503, 0.0
        %v4512 = vadd.f32 %v4504, 0.0
        %v4513 = vadd.f32 %v4505, 0.0
        %4514 = vset.pattern.permute.xlu0 9
        %4515 = vperm.xlu0 %4514, %v1309
        %v4516 = vpop.permute.xlu0 %4515
        %4518 = vset.pattern.permute.xlu0 9
        %4519 = vperm.xlu0 %4518, %v1313
        %v4520 = vpop.permute.xlu0 %4519
        %4522 = vset.pattern.permute.xlu0 9
        %4523 = vperm.xlu0 %4522, %v1317
        %v4524 = vpop.permute.xlu0 %4523
        %4526 = vset.pattern.permute.xlu0 9
        %4527 = vperm.xlu0 %4526, %v1321
        %v4528 = vpop.permute.xlu0 %4527
        %4530 = vset.pattern.permute.xlu0 9
        %4531 = vperm.xlu0 %4530, %v1325
        %v4532 = vpop.permute.xlu0 %4531
        %4534 = vset.pattern.permute.xlu0 9
        %4535 = vperm.xlu0 %4534, %v1329
        %v4536 = vpop.permute.xlu0 %4535
        %4538 = vset.pattern.permute.xlu0 9
        %4539 = vperm.xlu0 %4538, %v1333
        %v4540 = vpop.permute.xlu0 %4539
        %4542 = vset.pattern.permute.xlu0 9
        %4543 = vperm.xlu0 %4542, %v1337
        %v4544 = vpop.permute.xlu0 %4543
        %v4546 = vmul.f32 %v3657, %v4516
        %v4547 = vmul.f32 %v3658, %v4520
        %v4548 = vmul.f32 %v3659, %v4524
        %v4549 = vmul.f32 %v3660, %v4528
        %v4550 = vmul.f32 %v3661, %v4532
        %v4551 = vmul.f32 %v3662, %v4536
        %v4552 = vmul.f32 %v3663, %v4540
        %v4553 = vmul.f32 %v3664, %v4544
        %v4554 = vadd.f32 %v4506, %v4546
        %v4555 = vadd.f32 %v4507, %v4547
        %v4556 = vadd.f32 %v4508, %v4548
        %v4557 = vadd.f32 %v4509, %v4549
        %v4558 = vadd.f32 %v4510, %v4550
        %v4559 = vadd.f32 %v4511, %v4551
        %v4560 = vadd.f32 %v4512, %v4552
        %v4561 = vadd.f32 %v4513, %v4553
        %4562 = vset.pattern.permute.xlu0 10
        %4563 = vperm.xlu0 %4562, %v1309
        %v4564 = vpop.permute.xlu0 %4563
        %4566 = vset.pattern.permute.xlu0 10
        %4567 = vperm.xlu0 %4566, %v1313
        %v4568 = vpop.permute.xlu0 %4567
        %4570 = vset.pattern.permute.xlu0 10
        %4571 = vperm.xlu0 %4570, %v1317
        %v4572 = vpop.permute.xlu0 %4571
        %4574 = vset.pattern.permute.xlu0 10
        %4575 = vperm.xlu0 %4574, %v1321
        %v4576 = vpop.permute.xlu0 %4575
        %4578 = vset.pattern.permute.xlu0 10
        %4579 = vperm.xlu0 %4578, %v1325
        %v4580 = vpop.permute.xlu0 %4579
        %4582 = vset.pattern.permute.xlu0 10
        %4583 = vperm.xlu0 %4582, %v1329
        %v4584 = vpop.permute.xlu0 %4583
        %4586 = vset.pattern.permute.xlu0 10
        %4587 = vperm.xlu0 %4586, %v1333
        %v4588 = vpop.permute.xlu0 %4587
        %4590 = vset.pattern.permute.xlu0 10
        %4591 = vperm.xlu0 %4590, %v1337
        %v4592 = vpop.permute.xlu0 %4591
        %v4594 = vmul.f32 %v3714, %v4564
        %v4595 = vmul.f32 %v3715, %v4568
        %v4596 = vmul.f32 %v3716, %v4572
        %v4597 = vmul.f32 %v3717, %v4576
        %v4598 = vmul.f32 %v3718, %v4580
        %v4599 = vmul.f32 %v3719, %v4584
        %v4600 = vmul.f32 %v3720, %v4588
        %v4601 = vmul.f32 %v3721, %v4592
        %v4602 = vadd.f32 %v4554, %v4594
        %v4603 = vadd.f32 %v4555, %v4595
        %v4604 = vadd.f32 %v4556, %v4596
        %v4605 = vadd.f32 %v4557, %v4597
        %v4606 = vadd.f32 %v4558, %v4598
        %v4607 = vadd.f32 %v4559, %v4599
        %v4608 = vadd.f32 %v4560, %v4600
        %v4609 = vadd.f32 %v4561, %v4601
        %4610 = vset.pattern.permute.xlu0 11
        %4611 = vperm.xlu0 %4610, %v1309
        %v4612 = vpop.permute.xlu0 %4611
        %4614 = vset.pattern.permute.xlu0 11
        %4615 = vperm.xlu0 %4614, %v1313
        %v4616 = vpop.permute.xlu0 %4615
        %4618 = vset.pattern.permute.xlu0 11
        %4619 = vperm.xlu0 %4618, %v1317
        %v4620 = vpop.permute.xlu0 %4619
        %4622 = vset.pattern.permute.xlu0 11
        %4623 = vperm.xlu0 %4622, %v1321
        %v4624 = vpop.permute.xlu0 %4623
        %4626 = vset.pattern.permute.xlu0 11
        %4627 = vperm.xlu0 %4626, %v1325
        %v4628 = vpop.permute.xlu0 %4627
        %4630 = vset.pattern.permute.xlu0 11
        %4631 = vperm.xlu0 %4630, %v1329
        %v4632 = vpop.permute.xlu0 %4631
        %4634 = vset.pattern.permute.xlu0 11
        %4635 = vperm.xlu0 %4634, %v1333
        %v4636 = vpop.permute.xlu0 %4635
        %4638 = vset.pattern.permute.xlu0 11
        %4639 = vperm.xlu0 %4638, %v1337
        %v4640 = vpop.permute.xlu0 %4639
        %v4642 = vmul.f32 %v3771, %v4612
        %v4643 = vmul.f32 %v3772, %v4616
        %v4644 = vmul.f32 %v3773, %v4620
        %v4645 = vmul.f32 %v3774, %v4624
        %v4646 = vmul.f32 %v3775, %v4628
        %v4647 = vmul.f32 %v3776, %v4632
        %v4648 = vmul.f32 %v3777, %v4636
        %v4649 = vmul.f32 %v3778, %v4640
        %v4650 = vadd.f32 %v4602, %v4642
        %v4651 = vadd.f32 %v4603, %v4643
        %v4652 = vadd.f32 %v4604, %v4644
        %v4653 = vadd.f32 %v4605, %v4645
        %v4654 = vadd.f32 %v4606, %v4646
        %v4655 = vadd.f32 %v4607, %v4647
        %v4656 = vadd.f32 %v4608, %v4648
        %v4657 = vadd.f32 %v4609, %v4649
        %4658 = vset.pattern.permute.xlu0 12
        %4659 = vperm.xlu0 %4658, %v1309
        %v4660 = vpop.permute.xlu0 %4659
        %4662 = vset.pattern.permute.xlu0 12
        %4663 = vperm.xlu0 %4662, %v1313
        %v4664 = vpop.permute.xlu0 %4663
        %4666 = vset.pattern.permute.xlu0 12
        %4667 = vperm.xlu0 %4666, %v1317
        %v4668 = vpop.permute.xlu0 %4667
        %4670 = vset.pattern.permute.xlu0 12
        %4671 = vperm.xlu0 %4670, %v1321
        %v4672 = vpop.permute.xlu0 %4671
        %4674 = vset.pattern.permute.xlu0 12
        %4675 = vperm.xlu0 %4674, %v1325
        %v4676 = vpop.permute.xlu0 %4675
        %4678 = vset.pattern.permute.xlu0 12
        %4679 = vperm.xlu0 %4678, %v1329
        %v4680 = vpop.permute.xlu0 %4679
        %4682 = vset.pattern.permute.xlu0 12
        %4683 = vperm.xlu0 %4682, %v1333
        %v4684 = vpop.permute.xlu0 %4683
        %4686 = vset.pattern.permute.xlu0 12
        %4687 = vperm.xlu0 %4686, %v1337
        %v4688 = vpop.permute.xlu0 %4687
        %v4690 = vmul.f32 %v3828, %v4660
        %v4691 = vmul.f32 %v3829, %v4664
        %v4692 = vmul.f32 %v3830, %v4668
        %v4693 = vmul.f32 %v3831, %v4672
        %v4694 = vmul.f32 %v3832, %v4676
        %v4695 = vmul.f32 %v3833, %v4680
        %v4696 = vmul.f32 %v3834, %v4684
        %v4697 = vmul.f32 %v3835, %v4688
        %v4698 = vadd.f32 %v4650, %v4690
        %v4699 = vadd.f32 %v4651, %v4691
        %v4700 = vadd.f32 %v4652, %v4692
        %v4701 = vadd.f32 %v4653, %v4693
        %v4702 = vadd.f32 %v4654, %v4694
        %v4703 = vadd.f32 %v4655, %v4695
        %v4704 = vadd.f32 %v4656, %v4696
        %v4705 = vadd.f32 %v4657, %v4697
        %4706 = vset.pattern.permute.xlu0 13
        %4707 = vperm.xlu0 %4706, %v1309
        %v4708 = vpop.permute.xlu0 %4707
        %4710 = vset.pattern.permute.xlu0 13
        %4711 = vperm.xlu0 %4710, %v1313
        %v4712 = vpop.permute.xlu0 %4711
        %4714 = vset.pattern.permute.xlu0 13
        %4715 = vperm.xlu0 %4714, %v1317
        %v4716 = vpop.permute.xlu0 %4715
        %4718 = vset.pattern.permute.xlu0 13
        %4719 = vperm.xlu0 %4718, %v1321
        %v4720 = vpop.permute.xlu0 %4719
        %4722 = vset.pattern.permute.xlu0 13
        %4723 = vperm.xlu0 %4722, %v1325
        %v4724 = vpop.permute.xlu0 %4723
        %4726 = vset.pattern.permute.xlu0 13
        %4727 = vperm.xlu0 %4726, %v1329
        %v4728 = vpop.permute.xlu0 %4727
        %4730 = vset.pattern.permute.xlu0 13
        %4731 = vperm.xlu0 %4730, %v1333
        %v4732 = vpop.permute.xlu0 %4731
        %4734 = vset.pattern.permute.xlu0 13
        %4735 = vperm.xlu0 %4734, %v1337
        %v4736 = vpop.permute.xlu0 %4735
        %v4738 = vmul.f32 %v3885, %v4708
        %v4739 = vmul.f32 %v3886, %v4712
        %v4740 = vmul.f32 %v3887, %v4716
        %v4741 = vmul.f32 %v3888, %v4720
        %v4742 = vmul.f32 %v3889, %v4724
        %v4743 = vmul.f32 %v3890, %v4728
        %v4744 = vmul.f32 %v3891, %v4732
        %v4745 = vmul.f32 %v3892, %v4736
        %v4746 = vadd.f32 %v4698, %v4738
        %v4747 = vadd.f32 %v4699, %v4739
        %v4748 = vadd.f32 %v4700, %v4740
        %v4749 = vadd.f32 %v4701, %v4741
        %v4750 = vadd.f32 %v4702, %v4742
        %v4751 = vadd.f32 %v4703, %v4743
        %v4752 = vadd.f32 %v4704, %v4744
        %v4753 = vadd.f32 %v4705, %v4745
        %4754 = vset.pattern.permute.xlu0 14
        %4755 = vperm.xlu0 %4754, %v1309
        %v4756 = vpop.permute.xlu0 %4755
        %4758 = vset.pattern.permute.xlu0 14
        %4759 = vperm.xlu0 %4758, %v1313
        %v4760 = vpop.permute.xlu0 %4759
        %4762 = vset.pattern.permute.xlu0 14
        %4763 = vperm.xlu0 %4762, %v1317
        %v4764 = vpop.permute.xlu0 %4763
        %4766 = vset.pattern.permute.xlu0 14
        %4767 = vperm.xlu0 %4766, %v1321
        %v4768 = vpop.permute.xlu0 %4767
        %4770 = vset.pattern.permute.xlu0 14
        %4771 = vperm.xlu0 %4770, %v1325
        %v4772 = vpop.permute.xlu0 %4771
        %4774 = vset.pattern.permute.xlu0 14
        %4775 = vperm.xlu0 %4774, %v1329
        %v4776 = vpop.permute.xlu0 %4775
        %4778 = vset.pattern.permute.xlu0 14
        %4779 = vperm.xlu0 %4778, %v1333
        %v4780 = vpop.permute.xlu0 %4779
        %4782 = vset.pattern.permute.xlu0 14
        %4783 = vperm.xlu0 %4782, %v1337
        %v4784 = vpop.permute.xlu0 %4783
        %v4786 = vmul.f32 %v3942, %v4756
        %v4787 = vmul.f32 %v3943, %v4760
        %v4788 = vmul.f32 %v3944, %v4764
        %v4789 = vmul.f32 %v3945, %v4768
        %v4790 = vmul.f32 %v3946, %v4772
        %v4791 = vmul.f32 %v3947, %v4776
        %v4792 = vmul.f32 %v3948, %v4780
        %v4793 = vmul.f32 %v3949, %v4784
        %v4794 = vadd.f32 %v4746, %v4786
        %v4795 = vadd.f32 %v4747, %v4787
        %v4796 = vadd.f32 %v4748, %v4788
        %v4797 = vadd.f32 %v4749, %v4789
        %v4798 = vadd.f32 %v4750, %v4790
        %v4799 = vadd.f32 %v4751, %v4791
        %v4800 = vadd.f32 %v4752, %v4792
        %v4801 = vadd.f32 %v4753, %v4793
        %4802 = vset.pattern.permute.xlu0 15
        %4803 = vperm.xlu0 %4802, %v1309
        %v4804 = vpop.permute.xlu0 %4803
        %4806 = vset.pattern.permute.xlu0 15
        %4807 = vperm.xlu0 %4806, %v1313
        %v4808 = vpop.permute.xlu0 %4807
        %4810 = vset.pattern.permute.xlu0 15
        %4811 = vperm.xlu0 %4810, %v1317
        %v4812 = vpop.permute.xlu0 %4811
        %4814 = vset.pattern.permute.xlu0 15
        %4815 = vperm.xlu0 %4814, %v1321
        %v4816 = vpop.permute.xlu0 %4815
        %4818 = vset.pattern.permute.xlu0 15
        %4819 = vperm.xlu0 %4818, %v1325
        %v4820 = vpop.permute.xlu0 %4819
        %4822 = vset.pattern.permute.xlu0 15
        %4823 = vperm.xlu0 %4822, %v1329
        %v4824 = vpop.permute.xlu0 %4823
        %4826 = vset.pattern.permute.xlu0 15
        %4827 = vperm.xlu0 %4826, %v1333
        %v4828 = vpop.permute.xlu0 %4827
        %4830 = vset.pattern.permute.xlu0 15
        %4831 = vperm.xlu0 %4830, %v1337
        %v4832 = vpop.permute.xlu0 %4831
        %v4834 = vmul.f32 %v3999, %v4804
        %v4835 = vmul.f32 %v4000, %v4808
        %v4836 = vmul.f32 %v4001, %v4812
        %v4837 = vmul.f32 %v4002, %v4816
        %v4838 = vmul.f32 %v4003, %v4820
        %v4839 = vmul.f32 %v4004, %v4824
        %v4840 = vmul.f32 %v4005, %v4828
        %v4841 = vmul.f32 %v4006, %v4832
        %v4842 = vadd.f32 %v4794, %v4834
        %v4843 = vadd.f32 %v4795, %v4835
        %v4844 = vadd.f32 %v4796, %v4836
        %v4845 = vadd.f32 %v4797, %v4837
        %v4846 = vadd.f32 %v4798, %v4838
        %v4847 = vadd.f32 %v4799, %v4839
        %v4848 = vadd.f32 %v4800, %v4840
        %v4849 = vadd.f32 %v4801, %v4841
        %v4850 = vmul.f32 %v4842, %v4436
        %v4851 = vmul.f32 %v4843, %v4440
        %v4852 = vmul.f32 %v4844, %v4444
        %v4853 = vmul.f32 %v4845, %v4448
        %v4854 = vmul.f32 %v4846, %v4452
        %v4855 = vmul.f32 %v4847, %v4456
        %v4856 = vmul.f32 %v4848, %v4460
        %v4857 = vmul.f32 %v4849, %v4464
        %v4858 = vadd.f32 %v4063, %v4850
        %v4859 = vadd.f32 %v4064, %v4851
        %v4860 = vadd.f32 %v4065, %v4852
        %v4861 = vadd.f32 %v4066, %v4853
        %v4862 = vadd.f32 %v4067, %v4854
        %v4863 = vadd.f32 %v4068, %v4855
        %v4864 = vadd.f32 %v4069, %v4856
        %v4865 = vadd.f32 %v4070, %v4857
        %4866 = vrot.lane.b32.xlu0 %v3195, 112
        %v4867 = vpop.permute.xlu0 %4866
        %4868 = vrot.lane.b32.xlu0 %v3196, 112
        %v4869 = vpop.permute.xlu0 %4868
        %4870 = vrot.lane.b32.xlu0 %v3197, 112
        %v4871 = vpop.permute.xlu0 %4870
        %4872 = vrot.lane.b32.xlu0 %v3198, 112
        %v4873 = vpop.permute.xlu0 %4872
        %4874 = vrot.lane.b32.xlu0 %v3199, 112
        %v4875 = vpop.permute.xlu0 %4874
        %4876 = vrot.lane.b32.xlu0 %v3200, 112
        %v4877 = vpop.permute.xlu0 %4876
        %4878 = vrot.lane.b32.xlu0 %v3201, 112
        %v4879 = vpop.permute.xlu0 %4878
        %4880 = vrot.lane.b32.xlu0 %v3202, 112
        %v4881 = vpop.permute.xlu0 %4880
        %v4882 = vsel %vm3204, %v4867, 0
        %v4884 = vsel %vm3204, %v4869, 0
        %v4886 = vsel %vm3204, %v4871, 0
        %v4888 = vsel %vm3204, %v4873, 0
        %v4890 = vsel %vm3204, %v4875, 0
        %v4892 = vsel %vm3204, %v4877, 0
        %v4894 = vsel %vm3204, %v4879, 0
        %v4896 = vsel %vm3204, %v4881, 0
        %4898 = vmatpush.msra.mxu0 0.0
        %4899 = vmatpush.msra.mxu0 0.0
        %4900 = vmatpush.msra.mxu0 0.0
        %4901 = vmatpush.msra.mxu0 0.0
        %4902 = vmatpush.msra.mxu0 0.0
        %4903 = vmatpush.msra.mxu0 0.0
        %4904 = vmatpush.msra.mxu0 0.0
        %4905 = vmatpush.msra.mxu0 0.0
        %4906 = vmatpush.msra.mxu0 0.0
        %4907 = vmatpush.msra.mxu0 0.0
        %4908 = vmatpush.msra.mxu0 0.0
        %4909 = vmatpush.msra.mxu0 0.0
        %4910 = vmatpush.msra.mxu0 0.0
        %4911 = vmatpush.msra.mxu0 0.0
        %4912 = vmatpush.msra.mxu0 0.0
        %v4913 = vand.u32 %v3203, 4294901760
        %4914 = vmatpush.msra.mxu0 %v4913
        %v4915 = vand.u32 %v4882, 4294901760
        %v4916 = vsub.f32 %v4882, %v4915
        %v4917 = vand.u32 %v4916, 4294901760
        %v4918 = vsub.f32 %v4916, %v4917
        %v4919 = vand.u32 %v4918, 4294901760
        %4920 = vmatmul.f32.gmra.mxu0 %v4919
        %v4921 = vpop.f32.mrf.mxu0
        %v4922 = vadd.f32 0.0, %v4921
        %v4923 = vand.u32 %v4884, 4294901760
        %v4924 = vsub.f32 %v4884, %v4923
        %v4925 = vand.u32 %v4924, 4294901760
        %v4926 = vsub.f32 %v4924, %v4925
        %v4927 = vand.u32 %v4926, 4294901760
        %4928 = vmatmul.f32.gmra.mxu0 %v4927
        %v4929 = vpop.f32.mrf.mxu0
        %v4930 = vadd.f32 0.0, %v4929
        %v4931 = vand.u32 %v4886, 4294901760
        %v4932 = vsub.f32 %v4886, %v4931
        %v4933 = vand.u32 %v4932, 4294901760
        %v4934 = vsub.f32 %v4932, %v4933
        %v4935 = vand.u32 %v4934, 4294901760
        %4936 = vmatmul.f32.gmra.mxu0 %v4935
        %v4937 = vpop.f32.mrf.mxu0
        %v4938 = vadd.f32 0.0, %v4937
        %v4939 = vand.u32 %v4888, 4294901760
        %v4940 = vsub.f32 %v4888, %v4939
        %v4941 = vand.u32 %v4940, 4294901760
        %v4942 = vsub.f32 %v4940, %v4941
        %v4943 = vand.u32 %v4942, 4294901760
        %4944 = vmatmul.f32.gmra.mxu0 %v4943
        %v4945 = vpop.f32.mrf.mxu0
        %v4946 = vadd.f32 0.0, %v4945
        %v4947 = vand.u32 %v4890, 4294901760
        %v4948 = vsub.f32 %v4890, %v4947
        %v4949 = vand.u32 %v4948, 4294901760
        %v4950 = vsub.f32 %v4948, %v4949
        %v4951 = vand.u32 %v4950, 4294901760
        %4952 = vmatmul.f32.gmra.mxu0 %v4951
        %v4953 = vpop.f32.mrf.mxu0
        %v4954 = vadd.f32 0.0, %v4953
        %v4955 = vand.u32 %v4892, 4294901760
        %v4956 = vsub.f32 %v4892, %v4955
        %v4957 = vand.u32 %v4956, 4294901760
        %v4958 = vsub.f32 %v4956, %v4957
        %v4959 = vand.u32 %v4958, 4294901760
        %4960 = vmatmul.f32.gmra.mxu0 %v4959
        %v4961 = vpop.f32.mrf.mxu0
        %v4962 = vadd.f32 0.0, %v4961
        %v4963 = vand.u32 %v4894, 4294901760
        %v4964 = vsub.f32 %v4894, %v4963
        %v4965 = vand.u32 %v4964, 4294901760
        %v4966 = vsub.f32 %v4964, %v4965
        %v4967 = vand.u32 %v4966, 4294901760
        %4968 = vmatmul.f32.gmra.mxu0 %v4967
        %v4969 = vpop.f32.mrf.mxu0
        %v4970 = vadd.f32 0.0, %v4969
        %v4971 = vand.u32 %v4896, 4294901760
        %v4972 = vsub.f32 %v4896, %v4971
        %v4973 = vand.u32 %v4972, 4294901760
        %v4974 = vsub.f32 %v4972, %v4973
        %v4975 = vand.u32 %v4974, 4294901760
        %4976 = vmatmul.f32.gmra.mxu0 %v4975
        %v4977 = vpop.f32.mrf.mxu0
        %v4978 = vadd.f32 0.0, %v4977
        %4979 = vdwg.mxu0
        %4980 = vmatpush.msra.mxu0 0.0
        %4981 = vmatpush.msra.mxu0 0.0
        %4982 = vmatpush.msra.mxu0 0.0
        %4983 = vmatpush.msra.mxu0 0.0
        %4984 = vmatpush.msra.mxu0 0.0
        %4985 = vmatpush.msra.mxu0 0.0
        %4986 = vmatpush.msra.mxu0 0.0
        %4987 = vmatpush.msra.mxu0 0.0
        %4988 = vmatpush.msra.mxu0 0.0
        %4989 = vmatpush.msra.mxu0 0.0
        %4990 = vmatpush.msra.mxu0 0.0
        %4991 = vmatpush.msra.mxu0 0.0
        %4992 = vmatpush.msra.mxu0 0.0
        %4993 = vmatpush.msra.mxu0 0.0
        %4994 = vmatpush.msra.mxu0 0.0
        %v4995 = vand.u32 %v3203, 4294901760
        %v4996 = vsub.f32 %v3203, %v4995
        %v4997 = vand.u32 %v4996, 4294901760
        %v4998 = vsub.f32 %v4996, %v4997
        %v4999 = vand.u32 %v4998, 4294901760
        %5000 = vmatpush.msra.mxu0 %v4999
        %v5001 = vand.u32 %v4882, 4294901760
        %5002 = vmatmul.f32.gmra.mxu0 %v5001
        %v5003 = vpop.f32.mrf.mxu0
        %v5004 = vadd.f32 %v4922, %v5003
        %v5005 = vand.u32 %v4884, 4294901760
        %5006 = vmatmul.f32.gmra.mxu0 %v5005
        %v5007 = vpop.f32.mrf.mxu0
        %v5008 = vadd.f32 %v4930, %v5007
        %v5009 = vand.u32 %v4886, 4294901760
        %5010 = vmatmul.f32.gmra.mxu0 %v5009
        %v5011 = vpop.f32.mrf.mxu0
        %v5012 = vadd.f32 %v4938, %v5011
        %v5013 = vand.u32 %v4888, 4294901760
        %5014 = vmatmul.f32.gmra.mxu0 %v5013
        %v5015 = vpop.f32.mrf.mxu0
        %v5016 = vadd.f32 %v4946, %v5015
        %v5017 = vand.u32 %v4890, 4294901760
        %5018 = vmatmul.f32.gmra.mxu0 %v5017
        %v5019 = vpop.f32.mrf.mxu0
        %v5020 = vadd.f32 %v4954, %v5019
        %v5021 = vand.u32 %v4892, 4294901760
        %5022 = vmatmul.f32.gmra.mxu0 %v5021
        %v5023 = vpop.f32.mrf.mxu0
        %v5024 = vadd.f32 %v4962, %v5023
        %v5025 = vand.u32 %v4894, 4294901760
        %5026 = vmatmul.f32.gmra.mxu0 %v5025
        %v5027 = vpop.f32.mrf.mxu0
        %v5028 = vadd.f32 %v4970, %v5027
        %v5029 = vand.u32 %v4896, 4294901760
        %5030 = vmatmul.f32.gmra.mxu0 %v5029
        %v5031 = vpop.f32.mrf.mxu0
        %v5032 = vadd.f32 %v4978, %v5031
        %5033 = vdwg.mxu0
        %5034 = vmatpush.msra.mxu0 0.0
        %5035 = vmatpush.msra.mxu0 0.0
        %5036 = vmatpush.msra.mxu0 0.0
        %5037 = vmatpush.msra.mxu0 0.0
        %5038 = vmatpush.msra.mxu0 0.0
        %5039 = vmatpush.msra.mxu0 0.0
        %5040 = vmatpush.msra.mxu0 0.0
        %5041 = vmatpush.msra.mxu0 0.0
        %5042 = vmatpush.msra.mxu0 0.0
        %5043 = vmatpush.msra.mxu0 0.0
        %5044 = vmatpush.msra.mxu0 0.0
        %5045 = vmatpush.msra.mxu0 0.0
        %5046 = vmatpush.msra.mxu0 0.0
        %5047 = vmatpush.msra.mxu0 0.0
        %5048 = vmatpush.msra.mxu0 0.0
        %v5049 = vand.u32 %v3203, 4294901760
        %v5050 = vsub.f32 %v3203, %v5049
        %5051 = vmatpush.msra.mxu0 %v5050
        %v5052 = vand.u32 %v4882, 4294901760
        %v5053 = vsub.f32 %v4882, %v5052
        %5054 = vmatmul.f32.gmra.mxu0 %v5053
        %v5055 = vpop.f32.mrf.mxu0
        %v5056 = vadd.f32 %v5004, %v5055
        %v5057 = vand.u32 %v4884, 4294901760
        %v5058 = vsub.f32 %v4884, %v5057
        %5059 = vmatmul.f32.gmra.mxu0 %v5058
        %v5060 = vpop.f32.mrf.mxu0
        %v5061 = vadd.f32 %v5008, %v5060
        %v5062 = vand.u32 %v4886, 4294901760
        %v5063 = vsub.f32 %v4886, %v5062
        %5064 = vmatmul.f32.gmra.mxu0 %v5063
        %v5065 = vpop.f32.mrf.mxu0
        %v5066 = vadd.f32 %v5012, %v5065
        %v5067 = vand.u32 %v4888, 4294901760
        %v5068 = vsub.f32 %v4888, %v5067
        %5069 = vmatmul.f32.gmra.mxu0 %v5068
        %v5070 = vpop.f32.mrf.mxu0
        %v5071 = vadd.f32 %v5016, %v5070
        %v5072 = vand.u32 %v4890, 4294901760
        %v5073 = vsub.f32 %v4890, %v5072
        %5074 = vmatmul.f32.gmra.mxu0 %v5073
        %v5075 = vpop.f32.mrf.mxu0
        %v5076 = vadd.f32 %v5020, %v5075
        %v5077 = vand.u32 %v4892, 4294901760
        %v5078 = vsub.f32 %v4892, %v5077
        %5079 = vmatmul.f32.gmra.mxu0 %v5078
        %v5080 = vpop.f32.mrf.mxu0
        %v5081 = vadd.f32 %v5024, %v5080
        %v5082 = vand.u32 %v4894, 4294901760
        %v5083 = vsub.f32 %v4894, %v5082
        %5084 = vmatmul.f32.gmra.mxu0 %v5083
        %v5085 = vpop.f32.mrf.mxu0
        %v5086 = vadd.f32 %v5028, %v5085
        %v5087 = vand.u32 %v4896, 4294901760
        %v5088 = vsub.f32 %v4896, %v5087
        %5089 = vmatmul.f32.gmra.mxu0 %v5088
        %v5090 = vpop.f32.mrf.mxu0
        %v5091 = vadd.f32 %v5032, %v5090
        %5092 = vdwg.mxu0
        %5093 = vmatpush.msra.mxu0 0.0
        %5094 = vmatpush.msra.mxu0 0.0
        %5095 = vmatpush.msra.mxu0 0.0
        %5096 = vmatpush.msra.mxu0 0.0
        %5097 = vmatpush.msra.mxu0 0.0
        %5098 = vmatpush.msra.mxu0 0.0
        %5099 = vmatpush.msra.mxu0 0.0
        %5100 = vmatpush.msra.mxu0 0.0
        %5101 = vmatpush.msra.mxu0 0.0
        %5102 = vmatpush.msra.mxu0 0.0
        %5103 = vmatpush.msra.mxu0 0.0
        %5104 = vmatpush.msra.mxu0 0.0
        %5105 = vmatpush.msra.mxu0 0.0
        %5106 = vmatpush.msra.mxu0 0.0
        %5107 = vmatpush.msra.mxu0 0.0
        %v5108 = vand.u32 %v3203, 4294901760
        %5109 = vmatpush.msra.mxu0 %v5108
        %v5110 = vand.u32 %v4882, 4294901760
        %v5111 = vsub.f32 %v4882, %v5110
        %v5112 = vand.u32 %v5111, 4294901760
        %5113 = vmatmul.f32.gmra.mxu0 %v5112
        %v5114 = vpop.f32.mrf.mxu0
        %v5115 = vadd.f32 %v5056, %v5114
        %v5116 = vand.u32 %v4884, 4294901760
        %v5117 = vsub.f32 %v4884, %v5116
        %v5118 = vand.u32 %v5117, 4294901760
        %5119 = vmatmul.f32.gmra.mxu0 %v5118
        %v5120 = vpop.f32.mrf.mxu0
        %v5121 = vadd.f32 %v5061, %v5120
        %v5122 = vand.u32 %v4886, 4294901760
        %v5123 = vsub.f32 %v4886, %v5122
        %v5124 = vand.u32 %v5123, 4294901760
        %5125 = vmatmul.f32.gmra.mxu0 %v5124
        %v5126 = vpop.f32.mrf.mxu0
        %v5127 = vadd.f32 %v5066, %v5126
        %v5128 = vand.u32 %v4888, 4294901760
        %v5129 = vsub.f32 %v4888, %v5128
        %v5130 = vand.u32 %v5129, 4294901760
        %5131 = vmatmul.f32.gmra.mxu0 %v5130
        %v5132 = vpop.f32.mrf.mxu0
        %v5133 = vadd.f32 %v5071, %v5132
        %v5134 = vand.u32 %v4890, 4294901760
        %v5135 = vsub.f32 %v4890, %v5134
        %v5136 = vand.u32 %v5135, 4294901760
        %5137 = vmatmul.f32.gmra.mxu0 %v5136
        %v5138 = vpop.f32.mrf.mxu0
        %v5139 = vadd.f32 %v5076, %v5138
        %v5140 = vand.u32 %v4892, 4294901760
        %v5141 = vsub.f32 %v4892, %v5140
        %v5142 = vand.u32 %v5141, 4294901760
        %5143 = vmatmul.f32.gmra.mxu0 %v5142
        %v5144 = vpop.f32.mrf.mxu0
        %v5145 = vadd.f32 %v5081, %v5144
        %v5146 = vand.u32 %v4894, 4294901760
        %v5147 = vsub.f32 %v4894, %v5146
        %v5148 = vand.u32 %v5147, 4294901760
        %5149 = vmatmul.f32.gmra.mxu0 %v5148
        %v5150 = vpop.f32.mrf.mxu0
        %v5151 = vadd.f32 %v5086, %v5150
        %v5152 = vand.u32 %v4896, 4294901760
        %v5153 = vsub.f32 %v4896, %v5152
        %v5154 = vand.u32 %v5153, 4294901760
        %5155 = vmatmul.f32.gmra.mxu0 %v5154
        %v5156 = vpop.f32.mrf.mxu0
        %v5157 = vadd.f32 %v5091, %v5156
        %5158 = vdwg.mxu0
        %5159 = vmatpush.msra.mxu0 0.0
        %5160 = vmatpush.msra.mxu0 0.0
        %5161 = vmatpush.msra.mxu0 0.0
        %5162 = vmatpush.msra.mxu0 0.0
        %5163 = vmatpush.msra.mxu0 0.0
        %5164 = vmatpush.msra.mxu0 0.0
        %5165 = vmatpush.msra.mxu0 0.0
        %5166 = vmatpush.msra.mxu0 0.0
        %5167 = vmatpush.msra.mxu0 0.0
        %5168 = vmatpush.msra.mxu0 0.0
        %5169 = vmatpush.msra.mxu0 0.0
        %5170 = vmatpush.msra.mxu0 0.0
        %5171 = vmatpush.msra.mxu0 0.0
        %5172 = vmatpush.msra.mxu0 0.0
        %5173 = vmatpush.msra.mxu0 0.0
        %v5174 = vand.u32 %v3203, 4294901760
        %v5175 = vsub.f32 %v3203, %v5174
        %v5176 = vand.u32 %v5175, 4294901760
        %5177 = vmatpush.msra.mxu0 %v5176
        %v5178 = vand.u32 %v4882, 4294901760
        %5179 = vmatmul.f32.gmra.mxu0 %v5178
        %v5180 = vpop.f32.mrf.mxu0
        %v5181 = vadd.f32 %v5115, %v5180
        %v5182 = vand.u32 %v4884, 4294901760
        %5183 = vmatmul.f32.gmra.mxu0 %v5182
        %v5184 = vpop.f32.mrf.mxu0
        %v5185 = vadd.f32 %v5121, %v5184
        %v5186 = vand.u32 %v4886, 4294901760
        %5187 = vmatmul.f32.gmra.mxu0 %v5186
        %v5188 = vpop.f32.mrf.mxu0
        %v5189 = vadd.f32 %v5127, %v5188
        %v5190 = vand.u32 %v4888, 4294901760
        %5191 = vmatmul.f32.gmra.mxu0 %v5190
        %v5192 = vpop.f32.mrf.mxu0
        %v5193 = vadd.f32 %v5133, %v5192
        %v5194 = vand.u32 %v4890, 4294901760
        %5195 = vmatmul.f32.gmra.mxu0 %v5194
        %v5196 = vpop.f32.mrf.mxu0
        %v5197 = vadd.f32 %v5139, %v5196
        %v5198 = vand.u32 %v4892, 4294901760
        %5199 = vmatmul.f32.gmra.mxu0 %v5198
        %v5200 = vpop.f32.mrf.mxu0
        %v5201 = vadd.f32 %v5145, %v5200
        %v5202 = vand.u32 %v4894, 4294901760
        %5203 = vmatmul.f32.gmra.mxu0 %v5202
        %v5204 = vpop.f32.mrf.mxu0
        %v5205 = vadd.f32 %v5151, %v5204
        %v5206 = vand.u32 %v4896, 4294901760
        %5207 = vmatmul.f32.gmra.mxu0 %v5206
        %v5208 = vpop.f32.mrf.mxu0
        %v5209 = vadd.f32 %v5157, %v5208
        %5210 = vdwg.mxu0
        %5211 = vmatpush.msra.mxu0 0.0
        %5212 = vmatpush.msra.mxu0 0.0
        %5213 = vmatpush.msra.mxu0 0.0
        %5214 = vmatpush.msra.mxu0 0.0
        %5215 = vmatpush.msra.mxu0 0.0
        %5216 = vmatpush.msra.mxu0 0.0
        %5217 = vmatpush.msra.mxu0 0.0
        %5218 = vmatpush.msra.mxu0 0.0
        %5219 = vmatpush.msra.mxu0 0.0
        %5220 = vmatpush.msra.mxu0 0.0
        %5221 = vmatpush.msra.mxu0 0.0
        %5222 = vmatpush.msra.mxu0 0.0
        %5223 = vmatpush.msra.mxu0 0.0
        %5224 = vmatpush.msra.mxu0 0.0
        %5225 = vmatpush.msra.mxu0 0.0
        %v5226 = vand.u32 %v3203, 4294901760
        %5227 = vmatpush.msra.mxu0 %v5226
        %v5228 = vand.u32 %v4882, 4294901760
        %5229 = vmatmul.f32.gmra.mxu0 %v5228
        %v5230 = vpop.f32.mrf.mxu0
        %v5231 = vadd.f32 %v5181, %v5230
        %v5232 = vand.u32 %v4884, 4294901760
        %5233 = vmatmul.f32.gmra.mxu0 %v5232
        %v5234 = vpop.f32.mrf.mxu0
        %v5235 = vadd.f32 %v5185, %v5234
        %v5236 = vand.u32 %v4886, 4294901760
        %5237 = vmatmul.f32.gmra.mxu0 %v5236
        %v5238 = vpop.f32.mrf.mxu0
        %v5239 = vadd.f32 %v5189, %v5238
        %v5240 = vand.u32 %v4888, 4294901760
        %5241 = vmatmul.f32.gmra.mxu0 %v5240
        %v5242 = vpop.f32.mrf.mxu0
        %v5243 = vadd.f32 %v5193, %v5242
        %v5244 = vand.u32 %v4890, 4294901760
        %5245 = vmatmul.f32.gmra.mxu0 %v5244
        %v5246 = vpop.f32.mrf.mxu0
        %v5247 = vadd.f32 %v5197, %v5246
        %v5248 = vand.u32 %v4892, 4294901760
        %5249 = vmatmul.f32.gmra.mxu0 %v5248
        %v5250 = vpop.f32.mrf.mxu0
        %v5251 = vadd.f32 %v5201, %v5250
        %v5252 = vand.u32 %v4894, 4294901760
        %5253 = vmatmul.f32.gmra.mxu0 %v5252
        %v5254 = vpop.f32.mrf.mxu0
        %v5255 = vadd.f32 %v5205, %v5254
        %v5256 = vand.u32 %v4896, 4294901760
        %5257 = vmatmul.f32.gmra.mxu0 %v5256
        %v5258 = vpop.f32.mrf.mxu0
        %v5259 = vadd.f32 %v5209, %v5258
        %5260 = vdwg.mxu0
        %5261 = vset.pattern.permute.xlu0 16
        %5262 = vperm.xlu0 %5261, %v1309
        %v5263 = vpop.permute.xlu0 %5262
        %5265 = vset.pattern.permute.xlu0 16
        %5266 = vperm.xlu0 %5265, %v1313
        %v5267 = vpop.permute.xlu0 %5266
        %5269 = vset.pattern.permute.xlu0 16
        %5270 = vperm.xlu0 %5269, %v1317
        %v5271 = vpop.permute.xlu0 %5270
        %5273 = vset.pattern.permute.xlu0 16
        %5274 = vperm.xlu0 %5273, %v1321
        %v5275 = vpop.permute.xlu0 %5274
        %5277 = vset.pattern.permute.xlu0 16
        %5278 = vperm.xlu0 %5277, %v1325
        %v5279 = vpop.permute.xlu0 %5278
        %5281 = vset.pattern.permute.xlu0 16
        %5282 = vperm.xlu0 %5281, %v1329
        %v5283 = vpop.permute.xlu0 %5282
        %5285 = vset.pattern.permute.xlu0 16
        %5286 = vperm.xlu0 %5285, %v1333
        %v5287 = vpop.permute.xlu0 %5286
        %5289 = vset.pattern.permute.xlu0 16
        %5290 = vperm.xlu0 %5289, %v1337
        %v5291 = vpop.permute.xlu0 %5290
        %v5293 = vmul.f32 %v3592, %v5263
        %v5294 = vmul.f32 %v3593, %v5267
        %v5295 = vmul.f32 %v3594, %v5271
        %v5296 = vmul.f32 %v3595, %v5275
        %v5297 = vmul.f32 %v3596, %v5279
        %v5298 = vmul.f32 %v3597, %v5283
        %v5299 = vmul.f32 %v3598, %v5287
        %v5300 = vmul.f32 %v3599, %v5291
        %v5301 = vadd.f32 %v5293, 0.0
        %v5302 = vadd.f32 %v5294, 0.0
        %v5303 = vadd.f32 %v5295, 0.0
        %v5304 = vadd.f32 %v5296, 0.0
        %v5305 = vadd.f32 %v5297, 0.0
        %v5306 = vadd.f32 %v5298, 0.0
        %v5307 = vadd.f32 %v5299, 0.0
        %v5308 = vadd.f32 %v5300, 0.0
        %5309 = vset.pattern.permute.xlu0 17
        %5310 = vperm.xlu0 %5309, %v1309
        %v5311 = vpop.permute.xlu0 %5310
        %5313 = vset.pattern.permute.xlu0 17
        %5314 = vperm.xlu0 %5313, %v1313
        %v5315 = vpop.permute.xlu0 %5314
        %5317 = vset.pattern.permute.xlu0 17
        %5318 = vperm.xlu0 %5317, %v1317
        %v5319 = vpop.permute.xlu0 %5318
        %5321 = vset.pattern.permute.xlu0 17
        %5322 = vperm.xlu0 %5321, %v1321
        %v5323 = vpop.permute.xlu0 %5322
        %5325 = vset.pattern.permute.xlu0 17
        %5326 = vperm.xlu0 %5325, %v1325
        %v5327 = vpop.permute.xlu0 %5326
        %5329 = vset.pattern.permute.xlu0 17
        %5330 = vperm.xlu0 %5329, %v1329
        %v5331 = vpop.permute.xlu0 %5330
        %5333 = vset.pattern.permute.xlu0 17
        %5334 = vperm.xlu0 %5333, %v1333
        %v5335 = vpop.permute.xlu0 %5334
        %5337 = vset.pattern.permute.xlu0 17
        %5338 = vperm.xlu0 %5337, %v1337
        %v5339 = vpop.permute.xlu0 %5338
        %v5341 = vmul.f32 %v3657, %v5311
        %v5342 = vmul.f32 %v3658, %v5315
        %v5343 = vmul.f32 %v3659, %v5319
        %v5344 = vmul.f32 %v3660, %v5323
        %v5345 = vmul.f32 %v3661, %v5327
        %v5346 = vmul.f32 %v3662, %v5331
        %v5347 = vmul.f32 %v3663, %v5335
        %v5348 = vmul.f32 %v3664, %v5339
        %v5349 = vadd.f32 %v5301, %v5341
        %v5350 = vadd.f32 %v5302, %v5342
        %v5351 = vadd.f32 %v5303, %v5343
        %v5352 = vadd.f32 %v5304, %v5344
        %v5353 = vadd.f32 %v5305, %v5345
        %v5354 = vadd.f32 %v5306, %v5346
        %v5355 = vadd.f32 %v5307, %v5347
        %v5356 = vadd.f32 %v5308, %v5348
        %5357 = vset.pattern.permute.xlu0 18
        %5358 = vperm.xlu0 %5357, %v1309
        %v5359 = vpop.permute.xlu0 %5358
        %5361 = vset.pattern.permute.xlu0 18
        %5362 = vperm.xlu0 %5361, %v1313
        %v5363 = vpop.permute.xlu0 %5362
        %5365 = vset.pattern.permute.xlu0 18
        %5366 = vperm.xlu0 %5365, %v1317
        %v5367 = vpop.permute.xlu0 %5366
        %5369 = vset.pattern.permute.xlu0 18
        %5370 = vperm.xlu0 %5369, %v1321
        %v5371 = vpop.permute.xlu0 %5370
        %5373 = vset.pattern.permute.xlu0 18
        %5374 = vperm.xlu0 %5373, %v1325
        %v5375 = vpop.permute.xlu0 %5374
        %5377 = vset.pattern.permute.xlu0 18
        %5378 = vperm.xlu0 %5377, %v1329
        %v5379 = vpop.permute.xlu0 %5378
        %5381 = vset.pattern.permute.xlu0 18
        %5382 = vperm.xlu0 %5381, %v1333
        %v5383 = vpop.permute.xlu0 %5382
        %5385 = vset.pattern.permute.xlu0 18
        %5386 = vperm.xlu0 %5385, %v1337
        %v5387 = vpop.permute.xlu0 %5386
        %v5389 = vmul.f32 %v3714, %v5359
        %v5390 = vmul.f32 %v3715, %v5363
        %v5391 = vmul.f32 %v3716, %v5367
        %v5392 = vmul.f32 %v3717, %v5371
        %v5393 = vmul.f32 %v3718, %v5375
        %v5394 = vmul.f32 %v3719, %v5379
        %v5395 = vmul.f32 %v3720, %v5383
        %v5396 = vmul.f32 %v3721, %v5387
        %v5397 = vadd.f32 %v5349, %v5389
        %v5398 = vadd.f32 %v5350, %v5390
        %v5399 = vadd.f32 %v5351, %v5391
        %v5400 = vadd.f32 %v5352, %v5392
        %v5401 = vadd.f32 %v5353, %v5393
        %v5402 = vadd.f32 %v5354, %v5394
        %v5403 = vadd.f32 %v5355, %v5395
        %v5404 = vadd.f32 %v5356, %v5396
        %5405 = vset.pattern.permute.xlu0 19
        %5406 = vperm.xlu0 %5405, %v1309
        %v5407 = vpop.permute.xlu0 %5406
        %5409 = vset.pattern.permute.xlu0 19
        %5410 = vperm.xlu0 %5409, %v1313
        %v5411 = vpop.permute.xlu0 %5410
        %5413 = vset.pattern.permute.xlu0 19
        %5414 = vperm.xlu0 %5413, %v1317
        %v5415 = vpop.permute.xlu0 %5414
        %5417 = vset.pattern.permute.xlu0 19
        %5418 = vperm.xlu0 %5417, %v1321
        %v5419 = vpop.permute.xlu0 %5418
        %5421 = vset.pattern.permute.xlu0 19
        %5422 = vperm.xlu0 %5421, %v1325
        %v5423 = vpop.permute.xlu0 %5422
        %5425 = vset.pattern.permute.xlu0 19
        %5426 = vperm.xlu0 %5425, %v1329
        %v5427 = vpop.permute.xlu0 %5426
        %5429 = vset.pattern.permute.xlu0 19
        %5430 = vperm.xlu0 %5429, %v1333
        %v5431 = vpop.permute.xlu0 %5430
        %5433 = vset.pattern.permute.xlu0 19
        %5434 = vperm.xlu0 %5433, %v1337
        %v5435 = vpop.permute.xlu0 %5434
        %v5437 = vmul.f32 %v3771, %v5407
        %v5438 = vmul.f32 %v3772, %v5411
        %v5439 = vmul.f32 %v3773, %v5415
        %v5440 = vmul.f32 %v3774, %v5419
        %v5441 = vmul.f32 %v3775, %v5423
        %v5442 = vmul.f32 %v3776, %v5427
        %v5443 = vmul.f32 %v3777, %v5431
        %v5444 = vmul.f32 %v3778, %v5435
        %v5445 = vadd.f32 %v5397, %v5437
        %v5446 = vadd.f32 %v5398, %v5438
        %v5447 = vadd.f32 %v5399, %v5439
        %v5448 = vadd.f32 %v5400, %v5440
        %v5449 = vadd.f32 %v5401, %v5441
        %v5450 = vadd.f32 %v5402, %v5442
        %v5451 = vadd.f32 %v5403, %v5443
        %v5452 = vadd.f32 %v5404, %v5444
        %5453 = vset.pattern.permute.xlu0 20
        %5454 = vperm.xlu0 %5453, %v1309
        %v5455 = vpop.permute.xlu0 %5454
        %5457 = vset.pattern.permute.xlu0 20
        %5458 = vperm.xlu0 %5457, %v1313
        %v5459 = vpop.permute.xlu0 %5458
        %5461 = vset.pattern.permute.xlu0 20
        %5462 = vperm.xlu0 %5461, %v1317
        %v5463 = vpop.permute.xlu0 %5462
        %5465 = vset.pattern.permute.xlu0 20
        %5466 = vperm.xlu0 %5465, %v1321
        %v5467 = vpop.permute.xlu0 %5466
        %5469 = vset.pattern.permute.xlu0 20
        %5470 = vperm.xlu0 %5469, %v1325
        %v5471 = vpop.permute.xlu0 %5470
        %5473 = vset.pattern.permute.xlu0 20
        %5474 = vperm.xlu0 %5473, %v1329
        %v5475 = vpop.permute.xlu0 %5474
        %5477 = vset.pattern.permute.xlu0 20
        %5478 = vperm.xlu0 %5477, %v1333
        %v5479 = vpop.permute.xlu0 %5478
        %5481 = vset.pattern.permute.xlu0 20
        %5482 = vperm.xlu0 %5481, %v1337
        %v5483 = vpop.permute.xlu0 %5482
        %v5485 = vmul.f32 %v3828, %v5455
        %v5486 = vmul.f32 %v3829, %v5459
        %v5487 = vmul.f32 %v3830, %v5463
        %v5488 = vmul.f32 %v3831, %v5467
        %v5489 = vmul.f32 %v3832, %v5471
        %v5490 = vmul.f32 %v3833, %v5475
        %v5491 = vmul.f32 %v3834, %v5479
        %v5492 = vmul.f32 %v3835, %v5483
        %v5493 = vadd.f32 %v5445, %v5485
        %v5494 = vadd.f32 %v5446, %v5486
        %v5495 = vadd.f32 %v5447, %v5487
        %v5496 = vadd.f32 %v5448, %v5488
        %v5497 = vadd.f32 %v5449, %v5489
        %v5498 = vadd.f32 %v5450, %v5490
        %v5499 = vadd.f32 %v5451, %v5491
        %v5500 = vadd.f32 %v5452, %v5492
        %5501 = vset.pattern.permute.xlu0 21
        %5502 = vperm.xlu0 %5501, %v1309
        %v5503 = vpop.permute.xlu0 %5502
        %5505 = vset.pattern.permute.xlu0 21
        %5506 = vperm.xlu0 %5505, %v1313
        %v5507 = vpop.permute.xlu0 %5506
        %5509 = vset.pattern.permute.xlu0 21
        %5510 = vperm.xlu0 %5509, %v1317
        %v5511 = vpop.permute.xlu0 %5510
        %5513 = vset.pattern.permute.xlu0 21
        %5514 = vperm.xlu0 %5513, %v1321
        %v5515 = vpop.permute.xlu0 %5514
        %5517 = vset.pattern.permute.xlu0 21
        %5518 = vperm.xlu0 %5517, %v1325
        %v5519 = vpop.permute.xlu0 %5518
        %5521 = vset.pattern.permute.xlu0 21
        %5522 = vperm.xlu0 %5521, %v1329
        %v5523 = vpop.permute.xlu0 %5522
        %5525 = vset.pattern.permute.xlu0 21
        %5526 = vperm.xlu0 %5525, %v1333
        %v5527 = vpop.permute.xlu0 %5526
        %5529 = vset.pattern.permute.xlu0 21
        %5530 = vperm.xlu0 %5529, %v1337
        %v5531 = vpop.permute.xlu0 %5530
        %v5533 = vmul.f32 %v3885, %v5503
        %v5534 = vmul.f32 %v3886, %v5507
        %v5535 = vmul.f32 %v3887, %v5511
        %v5536 = vmul.f32 %v3888, %v5515
        %v5537 = vmul.f32 %v3889, %v5519
        %v5538 = vmul.f32 %v3890, %v5523
        %v5539 = vmul.f32 %v3891, %v5527
        %v5540 = vmul.f32 %v3892, %v5531
        %v5541 = vadd.f32 %v5493, %v5533
        %v5542 = vadd.f32 %v5494, %v5534
        %v5543 = vadd.f32 %v5495, %v5535
        %v5544 = vadd.f32 %v5496, %v5536
        %v5545 = vadd.f32 %v5497, %v5537
        %v5546 = vadd.f32 %v5498, %v5538
        %v5547 = vadd.f32 %v5499, %v5539
        %v5548 = vadd.f32 %v5500, %v5540
        %5549 = vset.pattern.permute.xlu0 22
        %5550 = vperm.xlu0 %5549, %v1309
        %v5551 = vpop.permute.xlu0 %5550
        %5553 = vset.pattern.permute.xlu0 22
        %5554 = vperm.xlu0 %5553, %v1313
        %v5555 = vpop.permute.xlu0 %5554
        %5557 = vset.pattern.permute.xlu0 22
        %5558 = vperm.xlu0 %5557, %v1317
        %v5559 = vpop.permute.xlu0 %5558
        %5561 = vset.pattern.permute.xlu0 22
        %5562 = vperm.xlu0 %5561, %v1321
        %v5563 = vpop.permute.xlu0 %5562
        %5565 = vset.pattern.permute.xlu0 22
        %5566 = vperm.xlu0 %5565, %v1325
        %v5567 = vpop.permute.xlu0 %5566
        %5569 = vset.pattern.permute.xlu0 22
        %5570 = vperm.xlu0 %5569, %v1329
        %v5571 = vpop.permute.xlu0 %5570
        %5573 = vset.pattern.permute.xlu0 22
        %5574 = vperm.xlu0 %5573, %v1333
        %v5575 = vpop.permute.xlu0 %5574
        %5577 = vset.pattern.permute.xlu0 22
        %5578 = vperm.xlu0 %5577, %v1337
        %v5579 = vpop.permute.xlu0 %5578
        %v5581 = vmul.f32 %v3942, %v5551
        %v5582 = vmul.f32 %v3943, %v5555
        %v5583 = vmul.f32 %v3944, %v5559
        %v5584 = vmul.f32 %v3945, %v5563
        %v5585 = vmul.f32 %v3946, %v5567
        %v5586 = vmul.f32 %v3947, %v5571
        %v5587 = vmul.f32 %v3948, %v5575
        %v5588 = vmul.f32 %v3949, %v5579
        %v5589 = vadd.f32 %v5541, %v5581
        %v5590 = vadd.f32 %v5542, %v5582
        %v5591 = vadd.f32 %v5543, %v5583
        %v5592 = vadd.f32 %v5544, %v5584
        %v5593 = vadd.f32 %v5545, %v5585
        %v5594 = vadd.f32 %v5546, %v5586
        %v5595 = vadd.f32 %v5547, %v5587
        %v5596 = vadd.f32 %v5548, %v5588
        %5597 = vset.pattern.permute.xlu0 23
        %5598 = vperm.xlu0 %5597, %v1309
        %v5599 = vpop.permute.xlu0 %5598
        %5601 = vset.pattern.permute.xlu0 23
        %5602 = vperm.xlu0 %5601, %v1313
        %v5603 = vpop.permute.xlu0 %5602
        %5605 = vset.pattern.permute.xlu0 23
        %5606 = vperm.xlu0 %5605, %v1317
        %v5607 = vpop.permute.xlu0 %5606
        %5609 = vset.pattern.permute.xlu0 23
        %5610 = vperm.xlu0 %5609, %v1321
        %v5611 = vpop.permute.xlu0 %5610
        %5613 = vset.pattern.permute.xlu0 23
        %5614 = vperm.xlu0 %5613, %v1325
        %v5615 = vpop.permute.xlu0 %5614
        %5617 = vset.pattern.permute.xlu0 23
        %5618 = vperm.xlu0 %5617, %v1329
        %v5619 = vpop.permute.xlu0 %5618
        %5621 = vset.pattern.permute.xlu0 23
        %5622 = vperm.xlu0 %5621, %v1333
        %v5623 = vpop.permute.xlu0 %5622
        %5625 = vset.pattern.permute.xlu0 23
        %5626 = vperm.xlu0 %5625, %v1337
        %v5627 = vpop.permute.xlu0 %5626
        %v5629 = vmul.f32 %v3999, %v5599
        %v5630 = vmul.f32 %v4000, %v5603
        %v5631 = vmul.f32 %v4001, %v5607
        %v5632 = vmul.f32 %v4002, %v5611
        %v5633 = vmul.f32 %v4003, %v5615
        %v5634 = vmul.f32 %v4004, %v5619
        %v5635 = vmul.f32 %v4005, %v5623
        %v5636 = vmul.f32 %v4006, %v5627
        %v5637 = vadd.f32 %v5589, %v5629
        %v5638 = vadd.f32 %v5590, %v5630
        %v5639 = vadd.f32 %v5591, %v5631
        %v5640 = vadd.f32 %v5592, %v5632
        %v5641 = vadd.f32 %v5593, %v5633
        %v5642 = vadd.f32 %v5594, %v5634
        %v5643 = vadd.f32 %v5595, %v5635
        %v5644 = vadd.f32 %v5596, %v5636
        %v5645 = vmul.f32 %v5637, %v5231
        %v5646 = vmul.f32 %v5638, %v5235
        %v5647 = vmul.f32 %v5639, %v5239
        %v5648 = vmul.f32 %v5640, %v5243
        %v5649 = vmul.f32 %v5641, %v5247
        %v5650 = vmul.f32 %v5642, %v5251
        %v5651 = vmul.f32 %v5643, %v5255
        %v5652 = vmul.f32 %v5644, %v5259
        %v5653 = vadd.f32 %v4858, %v5645
        %v5654 = vadd.f32 %v4859, %v5646
        %v5655 = vadd.f32 %v4860, %v5647
        %v5656 = vadd.f32 %v4861, %v5648
        %v5657 = vadd.f32 %v4862, %v5649
        %v5658 = vadd.f32 %v4863, %v5650
        %v5659 = vadd.f32 %v4864, %v5651
        %v5660 = vadd.f32 %v4865, %v5652
        %5661 = vrot.lane.b32.xlu0 %v3195, 104
        %v5662 = vpop.permute.xlu0 %5661
        %5663 = vrot.lane.b32.xlu0 %v3196, 104
        %v5664 = vpop.permute.xlu0 %5663
        %5665 = vrot.lane.b32.xlu0 %v3197, 104
        %v5666 = vpop.permute.xlu0 %5665
        %5667 = vrot.lane.b32.xlu0 %v3198, 104
        %v5668 = vpop.permute.xlu0 %5667
        %5669 = vrot.lane.b32.xlu0 %v3199, 104
        %v5670 = vpop.permute.xlu0 %5669
        %5671 = vrot.lane.b32.xlu0 %v3200, 104
        %v5672 = vpop.permute.xlu0 %5671
        %5673 = vrot.lane.b32.xlu0 %v3201, 104
        %v5674 = vpop.permute.xlu0 %5673
        %5675 = vrot.lane.b32.xlu0 %v3202, 104
        %v5676 = vpop.permute.xlu0 %5675
        %v5677 = vsel %vm3204, %v5662, 0
        %v5679 = vsel %vm3204, %v5664, 0
        %v5681 = vsel %vm3204, %v5666, 0
        %v5683 = vsel %vm3204, %v5668, 0
        %v5685 = vsel %vm3204, %v5670, 0
        %v5687 = vsel %vm3204, %v5672, 0
        %v5689 = vsel %vm3204, %v5674, 0
        %v5691 = vsel %vm3204, %v5676, 0
        %5693 = vmatpush.msra.mxu0 0.0
        %5694 = vmatpush.msra.mxu0 0.0
        %5695 = vmatpush.msra.mxu0 0.0
        %5696 = vmatpush.msra.mxu0 0.0
        %5697 = vmatpush.msra.mxu0 0.0
        %5698 = vmatpush.msra.mxu0 0.0
        %5699 = vmatpush.msra.mxu0 0.0
        %5700 = vmatpush.msra.mxu0 0.0
        %5701 = vmatpush.msra.mxu0 0.0
        %5702 = vmatpush.msra.mxu0 0.0
        %5703 = vmatpush.msra.mxu0 0.0
        %5704 = vmatpush.msra.mxu0 0.0
        %5705 = vmatpush.msra.mxu0 0.0
        %5706 = vmatpush.msra.mxu0 0.0
        %5707 = vmatpush.msra.mxu0 0.0
        %v5708 = vand.u32 %v3203, 4294901760
        %5709 = vmatpush.msra.mxu0 %v5708
        %v5710 = vand.u32 %v5677, 4294901760
        %v5711 = vsub.f32 %v5677, %v5710
        %v5712 = vand.u32 %v5711, 4294901760
        %v5713 = vsub.f32 %v5711, %v5712
        %v5714 = vand.u32 %v5713, 4294901760
        %5715 = vmatmul.f32.gmra.mxu0 %v5714
        %v5716 = vpop.f32.mrf.mxu0
        %v5717 = vadd.f32 0.0, %v5716
        %v5718 = vand.u32 %v5679, 4294901760
        %v5719 = vsub.f32 %v5679, %v5718
        %v5720 = vand.u32 %v5719, 4294901760
        %v5721 = vsub.f32 %v5719, %v5720
        %v5722 = vand.u32 %v5721, 4294901760
        %5723 = vmatmul.f32.gmra.mxu0 %v5722
        %v5724 = vpop.f32.mrf.mxu0
        %v5725 = vadd.f32 0.0, %v5724
        %v5726 = vand.u32 %v5681, 4294901760
        %v5727 = vsub.f32 %v5681, %v5726
        %v5728 = vand.u32 %v5727, 4294901760
        %v5729 = vsub.f32 %v5727, %v5728
        %v5730 = vand.u32 %v5729, 4294901760
        %5731 = vmatmul.f32.gmra.mxu0 %v5730
        %v5732 = vpop.f32.mrf.mxu0
        %v5733 = vadd.f32 0.0, %v5732
        %v5734 = vand.u32 %v5683, 4294901760
        %v5735 = vsub.f32 %v5683, %v5734
        %v5736 = vand.u32 %v5735, 4294901760
        %v5737 = vsub.f32 %v5735, %v5736
        %v5738 = vand.u32 %v5737, 4294901760
        %5739 = vmatmul.f32.gmra.mxu0 %v5738
        %v5740 = vpop.f32.mrf.mxu0
        %v5741 = vadd.f32 0.0, %v5740
        %v5742 = vand.u32 %v5685, 4294901760
        %v5743 = vsub.f32 %v5685, %v5742
        %v5744 = vand.u32 %v5743, 4294901760
        %v5745 = vsub.f32 %v5743, %v5744
        %v5746 = vand.u32 %v5745, 4294901760
        %5747 = vmatmul.f32.gmra.mxu0 %v5746
        %v5748 = vpop.f32.mrf.mxu0
        %v5749 = vadd.f32 0.0, %v5748
        %v5750 = vand.u32 %v5687, 4294901760
        %v5751 = vsub.f32 %v5687, %v5750
        %v5752 = vand.u32 %v5751, 4294901760
        %v5753 = vsub.f32 %v5751, %v5752
        %v5754 = vand.u32 %v5753, 4294901760
        %5755 = vmatmul.f32.gmra.mxu0 %v5754
        %v5756 = vpop.f32.mrf.mxu0
        %v5757 = vadd.f32 0.0, %v5756
        %v5758 = vand.u32 %v5689, 4294901760
        %v5759 = vsub.f32 %v5689, %v5758
        %v5760 = vand.u32 %v5759, 4294901760
        %v5761 = vsub.f32 %v5759, %v5760
        %v5762 = vand.u32 %v5761, 4294901760
        %5763 = vmatmul.f32.gmra.mxu0 %v5762
        %v5764 = vpop.f32.mrf.mxu0
        %v5765 = vadd.f32 0.0, %v5764
        %v5766 = vand.u32 %v5691, 4294901760
        %v5767 = vsub.f32 %v5691, %v5766
        %v5768 = vand.u32 %v5767, 4294901760
        %v5769 = vsub.f32 %v5767, %v5768
        %v5770 = vand.u32 %v5769, 4294901760
        %5771 = vmatmul.f32.gmra.mxu0 %v5770
        %v5772 = vpop.f32.mrf.mxu0
        %v5773 = vadd.f32 0.0, %v5772
        %5774 = vdwg.mxu0
        %5775 = vmatpush.msra.mxu0 0.0
        %5776 = vmatpush.msra.mxu0 0.0
        %5777 = vmatpush.msra.mxu0 0.0
        %5778 = vmatpush.msra.mxu0 0.0
        %5779 = vmatpush.msra.mxu0 0.0
        %5780 = vmatpush.msra.mxu0 0.0
        %5781 = vmatpush.msra.mxu0 0.0
        %5782 = vmatpush.msra.mxu0 0.0
        %5783 = vmatpush.msra.mxu0 0.0
        %5784 = vmatpush.msra.mxu0 0.0
        %5785 = vmatpush.msra.mxu0 0.0
        %5786 = vmatpush.msra.mxu0 0.0
        %5787 = vmatpush.msra.mxu0 0.0
        %5788 = vmatpush.msra.mxu0 0.0
        %5789 = vmatpush.msra.mxu0 0.0
        %v5790 = vand.u32 %v3203, 4294901760
        %v5791 = vsub.f32 %v3203, %v5790
        %v5792 = vand.u32 %v5791, 4294901760
        %v5793 = vsub.f32 %v5791, %v5792
        %v5794 = vand.u32 %v5793, 4294901760
        %5795 = vmatpush.msra.mxu0 %v5794
        %v5796 = vand.u32 %v5677, 4294901760
        %5797 = vmatmul.f32.gmra.mxu0 %v5796
        %v5798 = vpop.f32.mrf.mxu0
        %v5799 = vadd.f32 %v5717, %v5798
        %v5800 = vand.u32 %v5679, 4294901760
        %5801 = vmatmul.f32.gmra.mxu0 %v5800
        %v5802 = vpop.f32.mrf.mxu0
        %v5803 = vadd.f32 %v5725, %v5802
        %v5804 = vand.u32 %v5681, 4294901760
        %5805 = vmatmul.f32.gmra.mxu0 %v5804
        %v5806 = vpop.f32.mrf.mxu0
        %v5807 = vadd.f32 %v5733, %v5806
        %v5808 = vand.u32 %v5683, 4294901760
        %5809 = vmatmul.f32.gmra.mxu0 %v5808
        %v5810 = vpop.f32.mrf.mxu0
        %v5811 = vadd.f32 %v5741, %v5810
        %v5812 = vand.u32 %v5685, 4294901760
        %5813 = vmatmul.f32.gmra.mxu0 %v5812
        %v5814 = vpop.f32.mrf.mxu0
        %v5815 = vadd.f32 %v5749, %v5814
        %v5816 = vand.u32 %v5687, 4294901760
        %5817 = vmatmul.f32.gmra.mxu0 %v5816
        %v5818 = vpop.f32.mrf.mxu0
        %v5819 = vadd.f32 %v5757, %v5818
        %v5820 = vand.u32 %v5689, 4294901760
        %5821 = vmatmul.f32.gmra.mxu0 %v5820
        %v5822 = vpop.f32.mrf.mxu0
        %v5823 = vadd.f32 %v5765, %v5822
        %v5824 = vand.u32 %v5691, 4294901760
        %5825 = vmatmul.f32.gmra.mxu0 %v5824
        %v5826 = vpop.f32.mrf.mxu0
        %v5827 = vadd.f32 %v5773, %v5826
        %5828 = vdwg.mxu0
        %5829 = vmatpush.msra.mxu0 0.0
        %5830 = vmatpush.msra.mxu0 0.0
        %5831 = vmatpush.msra.mxu0 0.0
        %5832 = vmatpush.msra.mxu0 0.0
        %5833 = vmatpush.msra.mxu0 0.0
        %5834 = vmatpush.msra.mxu0 0.0
        %5835 = vmatpush.msra.mxu0 0.0
        %5836 = vmatpush.msra.mxu0 0.0
        %5837 = vmatpush.msra.mxu0 0.0
        %5838 = vmatpush.msra.mxu0 0.0
        %5839 = vmatpush.msra.mxu0 0.0
        %5840 = vmatpush.msra.mxu0 0.0
        %5841 = vmatpush.msra.mxu0 0.0
        %5842 = vmatpush.msra.mxu0 0.0
        %5843 = vmatpush.msra.mxu0 0.0
        %v5844 = vand.u32 %v3203, 4294901760
        %v5845 = vsub.f32 %v3203, %v5844
        %5846 = vmatpush.msra.mxu0 %v5845
        %v5847 = vand.u32 %v5677, 4294901760
        %v5848 = vsub.f32 %v5677, %v5847
        %5849 = vmatmul.f32.gmra.mxu0 %v5848
        %v5850 = vpop.f32.mrf.mxu0
        %v5851 = vadd.f32 %v5799, %v5850
        %v5852 = vand.u32 %v5679, 4294901760
        %v5853 = vsub.f32 %v5679, %v5852
        %5854 = vmatmul.f32.gmra.mxu0 %v5853
        %v5855 = vpop.f32.mrf.mxu0
        %v5856 = vadd.f32 %v5803, %v5855
        %v5857 = vand.u32 %v5681, 4294901760
        %v5858 = vsub.f32 %v5681, %v5857
        %5859 = vmatmul.f32.gmra.mxu0 %v5858
        %v5860 = vpop.f32.mrf.mxu0
        %v5861 = vadd.f32 %v5807, %v5860
        %v5862 = vand.u32 %v5683, 4294901760
        %v5863 = vsub.f32 %v5683, %v5862
        %5864 = vmatmul.f32.gmra.mxu0 %v5863
        %v5865 = vpop.f32.mrf.mxu0
        %v5866 = vadd.f32 %v5811, %v5865
        %v5867 = vand.u32 %v5685, 4294901760
        %v5868 = vsub.f32 %v5685, %v5867
        %5869 = vmatmul.f32.gmra.mxu0 %v5868
        %v5870 = vpop.f32.mrf.mxu0
        %v5871 = vadd.f32 %v5815, %v5870
        %v5872 = vand.u32 %v5687, 4294901760
        %v5873 = vsub.f32 %v5687, %v5872
        %5874 = vmatmul.f32.gmra.mxu0 %v5873
        %v5875 = vpop.f32.mrf.mxu0
        %v5876 = vadd.f32 %v5819, %v5875
        %v5877 = vand.u32 %v5689, 4294901760
        %v5878 = vsub.f32 %v5689, %v5877
        %5879 = vmatmul.f32.gmra.mxu0 %v5878
        %v5880 = vpop.f32.mrf.mxu0
        %v5881 = vadd.f32 %v5823, %v5880
        %v5882 = vand.u32 %v5691, 4294901760
        %v5883 = vsub.f32 %v5691, %v5882
        %5884 = vmatmul.f32.gmra.mxu0 %v5883
        %v5885 = vpop.f32.mrf.mxu0
        %v5886 = vadd.f32 %v5827, %v5885
        %5887 = vdwg.mxu0
        %5888 = vmatpush.msra.mxu0 0.0
        %5889 = vmatpush.msra.mxu0 0.0
        %5890 = vmatpush.msra.mxu0 0.0
        %5891 = vmatpush.msra.mxu0 0.0
        %5892 = vmatpush.msra.mxu0 0.0
        %5893 = vmatpush.msra.mxu0 0.0
        %5894 = vmatpush.msra.mxu0 0.0
        %5895 = vmatpush.msra.mxu0 0.0
        %5896 = vmatpush.msra.mxu0 0.0
        %5897 = vmatpush.msra.mxu0 0.0
        %5898 = vmatpush.msra.mxu0 0.0
        %5899 = vmatpush.msra.mxu0 0.0
        %5900 = vmatpush.msra.mxu0 0.0
        %5901 = vmatpush.msra.mxu0 0.0
        %5902 = vmatpush.msra.mxu0 0.0
        %v5903 = vand.u32 %v3203, 4294901760
        %5904 = vmatpush.msra.mxu0 %v5903
        %v5905 = vand.u32 %v5677, 4294901760
        %v5906 = vsub.f32 %v5677, %v5905
        %v5907 = vand.u32 %v5906, 4294901760
        %5908 = vmatmul.f32.gmra.mxu0 %v5907
        %v5909 = vpop.f32.mrf.mxu0
        %v5910 = vadd.f32 %v5851, %v5909
        %v5911 = vand.u32 %v5679, 4294901760
        %v5912 = vsub.f32 %v5679, %v5911
        %v5913 = vand.u32 %v5912, 4294901760
        %5914 = vmatmul.f32.gmra.mxu0 %v5913
        %v5915 = vpop.f32.mrf.mxu0
        %v5916 = vadd.f32 %v5856, %v5915
        %v5917 = vand.u32 %v5681, 4294901760
        %v5918 = vsub.f32 %v5681, %v5917
        %v5919 = vand.u32 %v5918, 4294901760
        %5920 = vmatmul.f32.gmra.mxu0 %v5919
        %v5921 = vpop.f32.mrf.mxu0
        %v5922 = vadd.f32 %v5861, %v5921
        %v5923 = vand.u32 %v5683, 4294901760
        %v5924 = vsub.f32 %v5683, %v5923
        %v5925 = vand.u32 %v5924, 4294901760
        %5926 = vmatmul.f32.gmra.mxu0 %v5925
        %v5927 = vpop.f32.mrf.mxu0
        %v5928 = vadd.f32 %v5866, %v5927
        %v5929 = vand.u32 %v5685, 4294901760
        %v5930 = vsub.f32 %v5685, %v5929
        %v5931 = vand.u32 %v5930, 4294901760
        %5932 = vmatmul.f32.gmra.mxu0 %v5931
        %v5933 = vpop.f32.mrf.mxu0
        %v5934 = vadd.f32 %v5871, %v5933
        %v5935 = vand.u32 %v5687, 4294901760
        %v5936 = vsub.f32 %v5687, %v5935
        %v5937 = vand.u32 %v5936, 4294901760
        %5938 = vmatmul.f32.gmra.mxu0 %v5937
        %v5939 = vpop.f32.mrf.mxu0
        %v5940 = vadd.f32 %v5876, %v5939
        %v5941 = vand.u32 %v5689, 4294901760
        %v5942 = vsub.f32 %v5689, %v5941
        %v5943 = vand.u32 %v5942, 4294901760
        %5944 = vmatmul.f32.gmra.mxu0 %v5943
        %v5945 = vpop.f32.mrf.mxu0
        %v5946 = vadd.f32 %v5881, %v5945
        %v5947 = vand.u32 %v5691, 4294901760
        %v5948 = vsub.f32 %v5691, %v5947
        %v5949 = vand.u32 %v5948, 4294901760
        %5950 = vmatmul.f32.gmra.mxu0 %v5949
        %v5951 = vpop.f32.mrf.mxu0
        %v5952 = vadd.f32 %v5886, %v5951
        %5953 = vdwg.mxu0
        %5954 = vmatpush.msra.mxu0 0.0
        %5955 = vmatpush.msra.mxu0 0.0
        %5956 = vmatpush.msra.mxu0 0.0
        %5957 = vmatpush.msra.mxu0 0.0
        %5958 = vmatpush.msra.mxu0 0.0
        %5959 = vmatpush.msra.mxu0 0.0
        %5960 = vmatpush.msra.mxu0 0.0
        %5961 = vmatpush.msra.mxu0 0.0
        %5962 = vmatpush.msra.mxu0 0.0
        %5963 = vmatpush.msra.mxu0 0.0
        %5964 = vmatpush.msra.mxu0 0.0
        %5965 = vmatpush.msra.mxu0 0.0
        %5966 = vmatpush.msra.mxu0 0.0
        %5967 = vmatpush.msra.mxu0 0.0
        %5968 = vmatpush.msra.mxu0 0.0
        %v5969 = vand.u32 %v3203, 4294901760
        %v5970 = vsub.f32 %v3203, %v5969
        %v5971 = vand.u32 %v5970, 4294901760
        %5972 = vmatpush.msra.mxu0 %v5971
        %v5973 = vand.u32 %v5677, 4294901760
        %5974 = vmatmul.f32.gmra.mxu0 %v5973
        %v5975 = vpop.f32.mrf.mxu0
        %v5976 = vadd.f32 %v5910, %v5975
        %v5977 = vand.u32 %v5679, 4294901760
        %5978 = vmatmul.f32.gmra.mxu0 %v5977
        %v5979 = vpop.f32.mrf.mxu0
        %v5980 = vadd.f32 %v5916, %v5979
        %v5981 = vand.u32 %v5681, 4294901760
        %5982 = vmatmul.f32.gmra.mxu0 %v5981
        %v5983 = vpop.f32.mrf.mxu0
        %v5984 = vadd.f32 %v5922, %v5983
        %v5985 = vand.u32 %v5683, 4294901760
        %5986 = vmatmul.f32.gmra.mxu0 %v5985
        %v5987 = vpop.f32.mrf.mxu0
        %v5988 = vadd.f32 %v5928, %v5987
        %v5989 = vand.u32 %v5685, 4294901760
        %5990 = vmatmul.f32.gmra.mxu0 %v5989
        %v5991 = vpop.f32.mrf.mxu0
        %v5992 = vadd.f32 %v5934, %v5991
        %v5993 = vand.u32 %v5687, 4294901760
        %5994 = vmatmul.f32.gmra.mxu0 %v5993
        %v5995 = vpop.f32.mrf.mxu0
        %v5996 = vadd.f32 %v5940, %v5995
        %v5997 = vand.u32 %v5689, 4294901760
        %5998 = vmatmul.f32.gmra.mxu0 %v5997
        %v5999 = vpop.f32.mrf.mxu0
        %v6000 = vadd.f32 %v5946, %v5999
        %v6001 = vand.u32 %v5691, 4294901760
        %6002 = vmatmul.f32.gmra.mxu0 %v6001
        %v6003 = vpop.f32.mrf.mxu0
        %v6004 = vadd.f32 %v5952, %v6003
        %6005 = vdwg.mxu0
        %6006 = vmatpush.msra.mxu0 0.0
        %6007 = vmatpush.msra.mxu0 0.0
        %6008 = vmatpush.msra.mxu0 0.0
        %6009 = vmatpush.msra.mxu0 0.0
        %6010 = vmatpush.msra.mxu0 0.0
        %6011 = vmatpush.msra.mxu0 0.0
        %6012 = vmatpush.msra.mxu0 0.0
        %6013 = vmatpush.msra.mxu0 0.0
        %6014 = vmatpush.msra.mxu0 0.0
        %6015 = vmatpush.msra.mxu0 0.0
        %6016 = vmatpush.msra.mxu0 0.0
        %6017 = vmatpush.msra.mxu0 0.0
        %6018 = vmatpush.msra.mxu0 0.0
        %6019 = vmatpush.msra.mxu0 0.0
        %6020 = vmatpush.msra.mxu0 0.0
        %v6021 = vand.u32 %v3203, 4294901760
        %6022 = vmatpush.msra.mxu0 %v6021
        %v6023 = vand.u32 %v5677, 4294901760
        %6024 = vmatmul.f32.gmra.mxu0 %v6023
        %v6025 = vpop.f32.mrf.mxu0
        %v6026 = vadd.f32 %v5976, %v6025
        %v6027 = vand.u32 %v5679, 4294901760
        %6028 = vmatmul.f32.gmra.mxu0 %v6027
        %v6029 = vpop.f32.mrf.mxu0
        %v6030 = vadd.f32 %v5980, %v6029
        %v6031 = vand.u32 %v5681, 4294901760
        %6032 = vmatmul.f32.gmra.mxu0 %v6031
        %v6033 = vpop.f32.mrf.mxu0
        %v6034 = vadd.f32 %v5984, %v6033
        %v6035 = vand.u32 %v5683, 4294901760
        %6036 = vmatmul.f32.gmra.mxu0 %v6035
        %v6037 = vpop.f32.mrf.mxu0
        %v6038 = vadd.f32 %v5988, %v6037
        %v6039 = vand.u32 %v5685, 4294901760
        %6040 = vmatmul.f32.gmra.mxu0 %v6039
        %v6041 = vpop.f32.mrf.mxu0
        %v6042 = vadd.f32 %v5992, %v6041
        %v6043 = vand.u32 %v5687, 4294901760
        %6044 = vmatmul.f32.gmra.mxu0 %v6043
        %v6045 = vpop.f32.mrf.mxu0
        %v6046 = vadd.f32 %v5996, %v6045
        %v6047 = vand.u32 %v5689, 4294901760
        %6048 = vmatmul.f32.gmra.mxu0 %v6047
        %v6049 = vpop.f32.mrf.mxu0
        %v6050 = vadd.f32 %v6000, %v6049
        %v6051 = vand.u32 %v5691, 4294901760
        %6052 = vmatmul.f32.gmra.mxu0 %v6051
        %v6053 = vpop.f32.mrf.mxu0
        %v6054 = vadd.f32 %v6004, %v6053
        %6055 = vdwg.mxu0
        %6056 = vset.pattern.permute.xlu0 24
        %6057 = vperm.xlu0 %6056, %v1309
        %v6058 = vpop.permute.xlu0 %6057
        %6060 = vset.pattern.permute.xlu0 24
        %6061 = vperm.xlu0 %6060, %v1313
        %v6062 = vpop.permute.xlu0 %6061
        %6064 = vset.pattern.permute.xlu0 24
        %6065 = vperm.xlu0 %6064, %v1317
        %v6066 = vpop.permute.xlu0 %6065
        %6068 = vset.pattern.permute.xlu0 24
        %6069 = vperm.xlu0 %6068, %v1321
        %v6070 = vpop.permute.xlu0 %6069
        %6072 = vset.pattern.permute.xlu0 24
        %6073 = vperm.xlu0 %6072, %v1325
        %v6074 = vpop.permute.xlu0 %6073
        %6076 = vset.pattern.permute.xlu0 24
        %6077 = vperm.xlu0 %6076, %v1329
        %v6078 = vpop.permute.xlu0 %6077
        %6080 = vset.pattern.permute.xlu0 24
        %6081 = vperm.xlu0 %6080, %v1333
        %v6082 = vpop.permute.xlu0 %6081
        %6084 = vset.pattern.permute.xlu0 24
        %6085 = vperm.xlu0 %6084, %v1337
        %v6086 = vpop.permute.xlu0 %6085
        %v6088 = vmul.f32 %v3592, %v6058
        %v6089 = vmul.f32 %v3593, %v6062
        %v6090 = vmul.f32 %v3594, %v6066
        %v6091 = vmul.f32 %v3595, %v6070
        %v6092 = vmul.f32 %v3596, %v6074
        %v6093 = vmul.f32 %v3597, %v6078
        %v6094 = vmul.f32 %v3598, %v6082
        %v6095 = vmul.f32 %v3599, %v6086
        %v6096 = vadd.f32 %v6088, 0.0
        %v6097 = vadd.f32 %v6089, 0.0
        %v6098 = vadd.f32 %v6090, 0.0
        %v6099 = vadd.f32 %v6091, 0.0
        %v6100 = vadd.f32 %v6092, 0.0
        %v6101 = vadd.f32 %v6093, 0.0
        %v6102 = vadd.f32 %v6094, 0.0
        %v6103 = vadd.f32 %v6095, 0.0
        %6104 = vset.pattern.permute.xlu0 25
        %6105 = vperm.xlu0 %6104, %v1309
        %v6106 = vpop.permute.xlu0 %6105
        %6108 = vset.pattern.permute.xlu0 25
        %6109 = vperm.xlu0 %6108, %v1313
        %v6110 = vpop.permute.xlu0 %6109
        %6112 = vset.pattern.permute.xlu0 25
        %6113 = vperm.xlu0 %6112, %v1317
        %v6114 = vpop.permute.xlu0 %6113
        %6116 = vset.pattern.permute.xlu0 25
        %6117 = vperm.xlu0 %6116, %v1321
        %v6118 = vpop.permute.xlu0 %6117
        %6120 = vset.pattern.permute.xlu0 25
        %6121 = vperm.xlu0 %6120, %v1325
        %v6122 = vpop.permute.xlu0 %6121
        %6124 = vset.pattern.permute.xlu0 25
        %6125 = vperm.xlu0 %6124, %v1329
        %v6126 = vpop.permute.xlu0 %6125
        %6128 = vset.pattern.permute.xlu0 25
        %6129 = vperm.xlu0 %6128, %v1333
        %v6130 = vpop.permute.xlu0 %6129
        %6132 = vset.pattern.permute.xlu0 25
        %6133 = vperm.xlu0 %6132, %v1337
        %v6134 = vpop.permute.xlu0 %6133
        %v6136 = vmul.f32 %v3657, %v6106
        %v6137 = vmul.f32 %v3658, %v6110
        %v6138 = vmul.f32 %v3659, %v6114
        %v6139 = vmul.f32 %v3660, %v6118
        %v6140 = vmul.f32 %v3661, %v6122
        %v6141 = vmul.f32 %v3662, %v6126
        %v6142 = vmul.f32 %v3663, %v6130
        %v6143 = vmul.f32 %v3664, %v6134
        %v6144 = vadd.f32 %v6096, %v6136
        %v6145 = vadd.f32 %v6097, %v6137
        %v6146 = vadd.f32 %v6098, %v6138
        %v6147 = vadd.f32 %v6099, %v6139
        %v6148 = vadd.f32 %v6100, %v6140
        %v6149 = vadd.f32 %v6101, %v6141
        %v6150 = vadd.f32 %v6102, %v6142
        %v6151 = vadd.f32 %v6103, %v6143
        %6152 = vset.pattern.permute.xlu0 26
        %6153 = vperm.xlu0 %6152, %v1309
        %v6154 = vpop.permute.xlu0 %6153
        %6156 = vset.pattern.permute.xlu0 26
        %6157 = vperm.xlu0 %6156, %v1313
        %v6158 = vpop.permute.xlu0 %6157
        %6160 = vset.pattern.permute.xlu0 26
        %6161 = vperm.xlu0 %6160, %v1317
        %v6162 = vpop.permute.xlu0 %6161
        %6164 = vset.pattern.permute.xlu0 26
        %6165 = vperm.xlu0 %6164, %v1321
        %v6166 = vpop.permute.xlu0 %6165
        %6168 = vset.pattern.permute.xlu0 26
        %6169 = vperm.xlu0 %6168, %v1325
        %v6170 = vpop.permute.xlu0 %6169
        %6172 = vset.pattern.permute.xlu0 26
        %6173 = vperm.xlu0 %6172, %v1329
        %v6174 = vpop.permute.xlu0 %6173
        %6176 = vset.pattern.permute.xlu0 26
        %6177 = vperm.xlu0 %6176, %v1333
        %v6178 = vpop.permute.xlu0 %6177
        %6180 = vset.pattern.permute.xlu0 26
        %6181 = vperm.xlu0 %6180, %v1337
        %v6182 = vpop.permute.xlu0 %6181
        %v6184 = vmul.f32 %v3714, %v6154
        %v6185 = vmul.f32 %v3715, %v6158
        %v6186 = vmul.f32 %v3716, %v6162
        %v6187 = vmul.f32 %v3717, %v6166
        %v6188 = vmul.f32 %v3718, %v6170
        %v6189 = vmul.f32 %v3719, %v6174
        %v6190 = vmul.f32 %v3720, %v6178
        %v6191 = vmul.f32 %v3721, %v6182
        %v6192 = vadd.f32 %v6144, %v6184
        %v6193 = vadd.f32 %v6145, %v6185
        %v6194 = vadd.f32 %v6146, %v6186
        %v6195 = vadd.f32 %v6147, %v6187
        %v6196 = vadd.f32 %v6148, %v6188
        %v6197 = vadd.f32 %v6149, %v6189
        %v6198 = vadd.f32 %v6150, %v6190
        %v6199 = vadd.f32 %v6151, %v6191
        %6200 = vset.pattern.permute.xlu0 27
        %6201 = vperm.xlu0 %6200, %v1309
        %v6202 = vpop.permute.xlu0 %6201
        %6204 = vset.pattern.permute.xlu0 27
        %6205 = vperm.xlu0 %6204, %v1313
        %v6206 = vpop.permute.xlu0 %6205
        %6208 = vset.pattern.permute.xlu0 27
        %6209 = vperm.xlu0 %6208, %v1317
        %v6210 = vpop.permute.xlu0 %6209
        %6212 = vset.pattern.permute.xlu0 27
        %6213 = vperm.xlu0 %6212, %v1321
        %v6214 = vpop.permute.xlu0 %6213
        %6216 = vset.pattern.permute.xlu0 27
        %6217 = vperm.xlu0 %6216, %v1325
        %v6218 = vpop.permute.xlu0 %6217
        %6220 = vset.pattern.permute.xlu0 27
        %6221 = vperm.xlu0 %6220, %v1329
        %v6222 = vpop.permute.xlu0 %6221
        %6224 = vset.pattern.permute.xlu0 27
        %6225 = vperm.xlu0 %6224, %v1333
        %v6226 = vpop.permute.xlu0 %6225
        %6228 = vset.pattern.permute.xlu0 27
        %6229 = vperm.xlu0 %6228, %v1337
        %v6230 = vpop.permute.xlu0 %6229
        %v6232 = vmul.f32 %v3771, %v6202
        %v6233 = vmul.f32 %v3772, %v6206
        %v6234 = vmul.f32 %v3773, %v6210
        %v6235 = vmul.f32 %v3774, %v6214
        %v6236 = vmul.f32 %v3775, %v6218
        %v6237 = vmul.f32 %v3776, %v6222
        %v6238 = vmul.f32 %v3777, %v6226
        %v6239 = vmul.f32 %v3778, %v6230
        %v6240 = vadd.f32 %v6192, %v6232
        %v6241 = vadd.f32 %v6193, %v6233
        %v6242 = vadd.f32 %v6194, %v6234
        %v6243 = vadd.f32 %v6195, %v6235
        %v6244 = vadd.f32 %v6196, %v6236
        %v6245 = vadd.f32 %v6197, %v6237
        %v6246 = vadd.f32 %v6198, %v6238
        %v6247 = vadd.f32 %v6199, %v6239
        %6248 = vset.pattern.permute.xlu0 28
        %6249 = vperm.xlu0 %6248, %v1309
        %v6250 = vpop.permute.xlu0 %6249
        %6252 = vset.pattern.permute.xlu0 28
        %6253 = vperm.xlu0 %6252, %v1313
        %v6254 = vpop.permute.xlu0 %6253
        %6256 = vset.pattern.permute.xlu0 28
        %6257 = vperm.xlu0 %6256, %v1317
        %v6258 = vpop.permute.xlu0 %6257
        %6260 = vset.pattern.permute.xlu0 28
        %6261 = vperm.xlu0 %6260, %v1321
        %v6262 = vpop.permute.xlu0 %6261
        %6264 = vset.pattern.permute.xlu0 28
        %6265 = vperm.xlu0 %6264, %v1325
        %v6266 = vpop.permute.xlu0 %6265
        %6268 = vset.pattern.permute.xlu0 28
        %6269 = vperm.xlu0 %6268, %v1329
        %v6270 = vpop.permute.xlu0 %6269
        %6272 = vset.pattern.permute.xlu0 28
        %6273 = vperm.xlu0 %6272, %v1333
        %v6274 = vpop.permute.xlu0 %6273
        %6276 = vset.pattern.permute.xlu0 28
        %6277 = vperm.xlu0 %6276, %v1337
        %v6278 = vpop.permute.xlu0 %6277
        %v6280 = vmul.f32 %v3828, %v6250
        %v6281 = vmul.f32 %v3829, %v6254
        %v6282 = vmul.f32 %v3830, %v6258
        %v6283 = vmul.f32 %v3831, %v6262
        %v6284 = vmul.f32 %v3832, %v6266
        %v6285 = vmul.f32 %v3833, %v6270
        %v6286 = vmul.f32 %v3834, %v6274
        %v6287 = vmul.f32 %v3835, %v6278
        %v6288 = vadd.f32 %v6240, %v6280
        %v6289 = vadd.f32 %v6241, %v6281
        %v6290 = vadd.f32 %v6242, %v6282
        %v6291 = vadd.f32 %v6243, %v6283
        %v6292 = vadd.f32 %v6244, %v6284
        %v6293 = vadd.f32 %v6245, %v6285
        %v6294 = vadd.f32 %v6246, %v6286
        %v6295 = vadd.f32 %v6247, %v6287
        %6296 = vset.pattern.permute.xlu0 29
        %6297 = vperm.xlu0 %6296, %v1309
        %v6298 = vpop.permute.xlu0 %6297
        %6300 = vset.pattern.permute.xlu0 29
        %6301 = vperm.xlu0 %6300, %v1313
        %v6302 = vpop.permute.xlu0 %6301
        %6304 = vset.pattern.permute.xlu0 29
        %6305 = vperm.xlu0 %6304, %v1317
        %v6306 = vpop.permute.xlu0 %6305
        %6308 = vset.pattern.permute.xlu0 29
        %6309 = vperm.xlu0 %6308, %v1321
        %v6310 = vpop.permute.xlu0 %6309
        %6312 = vset.pattern.permute.xlu0 29
        %6313 = vperm.xlu0 %6312, %v1325
        %v6314 = vpop.permute.xlu0 %6313
        %6316 = vset.pattern.permute.xlu0 29
        %6317 = vperm.xlu0 %6316, %v1329
        %v6318 = vpop.permute.xlu0 %6317
        %6320 = vset.pattern.permute.xlu0 29
        %6321 = vperm.xlu0 %6320, %v1333
        %v6322 = vpop.permute.xlu0 %6321
        %6324 = vset.pattern.permute.xlu0 29
        %6325 = vperm.xlu0 %6324, %v1337
        %v6326 = vpop.permute.xlu0 %6325
        %v6328 = vmul.f32 %v3885, %v6298
        %v6329 = vmul.f32 %v3886, %v6302
        %v6330 = vmul.f32 %v3887, %v6306
        %v6331 = vmul.f32 %v3888, %v6310
        %v6332 = vmul.f32 %v3889, %v6314
        %v6333 = vmul.f32 %v3890, %v6318
        %v6334 = vmul.f32 %v3891, %v6322
        %v6335 = vmul.f32 %v3892, %v6326
        %v6336 = vadd.f32 %v6288, %v6328
        %v6337 = vadd.f32 %v6289, %v6329
        %v6338 = vadd.f32 %v6290, %v6330
        %v6339 = vadd.f32 %v6291, %v6331
        %v6340 = vadd.f32 %v6292, %v6332
        %v6341 = vadd.f32 %v6293, %v6333
        %v6342 = vadd.f32 %v6294, %v6334
        %v6343 = vadd.f32 %v6295, %v6335
        %6344 = vset.pattern.permute.xlu0 30
        %6345 = vperm.xlu0 %6344, %v1309
        %v6346 = vpop.permute.xlu0 %6345
        %6348 = vset.pattern.permute.xlu0 30
        %6349 = vperm.xlu0 %6348, %v1313
        %v6350 = vpop.permute.xlu0 %6349
        %6352 = vset.pattern.permute.xlu0 30
        %6353 = vperm.xlu0 %6352, %v1317
        %v6354 = vpop.permute.xlu0 %6353
        %6356 = vset.pattern.permute.xlu0 30
        %6357 = vperm.xlu0 %6356, %v1321
        %v6358 = vpop.permute.xlu0 %6357
        %6360 = vset.pattern.permute.xlu0 30
        %6361 = vperm.xlu0 %6360, %v1325
        %v6362 = vpop.permute.xlu0 %6361
        %6364 = vset.pattern.permute.xlu0 30
        %6365 = vperm.xlu0 %6364, %v1329
        %v6366 = vpop.permute.xlu0 %6365
        %6368 = vset.pattern.permute.xlu0 30
        %6369 = vperm.xlu0 %6368, %v1333
        %v6370 = vpop.permute.xlu0 %6369
        %6372 = vset.pattern.permute.xlu0 30
        %6373 = vperm.xlu0 %6372, %v1337
        %v6374 = vpop.permute.xlu0 %6373
        %v6376 = vmul.f32 %v3942, %v6346
        %v6377 = vmul.f32 %v3943, %v6350
        %v6378 = vmul.f32 %v3944, %v6354
        %v6379 = vmul.f32 %v3945, %v6358
        %v6380 = vmul.f32 %v3946, %v6362
        %v6381 = vmul.f32 %v3947, %v6366
        %v6382 = vmul.f32 %v3948, %v6370
        %v6383 = vmul.f32 %v3949, %v6374
        %v6384 = vadd.f32 %v6336, %v6376
        %v6385 = vadd.f32 %v6337, %v6377
        %v6386 = vadd.f32 %v6338, %v6378
        %v6387 = vadd.f32 %v6339, %v6379
        %v6388 = vadd.f32 %v6340, %v6380
        %v6389 = vadd.f32 %v6341, %v6381
        %v6390 = vadd.f32 %v6342, %v6382
        %v6391 = vadd.f32 %v6343, %v6383
        %6392 = vset.pattern.permute.xlu0 31
        %6393 = vperm.xlu0 %6392, %v1309
        %v6394 = vpop.permute.xlu0 %6393
        %6396 = vset.pattern.permute.xlu0 31
        %6397 = vperm.xlu0 %6396, %v1313
        %v6398 = vpop.permute.xlu0 %6397
        %6400 = vset.pattern.permute.xlu0 31
        %6401 = vperm.xlu0 %6400, %v1317
        %v6402 = vpop.permute.xlu0 %6401
        %6404 = vset.pattern.permute.xlu0 31
        %6405 = vperm.xlu0 %6404, %v1321
        %v6406 = vpop.permute.xlu0 %6405
        %6408 = vset.pattern.permute.xlu0 31
        %6409 = vperm.xlu0 %6408, %v1325
        %v6410 = vpop.permute.xlu0 %6409
        %6412 = vset.pattern.permute.xlu0 31
        %6413 = vperm.xlu0 %6412, %v1329
        %v6414 = vpop.permute.xlu0 %6413
        %6416 = vset.pattern.permute.xlu0 31
        %6417 = vperm.xlu0 %6416, %v1333
        %v6418 = vpop.permute.xlu0 %6417
        %6420 = vset.pattern.permute.xlu0 31
        %6421 = vperm.xlu0 %6420, %v1337
        %v6422 = vpop.permute.xlu0 %6421
        %v6424 = vmul.f32 %v3999, %v6394
        %v6425 = vmul.f32 %v4000, %v6398
        %v6426 = vmul.f32 %v4001, %v6402
        %v6427 = vmul.f32 %v4002, %v6406
        %v6428 = vmul.f32 %v4003, %v6410
        %v6429 = vmul.f32 %v4004, %v6414
        %v6430 = vmul.f32 %v4005, %v6418
        %v6431 = vmul.f32 %v4006, %v6422
        %v6432 = vadd.f32 %v6384, %v6424
        %v6433 = vadd.f32 %v6385, %v6425
        %v6434 = vadd.f32 %v6386, %v6426
        %v6435 = vadd.f32 %v6387, %v6427
        %v6436 = vadd.f32 %v6388, %v6428
        %v6437 = vadd.f32 %v6389, %v6429
        %v6438 = vadd.f32 %v6390, %v6430
        %v6439 = vadd.f32 %v6391, %v6431
        %v6440 = vmul.f32 %v6432, %v6026
        %v6441 = vmul.f32 %v6433, %v6030
        %v6442 = vmul.f32 %v6434, %v6034
        %v6443 = vmul.f32 %v6435, %v6038
        %v6444 = vmul.f32 %v6436, %v6042
        %v6445 = vmul.f32 %v6437, %v6046
        %v6446 = vmul.f32 %v6438, %v6050
        %v6447 = vmul.f32 %v6439, %v6054
        %v6448 = vadd.f32 %v5653, %v6440
        %v6449 = vadd.f32 %v5654, %v6441
        %v6450 = vadd.f32 %v5655, %v6442
        %v6451 = vadd.f32 %v5656, %v6443
        %v6452 = vadd.f32 %v5657, %v6444
        %v6453 = vadd.f32 %v5658, %v6445
        %v6454 = vadd.f32 %v5659, %v6446
        %v6455 = vadd.f32 %v5660, %v6447
        %6456 = vrot.lane.b32.xlu0 %v6448, 64
        %v6457 = vpop.permute.xlu0 %6456
        %6458 = vrot.lane.b32.xlu0 %v6449, 64
        %v6459 = vpop.permute.xlu0 %6458
        %6460 = vrot.lane.b32.xlu0 %v6450, 64
        %v6461 = vpop.permute.xlu0 %6460
        %6462 = vrot.lane.b32.xlu0 %v6451, 64
        %v6463 = vpop.permute.xlu0 %6462
        %6464 = vrot.lane.b32.xlu0 %v6452, 64
        %v6465 = vpop.permute.xlu0 %6464
        %6466 = vrot.lane.b32.xlu0 %v6453, 64
        %v6467 = vpop.permute.xlu0 %6466
        %6468 = vrot.lane.b32.xlu0 %v6454, 64
        %v6469 = vpop.permute.xlu0 %6468
        %6470 = vrot.lane.b32.xlu0 %v6455, 64
        %v6471 = vpop.permute.xlu0 %6470
        %v6472 = vmax.f32 %v6448, %v6457
        %v6473 = vmax.f32 %v6449, %v6459
        %v6474 = vmax.f32 %v6450, %v6461
        %v6475 = vmax.f32 %v6451, %v6463
        %v6476 = vmax.f32 %v6452, %v6465
        %v6477 = vmax.f32 %v6453, %v6467
        %v6478 = vmax.f32 %v6454, %v6469
        %v6479 = vmax.f32 %v6455, %v6471
        %6480 = vrot.lane.b32.xlu0 %v6472, 32
        %v6481 = vpop.permute.xlu0 %6480
        %6482 = vrot.lane.b32.xlu0 %v6473, 32
        %v6483 = vpop.permute.xlu0 %6482
        %6484 = vrot.lane.b32.xlu0 %v6474, 32
        %v6485 = vpop.permute.xlu0 %6484
        %6486 = vrot.lane.b32.xlu0 %v6475, 32
        %v6487 = vpop.permute.xlu0 %6486
        %6488 = vrot.lane.b32.xlu0 %v6476, 32
        %v6489 = vpop.permute.xlu0 %6488
        %6490 = vrot.lane.b32.xlu0 %v6477, 32
        %v6491 = vpop.permute.xlu0 %6490
        %6492 = vrot.lane.b32.xlu0 %v6478, 32
        %v6493 = vpop.permute.xlu0 %6492
        %6494 = vrot.lane.b32.xlu0 %v6479, 32
        %v6495 = vpop.permute.xlu0 %6494
        %v6496 = vmax.f32 %v6472, %v6481
        %v6497 = vmax.f32 %v6473, %v6483
        %v6498 = vmax.f32 %v6474, %v6485
        %v6499 = vmax.f32 %v6475, %v6487
        %v6500 = vmax.f32 %v6476, %v6489
        %v6501 = vmax.f32 %v6477, %v6491
        %v6502 = vmax.f32 %v6478, %v6493
        %v6503 = vmax.f32 %v6479, %v6495
        %6504 = vrot.lane.b32.xlu0 %v6496, 16
        %v6505 = vpop.permute.xlu0 %6504
        %6506 = vrot.lane.b32.xlu0 %v6497, 16
        %v6507 = vpop.permute.xlu0 %6506
        %6508 = vrot.lane.b32.xlu0 %v6498, 16
        %v6509 = vpop.permute.xlu0 %6508
        %6510 = vrot.lane.b32.xlu0 %v6499, 16
        %v6511 = vpop.permute.xlu0 %6510
        %6512 = vrot.lane.b32.xlu0 %v6500, 16
        %v6513 = vpop.permute.xlu0 %6512
        %6514 = vrot.lane.b32.xlu0 %v6501, 16
        %v6515 = vpop.permute.xlu0 %6514
        %6516 = vrot.lane.b32.xlu0 %v6502, 16
        %v6517 = vpop.permute.xlu0 %6516
        %6518 = vrot.lane.b32.xlu0 %v6503, 16
        %v6519 = vpop.permute.xlu0 %6518
        %v6520 = vmax.f32 %v6496, %v6505
        %v6521 = vmax.f32 %v6497, %v6507
        %v6522 = vmax.f32 %v6498, %v6509
        %v6523 = vmax.f32 %v6499, %v6511
        %v6524 = vmax.f32 %v6500, %v6513
        %v6525 = vmax.f32 %v6501, %v6515
        %v6526 = vmax.f32 %v6502, %v6517
        %v6527 = vmax.f32 %v6503, %v6519
        %6528 = vrot.lane.b32.xlu0 %v6520, 8
        %v6529 = vpop.permute.xlu0 %6528
        %6530 = vrot.lane.b32.xlu0 %v6521, 8
        %v6531 = vpop.permute.xlu0 %6530
        %6532 = vrot.lane.b32.xlu0 %v6522, 8
        %v6533 = vpop.permute.xlu0 %6532
        %6534 = vrot.lane.b32.xlu0 %v6523, 8
        %v6535 = vpop.permute.xlu0 %6534
        %6536 = vrot.lane.b32.xlu0 %v6524, 8
        %v6537 = vpop.permute.xlu0 %6536
        %6538 = vrot.lane.b32.xlu0 %v6525, 8
        %v6539 = vpop.permute.xlu0 %6538
        %6540 = vrot.lane.b32.xlu0 %v6526, 8
        %v6541 = vpop.permute.xlu0 %6540
        %6542 = vrot.lane.b32.xlu0 %v6527, 8
        %v6543 = vpop.permute.xlu0 %6542
        %v6544 = vmax.f32 %v6520, %v6529
        %v6545 = vmax.f32 %v6521, %v6531
        %v6546 = vmax.f32 %v6522, %v6533
        %v6547 = vmax.f32 %v6523, %v6535
        %v6548 = vmax.f32 %v6524, %v6537
        %v6549 = vmax.f32 %v6525, %v6539
        %v6550 = vmax.f32 %v6526, %v6541
        %v6551 = vmax.f32 %v6527, %v6543
        %6552 = vxpose.xlu0.b32.start [1/16] %v6544, 128
        %6553 = vxpose.xlu0.b32.cont [2/16] 0.0, 128
        %6554 = vxpose.xlu0.b32.cont [3/16] 0.0, 128
        %6555 = vxpose.xlu0.b32.cont [4/16] 0.0, 128
        %6556 = vxpose.xlu0.b32.cont [5/16] 0.0, 128
        %6557 = vxpose.xlu0.b32.cont [6/16] 0.0, 128
        %6558 = vxpose.xlu0.b32.cont [7/16] 0.0, 128
        %6559 = vxpose.xlu0.b32.cont [8/16] 0.0, 128
        %6560 = vxpose.xlu0.b32.cont [9/16] 0.0, 128
        %6561 = vxpose.xlu0.b32.cont [10/16] 0.0, 128
        %6562 = vxpose.xlu0.b32.cont [11/16] 0.0, 128
        %6563 = vxpose.xlu0.b32.cont [12/16] 0.0, 128
        %6564 = vxpose.xlu0.b32.cont [13/16] 0.0, 128
        %6565 = vxpose.xlu0.b32.cont [14/16] 0.0, 128
        %6566 = vxpose.xlu0.b32.cont [15/16] 0.0, 128
        %6567 = vxpose.xlu0.b32.end [16/16] 0.0, 128
        %v6568 = vpop.trf.xlu0
        %v6569 = vpop.trf.xlu0
        %v6570 = vpop.trf.xlu0
        %v6571 = vpop.trf.xlu0
        %v6572 = vpop.trf.xlu0
        %v6573 = vpop.trf.xlu0
        %v6574 = vpop.trf.xlu0
        %v6575 = vpop.trf.xlu0
        %v6576 = vpop.trf.xlu0
        %v6577 = vpop.trf.xlu0
        %v6578 = vpop.trf.xlu0
        %v6579 = vpop.trf.xlu0
        %v6580 = vpop.trf.xlu0
        %v6581 = vpop.trf.xlu0
        %v6582 = vpop.trf.xlu0
        %v6583 = vpop.trf.xlu0
        %6584 = vxpose.xlu0.b32.start [1/16] %v6545, 128
        %6585 = vxpose.xlu0.b32.cont [2/16] 0.0, 128
        %6586 = vxpose.xlu0.b32.cont [3/16] 0.0, 128
        %6587 = vxpose.xlu0.b32.cont [4/16] 0.0, 128
        %6588 = vxpose.xlu0.b32.cont [5/16] 0.0, 128
        %6589 = vxpose.xlu0.b32.cont [6/16] 0.0, 128
        %6590 = vxpose.xlu0.b32.cont [7/16] 0.0, 128
        %6591 = vxpose.xlu0.b32.cont [8/16] 0.0, 128
        %6592 = vxpose.xlu0.b32.cont [9/16] 0.0, 128
        %6593 = vxpose.xlu0.b32.cont [10/16] 0.0, 128
        %6594 = vxpose.xlu0.b32.cont [11/16] 0.0, 128
        %6595 = vxpose.xlu0.b32.cont [12/16] 0.0, 128
        %6596 = vxpose.xlu0.b32.cont [13/16] 0.0, 128
        %6597 = vxpose.xlu0.b32.cont [14/16] 0.0, 128
        %6598 = vxpose.xlu0.b32.cont [15/16] 0.0, 128
        %6599 = vxpose.xlu0.b32.end [16/16] 0.0, 128
        %v6600 = vpop.trf.xlu0
        %v6601 = vpop.trf.xlu0
        %v6602 = vpop.trf.xlu0
        %v6603 = vpop.trf.xlu0
        %v6604 = vpop.trf.xlu0
        %v6605 = vpop.trf.xlu0
        %v6606 = vpop.trf.xlu0
        %v6607 = vpop.trf.xlu0
        %v6608 = vpop.trf.xlu0
        %v6609 = vpop.trf.xlu0
        %v6610 = vpop.trf.xlu0
        %v6611 = vpop.trf.xlu0
        %v6612 = vpop.trf.xlu0
        %v6613 = vpop.trf.xlu0
        %v6614 = vpop.trf.xlu0
        %v6615 = vpop.trf.xlu0
        %6616 = vxpose.xlu0.b32.start [1/16] %v6546, 128
        %6617 = vxpose.xlu0.b32.cont [2/16] 0.0, 128
        %6618 = vxpose.xlu0.b32.cont [3/16] 0.0, 128
        %6619 = vxpose.xlu0.b32.cont [4/16] 0.0, 128
        %6620 = vxpose.xlu0.b32.cont [5/16] 0.0, 128
        %6621 = vxpose.xlu0.b32.cont [6/16] 0.0, 128
        %6622 = vxpose.xlu0.b32.cont [7/16] 0.0, 128
        %6623 = vxpose.xlu0.b32.cont [8/16] 0.0, 128
        %6624 = vxpose.xlu0.b32.cont [9/16] 0.0, 128
        %6625 = vxpose.xlu0.b32.cont [10/16] 0.0, 128
        %6626 = vxpose.xlu0.b32.cont [11/16] 0.0, 128
        %6627 = vxpose.xlu0.b32.cont [12/16] 0.0, 128
        %6628 = vxpose.xlu0.b32.cont [13/16] 0.0, 128
        %6629 = vxpose.xlu0.b32.cont [14/16] 0.0, 128
        %6630 = vxpose.xlu0.b32.cont [15/16] 0.0, 128
        %6631 = vxpose.xlu0.b32.end [16/16] 0.0, 128
        %v6632 = vpop.trf.xlu0
        %v6633 = vpop.trf.xlu0
        %v6634 = vpop.trf.xlu0
        %v6635 = vpop.trf.xlu0
        %v6636 = vpop.trf.xlu0
        %v6637 = vpop.trf.xlu0
        %v6638 = vpop.trf.xlu0
        %v6639 = vpop.trf.xlu0
        %v6640 = vpop.trf.xlu0
        %v6641 = vpop.trf.xlu0
        %v6642 = vpop.trf.xlu0
        %v6643 = vpop.trf.xlu0
        %v6644 = vpop.trf.xlu0
        %v6645 = vpop.trf.xlu0
        %v6646 = vpop.trf.xlu0
        %v6647 = vpop.trf.xlu0
        %6648 = vxpose.xlu0.b32.start [1/16] %v6547, 128
        %6649 = vxpose.xlu0.b32.cont [2/16] 0.0, 128
        %6650 = vxpose.xlu0.b32.cont [3/16] 0.0, 128
        %6651 = vxpose.xlu0.b32.cont [4/16] 0.0, 128
        %6652 = vxpose.xlu0.b32.cont [5/16] 0.0, 128
        %6653 = vxpose.xlu0.b32.cont [6/16] 0.0, 128
        %6654 = vxpose.xlu0.b32.cont [7/16] 0.0, 128
        %6655 = vxpose.xlu0.b32.cont [8/16] 0.0, 128
        %6656 = vxpose.xlu0.b32.cont [9/16] 0.0, 128
        %6657 = vxpose.xlu0.b32.cont [10/16] 0.0, 128
        %6658 = vxpose.xlu0.b32.cont [11/16] 0.0, 128
        %6659 = vxpose.xlu0.b32.cont [12/16] 0.0, 128
        %6660 = vxpose.xlu0.b32.cont [13/16] 0.0, 128
        %6661 = vxpose.xlu0.b32.cont [14/16] 0.0, 128
        %6662 = vxpose.xlu0.b32.cont [15/16] 0.0, 128
        %6663 = vxpose.xlu0.b32.end [16/16] 0.0, 128
        %v6664 = vpop.trf.xlu0
        %v6665 = vpop.trf.xlu0
        %v6666 = vpop.trf.xlu0
        %v6667 = vpop.trf.xlu0
        %v6668 = vpop.trf.xlu0
        %v6669 = vpop.trf.xlu0
        %v6670 = vpop.trf.xlu0
        %v6671 = vpop.trf.xlu0
        %v6672 = vpop.trf.xlu0
        %v6673 = vpop.trf.xlu0
        %v6674 = vpop.trf.xlu0
        %v6675 = vpop.trf.xlu0
        %v6676 = vpop.trf.xlu0
        %v6677 = vpop.trf.xlu0
        %v6678 = vpop.trf.xlu0
        %v6679 = vpop.trf.xlu0
        %6680 = vxpose.xlu0.b32.start [1/16] %v6548, 128
        %6681 = vxpose.xlu0.b32.cont [2/16] 0.0, 128
        %6682 = vxpose.xlu0.b32.cont [3/16] 0.0, 128
        %6683 = vxpose.xlu0.b32.cont [4/16] 0.0, 128
        %6684 = vxpose.xlu0.b32.cont [5/16] 0.0, 128
        %6685 = vxpose.xlu0.b32.cont [6/16] 0.0, 128
        %6686 = vxpose.xlu0.b32.cont [7/16] 0.0, 128
        %6687 = vxpose.xlu0.b32.cont [8/16] 0.0, 128
        %6688 = vxpose.xlu0.b32.cont [9/16] 0.0, 128
        %6689 = vxpose.xlu0.b32.cont [10/16] 0.0, 128
        %6690 = vxpose.xlu0.b32.cont [11/16] 0.0, 128
        %6691 = vxpose.xlu0.b32.cont [12/16] 0.0, 128
        %6692 = vxpose.xlu0.b32.cont [13/16] 0.0, 128
        %6693 = vxpose.xlu0.b32.cont [14/16] 0.0, 128
        %6694 = vxpose.xlu0.b32.cont [15/16] 0.0, 128
        %6695 = vxpose.xlu0.b32.end [16/16] 0.0, 128
        %v6696 = vpop.trf.xlu0
        %v6697 = vpop.trf.xlu0
        %v6698 = vpop.trf.xlu0
        %v6699 = vpop.trf.xlu0
        %v6700 = vpop.trf.xlu0
        %v6701 = vpop.trf.xlu0
        %v6702 = vpop.trf.xlu0
        %v6703 = vpop.trf.xlu0
        %v6704 = vpop.trf.xlu0
        %v6705 = vpop.trf.xlu0
        %v6706 = vpop.trf.xlu0
        %v6707 = vpop.trf.xlu0
        %v6708 = vpop.trf.xlu0
        %v6709 = vpop.trf.xlu0
        %v6710 = vpop.trf.xlu0
        %v6711 = vpop.trf.xlu0
        %6712 = vxpose.xlu0.b32.start [1/16] %v6549, 128
        %6713 = vxpose.xlu0.b32.cont [2/16] 0.0, 128
        %6714 = vxpose.xlu0.b32.cont [3/16] 0.0, 128
        %6715 = vxpose.xlu0.b32.cont [4/16] 0.0, 128
        %6716 = vxpose.xlu0.b32.cont [5/16] 0.0, 128
        %6717 = vxpose.xlu0.b32.cont [6/16] 0.0, 128
        %6718 = vxpose.xlu0.b32.cont [7/16] 0.0, 128
        %6719 = vxpose.xlu0.b32.cont [8/16] 0.0, 128
        %6720 = vxpose.xlu0.b32.cont [9/16] 0.0, 128
        %6721 = vxpose.xlu0.b32.cont [10/16] 0.0, 128
        %6722 = vxpose.xlu0.b32.cont [11/16] 0.0, 128
        %6723 = vxpose.xlu0.b32.cont [12/16] 0.0, 128
        %6724 = vxpose.xlu0.b32.cont [13/16] 0.0, 128
        %6725 = vxpose.xlu0.b32.cont [14/16] 0.0, 128
        %6726 = vxpose.xlu0.b32.cont [15/16] 0.0, 128
        %6727 = vxpose.xlu0.b32.end [16/16] 0.0, 128
        %v6728 = vpop.trf.xlu0
        %v6729 = vpop.trf.xlu0
        %v6730 = vpop.trf.xlu0
        %v6731 = vpop.trf.xlu0
        %v6732 = vpop.trf.xlu0
        %v6733 = vpop.trf.xlu0
        %v6734 = vpop.trf.xlu0
        %v6735 = vpop.trf.xlu0
        %v6736 = vpop.trf.xlu0
        %v6737 = vpop.trf.xlu0
        %v6738 = vpop.trf.xlu0
        %v6739 = vpop.trf.xlu0
        %v6740 = vpop.trf.xlu0
        %v6741 = vpop.trf.xlu0
        %v6742 = vpop.trf.xlu0
        %v6743 = vpop.trf.xlu0
        %6744 = vxpose.xlu0.b32.start [1/16] %v6550, 128
        %6745 = vxpose.xlu0.b32.cont [2/16] 0.0, 128
        %6746 = vxpose.xlu0.b32.cont [3/16] 0.0, 128
        %6747 = vxpose.xlu0.b32.cont [4/16] 0.0, 128
        %6748 = vxpose.xlu0.b32.cont [5/16] 0.0, 128
        %6749 = vxpose.xlu0.b32.cont [6/16] 0.0, 128
        %6750 = vxpose.xlu0.b32.cont [7/16] 0.0, 128
        %6751 = vxpose.xlu0.b32.cont [8/16] 0.0, 128
        %6752 = vxpose.xlu0.b32.cont [9/16] 0.0, 128
        %6753 = vxpose.xlu0.b32.cont [10/16] 0.0, 128
        %6754 = vxpose.xlu0.b32.cont [11/16] 0.0, 128
        %6755 = vxpose.xlu0.b32.cont [12/16] 0.0, 128
        %6756 = vxpose.xlu0.b32.cont [13/16] 0.0, 128
        %6757 = vxpose.xlu0.b32.cont [14/16] 0.0, 128
        %6758 = vxpose.xlu0.b32.cont [15/16] 0.0, 128
        %6759 = vxpose.xlu0.b32.end [16/16] 0.0, 128
        %v6760 = vpop.trf.xlu0
        %v6761 = vpop.trf.xlu0
        %v6762 = vpop.trf.xlu0
        %v6763 = vpop.trf.xlu0
        %v6764 = vpop.trf.xlu0
        %v6765 = vpop.trf.xlu0
        %v6766 = vpop.trf.xlu0
        %v6767 = vpop.trf.xlu0
        %v6768 = vpop.trf.xlu0
        %v6769 = vpop.trf.xlu0
        %v6770 = vpop.trf.xlu0
        %v6771 = vpop.trf.xlu0
        %v6772 = vpop.trf.xlu0
        %v6773 = vpop.trf.xlu0
        %v6774 = vpop.trf.xlu0
        %v6775 = vpop.trf.xlu0
        %6776 = vxpose.xlu0.b32.start [1/16] %v6551, 128
        %6777 = vxpose.xlu0.b32.cont [2/16] 0.0, 128
        %6778 = vxpose.xlu0.b32.cont [3/16] 0.0, 128
        %6779 = vxpose.xlu0.b32.cont [4/16] 0.0, 128
        %6780 = vxpose.xlu0.b32.cont [5/16] 0.0, 128
        %6781 = vxpose.xlu0.b32.cont [6/16] 0.0, 128
        %6782 = vxpose.xlu0.b32.cont [7/16] 0.0, 128
        %6783 = vxpose.xlu0.b32.cont [8/16] 0.0, 128
        %6784 = vxpose.xlu0.b32.cont [9/16] 0.0, 128
        %6785 = vxpose.xlu0.b32.cont [10/16] 0.0, 128
        %6786 = vxpose.xlu0.b32.cont [11/16] 0.0, 128
        %6787 = vxpose.xlu0.b32.cont [12/16] 0.0, 128
        %6788 = vxpose.xlu0.b32.cont [13/16] 0.0, 128
        %6789 = vxpose.xlu0.b32.cont [14/16] 0.0, 128
        %6790 = vxpose.xlu0.b32.cont [15/16] 0.0, 128
        %6791 = vxpose.xlu0.b32.end [16/16] 0.0, 128
        %v6792 = vpop.trf.xlu0
        %v6793 = vpop.trf.xlu0
        %v6794 = vpop.trf.xlu0
        %v6795 = vpop.trf.xlu0
        %v6796 = vpop.trf.xlu0
        %v6797 = vpop.trf.xlu0
        %v6798 = vpop.trf.xlu0
        %v6799 = vpop.trf.xlu0
        %v6800 = vpop.trf.xlu0
        %v6801 = vpop.trf.xlu0
        %v6802 = vpop.trf.xlu0
        %v6803 = vpop.trf.xlu0
        %v6804 = vpop.trf.xlu0
        %v6805 = vpop.trf.xlu0
        %v6806 = vpop.trf.xlu0
        %v6807 = vpop.trf.xlu0
        %v6808 = vtanh.pop %v6568
        %v6809 = vtanh.pop %v6600
        %v6810 = vtanh.pop %v6632
        %v6811 = vtanh.pop %v6664
        %v6812 = vtanh.pop %v6696
        %v6813 = vtanh.pop %v6728
        %v6814 = vtanh.pop %v6760
        %v6815 = vtanh.pop %v6792
        %v6816 = vmax.f32 %v6808, 0.0
        %v6817 = vmax.f32 %v6809, 0.0
        %v6818 = vmax.f32 %v6810, 0.0
        %v6819 = vmax.f32 %v6811, 0.0
        %v6820 = vmax.f32 %v6812, 0.0
        %v6821 = vmax.f32 %v6813, 0.0
        %v6822 = vmax.f32 %v6814, 0.0
        %v6823 = vmax.f32 %v6815, 0.0
        %v6825 = vsel %vm3204, %v6816, 0
        %v6828 = vsel %vm3204, %v6817, 0
        %v6831 = vsel %vm3204, %v6818, 0
        %v6834 = vsel %vm3204, %v6819, 0
        %v6837 = vsel %vm3204, %v6820, 0
        %v6840 = vsel %vm3204, %v6821, 0
        %v6843 = vsel %vm3204, %v6822, 0
        %v6846 = vsel %vm3204, %v6823, 0
        %6848 = vmatpush.msra.mxu0 0.0
        %6849 = vmatpush.msra.mxu0 0.0
        %6850 = vmatpush.msra.mxu0 0.0
        %6851 = vmatpush.msra.mxu0 0.0
        %6852 = vmatpush.msra.mxu0 0.0
        %6853 = vmatpush.msra.mxu0 0.0
        %6854 = vmatpush.msra.mxu0 0.0
        %6855 = vmatpush.msra.mxu0 0.0
        %6856 = vmatpush.msra.mxu0 0.0
        %6857 = vmatpush.msra.mxu0 0.0
        %6858 = vmatpush.msra.mxu0 0.0
        %6859 = vmatpush.msra.mxu0 0.0
        %6860 = vmatpush.msra.mxu0 0.0
        %6861 = vmatpush.msra.mxu0 0.0
        %6862 = vmatpush.msra.mxu0 0.0
        %v6863 = vand.u32 %v3203, 4294901760
        %6864 = vmatpush.msra.mxu0 %v6863
        %v6865 = vand.u32 %v6825, 4294901760
        %v6866 = vsub.f32 %v6825, %v6865
        %v6867 = vand.u32 %v6866, 4294901760
        %v6868 = vsub.f32 %v6866, %v6867
        %v6869 = vand.u32 %v6868, 4294901760
        %6870 = vmatmul.f32.gmra.mxu0 %v6869
        %v6871 = vpop.f32.mrf.mxu0
        %v6872 = vadd.f32 0.0, %v6871
        %v6873 = vand.u32 %v6828, 4294901760
        %v6874 = vsub.f32 %v6828, %v6873
        %v6875 = vand.u32 %v6874, 4294901760
        %v6876 = vsub.f32 %v6874, %v6875
        %v6877 = vand.u32 %v6876, 4294901760
        %6878 = vmatmul.f32.gmra.mxu0 %v6877
        %v6879 = vpop.f32.mrf.mxu0
        %v6880 = vadd.f32 0.0, %v6879
        %v6881 = vand.u32 %v6831, 4294901760
        %v6882 = vsub.f32 %v6831, %v6881
        %v6883 = vand.u32 %v6882, 4294901760
        %v6884 = vsub.f32 %v6882, %v6883
        %v6885 = vand.u32 %v6884, 4294901760
        %6886 = vmatmul.f32.gmra.mxu0 %v6885
        %v6887 = vpop.f32.mrf.mxu0
        %v6888 = vadd.f32 0.0, %v6887
        %v6889 = vand.u32 %v6834, 4294901760
        %v6890 = vsub.f32 %v6834, %v6889
        %v6891 = vand.u32 %v6890, 4294901760
        %v6892 = vsub.f32 %v6890, %v6891
        %v6893 = vand.u32 %v6892, 4294901760
        %6894 = vmatmul.f32.gmra.mxu0 %v6893
        %v6895 = vpop.f32.mrf.mxu0
        %v6896 = vadd.f32 0.0, %v6895
        %v6897 = vand.u32 %v6837, 4294901760
        %v6898 = vsub.f32 %v6837, %v6897
        %v6899 = vand.u32 %v6898, 4294901760
        %v6900 = vsub.f32 %v6898, %v6899
        %v6901 = vand.u32 %v6900, 4294901760
        %6902 = vmatmul.f32.gmra.mxu0 %v6901
        %v6903 = vpop.f32.mrf.mxu0
        %v6904 = vadd.f32 0.0, %v6903
        %v6905 = vand.u32 %v6840, 4294901760
        %v6906 = vsub.f32 %v6840, %v6905
        %v6907 = vand.u32 %v6906, 4294901760
        %v6908 = vsub.f32 %v6906, %v6907
        %v6909 = vand.u32 %v6908, 4294901760
        %6910 = vmatmul.f32.gmra.mxu0 %v6909
        %v6911 = vpop.f32.mrf.mxu0
        %v6912 = vadd.f32 0.0, %v6911
        %v6913 = vand.u32 %v6843, 4294901760
        %v6914 = vsub.f32 %v6843, %v6913
        %v6915 = vand.u32 %v6914, 4294901760
        %v6916 = vsub.f32 %v6914, %v6915
        %v6917 = vand.u32 %v6916, 4294901760
        %6918 = vmatmul.f32.gmra.mxu0 %v6917
        %v6919 = vpop.f32.mrf.mxu0
        %v6920 = vadd.f32 0.0, %v6919
        %v6921 = vand.u32 %v6846, 4294901760
        %v6922 = vsub.f32 %v6846, %v6921
        %v6923 = vand.u32 %v6922, 4294901760
        %v6924 = vsub.f32 %v6922, %v6923
        %v6925 = vand.u32 %v6924, 4294901760
        %6926 = vmatmul.f32.gmra.mxu0 %v6925
        %v6927 = vpop.f32.mrf.mxu0
        %v6928 = vadd.f32 0.0, %v6927
        %6929 = vdwg.mxu0
        %6930 = vmatpush.msra.mxu0 0.0
        %6931 = vmatpush.msra.mxu0 0.0
        %6932 = vmatpush.msra.mxu0 0.0
        %6933 = vmatpush.msra.mxu0 0.0
        %6934 = vmatpush.msra.mxu0 0.0
        %6935 = vmatpush.msra.mxu0 0.0
        %6936 = vmatpush.msra.mxu0 0.0
        %6937 = vmatpush.msra.mxu0 0.0
        %6938 = vmatpush.msra.mxu0 0.0
        %6939 = vmatpush.msra.mxu0 0.0
        %6940 = vmatpush.msra.mxu0 0.0
        %6941 = vmatpush.msra.mxu0 0.0
        %6942 = vmatpush.msra.mxu0 0.0
        %6943 = vmatpush.msra.mxu0 0.0
        %6944 = vmatpush.msra.mxu0 0.0
        %v6945 = vand.u32 %v3203, 4294901760
        %v6946 = vsub.f32 %v3203, %v6945
        %v6947 = vand.u32 %v6946, 4294901760
        %v6948 = vsub.f32 %v6946, %v6947
        %v6949 = vand.u32 %v6948, 4294901760
        %6950 = vmatpush.msra.mxu0 %v6949
        %v6951 = vand.u32 %v6825, 4294901760
        %6952 = vmatmul.f32.gmra.mxu0 %v6951
        %v6953 = vpop.f32.mrf.mxu0
        %v6954 = vadd.f32 %v6872, %v6953
        %v6955 = vand.u32 %v6828, 4294901760
        %6956 = vmatmul.f32.gmra.mxu0 %v6955
        %v6957 = vpop.f32.mrf.mxu0
        %v6958 = vadd.f32 %v6880, %v6957
        %v6959 = vand.u32 %v6831, 4294901760
        %6960 = vmatmul.f32.gmra.mxu0 %v6959
        %v6961 = vpop.f32.mrf.mxu0
        %v6962 = vadd.f32 %v6888, %v6961
        %v6963 = vand.u32 %v6834, 4294901760
        %6964 = vmatmul.f32.gmra.mxu0 %v6963
        %v6965 = vpop.f32.mrf.mxu0
        %v6966 = vadd.f32 %v6896, %v6965
        %v6967 = vand.u32 %v6837, 4294901760
        %6968 = vmatmul.f32.gmra.mxu0 %v6967
        %v6969 = vpop.f32.mrf.mxu0
        %v6970 = vadd.f32 %v6904, %v6969
        %v6971 = vand.u32 %v6840, 4294901760
        %6972 = vmatmul.f32.gmra.mxu0 %v6971
        %v6973 = vpop.f32.mrf.mxu0
        %v6974 = vadd.f32 %v6912, %v6973
        %v6975 = vand.u32 %v6843, 4294901760
        %6976 = vmatmul.f32.gmra.mxu0 %v6975
        %v6977 = vpop.f32.mrf.mxu0
        %v6978 = vadd.f32 %v6920, %v6977
        %v6979 = vand.u32 %v6846, 4294901760
        %6980 = vmatmul.f32.gmra.mxu0 %v6979
        %v6981 = vpop.f32.mrf.mxu0
        %v6982 = vadd.f32 %v6928, %v6981
        %6983 = vdwg.mxu0
        %6984 = vmatpush.msra.mxu0 0.0
        %6985 = vmatpush.msra.mxu0 0.0
        %6986 = vmatpush.msra.mxu0 0.0
        %6987 = vmatpush.msra.mxu0 0.0
        %6988 = vmatpush.msra.mxu0 0.0
        %6989 = vmatpush.msra.mxu0 0.0
        %6990 = vmatpush.msra.mxu0 0.0
        %6991 = vmatpush.msra.mxu0 0.0
        %6992 = vmatpush.msra.mxu0 0.0
        %6993 = vmatpush.msra.mxu0 0.0
        %6994 = vmatpush.msra.mxu0 0.0
        %6995 = vmatpush.msra.mxu0 0.0
        %6996 = vmatpush.msra.mxu0 0.0
        %6997 = vmatpush.msra.mxu0 0.0
        %6998 = vmatpush.msra.mxu0 0.0
        %v6999 = vand.u32 %v3203, 4294901760
        %v7000 = vsub.f32 %v3203, %v6999
        %7001 = vmatpush.msra.mxu0 %v7000
        %v7002 = vand.u32 %v6825, 4294901760
        %v7003 = vsub.f32 %v6825, %v7002
        %7004 = vmatmul.f32.gmra.mxu0 %v7003
        %v7005 = vpop.f32.mrf.mxu0
        %v7006 = vadd.f32 %v6954, %v7005
        %v7007 = vand.u32 %v6828, 4294901760
        %v7008 = vsub.f32 %v6828, %v7007
        %7009 = vmatmul.f32.gmra.mxu0 %v7008
        %v7010 = vpop.f32.mrf.mxu0
        %v7011 = vadd.f32 %v6958, %v7010
        %v7012 = vand.u32 %v6831, 4294901760
        %v7013 = vsub.f32 %v6831, %v7012
        %7014 = vmatmul.f32.gmra.mxu0 %v7013
        %v7015 = vpop.f32.mrf.mxu0
        %v7016 = vadd.f32 %v6962, %v7015
        %v7017 = vand.u32 %v6834, 4294901760
        %v7018 = vsub.f32 %v6834, %v7017
        %7019 = vmatmul.f32.gmra.mxu0 %v7018
        %v7020 = vpop.f32.mrf.mxu0
        %v7021 = vadd.f32 %v6966, %v7020
        %v7022 = vand.u32 %v6837, 4294901760
        %v7023 = vsub.f32 %v6837, %v7022
        %7024 = vmatmul.f32.gmra.mxu0 %v7023
        %v7025 = vpop.f32.mrf.mxu0
        %v7026 = vadd.f32 %v6970, %v7025
        %v7027 = vand.u32 %v6840, 4294901760
        %v7028 = vsub.f32 %v6840, %v7027
        %7029 = vmatmul.f32.gmra.mxu0 %v7028
        %v7030 = vpop.f32.mrf.mxu0
        %v7031 = vadd.f32 %v6974, %v7030
        %v7032 = vand.u32 %v6843, 4294901760
        %v7033 = vsub.f32 %v6843, %v7032
        %7034 = vmatmul.f32.gmra.mxu0 %v7033
        %v7035 = vpop.f32.mrf.mxu0
        %v7036 = vadd.f32 %v6978, %v7035
        %v7037 = vand.u32 %v6846, 4294901760
        %v7038 = vsub.f32 %v6846, %v7037
        %7039 = vmatmul.f32.gmra.mxu0 %v7038
        %v7040 = vpop.f32.mrf.mxu0
        %v7041 = vadd.f32 %v6982, %v7040
        %7042 = vdwg.mxu0
        %7043 = vmatpush.msra.mxu0 0.0
        %7044 = vmatpush.msra.mxu0 0.0
        %7045 = vmatpush.msra.mxu0 0.0
        %7046 = vmatpush.msra.mxu0 0.0
        %7047 = vmatpush.msra.mxu0 0.0
        %7048 = vmatpush.msra.mxu0 0.0
        %7049 = vmatpush.msra.mxu0 0.0
        %7050 = vmatpush.msra.mxu0 0.0
        %7051 = vmatpush.msra.mxu0 0.0
        %7052 = vmatpush.msra.mxu0 0.0
        %7053 = vmatpush.msra.mxu0 0.0
        %7054 = vmatpush.msra.mxu0 0.0
        %7055 = vmatpush.msra.mxu0 0.0
        %7056 = vmatpush.msra.mxu0 0.0
        %7057 = vmatpush.msra.mxu0 0.0
        %v7058 = vand.u32 %v3203, 4294901760
        %7059 = vmatpush.msra.mxu0 %v7058
        %v7060 = vand.u32 %v6825, 4294901760
        %v7061 = vsub.f32 %v6825, %v7060
        %v7062 = vand.u32 %v7061, 4294901760
        %7063 = vmatmul.f32.gmra.mxu0 %v7062
        %v7064 = vpop.f32.mrf.mxu0
        %v7065 = vadd.f32 %v7006, %v7064
        %v7066 = vand.u32 %v6828, 4294901760
        %v7067 = vsub.f32 %v6828, %v7066
        %v7068 = vand.u32 %v7067, 4294901760
        %7069 = vmatmul.f32.gmra.mxu0 %v7068
        %v7070 = vpop.f32.mrf.mxu0
        %v7071 = vadd.f32 %v7011, %v7070
        %v7072 = vand.u32 %v6831, 4294901760
        %v7073 = vsub.f32 %v6831, %v7072
        %v7074 = vand.u32 %v7073, 4294901760
        %7075 = vmatmul.f32.gmra.mxu0 %v7074
        %v7076 = vpop.f32.mrf.mxu0
        %v7077 = vadd.f32 %v7016, %v7076
        %v7078 = vand.u32 %v6834, 4294901760
        %v7079 = vsub.f32 %v6834, %v7078
        %v7080 = vand.u32 %v7079, 4294901760
        %7081 = vmatmul.f32.gmra.mxu0 %v7080
        %v7082 = vpop.f32.mrf.mxu0
        %v7083 = vadd.f32 %v7021, %v7082
        %v7084 = vand.u32 %v6837, 4294901760
        %v7085 = vsub.f32 %v6837, %v7084
        %v7086 = vand.u32 %v7085, 4294901760
        %7087 = vmatmul.f32.gmra.mxu0 %v7086
        %v7088 = vpop.f32.mrf.mxu0
        %v7089 = vadd.f32 %v7026, %v7088
        %v7090 = vand.u32 %v6840, 4294901760
        %v7091 = vsub.f32 %v6840, %v7090
        %v7092 = vand.u32 %v7091, 4294901760
        %7093 = vmatmul.f32.gmra.mxu0 %v7092
        %v7094 = vpop.f32.mrf.mxu0
        %v7095 = vadd.f32 %v7031, %v7094
        %v7096 = vand.u32 %v6843, 4294901760
        %v7097 = vsub.f32 %v6843, %v7096
        %v7098 = vand.u32 %v7097, 4294901760
        %7099 = vmatmul.f32.gmra.mxu0 %v7098
        %v7100 = vpop.f32.mrf.mxu0
        %v7101 = vadd.f32 %v7036, %v7100
        %v7102 = vand.u32 %v6846, 4294901760
        %v7103 = vsub.f32 %v6846, %v7102
        %v7104 = vand.u32 %v7103, 4294901760
        %7105 = vmatmul.f32.gmra.mxu0 %v7104
        %v7106 = vpop.f32.mrf.mxu0
        %v7107 = vadd.f32 %v7041, %v7106
        %7108 = vdwg.mxu0
        %7109 = vmatpush.msra.mxu0 0.0
        %7110 = vmatpush.msra.mxu0 0.0
        %7111 = vmatpush.msra.mxu0 0.0
        %7112 = vmatpush.msra.mxu0 0.0
        %7113 = vmatpush.msra.mxu0 0.0
        %7114 = vmatpush.msra.mxu0 0.0
        %7115 = vmatpush.msra.mxu0 0.0
        %7116 = vmatpush.msra.mxu0 0.0
        %7117 = vmatpush.msra.mxu0 0.0
        %7118 = vmatpush.msra.mxu0 0.0
        %7119 = vmatpush.msra.mxu0 0.0
        %7120 = vmatpush.msra.mxu0 0.0
        %7121 = vmatpush.msra.mxu0 0.0
        %7122 = vmatpush.msra.mxu0 0.0
        %7123 = vmatpush.msra.mxu0 0.0
        %v7124 = vand.u32 %v3203, 4294901760
        %v7125 = vsub.f32 %v3203, %v7124
        %v7126 = vand.u32 %v7125, 4294901760
        %7127 = vmatpush.msra.mxu0 %v7126
        %v7128 = vand.u32 %v6825, 4294901760
        %7129 = vmatmul.f32.gmra.mxu0 %v7128
        %v7130 = vpop.f32.mrf.mxu0
        %v7131 = vadd.f32 %v7065, %v7130
        %v7132 = vand.u32 %v6828, 4294901760
        %7133 = vmatmul.f32.gmra.mxu0 %v7132
        %v7134 = vpop.f32.mrf.mxu0
        %v7135 = vadd.f32 %v7071, %v7134
        %v7136 = vand.u32 %v6831, 4294901760
        %7137 = vmatmul.f32.gmra.mxu0 %v7136
        %v7138 = vpop.f32.mrf.mxu0
        %v7139 = vadd.f32 %v7077, %v7138
        %v7140 = vand.u32 %v6834, 4294901760
        %7141 = vmatmul.f32.gmra.mxu0 %v7140
        %v7142 = vpop.f32.mrf.mxu0
        %v7143 = vadd.f32 %v7083, %v7142
        %v7144 = vand.u32 %v6837, 4294901760
        %7145 = vmatmul.f32.gmra.mxu0 %v7144
        %v7146 = vpop.f32.mrf.mxu0
        %v7147 = vadd.f32 %v7089, %v7146
        %v7148 = vand.u32 %v6840, 4294901760
        %7149 = vmatmul.f32.gmra.mxu0 %v7148
        %v7150 = vpop.f32.mrf.mxu0
        %v7151 = vadd.f32 %v7095, %v7150
        %v7152 = vand.u32 %v6843, 4294901760
        %7153 = vmatmul.f32.gmra.mxu0 %v7152
        %v7154 = vpop.f32.mrf.mxu0
        %v7155 = vadd.f32 %v7101, %v7154
        %v7156 = vand.u32 %v6846, 4294901760
        %7157 = vmatmul.f32.gmra.mxu0 %v7156
        %v7158 = vpop.f32.mrf.mxu0
        %v7159 = vadd.f32 %v7107, %v7158
        %7160 = vdwg.mxu0
        %7161 = vmatpush.msra.mxu0 0.0
        %7162 = vmatpush.msra.mxu0 0.0
        %7163 = vmatpush.msra.mxu0 0.0
        %7164 = vmatpush.msra.mxu0 0.0
        %7165 = vmatpush.msra.mxu0 0.0
        %7166 = vmatpush.msra.mxu0 0.0
        %7167 = vmatpush.msra.mxu0 0.0
        %7168 = vmatpush.msra.mxu0 0.0
        %7169 = vmatpush.msra.mxu0 0.0
        %7170 = vmatpush.msra.mxu0 0.0
        %7171 = vmatpush.msra.mxu0 0.0
        %7172 = vmatpush.msra.mxu0 0.0
        %7173 = vmatpush.msra.mxu0 0.0
        %7174 = vmatpush.msra.mxu0 0.0
        %7175 = vmatpush.msra.mxu0 0.0
        %v7176 = vand.u32 %v3203, 4294901760
        %7177 = vmatpush.msra.mxu0 %v7176
        %v7178 = vand.u32 %v6825, 4294901760
        %7179 = vmatmul.f32.gmra.mxu0 %v7178
        %v7180 = vpop.f32.mrf.mxu0
        %v7181 = vadd.f32 %v7131, %v7180
        %v7182 = vand.u32 %v6828, 4294901760
        %7183 = vmatmul.f32.gmra.mxu0 %v7182
        %v7184 = vpop.f32.mrf.mxu0
        %v7185 = vadd.f32 %v7135, %v7184
        %v7186 = vand.u32 %v6831, 4294901760
        %7187 = vmatmul.f32.gmra.mxu0 %v7186
        %v7188 = vpop.f32.mrf.mxu0
        %v7189 = vadd.f32 %v7139, %v7188
        %v7190 = vand.u32 %v6834, 4294901760
        %7191 = vmatmul.f32.gmra.mxu0 %v7190
        %v7192 = vpop.f32.mrf.mxu0
        %v7193 = vadd.f32 %v7143, %v7192
        %v7194 = vand.u32 %v6837, 4294901760
        %7195 = vmatmul.f32.gmra.mxu0 %v7194
        %v7196 = vpop.f32.mrf.mxu0
        %v7197 = vadd.f32 %v7147, %v7196
        %v7198 = vand.u32 %v6840, 4294901760
        %7199 = vmatmul.f32.gmra.mxu0 %v7198
        %v7200 = vpop.f32.mrf.mxu0
        %v7201 = vadd.f32 %v7151, %v7200
        %v7202 = vand.u32 %v6843, 4294901760
        %7203 = vmatmul.f32.gmra.mxu0 %v7202
        %v7204 = vpop.f32.mrf.mxu0
        %v7205 = vadd.f32 %v7155, %v7204
        %v7206 = vand.u32 %v6846, 4294901760
        %7207 = vmatmul.f32.gmra.mxu0 %v7206
        %v7208 = vpop.f32.mrf.mxu0
        %v7209 = vadd.f32 %v7159, %v7208
        %7210 = vdwg.mxu0
        %v7211 = vmul.f32 %v6448, %v7181
        %v7212 = vmul.f32 %v6449, %v7185
        %v7213 = vmul.f32 %v6450, %v7189
        %v7214 = vmul.f32 %v6451, %v7193
        %v7215 = vmul.f32 %v6452, %v7197
        %v7216 = vmul.f32 %v6453, %v7201
        %v7217 = vmul.f32 %v6454, %v7205
        %v7218 = vmul.f32 %v6455, %v7209
        %v7219 = vrot.slane %v7211, 4
        %v7220 = vadd.f32 %v7211, %v7219
        %v7221 = vrot.slane %v7220, 2
        %v7222 = vadd.f32 %v7220, %v7221
        %v7223 = vrot.slane %v7222, 1
        %v7224 = vadd.f32 %v7222, %v7223
        %v7225 = vrot.slane %v7212, 4
        %v7226 = vadd.f32 %v7212, %v7225
        %v7227 = vrot.slane %v7226, 2
        %v7228 = vadd.f32 %v7226, %v7227
        %v7229 = vrot.slane %v7228, 1
        %v7230 = vadd.f32 %v7228, %v7229
        %v7231 = vrot.slane %v7213, 4
        %v7232 = vadd.f32 %v7213, %v7231
        %v7233 = vrot.slane %v7232, 2
        %v7234 = vadd.f32 %v7232, %v7233
        %v7235 = vrot.slane %v7234, 1
        %v7236 = vadd.f32 %v7234, %v7235
        %v7237 = vrot.slane %v7214, 4
        %v7238 = vadd.f32 %v7214, %v7237
        %v7239 = vrot.slane %v7238, 2
        %v7240 = vadd.f32 %v7238, %v7239
        %v7241 = vrot.slane %v7240, 1
        %v7242 = vadd.f32 %v7240, %v7241
        %v7243 = vrot.slane %v7215, 4
        %v7244 = vadd.f32 %v7215, %v7243
        %v7245 = vrot.slane %v7244, 2
        %v7246 = vadd.f32 %v7244, %v7245
        %v7247 = vrot.slane %v7246, 1
        %v7248 = vadd.f32 %v7246, %v7247
        %v7249 = vrot.slane %v7216, 4
        %v7250 = vadd.f32 %v7216, %v7249
        %v7251 = vrot.slane %v7250, 2
        %v7252 = vadd.f32 %v7250, %v7251
        %v7253 = vrot.slane %v7252, 1
        %v7254 = vadd.f32 %v7252, %v7253
        %v7255 = vrot.slane %v7217, 4
        %v7256 = vadd.f32 %v7217, %v7255
        %v7257 = vrot.slane %v7256, 2
        %v7258 = vadd.f32 %v7256, %v7257
        %v7259 = vrot.slane %v7258, 1
        %v7260 = vadd.f32 %v7258, %v7259
        %v7261 = vrot.slane %v7218, 4
        %v7262 = vadd.f32 %v7218, %v7261
        %v7263 = vrot.slane %v7262, 2
        %v7264 = vadd.f32 %v7262, %v7263
        %v7265 = vrot.slane %v7264, 1
        %v7266 = vadd.f32 %v7264, %v7265
        %v7267 = vld [vmem:[%s10] sm:$0xff]
        %v7268 = vld [vmem:[%s10 + $0x8] sm:$0xff]
        %v7269 = vld [vmem:[%s10 + $0x10] sm:$0xff]
        %v7270 = vld [vmem:[%s10 + $0x18] sm:$0xff]
        %v7271 = vld [vmem:[%s10 + $0x20] sm:$0xff]
        %v7272 = vld [vmem:[%s10 + $0x28] sm:$0xff]
        %v7273 = vld [vmem:[%s10 + $0x30] sm:$0xff]
        %v7274 = vld [vmem:[%s10 + $0x38] sm:$0xff]
        %v7275 = vld [vmem:[%s10 + $0x40] sm:$0xff]
        %v7276 = vld [vmem:[%s10 + $0x48] sm:$0xff]
        %v7277 = vld [vmem:[%s10 + $0x50] sm:$0xff]
        %v7278 = vld [vmem:[%s10 + $0x58] sm:$0xff]
        %v7279 = vld [vmem:[%s10 + $0x60] sm:$0xff]
        %v7280 = vld [vmem:[%s10 + $0x68] sm:$0xff]
        %v7281 = vld [vmem:[%s10 + $0x70] sm:$0xff]
        %v7282 = vld [vmem:[%s10 + $0x78] sm:$0xff]
        %v7283 = vld [vmem:[%s11] sm:$0x1]
        %v7285 = vperm.slane %v7283, 0
        %vm7295 = vcmask 1041409
        %v7296 = vsel %vm7295, %v7230, %v7224
        %vm7297 = vcmask 1042434
        %v7298 = vsel %vm7297, %v7236, %v7296
        %vm7299 = vcmask 1043459
        %v7300 = vsel %vm7299, %v7242, %v7298
        %vm7301 = vcmask 1044484
        %v7302 = vsel %vm7301, %v7248, %v7300
        %vm7303 = vcmask 1045509
        %v7304 = vsel %vm7303, %v7254, %v7302
        %vm7305 = vcmask 1046534
        %v7306 = vsel %vm7305, %v7260, %v7304
        %vm7307 = vcmask 1047559
        %v7308 = vsel %vm7307, %v7266, %v7306
        %v7310 = vand.u32 %v7282, 4294901760
        %7311 = vmatpush.msra.mxu0 %v7310
        %v7312 = vand.u32 %v7281, 4294901760
        %7313 = vmatpush.msra.mxu0 %v7312
        %v7314 = vand.u32 %v7280, 4294901760
        %7315 = vmatpush.msra.mxu0 %v7314
        %v7316 = vand.u32 %v7279, 4294901760
        %7317 = vmatpush.msra.mxu0 %v7316
        %v7318 = vand.u32 %v7278, 4294901760
        %7319 = vmatpush.msra.mxu0 %v7318
        %v7320 = vand.u32 %v7277, 4294901760
        %7321 = vmatpush.msra.mxu0 %v7320
        %v7322 = vand.u32 %v7276, 4294901760
        %7323 = vmatpush.msra.mxu0 %v7322
        %v7324 = vand.u32 %v7275, 4294901760
        %7325 = vmatpush.msra.mxu0 %v7324
        %v7326 = vand.u32 %v7274, 4294901760
        %7327 = vmatpush.msra.mxu0 %v7326
        %v7328 = vand.u32 %v7273, 4294901760
        %7329 = vmatpush.msra.mxu0 %v7328
        %v7330 = vand.u32 %v7272, 4294901760
        %7331 = vmatpush.msra.mxu0 %v7330
        %v7332 = vand.u32 %v7271, 4294901760
        %7333 = vmatpush.msra.mxu0 %v7332
        %v7334 = vand.u32 %v7270, 4294901760
        %7335 = vmatpush.msra.mxu0 %v7334
        %v7336 = vand.u32 %v7269, 4294901760
        %7337 = vmatpush.msra.mxu0 %v7336
        %v7338 = vand.u32 %v7268, 4294901760
        %7339 = vmatpush.msra.mxu0 %v7338
        %v7340 = vand.u32 %v7267, 4294901760
        %7341 = vmatpush.msra.mxu0 %v7340
        %v7342 = vand.u32 %v7308, 4294901760
        %v7343 = vsub.f32 %v7308, %v7342
        %v7344 = vand.u32 %v7343, 4294901760
        %v7345 = vsub.f32 %v7343, %v7344
        %v7346 = vand.u32 %v7345, 4294901760
        %7347 = vmatmul.f32.gmra.mxu0 %v7346
        %v7348 = vpop.f32.mrf.mxu0
        %v7349 = vadd.f32 %v7285, %v7348
        %7350 = vdwg.mxu0
        %v7351 = vand.u32 %v7282, 4294901760
        %v7352 = vsub.f32 %v7282, %v7351
        %v7353 = vand.u32 %v7352, 4294901760
        %v7354 = vsub.f32 %v7352, %v7353
        %v7355 = vand.u32 %v7354, 4294901760
        %7356 = vmatpush.msra.mxu0 %v7355
        %v7357 = vand.u32 %v7281, 4294901760
        %v7358 = vsub.f32 %v7281, %v7357
        %v7359 = vand.u32 %v7358, 4294901760
        %v7360 = vsub.f32 %v7358, %v7359
        %v7361 = vand.u32 %v7360, 4294901760
        %7362 = vmatpush.msra.mxu0 %v7361
        %v7363 = vand.u32 %v7280, 4294901760
        %v7364 = vsub.f32 %v7280, %v7363
        %v7365 = vand.u32 %v7364, 4294901760
        %v7366 = vsub.f32 %v7364, %v7365
        %v7367 = vand.u32 %v7366, 4294901760
        %7368 = vmatpush.msra.mxu0 %v7367
        %v7369 = vand.u32 %v7279, 4294901760
        %v7370 = vsub.f32 %v7279, %v7369
        %v7371 = vand.u32 %v7370, 4294901760
        %v7372 = vsub.f32 %v7370, %v7371
        %v7373 = vand.u32 %v7372, 4294901760
        %7374 = vmatpush.msra.mxu0 %v7373
        %v7375 = vand.u32 %v7278, 4294901760
        %v7376 = vsub.f32 %v7278, %v7375
        %v7377 = vand.u32 %v7376, 4294901760
        %v7378 = vsub.f32 %v7376, %v7377
        %v7379 = vand.u32 %v7378, 4294901760
        %7380 = vmatpush.msra.mxu0 %v7379
        %v7381 = vand.u32 %v7277, 4294901760
        %v7382 = vsub.f32 %v7277, %v7381
        %v7383 = vand.u32 %v7382, 4294901760
        %v7384 = vsub.f32 %v7382, %v7383
        %v7385 = vand.u32 %v7384, 4294901760
        %7386 = vmatpush.msra.mxu0 %v7385
        %v7387 = vand.u32 %v7276, 4294901760
        %v7388 = vsub.f32 %v7276, %v7387
        %v7389 = vand.u32 %v7388, 4294901760
        %v7390 = vsub.f32 %v7388, %v7389
        %v7391 = vand.u32 %v7390, 4294901760
        %7392 = vmatpush.msra.mxu0 %v7391
        %v7393 = vand.u32 %v7275, 4294901760
        %v7394 = vsub.f32 %v7275, %v7393
        %v7395 = vand.u32 %v7394, 4294901760
        %v7396 = vsub.f32 %v7394, %v7395
        %v7397 = vand.u32 %v7396, 4294901760
        %7398 = vmatpush.msra.mxu0 %v7397
        %v7399 = vand.u32 %v7274, 4294901760
        %v7400 = vsub.f32 %v7274, %v7399
        %v7401 = vand.u32 %v7400, 4294901760
        %v7402 = vsub.f32 %v7400, %v7401
        %v7403 = vand.u32 %v7402, 4294901760
        %7404 = vmatpush.msra.mxu0 %v7403
        %v7405 = vand.u32 %v7273, 4294901760
        %v7406 = vsub.f32 %v7273, %v7405
        %v7407 = vand.u32 %v7406, 4294901760
        %v7408 = vsub.f32 %v7406, %v7407
        %v7409 = vand.u32 %v7408, 4294901760
        %7410 = vmatpush.msra.mxu0 %v7409
        %v7411 = vand.u32 %v7272, 4294901760
        %v7412 = vsub.f32 %v7272, %v7411
        %v7413 = vand.u32 %v7412, 4294901760
        %v7414 = vsub.f32 %v7412, %v7413
        %v7415 = vand.u32 %v7414, 4294901760
        %7416 = vmatpush.msra.mxu0 %v7415
        %v7417 = vand.u32 %v7271, 4294901760
        %v7418 = vsub.f32 %v7271, %v7417
        %v7419 = vand.u32 %v7418, 4294901760
        %v7420 = vsub.f32 %v7418, %v7419
        %v7421 = vand.u32 %v7420, 4294901760
        %7422 = vmatpush.msra.mxu0 %v7421
        %v7423 = vand.u32 %v7270, 4294901760
        %v7424 = vsub.f32 %v7270, %v7423
        %v7425 = vand.u32 %v7424, 4294901760
        %v7426 = vsub.f32 %v7424, %v7425
        %v7427 = vand.u32 %v7426, 4294901760
        %7428 = vmatpush.msra.mxu0 %v7427
        %v7429 = vand.u32 %v7269, 4294901760
        %v7430 = vsub.f32 %v7269, %v7429
        %v7431 = vand.u32 %v7430, 4294901760
        %v7432 = vsub.f32 %v7430, %v7431
        %v7433 = vand.u32 %v7432, 4294901760
        %7434 = vmatpush.msra.mxu0 %v7433
        %v7435 = vand.u32 %v7268, 4294901760
        %v7436 = vsub.f32 %v7268, %v7435
        %v7437 = vand.u32 %v7436, 4294901760
        %v7438 = vsub.f32 %v7436, %v7437
        %v7439 = vand.u32 %v7438, 4294901760
        %7440 = vmatpush.msra.mxu0 %v7439
        %v7441 = vand.u32 %v7267, 4294901760
        %v7442 = vsub.f32 %v7267, %v7441
        %v7443 = vand.u32 %v7442, 4294901760
        %v7444 = vsub.f32 %v7442, %v7443
        %v7445 = vand.u32 %v7444, 4294901760
        %7446 = vmatpush.msra.mxu0 %v7445
        %v7447 = vand.u32 %v7308, 4294901760
        %7448 = vmatmul.f32.gmra.mxu0 %v7447
        %v7449 = vpop.f32.mrf.mxu0
        %v7450 = vadd.f32 %v7349, %v7449
        %7451 = vdwg.mxu0
        %v7452 = vand.u32 %v7282, 4294901760
        %v7453 = vsub.f32 %v7282, %v7452
        %7454 = vmatpush.msra.mxu0 %v7453
        %v7455 = vand.u32 %v7281, 4294901760
        %v7456 = vsub.f32 %v7281, %v7455
        %7457 = vmatpush.msra.mxu0 %v7456
        %v7458 = vand.u32 %v7280, 4294901760
        %v7459 = vsub.f32 %v7280, %v7458
        %7460 = vmatpush.msra.mxu0 %v7459
        %v7461 = vand.u32 %v7279, 4294901760
        %v7462 = vsub.f32 %v7279, %v7461
        %7463 = vmatpush.msra.mxu0 %v7462
        %v7464 = vand.u32 %v7278, 4294901760
        %v7465 = vsub.f32 %v7278, %v7464
        %7466 = vmatpush.msra.mxu0 %v7465
        %v7467 = vand.u32 %v7277, 4294901760
        %v7468 = vsub.f32 %v7277, %v7467
        %7469 = vmatpush.msra.mxu0 %v7468
        %v7470 = vand.u32 %v7276, 4294901760
        %v7471 = vsub.f32 %v7276, %v7470
        %7472 = vmatpush.msra.mxu0 %v7471
        %v7473 = vand.u32 %v7275, 4294901760
        %v7474 = vsub.f32 %v7275, %v7473
        %7475 = vmatpush.msra.mxu0 %v7474
        %v7476 = vand.u32 %v7274, 4294901760
        %v7477 = vsub.f32 %v7274, %v7476
        %7478 = vmatpush.msra.mxu0 %v7477
        %v7479 = vand.u32 %v7273, 4294901760
        %v7480 = vsub.f32 %v7273, %v7479
        %7481 = vmatpush.msra.mxu0 %v7480
        %v7482 = vand.u32 %v7272, 4294901760
        %v7483 = vsub.f32 %v7272, %v7482
        %7484 = vmatpush.msra.mxu0 %v7483
        %v7485 = vand.u32 %v7271, 4294901760
        %v7486 = vsub.f32 %v7271, %v7485
        %7487 = vmatpush.msra.mxu0 %v7486
        %v7488 = vand.u32 %v7270, 4294901760
        %v7489 = vsub.f32 %v7270, %v7488
        %7490 = vmatpush.msra.mxu0 %v7489
        %v7491 = vand.u32 %v7269, 4294901760
        %v7492 = vsub.f32 %v7269, %v7491
        %7493 = vmatpush.msra.mxu0 %v7492
        %v7494 = vand.u32 %v7268, 4294901760
        %v7495 = vsub.f32 %v7268, %v7494
        %7496 = vmatpush.msra.mxu0 %v7495
        %v7497 = vand.u32 %v7267, 4294901760
        %v7498 = vsub.f32 %v7267, %v7497
        %7499 = vmatpush.msra.mxu0 %v7498
        %v7500 = vand.u32 %v7308, 4294901760
        %v7501 = vsub.f32 %v7308, %v7500
        %7502 = vmatmul.f32.gmra.mxu0 %v7501
        %v7503 = vpop.f32.mrf.mxu0
        %v7504 = vadd.f32 %v7450, %v7503
        %7505 = vdwg.mxu0
        %v7506 = vand.u32 %v7282, 4294901760
        %7507 = vmatpush.msra.mxu0 %v7506
        %v7508 = vand.u32 %v7281, 4294901760
        %7509 = vmatpush.msra.mxu0 %v7508
        %v7510 = vand.u32 %v7280, 4294901760
        %7511 = vmatpush.msra.mxu0 %v7510
        %v7512 = vand.u32 %v7279, 4294901760
        %7513 = vmatpush.msra.mxu0 %v7512
        %v7514 = vand.u32 %v7278, 4294901760
        %7515 = vmatpush.msra.mxu0 %v7514
        %v7516 = vand.u32 %v7277, 4294901760
        %7517 = vmatpush.msra.mxu0 %v7516
        %v7518 = vand.u32 %v7276, 4294901760
        %7519 = vmatpush.msra.mxu0 %v7518
        %v7520 = vand.u32 %v7275, 4294901760
        %7521 = vmatpush.msra.mxu0 %v7520
        %v7522 = vand.u32 %v7274, 4294901760
        %7523 = vmatpush.msra.mxu0 %v7522
        %v7524 = vand.u32 %v7273, 4294901760
        %7525 = vmatpush.msra.mxu0 %v7524
        %v7526 = vand.u32 %v7272, 4294901760
        %7527 = vmatpush.msra.mxu0 %v7526
        %v7528 = vand.u32 %v7271, 4294901760
        %7529 = vmatpush.msra.mxu0 %v7528
        %v7530 = vand.u32 %v7270, 4294901760
        %7531 = vmatpush.msra.mxu0 %v7530
        %v7532 = vand.u32 %v7269, 4294901760
        %7533 = vmatpush.msra.mxu0 %v7532
        %v7534 = vand.u32 %v7268, 4294901760
        %7535 = vmatpush.msra.mxu0 %v7534
        %v7536 = vand.u32 %v7267, 4294901760
        %7537 = vmatpush.msra.mxu0 %v7536
        %v7538 = vand.u32 %v7308, 4294901760
        %v7539 = vsub.f32 %v7308, %v7538
        %v7540 = vand.u32 %v7539, 4294901760
        %7541 = vmatmul.f32.gmra.mxu0 %v7540
        %v7542 = vpop.f32.mrf.mxu0
        %v7543 = vadd.f32 %v7504, %v7542
        %7544 = vdwg.mxu0
        %v7545 = vand.u32 %v7282, 4294901760
        %v7546 = vsub.f32 %v7282, %v7545
        %v7547 = vand.u32 %v7546, 4294901760
        %7548 = vmatpush.msra.mxu0 %v7547
        %v7549 = vand.u32 %v7281, 4294901760
        %v7550 = vsub.f32 %v7281, %v7549
        %v7551 = vand.u32 %v7550, 4294901760
        %7552 = vmatpush.msra.mxu0 %v7551
        %v7553 = vand.u32 %v7280, 4294901760
        %v7554 = vsub.f32 %v7280, %v7553
        %v7555 = vand.u32 %v7554, 4294901760
        %7556 = vmatpush.msra.mxu0 %v7555
        %v7557 = vand.u32 %v7279, 4294901760
        %v7558 = vsub.f32 %v7279, %v7557
        %v7559 = vand.u32 %v7558, 4294901760
        %7560 = vmatpush.msra.mxu0 %v7559
        %v7561 = vand.u32 %v7278, 4294901760
        %v7562 = vsub.f32 %v7278, %v7561
        %v7563 = vand.u32 %v7562, 4294901760
        %7564 = vmatpush.msra.mxu0 %v7563
        %v7565 = vand.u32 %v7277, 4294901760
        %v7566 = vsub.f32 %v7277, %v7565
        %v7567 = vand.u32 %v7566, 4294901760
        %7568 = vmatpush.msra.mxu0 %v7567
        %v7569 = vand.u32 %v7276, 4294901760
        %v7570 = vsub.f32 %v7276, %v7569
        %v7571 = vand.u32 %v7570, 4294901760
        %7572 = vmatpush.msra.mxu0 %v7571
        %v7573 = vand.u32 %v7275, 4294901760
        %v7574 = vsub.f32 %v7275, %v7573
        %v7575 = vand.u32 %v7574, 4294901760
        %7576 = vmatpush.msra.mxu0 %v7575
        %v7577 = vand.u32 %v7274, 4294901760
        %v7578 = vsub.f32 %v7274, %v7577
        %v7579 = vand.u32 %v7578, 4294901760
        %7580 = vmatpush.msra.mxu0 %v7579
        %v7581 = vand.u32 %v7273, 4294901760
        %v7582 = vsub.f32 %v7273, %v7581
        %v7583 = vand.u32 %v7582, 4294901760
        %7584 = vmatpush.msra.mxu0 %v7583
        %v7585 = vand.u32 %v7272, 4294901760
        %v7586 = vsub.f32 %v7272, %v7585
        %v7587 = vand.u32 %v7586, 4294901760
        %7588 = vmatpush.msra.mxu0 %v7587
        %v7589 = vand.u32 %v7271, 4294901760
        %v7590 = vsub.f32 %v7271, %v7589
        %v7591 = vand.u32 %v7590, 4294901760
        %7592 = vmatpush.msra.mxu0 %v7591
        %v7593 = vand.u32 %v7270, 4294901760
        %v7594 = vsub.f32 %v7270, %v7593
        %v7595 = vand.u32 %v7594, 4294901760
        %7596 = vmatpush.msra.mxu0 %v7595
        %v7597 = vand.u32 %v7269, 4294901760
        %v7598 = vsub.f32 %v7269, %v7597
        %v7599 = vand.u32 %v7598, 4294901760
        %7600 = vmatpush.msra.mxu0 %v7599
        %v7601 = vand.u32 %v7268, 4294901760
        %v7602 = vsub.f32 %v7268, %v7601
        %v7603 = vand.u32 %v7602, 4294901760
        %7604 = vmatpush.msra.mxu0 %v7603
        %v7605 = vand.u32 %v7267, 4294901760
        %v7606 = vsub.f32 %v7267, %v7605
        %v7607 = vand.u32 %v7606, 4294901760
        %7608 = vmatpush.msra.mxu0 %v7607
        %v7609 = vand.u32 %v7308, 4294901760
        %7610 = vmatmul.f32.gmra.mxu0 %v7609
        %v7611 = vpop.f32.mrf.mxu0
        %v7612 = vadd.f32 %v7543, %v7611
        %7613 = vdwg.mxu0
        %v7614 = vand.u32 %v7282, 4294901760
        %7615 = vmatpush.msra.mxu0 %v7614
        %v7616 = vand.u32 %v7281, 4294901760
        %7617 = vmatpush.msra.mxu0 %v7616
        %v7618 = vand.u32 %v7280, 4294901760
        %7619 = vmatpush.msra.mxu0 %v7618
        %v7620 = vand.u32 %v7279, 4294901760
        %7621 = vmatpush.msra.mxu0 %v7620
        %v7622 = vand.u32 %v7278, 4294901760
        %7623 = vmatpush.msra.mxu0 %v7622
        %v7624 = vand.u32 %v7277, 4294901760
        %7625 = vmatpush.msra.mxu0 %v7624
        %v7626 = vand.u32 %v7276, 4294901760
        %7627 = vmatpush.msra.mxu0 %v7626
        %v7628 = vand.u32 %v7275, 4294901760
        %7629 = vmatpush.msra.mxu0 %v7628
        %v7630 = vand.u32 %v7274, 4294901760
        %7631 = vmatpush.msra.mxu0 %v7630
        %v7632 = vand.u32 %v7273, 4294901760
        %7633 = vmatpush.msra.mxu0 %v7632
        %v7634 = vand.u32 %v7272, 4294901760
        %7635 = vmatpush.msra.mxu0 %v7634
        %v7636 = vand.u32 %v7271, 4294901760
        %7637 = vmatpush.msra.mxu0 %v7636
        %v7638 = vand.u32 %v7270, 4294901760
        %7639 = vmatpush.msra.mxu0 %v7638
        %v7640 = vand.u32 %v7269, 4294901760
        %7641 = vmatpush.msra.mxu0 %v7640
        %v7642 = vand.u32 %v7268, 4294901760
        %7643 = vmatpush.msra.mxu0 %v7642
        %v7644 = vand.u32 %v7267, 4294901760
        %7645 = vmatpush.msra.mxu0 %v7644
        %v7646 = vand.u32 %v7308, 4294901760
        %7647 = vmatmul.f32.gmra.mxu0 %v7646
        %v7648 = vpop.f32.mrf.mxu0
        %v7649 = vadd.f32 %v7612, %v7648
        %7650 = vdwg.mxu0
        %7651 = vst [vmem:[%s744] sm:$0xff] %v7649
        %p7652 = scmp.lt.s32.totalorder %s23, 1
        %s7653 = scalar_select %p7652, %s23, 1
        %s7654 = smul.addr %s7653, 8
        %s7655 = scalar_lea.vmem %s12, %s7654
        // Predicated region
        $region107: #{es_module_forward.1} parent=101 // pred_check
          %p7656 = pneg %p308
        $region108: #{es_module_forward.1} parent=101 // pred_check_branch
          %7658 = sbr.rel (%p7656) target = $region110
        $region109: #{es_module_forward.1} parent=101 // pred_region
          _
        $region110: #{es_module_forward.1} parent=101 // pred_fallthru
          _
      $region102: #{es_module_forward.1} parent=5 // pred_fallthru
        _
      %p7659 = scmp.le.s32.totalorder 2, %s18
      // Predicated region
      $region111: #{es_module_forward.1} parent=5 // pred_check
        %p7660 = pneg %p7659
      $region112: #{es_module_forward.1} parent=5 // pred_check_branch
        %7662 = sbr.rel (%p7660) target = $region114
      $region113: #{es_module_forward.1} parent=5 // pred_region
        %s7663 = ssub.s32 %s18, 2
        // Predicated region
        $region115: #{es_module_forward.1} parent=113 // pred_check
          %p7664 = pneg %p314
        $region116: #{es_module_forward.1} parent=113 // pred_check_branch
          %7666 = sbr.rel (%p7664) target = $region118
        $region117: #{es_module_forward.1} parent=113 // pred_region
          %p7667 = scmp.lt.s32.totalorder %s24, 1
          %s7668 = scalar_select %p7667, %s24, 1
          %s7669 = smul.addr %s7668, 8
          %s7670 = scalar_lea.vmem %s12, %s7669
        $region118: #{es_module_forward.1} parent=113 // pred_fallthru
          _
      $region114: #{es_module_forward.1} parent=5 // pred_fallthru
        _
    $region6: #{es_module_forward.1} parent=1 // loop_footer
      %s22 = sadd.s32 1, %s18
    $region7: #{es_module_forward.1} parent=1 // loop_footer_branch
      %17 = sbr.rel target = $region3
    $region8: #{es_module_forward.1} parent=1 // loop_exit
      _

</llo_original>
